<compile_context>
chip_gen: v5e
topology: v5e:2x2
jax: 0.10.0
libtpu: 0.0.40
codegen_flags: <defaults>
</compile_context>

<pallas_src>
import functools

import jax
import jax.numpy as jnp
from jax.experimental import pallas as pl
from jax.experimental.pallas import tpu as pltpu

EPS = 1e-6  # torchvision ViT uses LayerNorm(eps=1e-6)


# ---------- small in-kernel helpers ----------
def _layernorm(x, g, b):
    mu = jnp.mean(x, axis=-1, keepdims=True)
    var = jnp.mean((x - mu) ** 2, axis=-1, keepdims=True)
    return (x - mu) * jax.lax.rsqrt(var + EPS) * g + b


def _erf(x):
    # Abramowitz & Stegun 7.1.26 polynomial (max abs err ~1.5e-7); exact-GELU of
    # nn.GELU() without relying on an erf primitive in Mosaic.
    a1, a2, a3, a4, a5 = 0.254829592, -0.284496736, 1.421413741, -1.453152027, 1.061405429
    p = 0.3275911
    s = jnp.where(x >= 0.0, 1.0, -1.0)
    xa = jnp.abs(x)
    t = 1.0 / (1.0 + p * xa)
    poly = ((((a5 * t + a4) * t + a3) * t + a2) * t + a1) * t
    return s * (1.0 - poly * jnp.exp(-xa * xa))


def _gelu_exact(x):
    return 0.5 * x * (1.0 + _erf(x * (1.0 / jnp.sqrt(2.0))))


def _tensorcores_per_device():
    """1 for v5e/v6e (single TensorCore), 2 for megacore-style chips."""
    try:
        kind = jax.devices()[0].device_kind.lower()
    except Exception:  # pragma: no cover - defensive
        return 1
    if ("v7" in kind) or ("v4" in kind) or ("v5p" in kind):
        return 2
    return 1


# ---------- Kernel 1: fully fused encoder (patch embed -> L blocks -> head) ----------
def fused_encoder_kernel(num_heads, seq_len, n_layers,
                         patches_ref, conv_w, bias_full,
                         ln1g, ln1b, wqkv, bqkv, wo, bo,
                         ln2g, ln2b, w1, b1, w2, b2,
                         lnfg, lnfb, dw1, db1,
                         h_ref):
    # One grid step == `blk_b` batch elements (B on single-TC chips, 1 on v7x).
    blk_b, s_pad, p_dim = patches_ref.shape
    D = conv_w.shape[1]
    dh = D // num_heads
    scale = 1.0 / (dh ** 0.5)

    # Patch embedding (conv-as-matmul) over all blk_b*s_pad token rows at once,
    # then add the folded (class token + conv bias + positional embedding).
    patches = patches_ref[...].reshape(blk_b * s_pad, p_dim)
    x = jnp.dot(patches, conv_w[...], preferred_element_type=jnp.float32)
    x = (x.reshape(blk_b, s_pad, D) + bias_full[...][None]).reshape(blk_b * s_pad, D)

    # Key mask for padded positions (>= seq_len), pre-broadcast once, kept f32.
    kpos = jax.lax.broadcasted_iota(jnp.int32, (s_pad, s_pad), 1)
    kmask = jnp.where(kpos < seq_len, 0.0, -1e30).astype(jnp.float32)

    for l in range(n_layers):  # static unroll, n_layers is tiny
        ln1g_l, ln1b_l = ln1g[l], ln1b[l]
        wqkv_l, bqkv_l = wqkv[l], bqkv[l]
        wo_l, bo_l = wo[l], bo[l]

        # --- ln_1 + multi-head self-attention + residual ---
        y = _layernorm(x, ln1g_l, ln1b_l)
        qkv = jnp.dot(y, wqkv_l, preferred_element_type=jnp.float32) + bqkv_l  # (M, 3D)

        attn_parts = []
        for b in range(blk_b):
            qkv_b = qkv[b * s_pad:(b + 1) * s_pad]          # (S_pad, 3D), static slice
            attn_b = None
            for h in range(num_heads):
                q_h = qkv_b[:, h * dh:(h + 1) * dh]
                k_h = qkv_b[:, D + h * dh:D + (h + 1) * dh]
                v_h = qkv_b[:, 2 * D + h * dh:2 * D + (h + 1) * dh]
                s = jax.lax.dot_general(q_h, k_h, (((1,), (1,)), ((), ())),
                                        preferred_element_type=jnp.float32) * scale
                s = s + kmask
                s = s - jnp.max(s, axis=-1, keepdims=True)
                p = jnp.exp(s)
                p = p / jnp.sum(p, axis=-1, keepdims=True)   # exact division for torch parity
                ctx_h = jnp.dot(p, v_h, preferred_element_type=jnp.float32)   # (S_pad, dh)
                contrib = jnp.dot(ctx_h, wo_l[h * dh:(h + 1) * dh, :],
                                  preferred_element_type=jnp.float32)
                attn_b = contrib if attn_b is None else attn_b + contrib
            attn_parts.append(attn_b + bo_l)
        attn = attn_parts[0] if blk_b == 1 else jnp.concatenate(attn_parts, axis=0)
        x = x + attn                                          # dropout is identity in eval mode

        # --- ln_2 + MLP (Linear -> GELU -> Linear) + residual ---
        y = _layernorm(x, ln2g[l], ln2b[l])
        h1 = jnp.dot(y, w1[l], preferred_element_type=jnp.float32) + b1[l]
        h1 = _gelu_exact(h1)
        h2 = jnp.dot(h1, w2[l], preferred_element_type=jnp.float32) + b2[l]
        x = x + h2

    # --- final encoder LayerNorm on the CLS tokens + decoder Linear1 + ReLU ---
    cls_rows = [x[b * s_pad:b * s_pad + 1] for b in range(blk_b)]
    cls = cls_rows[0] if blk_b == 1 else jnp.concatenate(cls_rows, axis=0)   # (blk_b, D)
    cls = _layernorm(cls, lnfg[...], lnfb[...])
    h = jnp.dot(cls, dw1[...], preferred_element_type=jnp.float32) + db1[...]
    h_ref[...] = jnp.maximum(h, 0.0)


def fused_encoder(patches, params, *, num_heads, seq_len, n_layers, collapse_batch):
    B, S_pad, Pd = patches.shape
    dec_h = params["dec_w1"].shape[1]

    weight_args = [params[k] for k in (
        "conv_w", "bias_full",
        "ln1g", "ln1b", "wqkv", "bqkv", "wo", "bo",
        "ln2g", "ln2b", "w1", "b1", "w2", "b2",
        "ln_f_g", "ln_f_b", "dec_w1", "dec_b1")]

    if collapse_batch:
        grid = (1,)
        blk_b = B
    else:
        grid = (B,)
        blk_b = 1

    def const_spec(a):
        nd = a.ndim
        return pl.BlockSpec(a.shape, lambda b, _nd=nd: (0,) * _nd)

    kernel = functools.partial(fused_encoder_kernel, num_heads, seq_len, n_layers)
    return pl.pallas_call(
        kernel,
        out_shape=jax.ShapeDtypeStruct((B, dec_h), jnp.float32),
        grid=grid,
        in_specs=[pl.BlockSpec((blk_b, S_pad, Pd), lambda b: (b, 0, 0))]
                 + [const_spec(a) for a in weight_args],
        out_specs=pl.BlockSpec((blk_b, dec_h), lambda b: (b, 0)),
        compiler_params=pltpu.CompilerParams(dimension_semantics=("parallel",)),
    )(patches, *weight_args)


# ---------- Kernel 2: decoder output Linear + Sigmoid, tiled over output cols ----------
def decoder_out_kernel(h_ref, w_ref, b_ref, o_ref):
    # h is tiny (B x 2D); cast to the bf16 weight dtype so the matmul is
    # MXU-native with f32 accumulation.  The weight read is the HBM bottleneck.
    acc = jnp.dot(h_ref[...].astype(w_ref.dtype), w_ref[...],
                  preferred_element_type=jnp.float32)
    o_ref[...] = jax.nn.sigmoid(acc + b_ref[...])


def _pick_tile(n, targets=(6144, 4096, 3072, 2048, 1536, 1024, 512, 256, 128)):
    # 6144-wide tiles: 2 grid steps for the 12288-wide output -> low fixed
    # overhead on single-TC chips, still 2 "parallel" tiles for v7x's 2 TCs.
    for t in targets:
        if n % t == 0:
            return t
    return n  # fall back to a single (un-tiled) block


def decoder_out(h, w, b):
    B, Dh = h.shape
    N = w.shape[1]
    tile_n = _pick_tile(N)
    return pl.pallas_call(
        decoder_out_kernel,
        out_shape=jax.ShapeDtypeStruct((B, N), jnp.float32),
        grid=(N // tile_n,),
        in_specs=[
            pl.BlockSpec((B, Dh), lambda j: (0, 0)),       # constant block: fetched once
            pl.BlockSpec((Dh, tile_n), lambda j: (0, j)),
            pl.BlockSpec((1, tile_n), lambda j: (0, j)),
        ],
        out_specs=pl.BlockSpec((B, tile_n), lambda j: (0, j)),
        compiler_params=pltpu.CompilerParams(dimension_semantics=("parallel",)),
    )(h, w, b)


# ---------- parameter init (deterministic, synthetic, pre-packed for the kernels) ----------
def init_params(key, image_size, patch_size, hidden_dim, mlp_dim, num_layers, seq_pad):
    D, M = hidden_dim, mlp_dim
    patch_dim = 3 * patch_size * patch_size
    n_patches = (image_size // patch_size) ** 2
    S = n_patches + 1
    out_dim = 3 * image_size * image_size

    keys = iter(jax.random.split(key, 64))
    nrm = lambda shape: 0.02 * jax.random.normal(next(keys), shape, jnp.float32)

    conv_w = nrm((patch_dim, D))
    conv_b = jnp.zeros((D,), jnp.float32)
    class_token = nrm((D,))
    pos_emb = nrm((S, D))

    # Fold class token, conv bias and positional embedding into one additive tensor:
    #   row 0          -> class_token + pos_emb[0]
    #   rows 1..S-1    -> conv_bias + pos_emb[1:]
    #   padded rows    -> 0
    bias_full = jnp.zeros((seq_pad, D), jnp.float32)
    bias_full = bias_full.at[0].set(class_token + pos_emb[0])
    bias_full = bias_full.at[1:S].set(conv_b[None, :] + pos_emb[1:])

    ln1g, ln1b, wqkv, bqkv, wo, bo = [], [], [], [], [], []
    ln2g, ln2b, w1, b1, w2, b2 = [], [], [], [], [], []
    for _ in range(num_layers):
        ln1g.append(jnp.ones((1, D), jnp.float32))
        ln1b.append(jnp.zeros((1, D), jnp.float32))
        wqkv.append(nrm((D, 3 * D)))                 # in_proj weight (pre-transposed)
        bqkv.append(jnp.zeros((1, 3 * D), jnp.float32))
        wo.append(nrm((D, D)))                       # out_proj weight (pre-transposed)
        bo.append(jnp.zeros((1, D), jnp.float32))
        ln2g.append(jnp.ones((1, D), jnp.float32))
        ln2b.append(jnp.zeros((1, D), jnp.float32))
        w1.append(nrm((D, M)))                       # mlp linear1
        b1.append(jnp.zeros((1, M), jnp.float32))
        w2.append(nrm((M, D)))                       # mlp linear2
        b2.append(jnp.zeros((1, D), jnp.float32))

    stack = lambda xs: jnp.stack(xs, axis=0)         # (L, ...)

    return {
        "conv_w": conv_w,
        "bias_full": bias_full,
        "ln1g": stack(ln1g), "ln1b": stack(ln1b),
        "wqkv": stack(wqkv), "bqkv": stack(bqkv),
        "wo": stack(wo), "bo": stack(bo),
        "ln2g": stack(ln2g), "ln2b": stack(ln2b),
        "w1": stack(w1), "b1": stack(b1),
        "w2": stack(w2), "b2": stack(b2),
        "ln_f_g": jnp.ones((1, D), jnp.float32),
        "ln_f_b": jnp.zeros((1, D), jnp.float32),
        "dec_w1": nrm((D, 2 * D)),
        "dec_b1": jnp.zeros((1, 2 * D), jnp.float32),
        # bf16 storage halves the HBM read of the decoder's dominant weight.
        "dec_w2": nrm((2 * D, out_dim)).astype(jnp.bfloat16),
        "dec_b2": jnp.zeros((1, out_dim), jnp.float32),
    }


# ---------- full forward ----------
def vit_autoencoder_forward(x, params, *, patch_size, num_heads, seq_len, seq_pad,
                            collapse_batch):
    B, C, H, W = x.shape
    p = patch_size
    Hp, Wp = H // p, W // p
    Np = Hp * Wp
    n_layers = params["wqkv"].shape[0]

    # Patchify (equivalent to strided conv on NCHW): (B,3,H,W) -> (B, Np, 3*p*p),
    # then pad to the (seq_pad)-row token layout (row 0 = CLS slot, tail = padding).
    patches = x.reshape(B, C, Hp, p, Wp, p).transpose(0, 2, 4, 1, 3, 5)
    patches = patches.reshape(B, Np, C * p * p)
    patches = jnp.pad(patches, ((0, 0), (1, seq_pad - 1 - Np), (0, 0)))

    h = fused_encoder(patches, params, num_heads=num_heads, seq_len=seq_len,
                      n_layers=n_layers, collapse_batch=collapse_batch)   # (B, 2D)

    out = decoder_out(h, params["dec_w2"], params["dec_b2"])              # (B, 3*H*W)
    return out.reshape(B, 3, H, W)


if __name__ == "__main__":
    # Small shapes consistent with the module: image 64x64 (patch 16 -> 16 patches),
    # hidden_dim=32, mlp_dim=64, 2 layers, 2 heads, batch=2.
    IMAGE_SIZE = 64
    PATCH = 16
    HIDDEN = 32
    MLP = 64
    LAYERS = 2
    HEADS = 2
    B = 2

    SEQ = (IMAGE_SIZE // PATCH) ** 2 + 1            # 17 tokens (CLS + patches)
    SEQ_PAD = ((SEQ + 7) // 8) * 8                  # 24 (sublane-aligned)

    # Collapse the batch grid on single-TC chips (v5e/v6e); keep it "parallel"
    # across the 2 TensorCores on megacore-style chips (v4/v5p/v7x).
    COLLAPSE_BATCH = (_tensorcores_per_device() == 1) or (B == 1)

    key = jax.random.PRNGKey(0)
    k_x, k_p = jax.random.split(key)
    x = jax.random.normal(k_x, (B, 3, IMAGE_SIZE, IMAGE_SIZE), jnp.float32)
    params = init_params(k_p, IMAGE_SIZE, PATCH, HIDDEN, MLP, LAYERS, SEQ_PAD)

    fwd = jax.jit(functools.partial(vit_autoencoder_forward,
                                    patch_size=PATCH, num_heads=HEADS,
                                    seq_len=SEQ, seq_pad=SEQ_PAD,
                                    collapse_batch=COLLAPSE_BATCH))
    out = fwd(x, params)
    jax.block_until_ready(out)
    assert out.shape == (B, 3, IMAGE_SIZE, IMAGE_SIZE)
    assert bool(jnp.all((out >= 0.0) & (out <= 1.0)))
    assert bool(jnp.all(jnp.isfinite(out)))
    print("KERNEL_OK")
</pallas_src>

<mosaic_0001>
module attributes {stable_mosaic.version = 11 : i64} {
  func.func @fused_encoder_kernel(%arg0: i32, %arg1: memref<2x24x768xf32, #tpu.memory_space<vmem>>, %arg2: memref<768x32xf32, #tpu.memory_space<vmem>>, %arg3: memref<24x32xf32, #tpu.memory_space<vmem>>, %arg4: memref<2x1x32xf32, #tpu.memory_space<vmem>>, %arg5: memref<2x1x32xf32, #tpu.memory_space<vmem>>, %arg6: memref<2x32x96xf32, #tpu.memory_space<vmem>>, %arg7: memref<2x1x96xf32, #tpu.memory_space<vmem>>, %arg8: memref<2x32x32xf32, #tpu.memory_space<vmem>>, %arg9: memref<2x1x32xf32, #tpu.memory_space<vmem>>, %arg10: memref<2x1x32xf32, #tpu.memory_space<vmem>>, %arg11: memref<2x1x32xf32, #tpu.memory_space<vmem>>, %arg12: memref<2x32x64xf32, #tpu.memory_space<vmem>>, %arg13: memref<2x1x64xf32, #tpu.memory_space<vmem>>, %arg14: memref<2x64x32xf32, #tpu.memory_space<vmem>>, %arg15: memref<2x1x32xf32, #tpu.memory_space<vmem>>, %arg16: memref<1x32xf32, #tpu.memory_space<vmem>>, %arg17: memref<1x32xf32, #tpu.memory_space<vmem>>, %arg18: memref<32x64xf32, #tpu.memory_space<vmem>>, %arg19: memref<1x64xf32, #tpu.memory_space<vmem>>, %arg20: memref<2x64xf32, #tpu.memory_space<vmem>>) attributes {dimension_semantics = [#tpu.dimension_semantics<parallel>], iteration_bounds = array<i64: 1>, scalar_prefetch = 0 : i64, scratch_operands = 0 : i64, tpu.core_type = #tpu.core_type<tc>, window_params = [{transform_indices = @transform_0, window_bounds = array<i64: 2, 24, 768>}, {pipeline_mode = #tpu.pipeline_mode<synchronous>, transform_indices = @transform_1, window_bounds = array<i64: 768, 32>}, {pipeline_mode = #tpu.pipeline_mode<synchronous>, transform_indices = @transform_2, window_bounds = array<i64: 24, 32>}, {pipeline_mode = #tpu.pipeline_mode<synchronous>, transform_indices = @transform_3, window_bounds = array<i64: 2, 1, 32>}, {pipeline_mode = #tpu.pipeline_mode<synchronous>, transform_indices = @transform_4, window_bounds = array<i64: 2, 1, 32>}, {pipeline_mode = #tpu.pipeline_mode<synchronous>, transform_indices = @transform_5, window_bounds = array<i64: 2, 32, 96>}, {pipeline_mode = #tpu.pipeline_mode<synchronous>, transform_indices = @transform_6, window_bounds = array<i64: 2, 1, 96>}, {pipeline_mode = #tpu.pipeline_mode<synchronous>, transform_indices = @transform_7, window_bounds = array<i64: 2, 32, 32>}, {pipeline_mode = #tpu.pipeline_mode<synchronous>, transform_indices = @transform_8, window_bounds = array<i64: 2, 1, 32>}, {pipeline_mode = #tpu.pipeline_mode<synchronous>, transform_indices = @transform_9, window_bounds = array<i64: 2, 1, 32>}, {pipeline_mode = #tpu.pipeline_mode<synchronous>, transform_indices = @transform_10, window_bounds = array<i64: 2, 1, 32>}, {pipeline_mode = #tpu.pipeline_mode<synchronous>, transform_indices = @transform_11, window_bounds = array<i64: 2, 32, 64>}, {pipeline_mode = #tpu.pipeline_mode<synchronous>, transform_indices = @transform_12, window_bounds = array<i64: 2, 1, 64>}, {pipeline_mode = #tpu.pipeline_mode<synchronous>, transform_indices = @transform_13, window_bounds = array<i64: 2, 64, 32>}, {pipeline_mode = #tpu.pipeline_mode<synchronous>, transform_indices = @transform_14, window_bounds = array<i64: 2, 1, 32>}, {pipeline_mode = #tpu.pipeline_mode<synchronous>, transform_indices = @transform_15, window_bounds = array<i64: 1, 32>}, {pipeline_mode = #tpu.pipeline_mode<synchronous>, transform_indices = @transform_16, window_bounds = array<i64: 1, 32>}, {pipeline_mode = #tpu.pipeline_mode<synchronous>, transform_indices = @transform_17, window_bounds = array<i64: 32, 64>}, {pipeline_mode = #tpu.pipeline_mode<synchronous>, transform_indices = @transform_18, window_bounds = array<i64: 1, 64>}, {transform_indices = @transform_19, window_bounds = array<i64: 2, 64>}]} {
    %c0 = arith.constant 0 : index
    %c0_0 = arith.constant 0 : index
    %c0_1 = arith.constant 0 : index
    %0 = vector.load %arg1[%c0, %c0_0, %c0_1] : memref<2x24x768xf32, #tpu.memory_space<vmem>>, vector<2x24x768xf32>
    %1 = vector.shape_cast %0 : vector<2x24x768xf32> to vector<48x768xf32>
    %c0_2 = arith.constant 0 : index
    %c0_3 = arith.constant 0 : index
    %2 = vector.load %arg2[%c0_2, %c0_3] : memref<768x32xf32, #tpu.memory_space<vmem>>, vector<768x32xf32>
    %cst = arith.constant dense<0.000000e+00> : vector<48x32xf32>
    %3 = tpu.matmul %1, %2, %cst {dimension_numbers = #tpu.dot_dimension_numbers<[1], [0], [0], [1], [0, 0, 1, 1], [], []>} : vector<48x768xf32>, vector<768x32xf32>, vector<48x32xf32> -> vector<48x32xf32>
    %4 = vector.shape_cast %3 : vector<48x32xf32> to vector<2x24x32xf32>
    %c0_4 = arith.constant 0 : index
    %c0_5 = arith.constant 0 : index
    %5 = vector.load %arg3[%c0_4, %c0_5] : memref<24x32xf32, #tpu.memory_space<vmem>>, vector<24x32xf32>
    %6 = vector.shape_cast %5 : vector<24x32xf32> to vector<1x24x32xf32>
    %7 = vector.broadcast %6 : vector<1x24x32xf32> to vector<2x24x32xf32>
    %8 = arith.addf %4, %7 : vector<2x24x32xf32>
    %9 = vector.shape_cast %8 : vector<2x24x32xf32> to vector<48x32xf32>
    %10 = tpu.iota {dimensions = array<i32: 1>} : vector<24x24xi32>
    %c17_i32 = arith.constant 17 : i32
    %11 = vector.broadcast %c17_i32 : i32 to vector<24x24xi32>
    %12 = arith.cmpi slt, %10, %11 : vector<24x24xi32>
    %cst_6 = arith.constant 0.000000e+00 : f32
    %cst_7 = arith.constant -1.000000e+30 : f32
    %13 = vector.broadcast %cst_6 : f32 to vector<24x24xf32>
    %14 = vector.broadcast %cst_7 : f32 to vector<24x24xf32>
    %15 = arith.select %12, %13, %14 : vector<24x24xi1>, vector<24x24xf32>
    %c0_8 = arith.constant 0 : index
    %c0_9 = arith.constant 0 : index
    %c0_10 = arith.constant 0 : index
    %16 = vector.load %arg4[%c0_8, %c0_9, %c0_10] : memref<2x1x32xf32, #tpu.memory_space<vmem>>, vector<1x1x32xf32>
    %17 = vector.shape_cast %16 : vector<1x1x32xf32> to vector<1x32xf32>
    %c0_11 = arith.constant 0 : index
    %c0_12 = arith.constant 0 : index
    %c0_13 = arith.constant 0 : index
    %18 = vector.load %arg5[%c0_11, %c0_12, %c0_13] : memref<2x1x32xf32, #tpu.memory_space<vmem>>, vector<1x1x32xf32>
    %19 = vector.shape_cast %18 : vector<1x1x32xf32> to vector<1x32xf32>
    %c0_14 = arith.constant 0 : index
    %c0_15 = arith.constant 0 : index
    %c0_16 = arith.constant 0 : index
    %20 = vector.load %arg6[%c0_14, %c0_15, %c0_16] : memref<2x32x96xf32, #tpu.memory_space<vmem>>, vector<1x32x96xf32>
    %21 = vector.shape_cast %20 : vector<1x32x96xf32> to vector<32x96xf32>
    %c0_17 = arith.constant 0 : index
    %c0_18 = arith.constant 0 : index
    %c0_19 = arith.constant 0 : index
    %22 = vector.load %arg7[%c0_17, %c0_18, %c0_19] : memref<2x1x96xf32, #tpu.memory_space<vmem>>, vector<1x1x96xf32>
    %23 = vector.shape_cast %22 : vector<1x1x96xf32> to vector<1x96xf32>
    %c0_20 = arith.constant 0 : index
    %c0_21 = arith.constant 0 : index
    %c0_22 = arith.constant 0 : index
    %24 = vector.load %arg8[%c0_20, %c0_21, %c0_22] : memref<2x32x32xf32, #tpu.memory_space<vmem>>, vector<1x32x32xf32>
    %25 = vector.shape_cast %24 : vector<1x32x32xf32> to vector<32x32xf32>
    %c0_23 = arith.constant 0 : index
    %c0_24 = arith.constant 0 : index
    %c0_25 = arith.constant 0 : index
    %26 = vector.load %arg9[%c0_23, %c0_24, %c0_25] : memref<2x1x32xf32, #tpu.memory_space<vmem>>, vector<1x1x32xf32>
    %27 = vector.shape_cast %26 : vector<1x1x32xf32> to vector<1x32xf32>
    %cst_26 = arith.constant dense<0.000000e+00> : vector<48xf32>
    %28 = vector.multi_reduction <add>, %9, %cst_26 [1] : vector<48x32xf32> to vector<48xf32>
    %29 = vector.shape_cast %28 : vector<48xf32> to vector<48x1xf32>
    %cst_27 = arith.constant 3.200000e+01 : f32
    %30 = vector.broadcast %cst_27 : f32 to vector<48x1xf32>
    %31 = arith.divf %29, %30 : vector<48x1xf32>
    %32 = vector.broadcast %31 : vector<48x1xf32> to vector<48x32xf32>
    %33 = arith.subf %9, %32 : vector<48x32xf32>
    %34 = arith.mulf %33, %33 : vector<48x32xf32>
    %cst_28 = arith.constant dense<0.000000e+00> : vector<48xf32>
    %35 = vector.multi_reduction <add>, %34, %cst_28 [1] : vector<48x32xf32> to vector<48xf32>
    %36 = vector.shape_cast %35 : vector<48xf32> to vector<48x1xf32>
    %cst_29 = arith.constant 3.200000e+01 : f32
    %37 = vector.broadcast %cst_29 : f32 to vector<48x1xf32>
    %38 = arith.divf %36, %37 : vector<48x1xf32>
    %39 = vector.broadcast %31 : vector<48x1xf32> to vector<48x32xf32>
    %40 = arith.subf %9, %39 : vector<48x32xf32>
    %cst_30 = arith.constant 9.99999997E-7 : f32
    %41 = vector.broadcast %cst_30 : f32 to vector<48x1xf32>
    %42 = arith.addf %38, %41 : vector<48x1xf32>
    %43 = math.rsqrt %42 : vector<48x1xf32>
    %44 = vector.broadcast %43 : vector<48x1xf32> to vector<48x32xf32>
    %45 = arith.mulf %40, %44 : vector<48x32xf32>
    %46 = vector.broadcast %17 : vector<1x32xf32> to vector<48x32xf32>
    %47 = arith.mulf %45, %46 : vector<48x32xf32>
    %48 = vector.broadcast %19 : vector<1x32xf32> to vector<48x32xf32>
    %49 = arith.addf %47, %48 : vector<48x32xf32>
    %cst_31 = arith.constant dense<0.000000e+00> : vector<48x96xf32>
    %50 = tpu.matmul %49, %21, %cst_31 {dimension_numbers = #tpu.dot_dimension_numbers<[1], [0], [0], [1], [0, 0, 1, 1], [], []>} : vector<48x32xf32>, vector<32x96xf32>, vector<48x96xf32> -> vector<48x96xf32>
    %51 = vector.broadcast %23 : vector<1x96xf32> to vector<48x96xf32>
    %52 = arith.addf %50, %51 : vector<48x96xf32>
    %53 = vector.extract_strided_slice %52 {offsets = [0, 0], sizes = [24, 96], strides = [1, 1]} : vector<48x96xf32> to vector<24x96xf32>
    %54 = vector.extract_strided_slice %53 {offsets = [0, 0], sizes = [24, 16], strides = [1, 1]} : vector<24x96xf32> to vector<24x16xf32>
    %55 = vector.extract_strided_slice %53 {offsets = [0, 32], sizes = [24, 16], strides = [1, 1]} : vector<24x96xf32> to vector<24x16xf32>
    %56 = vector.extract_strided_slice %53 {offsets = [0, 64], sizes = [24, 16], strides = [1, 1]} : vector<24x96xf32> to vector<24x16xf32>
    %cst_32 = arith.constant dense<0.000000e+00> : vector<24x24xf32>
    %57 = tpu.matmul %54, %55, %cst_32 {dimension_numbers = #tpu.dot_dimension_numbers<[1], [1], [0], [0], [0, 0, 1, 0], [], []>} : vector<24x16xf32>, vector<24x16xf32>, vector<24x24xf32> -> vector<24x24xf32>
    %cst_33 = arith.constant 2.500000e-01 : f32
    %58 = vector.broadcast %cst_33 : f32 to vector<24x24xf32>
    %59 = arith.mulf %57, %58 : vector<24x24xf32>
    %60 = arith.addf %59, %15 : vector<24x24xf32>
    %cst_34 = arith.constant dense<0xFF800000> : vector<24xf32>
    %61 = vector.multi_reduction <maximumf>, %60, %cst_34 [1] : vector<24x24xf32> to vector<24xf32>
    %62 = vector.shape_cast %61 : vector<24xf32> to vector<24x1xf32>
    %63 = vector.broadcast %62 : vector<24x1xf32> to vector<24x24xf32>
    %64 = arith.subf %60, %63 : vector<24x24xf32>
    %65 = math.exp %64 : vector<24x24xf32>
    %cst_35 = arith.constant dense<0.000000e+00> : vector<24xf32>
    %66 = vector.multi_reduction <add>, %65, %cst_35 [1] : vector<24x24xf32> to vector<24xf32>
    %67 = vector.shape_cast %66 : vector<24xf32> to vector<24x1xf32>
    %68 = vector.broadcast %67 : vector<24x1xf32> to vector<24x24xf32>
    %69 = arith.divf %65, %68 : vector<24x24xf32>
    %cst_36 = arith.constant dense<0.000000e+00> : vector<24x16xf32>
    %70 = tpu.matmul %69, %56, %cst_36 {dimension_numbers = #tpu.dot_dimension_numbers<[1], [0], [0], [1], [0, 0, 1, 1], [], []>} : vector<24x24xf32>, vector<24x16xf32>, vector<24x16xf32> -> vector<24x16xf32>
    %71 = vector.extract_strided_slice %25 {offsets = [0, 0], sizes = [16, 32], strides = [1, 1]} : vector<32x32xf32> to vector<16x32xf32>
    %cst_37 = arith.constant dense<0.000000e+00> : vector<24x32xf32>
    %72 = tpu.matmul %70, %71, %cst_37 {dimension_numbers = #tpu.dot_dimension_numbers<[1], [0], [0], [1], [0, 0, 1, 1], [], []>} : vector<24x16xf32>, vector<16x32xf32>, vector<24x32xf32> -> vector<24x32xf32>
    %73 = vector.extract_strided_slice %53 {offsets = [0, 16], sizes = [24, 16], strides = [1, 1]} : vector<24x96xf32> to vector<24x16xf32>
    %74 = vector.extract_strided_slice %53 {offsets = [0, 48], sizes = [24, 16], strides = [1, 1]} : vector<24x96xf32> to vector<24x16xf32>
    %75 = vector.extract_strided_slice %53 {offsets = [0, 80], sizes = [24, 16], strides = [1, 1]} : vector<24x96xf32> to vector<24x16xf32>
    %cst_38 = arith.constant dense<0.000000e+00> : vector<24x24xf32>
    %76 = tpu.matmul %73, %74, %cst_38 {dimension_numbers = #tpu.dot_dimension_numbers<[1], [1], [0], [0], [0, 0, 1, 0], [], []>} : vector<24x16xf32>, vector<24x16xf32>, vector<24x24xf32> -> vector<24x24xf32>
    %cst_39 = arith.constant 2.500000e-01 : f32
    %77 = vector.broadcast %cst_39 : f32 to vector<24x24xf32>
    %78 = arith.mulf %76, %77 : vector<24x24xf32>
    %79 = arith.addf %78, %15 : vector<24x24xf32>
    %cst_40 = arith.constant dense<0xFF800000> : vector<24xf32>
    %80 = vector.multi_reduction <maximumf>, %79, %cst_40 [1] : vector<24x24xf32> to vector<24xf32>
    %81 = vector.shape_cast %80 : vector<24xf32> to vector<24x1xf32>
    %82 = vector.broadcast %81 : vector<24x1xf32> to vector<24x24xf32>
    %83 = arith.subf %79, %82 : vector<24x24xf32>
    %84 = math.exp %83 : vector<24x24xf32>
    %cst_41 = arith.constant dense<0.000000e+00> : vector<24xf32>
    %85 = vector.multi_reduction <add>, %84, %cst_41 [1] : vector<24x24xf32> to vector<24xf32>
    %86 = vector.shape_cast %85 : vector<24xf32> to vector<24x1xf32>
    %87 = vector.broadcast %86 : vector<24x1xf32> to vector<24x24xf32>
    %88 = arith.divf %84, %87 : vector<24x24xf32>
    %cst_42 = arith.constant dense<0.000000e+00> : vector<24x16xf32>
    %89 = tpu.matmul %88, %75, %cst_42 {dimension_numbers = #tpu.dot_dimension_numbers<[1], [0], [0], [1], [0, 0, 1, 1], [], []>} : vector<24x24xf32>, vector<24x16xf32>, vector<24x16xf32> -> vector<24x16xf32>
    %90 = vector.extract_strided_slice %25 {offsets = [16, 0], sizes = [16, 32], strides = [1, 1]} : vector<32x32xf32> to vector<16x32xf32>
    %cst_43 = arith.constant dense<0.000000e+00> : vector<24x32xf32>
    %91 = tpu.matmul %89, %90, %cst_43 {dimension_numbers = #tpu.dot_dimension_numbers<[1], [0], [0], [1], [0, 0, 1, 1], [], []>} : vector<24x16xf32>, vector<16x32xf32>, vector<24x32xf32> -> vector<24x32xf32>
    %92 = arith.addf %72, %91 : vector<24x32xf32>
    %93 = vector.broadcast %27 : vector<1x32xf32> to vector<24x32xf32>
    %94 = arith.addf %92, %93 : vector<24x32xf32>
    %95 = vector.extract_strided_slice %52 {offsets = [24, 0], sizes = [24, 96], strides = [1, 1]} : vector<48x96xf32> to vector<24x96xf32>
    %96 = vector.extract_strided_slice %95 {offsets = [0, 0], sizes = [24, 16], strides = [1, 1]} : vector<24x96xf32> to vector<24x16xf32>
    %97 = vector.extract_strided_slice %95 {offsets = [0, 32], sizes = [24, 16], strides = [1, 1]} : vector<24x96xf32> to vector<24x16xf32>
    %98 = vector.extract_strided_slice %95 {offsets = [0, 64], sizes = [24, 16], strides = [1, 1]} : vector<24x96xf32> to vector<24x16xf32>
    %cst_44 = arith.constant dense<0.000000e+00> : vector<24x24xf32>
    %99 = tpu.matmul %96, %97, %cst_44 {dimension_numbers = #tpu.dot_dimension_numbers<[1], [1], [0], [0], [0, 0, 1, 0], [], []>} : vector<24x16xf32>, vector<24x16xf32>, vector<24x24xf32> -> vector<24x24xf32>
    %cst_45 = arith.constant 2.500000e-01 : f32
    %100 = vector.broadcast %cst_45 : f32 to vector<24x24xf32>
    %101 = arith.mulf %99, %100 : vector<24x24xf32>
    %102 = arith.addf %101, %15 : vector<24x24xf32>
    %cst_46 = arith.constant dense<0xFF800000> : vector<24xf32>
    %103 = vector.multi_reduction <maximumf>, %102, %cst_46 [1] : vector<24x24xf32> to vector<24xf32>
    %104 = vector.shape_cast %103 : vector<24xf32> to vector<24x1xf32>
    %105 = vector.broadcast %104 : vector<24x1xf32> to vector<24x24xf32>
    %106 = arith.subf %102, %105 : vector<24x24xf32>
    %107 = math.exp %106 : vector<24x24xf32>
    %cst_47 = arith.constant dense<0.000000e+00> : vector<24xf32>
    %108 = vector.multi_reduction <add>, %107, %cst_47 [1] : vector<24x24xf32> to vector<24xf32>
    %109 = vector.shape_cast %108 : vector<24xf32> to vector<24x1xf32>
    %110 = vector.broadcast %109 : vector<24x1xf32> to vector<24x24xf32>
    %111 = arith.divf %107, %110 : vector<24x24xf32>
    %cst_48 = arith.constant dense<0.000000e+00> : vector<24x16xf32>
    %112 = tpu.matmul %111, %98, %cst_48 {dimension_numbers = #tpu.dot_dimension_numbers<[1], [0], [0], [1], [0, 0, 1, 1], [], []>} : vector<24x24xf32>, vector<24x16xf32>, vector<24x16xf32> -> vector<24x16xf32>
    %113 = vector.extract_strided_slice %25 {offsets = [0, 0], sizes = [16, 32], strides = [1, 1]} : vector<32x32xf32> to vector<16x32xf32>
    %cst_49 = arith.constant dense<0.000000e+00> : vector<24x32xf32>
    %114 = tpu.matmul %112, %113, %cst_49 {dimension_numbers = #tpu.dot_dimension_numbers<[1], [0], [0], [1], [0, 0, 1, 1], [], []>} : vector<24x16xf32>, vector<16x32xf32>, vector<24x32xf32> -> vector<24x32xf32>
    %115 = vector.extract_strided_slice %95 {offsets = [0, 16], sizes = [24, 16], strides = [1, 1]} : vector<24x96xf32> to vector<24x16xf32>
    %116 = vector.extract_strided_slice %95 {offsets = [0, 48], sizes = [24, 16], strides = [1, 1]} : vector<24x96xf32> to vector<24x16xf32>
    %117 = vector.extract_strided_slice %95 {offsets = [0, 80], sizes = [24, 16], strides = [1, 1]} : vector<24x96xf32> to vector<24x16xf32>
    %cst_50 = arith.constant dense<0.000000e+00> : vector<24x24xf32>
    %118 = tpu.matmul %115, %116, %cst_50 {dimension_numbers = #tpu.dot_dimension_numbers<[1], [1], [0], [0], [0, 0, 1, 0], [], []>} : vector<24x16xf32>, vector<24x16xf32>, vector<24x24xf32> -> vector<24x24xf32>
    %cst_51 = arith.constant 2.500000e-01 : f32
    %119 = vector.broadcast %cst_51 : f32 to vector<24x24xf32>
    %120 = arith.mulf %118, %119 : vector<24x24xf32>
    %121 = arith.addf %120, %15 : vector<24x24xf32>
    %cst_52 = arith.constant dense<0xFF800000> : vector<24xf32>
    %122 = vector.multi_reduction <maximumf>, %121, %cst_52 [1] : vector<24x24xf32> to vector<24xf32>
    %123 = vector.shape_cast %122 : vector<24xf32> to vector<24x1xf32>
    %124 = vector.broadcast %123 : vector<24x1xf32> to vector<24x24xf32>
    %125 = arith.subf %121, %124 : vector<24x24xf32>
    %126 = math.exp %125 : vector<24x24xf32>
    %cst_53 = arith.constant dense<0.000000e+00> : vector<24xf32>
    %127 = vector.multi_reduction <add>, %126, %cst_53 [1] : vector<24x24xf32> to vector<24xf32>
    %128 = vector.shape_cast %127 : vector<24xf32> to vector<24x1xf32>
    %129 = vector.broadcast %128 : vector<24x1xf32> to vector<24x24xf32>
    %130 = arith.divf %126, %129 : vector<24x24xf32>
    %cst_54 = arith.constant dense<0.000000e+00> : vector<24x16xf32>
    %131 = tpu.matmul %130, %117, %cst_54 {dimension_numbers = #tpu.dot_dimension_numbers<[1], [0], [0], [1], [0, 0, 1, 1], [], []>} : vector<24x24xf32>, vector<24x16xf32>, vector<24x16xf32> -> vector<24x16xf32>
    %132 = vector.extract_strided_slice %25 {offsets = [16, 0], sizes = [16, 32], strides = [1, 1]} : vector<32x32xf32> to vector<16x32xf32>
    %cst_55 = arith.constant dense<0.000000e+00> : vector<24x32xf32>
    %133 = tpu.matmul %131, %132, %cst_55 {dimension_numbers = #tpu.dot_dimension_numbers<[1], [0], [0], [1], [0, 0, 1, 1], [], []>} : vector<24x16xf32>, vector<16x32xf32>, vector<24x32xf32> -> vector<24x32xf32>
    %134 = arith.addf %114, %133 : vector<24x32xf32>
    %135 = vector.broadcast %27 : vector<1x32xf32> to vector<24x32xf32>
    %136 = arith.addf %134, %135 : vector<24x32xf32>
    %137 = tpu.concatenate %94, %136 in 0 : vector<24x32xf32>, vector<24x32xf32> -> vector<48x32xf32>
    %138 = arith.addf %9, %137 : vector<48x32xf32>
    %c0_56 = arith.constant 0 : index
    %c0_57 = arith.constant 0 : index
    %c0_58 = arith.constant 0 : index
    %139 = vector.load %arg10[%c0_56, %c0_57, %c0_58] : memref<2x1x32xf32, #tpu.memory_space<vmem>>, vector<1x1x32xf32>
    %140 = vector.shape_cast %139 : vector<1x1x32xf32> to vector<1x32xf32>
    %c0_59 = arith.constant 0 : index
    %c0_60 = arith.constant 0 : index
    %c0_61 = arith.constant 0 : index
    %141 = vector.load %arg11[%c0_59, %c0_60, %c0_61] : memref<2x1x32xf32, #tpu.memory_space<vmem>>, vector<1x1x32xf32>
    %142 = vector.shape_cast %141 : vector<1x1x32xf32> to vector<1x32xf32>
    %cst_62 = arith.constant dense<0.000000e+00> : vector<48xf32>
    %143 = vector.multi_reduction <add>, %138, %cst_62 [1] : vector<48x32xf32> to vector<48xf32>
    %144 = vector.shape_cast %143 : vector<48xf32> to vector<48x1xf32>
    %cst_63 = arith.constant 3.200000e+01 : f32
    %145 = vector.broadcast %cst_63 : f32 to vector<48x1xf32>
    %146 = arith.divf %144, %145 : vector<48x1xf32>
    %147 = vector.broadcast %146 : vector<48x1xf32> to vector<48x32xf32>
    %148 = arith.subf %138, %147 : vector<48x32xf32>
    %149 = arith.mulf %148, %148 : vector<48x32xf32>
    %cst_64 = arith.constant dense<0.000000e+00> : vector<48xf32>
    %150 = vector.multi_reduction <add>, %149, %cst_64 [1] : vector<48x32xf32> to vector<48xf32>
    %151 = vector.shape_cast %150 : vector<48xf32> to vector<48x1xf32>
    %cst_65 = arith.constant 3.200000e+01 : f32
    %152 = vector.broadcast %cst_65 : f32 to vector<48x1xf32>
    %153 = arith.divf %151, %152 : vector<48x1xf32>
    %154 = vector.broadcast %146 : vector<48x1xf32> to vector<48x32xf32>
    %155 = arith.subf %138, %154 : vector<48x32xf32>
    %cst_66 = arith.constant 9.99999997E-7 : f32
    %156 = vector.broadcast %cst_66 : f32 to vector<48x1xf32>
    %157 = arith.addf %153, %156 : vector<48x1xf32>
    %158 = math.rsqrt %157 : vector<48x1xf32>
    %159 = vector.broadcast %158 : vector<48x1xf32> to vector<48x32xf32>
    %160 = arith.mulf %155, %159 : vector<48x32xf32>
    %161 = vector.broadcast %140 : vector<1x32xf32> to vector<48x32xf32>
    %162 = arith.mulf %160, %161 : vector<48x32xf32>
    %163 = vector.broadcast %142 : vector<1x32xf32> to vector<48x32xf32>
    %164 = arith.addf %162, %163 : vector<48x32xf32>
    %c0_67 = arith.constant 0 : index
    %c0_68 = arith.constant 0 : index
    %c0_69 = arith.constant 0 : index
    %165 = vector.load %arg12[%c0_67, %c0_68, %c0_69] : memref<2x32x64xf32, #tpu.memory_space<vmem>>, vector<1x32x64xf32>
    %166 = vector.shape_cast %165 : vector<1x32x64xf32> to vector<32x64xf32>
    %cst_70 = arith.constant dense<0.000000e+00> : vector<48x64xf32>
    %167 = tpu.matmul %164, %166, %cst_70 {dimension_numbers = #tpu.dot_dimension_numbers<[1], [0], [0], [1], [0, 0, 1, 1], [], []>} : vector<48x32xf32>, vector<32x64xf32>, vector<48x64xf32> -> vector<48x64xf32>
    %c0_71 = arith.constant 0 : index
    %c0_72 = arith.constant 0 : index
    %c0_73 = arith.constant 0 : index
    %168 = vector.load %arg13[%c0_71, %c0_72, %c0_73] : memref<2x1x64xf32, #tpu.memory_space<vmem>>, vector<1x1x64xf32>
    %169 = vector.shape_cast %168 : vector<1x1x64xf32> to vector<1x64xf32>
    %170 = vector.broadcast %169 : vector<1x64xf32> to vector<48x64xf32>
    %171 = arith.addf %167, %170 : vector<48x64xf32>
    %cst_74 = arith.constant 5.000000e-01 : f32
    %172 = vector.broadcast %cst_74 : f32 to vector<48x64xf32>
    %173 = arith.mulf %172, %171 : vector<48x64xf32>
    %cst_75 = arith.constant 2.000000e+00 : f32
    %174 = math.sqrt %cst_75 : f32
    %cst_76 = arith.constant 1.000000e+00 : f32
    %175 = arith.divf %cst_76, %174 : f32
    %176 = vector.broadcast %175 : f32 to vector<48x64xf32>
    %177 = arith.mulf %171, %176 : vector<48x64xf32>
    %cst_77 = arith.constant 0.000000e+00 : f32
    %178 = vector.broadcast %cst_77 : f32 to vector<48x64xf32>
    %179 = arith.cmpf oge, %177, %178 : vector<48x64xf32>
    %cst_78 = arith.constant 1.000000e+00 : f32
    %cst_79 = arith.constant -1.000000e+00 : f32
    %180 = vector.broadcast %cst_78 : f32 to vector<48x64xf32>
    %181 = vector.broadcast %cst_79 : f32 to vector<48x64xf32>
    %182 = arith.select %179, %180, %181 : vector<48x64xi1>, vector<48x64xf32>
    %183 = math.absf %177 : vector<48x64xf32>
    %cst_80 = arith.constant 0.327591091 : f32
    %184 = vector.broadcast %cst_80 : f32 to vector<48x64xf32>
    %185 = arith.mulf %184, %183 : vector<48x64xf32>
    %cst_81 = arith.constant 1.000000e+00 : f32
    %186 = vector.broadcast %cst_81 : f32 to vector<48x64xf32>
    %187 = arith.addf %186, %185 : vector<48x64xf32>
    %cst_82 = arith.constant 1.000000e+00 : f32
    %188 = vector.broadcast %cst_82 : f32 to vector<48x64xf32>
    %189 = arith.divf %188, %187 : vector<48x64xf32>
    %cst_83 = arith.constant 1.06140542 : f32
    %190 = vector.broadcast %cst_83 : f32 to vector<48x64xf32>
    %191 = arith.mulf %190, %189 : vector<48x64xf32>
    %cst_84 = arith.constant -1.45315206 : f32
    %192 = vector.broadcast %cst_84 : f32 to vector<48x64xf32>
    %193 = arith.addf %191, %192 : vector<48x64xf32>
    %194 = arith.mulf %193, %189 : vector<48x64xf32>
    %cst_85 = arith.constant 1.42141378 : f32
    %195 = vector.broadcast %cst_85 : f32 to vector<48x64xf32>
    %196 = arith.addf %194, %195 : vector<48x64xf32>
    %197 = arith.mulf %196, %189 : vector<48x64xf32>
    %cst_86 = arith.constant -0.284496725 : f32
    %198 = vector.broadcast %cst_86 : f32 to vector<48x64xf32>
    %199 = arith.addf %197, %198 : vector<48x64xf32>
    %200 = arith.mulf %199, %189 : vector<48x64xf32>
    %cst_87 = arith.constant 0.254829586 : f32
    %201 = vector.broadcast %cst_87 : f32 to vector<48x64xf32>
    %202 = arith.addf %200, %201 : vector<48x64xf32>
    %203 = arith.mulf %202, %189 : vector<48x64xf32>
    %cst_88 = arith.constant 0.000000e+00 : f32
    %204 = vector.broadcast %cst_88 : f32 to vector<48x64xf32>
    %205 = arith.subf %204, %183 : vector<48x64xf32>
    %206 = arith.mulf %205, %183 : vector<48x64xf32>
    %207 = math.exp %206 : vector<48x64xf32>
    %208 = arith.mulf %203, %207 : vector<48x64xf32>
    %cst_89 = arith.constant 1.000000e+00 : f32
    %209 = vector.broadcast %cst_89 : f32 to vector<48x64xf32>
    %210 = arith.subf %209, %208 : vector<48x64xf32>
    %211 = arith.mulf %182, %210 : vector<48x64xf32>
    %cst_90 = arith.constant 1.000000e+00 : f32
    %212 = vector.broadcast %cst_90 : f32 to vector<48x64xf32>
    %213 = arith.addf %212, %211 : vector<48x64xf32>
    %214 = arith.mulf %173, %213 : vector<48x64xf32>
    %c0_91 = arith.constant 0 : index
    %c0_92 = arith.constant 0 : index
    %c0_93 = arith.constant 0 : index
    %215 = vector.load %arg14[%c0_91, %c0_92, %c0_93] : memref<2x64x32xf32, #tpu.memory_space<vmem>>, vector<1x64x32xf32>
    %216 = vector.shape_cast %215 : vector<1x64x32xf32> to vector<64x32xf32>
    %cst_94 = arith.constant dense<0.000000e+00> : vector<48x32xf32>
    %217 = tpu.matmul %214, %216, %cst_94 {dimension_numbers = #tpu.dot_dimension_numbers<[1], [0], [0], [1], [0, 0, 1, 1], [], []>} : vector<48x64xf32>, vector<64x32xf32>, vector<48x32xf32> -> vector<48x32xf32>
    %c0_95 = arith.constant 0 : index
    %c0_96 = arith.constant 0 : index
    %c0_97 = arith.constant 0 : index
    %218 = vector.load %arg15[%c0_95, %c0_96, %c0_97] : memref<2x1x32xf32, #tpu.memory_space<vmem>>, vector<1x1x32xf32>
    %219 = vector.shape_cast %218 : vector<1x1x32xf32> to vector<1x32xf32>
    %220 = vector.broadcast %219 : vector<1x32xf32> to vector<48x32xf32>
    %221 = arith.addf %217, %220 : vector<48x32xf32>
    %222 = arith.addf %138, %221 : vector<48x32xf32>
    %c1 = arith.constant 1 : index
    %c0_98 = arith.constant 0 : index
    %c0_99 = arith.constant 0 : index
    %223 = vector.load %arg4[%c1, %c0_98, %c0_99] : memref<2x1x32xf32, #tpu.memory_space<vmem>>, vector<1x1x32xf32>
    %224 = vector.shape_cast %223 : vector<1x1x32xf32> to vector<1x32xf32>
    %c1_100 = arith.constant 1 : index
    %c0_101 = arith.constant 0 : index
    %c0_102 = arith.constant 0 : index
    %225 = vector.load %arg5[%c1_100, %c0_101, %c0_102] : memref<2x1x32xf32, #tpu.memory_space<vmem>>, vector<1x1x32xf32>
    %226 = vector.shape_cast %225 : vector<1x1x32xf32> to vector<1x32xf32>
    %c1_103 = arith.constant 1 : index
    %c0_104 = arith.constant 0 : index
    %c0_105 = arith.constant 0 : index
    %227 = vector.load %arg6[%c1_103, %c0_104, %c0_105] : memref<2x32x96xf32, #tpu.memory_space<vmem>>, vector<1x32x96xf32>
    %228 = vector.shape_cast %227 : vector<1x32x96xf32> to vector<32x96xf32>
    %c1_106 = arith.constant 1 : index
    %c0_107 = arith.constant 0 : index
    %c0_108 = arith.constant 0 : index
    %229 = vector.load %arg7[%c1_106, %c0_107, %c0_108] : memref<2x1x96xf32, #tpu.memory_space<vmem>>, vector<1x1x96xf32>
    %230 = vector.shape_cast %229 : vector<1x1x96xf32> to vector<1x96xf32>
    %c1_109 = arith.constant 1 : index
    %c0_110 = arith.constant 0 : index
    %c0_111 = arith.constant 0 : index
    %231 = vector.load %arg8[%c1_109, %c0_110, %c0_111] : memref<2x32x32xf32, #tpu.memory_space<vmem>>, vector<1x32x32xf32>
    %232 = vector.shape_cast %231 : vector<1x32x32xf32> to vector<32x32xf32>
    %c1_112 = arith.constant 1 : index
    %c0_113 = arith.constant 0 : index
    %c0_114 = arith.constant 0 : index
    %233 = vector.load %arg9[%c1_112, %c0_113, %c0_114] : memref<2x1x32xf32, #tpu.memory_space<vmem>>, vector<1x1x32xf32>
    %234 = vector.shape_cast %233 : vector<1x1x32xf32> to vector<1x32xf32>
    %cst_115 = arith.constant dense<0.000000e+00> : vector<48xf32>
    %235 = vector.multi_reduction <add>, %222, %cst_115 [1] : vector<48x32xf32> to vector<48xf32>
    %236 = vector.shape_cast %235 : vector<48xf32> to vector<48x1xf32>
    %cst_116 = arith.constant 3.200000e+01 : f32
    %237 = vector.broadcast %cst_116 : f32 to vector<48x1xf32>
    %238 = arith.divf %236, %237 : vector<48x1xf32>
    %239 = vector.broadcast %238 : vector<48x1xf32> to vector<48x32xf32>
    %240 = arith.subf %222, %239 : vector<48x32xf32>
    %241 = arith.mulf %240, %240 : vector<48x32xf32>
    %cst_117 = arith.constant dense<0.000000e+00> : vector<48xf32>
    %242 = vector.multi_reduction <add>, %241, %cst_117 [1] : vector<48x32xf32> to vector<48xf32>
    %243 = vector.shape_cast %242 : vector<48xf32> to vector<48x1xf32>
    %cst_118 = arith.constant 3.200000e+01 : f32
    %244 = vector.broadcast %cst_118 : f32 to vector<48x1xf32>
    %245 = arith.divf %243, %244 : vector<48x1xf32>
    %246 = vector.broadcast %238 : vector<48x1xf32> to vector<48x32xf32>
    %247 = arith.subf %222, %246 : vector<48x32xf32>
    %cst_119 = arith.constant 9.99999997E-7 : f32
    %248 = vector.broadcast %cst_119 : f32 to vector<48x1xf32>
    %249 = arith.addf %245, %248 : vector<48x1xf32>
    %250 = math.rsqrt %249 : vector<48x1xf32>
    %251 = vector.broadcast %250 : vector<48x1xf32> to vector<48x32xf32>
    %252 = arith.mulf %247, %251 : vector<48x32xf32>
    %253 = vector.broadcast %224 : vector<1x32xf32> to vector<48x32xf32>
    %254 = arith.mulf %252, %253 : vector<48x32xf32>
    %255 = vector.broadcast %226 : vector<1x32xf32> to vector<48x32xf32>
    %256 = arith.addf %254, %255 : vector<48x32xf32>
    %cst_120 = arith.constant dense<0.000000e+00> : vector<48x96xf32>
    %257 = tpu.matmul %256, %228, %cst_120 {dimension_numbers = #tpu.dot_dimension_numbers<[1], [0], [0], [1], [0, 0, 1, 1], [], []>} : vector<48x32xf32>, vector<32x96xf32>, vector<48x96xf32> -> vector<48x96xf32>
    %258 = vector.broadcast %230 : vector<1x96xf32> to vector<48x96xf32>
    %259 = arith.addf %257, %258 : vector<48x96xf32>
    %260 = vector.extract_strided_slice %259 {offsets = [0, 0], sizes = [24, 96], strides = [1, 1]} : vector<48x96xf32> to vector<24x96xf32>
    %261 = vector.extract_strided_slice %260 {offsets = [0, 0], sizes = [24, 16], strides = [1, 1]} : vector<24x96xf32> to vector<24x16xf32>
    %262 = vector.extract_strided_slice %260 {offsets = [0, 32], sizes = [24, 16], strides = [1, 1]} : vector<24x96xf32> to vector<24x16xf32>
    %263 = vector.extract_strided_slice %260 {offsets = [0, 64], sizes = [24, 16], strides = [1, 1]} : vector<24x96xf32> to vector<24x16xf32>
    %cst_121 = arith.constant dense<0.000000e+00> : vector<24x24xf32>
    %264 = tpu.matmul %261, %262, %cst_121 {dimension_numbers = #tpu.dot_dimension_numbers<[1], [1], [0], [0], [0, 0, 1, 0], [], []>} : vector<24x16xf32>, vector<24x16xf32>, vector<24x24xf32> -> vector<24x24xf32>
    %cst_122 = arith.constant 2.500000e-01 : f32
    %265 = vector.broadcast %cst_122 : f32 to vector<24x24xf32>
    %266 = arith.mulf %264, %265 : vector<24x24xf32>
    %267 = arith.addf %266, %15 : vector<24x24xf32>
    %cst_123 = arith.constant dense<0xFF800000> : vector<24xf32>
    %268 = vector.multi_reduction <maximumf>, %267, %cst_123 [1] : vector<24x24xf32> to vector<24xf32>
    %269 = vector.shape_cast %268 : vector<24xf32> to vector<24x1xf32>
    %270 = vector.broadcast %269 : vector<24x1xf32> to vector<24x24xf32>
    %271 = arith.subf %267, %270 : vector<24x24xf32>
    %272 = math.exp %271 : vector<24x24xf32>
    %cst_124 = arith.constant dense<0.000000e+00> : vector<24xf32>
    %273 = vector.multi_reduction <add>, %272, %cst_124 [1] : vector<24x24xf32> to vector<24xf32>
    %274 = vector.shape_cast %273 : vector<24xf32> to vector<24x1xf32>
    %275 = vector.broadcast %274 : vector<24x1xf32> to vector<24x24xf32>
    %276 = arith.divf %272, %275 : vector<24x24xf32>
    %cst_125 = arith.constant dense<0.000000e+00> : vector<24x16xf32>
    %277 = tpu.matmul %276, %263, %cst_125 {dimension_numbers = #tpu.dot_dimension_numbers<[1], [0], [0], [1], [0, 0, 1, 1], [], []>} : vector<24x24xf32>, vector<24x16xf32>, vector<24x16xf32> -> vector<24x16xf32>
    %278 = vector.extract_strided_slice %232 {offsets = [0, 0], sizes = [16, 32], strides = [1, 1]} : vector<32x32xf32> to vector<16x32xf32>
    %cst_126 = arith.constant dense<0.000000e+00> : vector<24x32xf32>
    %279 = tpu.matmul %277, %278, %cst_126 {dimension_numbers = #tpu.dot_dimension_numbers<[1], [0], [0], [1], [0, 0, 1, 1], [], []>} : vector<24x16xf32>, vector<16x32xf32>, vector<24x32xf32> -> vector<24x32xf32>
    %280 = vector.extract_strided_slice %260 {offsets = [0, 16], sizes = [24, 16], strides = [1, 1]} : vector<24x96xf32> to vector<24x16xf32>
    %281 = vector.extract_strided_slice %260 {offsets = [0, 48], sizes = [24, 16], strides = [1, 1]} : vector<24x96xf32> to vector<24x16xf32>
    %282 = vector.extract_strided_slice %260 {offsets = [0, 80], sizes = [24, 16], strides = [1, 1]} : vector<24x96xf32> to vector<24x16xf32>
    %cst_127 = arith.constant dense<0.000000e+00> : vector<24x24xf32>
    %283 = tpu.matmul %280, %281, %cst_127 {dimension_numbers = #tpu.dot_dimension_numbers<[1], [1], [0], [0], [0, 0, 1, 0], [], []>} : vector<24x16xf32>, vector<24x16xf32>, vector<24x24xf32> -> vector<24x24xf32>
    %cst_128 = arith.constant 2.500000e-01 : f32
    %284 = vector.broadcast %cst_128 : f32 to vector<24x24xf32>
    %285 = arith.mulf %283, %284 : vector<24x24xf32>
    %286 = arith.addf %285, %15 : vector<24x24xf32>
    %cst_129 = arith.constant dense<0xFF800000> : vector<24xf32>
    %287 = vector.multi_reduction <maximumf>, %286, %cst_129 [1] : vector<24x24xf32> to vector<24xf32>
    %288 = vector.shape_cast %287 : vector<24xf32> to vector<24x1xf32>
    %289 = vector.broadcast %288 : vector<24x1xf32> to vector<24x24xf32>
    %290 = arith.subf %286, %289 : vector<24x24xf32>
    %291 = math.exp %290 : vector<24x24xf32>
    %cst_130 = arith.constant dense<0.000000e+00> : vector<24xf32>
    %292 = vector.multi_reduction <add>, %291, %cst_130 [1] : vector<24x24xf32> to vector<24xf32>
    %293 = vector.shape_cast %292 : vector<24xf32> to vector<24x1xf32>
    %294 = vector.broadcast %293 : vector<24x1xf32> to vector<24x24xf32>
    %295 = arith.divf %291, %294 : vector<24x24xf32>
    %cst_131 = arith.constant dense<0.000000e+00> : vector<24x16xf32>
    %296 = tpu.matmul %295, %282, %cst_131 {dimension_numbers = #tpu.dot_dimension_numbers<[1], [0], [0], [1], [0, 0, 1, 1], [], []>} : vector<24x24xf32>, vector<24x16xf32>, vector<24x16xf32> -> vector<24x16xf32>
    %297 = vector.extract_strided_slice %232 {offsets = [16, 0], sizes = [16, 32], strides = [1, 1]} : vector<32x32xf32> to vector<16x32xf32>
    %cst_132 = arith.constant dense<0.000000e+00> : vector<24x32xf32>
    %298 = tpu.matmul %296, %297, %cst_132 {dimension_numbers = #tpu.dot_dimension_numbers<[1], [0], [0], [1], [0, 0, 1, 1], [], []>} : vector<24x16xf32>, vector<16x32xf32>, vector<24x32xf32> -> vector<24x32xf32>
    %299 = arith.addf %279, %298 : vector<24x32xf32>
    %300 = vector.broadcast %234 : vector<1x32xf32> to vector<24x32xf32>
    %301 = arith.addf %299, %300 : vector<24x32xf32>
    %302 = vector.extract_strided_slice %259 {offsets = [24, 0], sizes = [24, 96], strides = [1, 1]} : vector<48x96xf32> to vector<24x96xf32>
    %303 = vector.extract_strided_slice %302 {offsets = [0, 0], sizes = [24, 16], strides = [1, 1]} : vector<24x96xf32> to vector<24x16xf32>
    %304 = vector.extract_strided_slice %302 {offsets = [0, 32], sizes = [24, 16], strides = [1, 1]} : vector<24x96xf32> to vector<24x16xf32>
    %305 = vector.extract_strided_slice %302 {offsets = [0, 64], sizes = [24, 16], strides = [1, 1]} : vector<24x96xf32> to vector<24x16xf32>
    %cst_133 = arith.constant dense<0.000000e+00> : vector<24x24xf32>
    %306 = tpu.matmul %303, %304, %cst_133 {dimension_numbers = #tpu.dot_dimension_numbers<[1], [1], [0], [0], [0, 0, 1, 0], [], []>} : vector<24x16xf32>, vector<24x16xf32>, vector<24x24xf32> -> vector<24x24xf32>
    %cst_134 = arith.constant 2.500000e-01 : f32
    %307 = vector.broadcast %cst_134 : f32 to vector<24x24xf32>
    %308 = arith.mulf %306, %307 : vector<24x24xf32>
    %309 = arith.addf %308, %15 : vector<24x24xf32>
    %cst_135 = arith.constant dense<0xFF800000> : vector<24xf32>
    %310 = vector.multi_reduction <maximumf>, %309, %cst_135 [1] : vector<24x24xf32> to vector<24xf32>
    %311 = vector.shape_cast %310 : vector<24xf32> to vector<24x1xf32>
    %312 = vector.broadcast %311 : vector<24x1xf32> to vector<24x24xf32>
    %313 = arith.subf %309, %312 : vector<24x24xf32>
    %314 = math.exp %313 : vector<24x24xf32>
    %cst_136 = arith.constant dense<0.000000e+00> : vector<24xf32>
    %315 = vector.multi_reduction <add>, %314, %cst_136 [1] : vector<24x24xf32> to vector<24xf32>
    %316 = vector.shape_cast %315 : vector<24xf32> to vector<24x1xf32>
    %317 = vector.broadcast %316 : vector<24x1xf32> to vector<24x24xf32>
    %318 = arith.divf %314, %317 : vector<24x24xf32>
    %cst_137 = arith.constant dense<0.000000e+00> : vector<24x16xf32>
    %319 = tpu.matmul %318, %305, %cst_137 {dimension_numbers = #tpu.dot_dimension_numbers<[1], [0], [0], [1], [0, 0, 1, 1], [], []>} : vector<24x24xf32>, vector<24x16xf32>, vector<24x16xf32> -> vector<24x16xf32>
    %320 = vector.extract_strided_slice %232 {offsets = [0, 0], sizes = [16, 32], strides = [1, 1]} : vector<32x32xf32> to vector<16x32xf32>
    %cst_138 = arith.constant dense<0.000000e+00> : vector<24x32xf32>
    %321 = tpu.matmul %319, %320, %cst_138 {dimension_numbers = #tpu.dot_dimension_numbers<[1], [0], [0], [1], [0, 0, 1, 1], [], []>} : vector<24x16xf32>, vector<16x32xf32>, vector<24x32xf32> -> vector<24x32xf32>
    %322 = vector.extract_strided_slice %302 {offsets = [0, 16], sizes = [24, 16], strides = [1, 1]} : vector<24x96xf32> to vector<24x16xf32>
    %323 = vector.extract_strided_slice %302 {offsets = [0, 48], sizes = [24, 16], strides = [1, 1]} : vector<24x96xf32> to vector<24x16xf32>
    %324 = vector.extract_strided_slice %302 {offsets = [0, 80], sizes = [24, 16], strides = [1, 1]} : vector<24x96xf32> to vector<24x16xf32>
    %cst_139 = arith.constant dense<0.000000e+00> : vector<24x24xf32>
    %325 = tpu.matmul %322, %323, %cst_139 {dimension_numbers = #tpu.dot_dimension_numbers<[1], [1], [0], [0], [0, 0, 1, 0], [], []>} : vector<24x16xf32>, vector<24x16xf32>, vector<24x24xf32> -> vector<24x24xf32>
    %cst_140 = arith.constant 2.500000e-01 : f32
    %326 = vector.broadcast %cst_140 : f32 to vector<24x24xf32>
    %327 = arith.mulf %325, %326 : vector<24x24xf32>
    %328 = arith.addf %327, %15 : vector<24x24xf32>
    %cst_141 = arith.constant dense<0xFF800000> : vector<24xf32>
    %329 = vector.multi_reduction <maximumf>, %328, %cst_141 [1] : vector<24x24xf32> to vector<24xf32>
    %330 = vector.shape_cast %329 : vector<24xf32> to vector<24x1xf32>
    %331 = vector.broadcast %330 : vector<24x1xf32> to vector<24x24xf32>
    %332 = arith.subf %328, %331 : vector<24x24xf32>
    %333 = math.exp %332 : vector<24x24xf32>
    %cst_142 = arith.constant dense<0.000000e+00> : vector<24xf32>
    %334 = vector.multi_reduction <add>, %333, %cst_142 [1] : vector<24x24xf32> to vector<24xf32>
    %335 = vector.shape_cast %334 : vector<24xf32> to vector<24x1xf32>
    %336 = vector.broadcast %335 : vector<24x1xf32> to vector<24x24xf32>
    %337 = arith.divf %333, %336 : vector<24x24xf32>
    %cst_143 = arith.constant dense<0.000000e+00> : vector<24x16xf32>
    %338 = tpu.matmul %337, %324, %cst_143 {dimension_numbers = #tpu.dot_dimension_numbers<[1], [0], [0], [1], [0, 0, 1, 1], [], []>} : vector<24x24xf32>, vector<24x16xf32>, vector<24x16xf32> -> vector<24x16xf32>
    %339 = vector.extract_strided_slice %232 {offsets = [16, 0], sizes = [16, 32], strides = [1, 1]} : vector<32x32xf32> to vector<16x32xf32>
    %cst_144 = arith.constant dense<0.000000e+00> : vector<24x32xf32>
    %340 = tpu.matmul %338, %339, %cst_144 {dimension_numbers = #tpu.dot_dimension_numbers<[1], [0], [0], [1], [0, 0, 1, 1], [], []>} : vector<24x16xf32>, vector<16x32xf32>, vector<24x32xf32> -> vector<24x32xf32>
    %341 = arith.addf %321, %340 : vector<24x32xf32>
    %342 = vector.broadcast %234 : vector<1x32xf32> to vector<24x32xf32>
    %343 = arith.addf %341, %342 : vector<24x32xf32>
    %344 = tpu.concatenate %301, %343 in 0 : vector<24x32xf32>, vector<24x32xf32> -> vector<48x32xf32>
    %345 = arith.addf %222, %344 : vector<48x32xf32>
    %c1_145 = arith.constant 1 : index
    %c0_146 = arith.constant 0 : index
    %c0_147 = arith.constant 0 : index
    %346 = vector.load %arg10[%c1_145, %c0_146, %c0_147] : memref<2x1x32xf32, #tpu.memory_space<vmem>>, vector<1x1x32xf32>
    %347 = vector.shape_cast %346 : vector<1x1x32xf32> to vector<1x32xf32>
    %c1_148 = arith.constant 1 : index
    %c0_149 = arith.constant 0 : index
    %c0_150 = arith.constant 0 : index
    %348 = vector.load %arg11[%c1_148, %c0_149, %c0_150] : memref<2x1x32xf32, #tpu.memory_space<vmem>>, vector<1x1x32xf32>
    %349 = vector.shape_cast %348 : vector<1x1x32xf32> to vector<1x32xf32>
    %cst_151 = arith.constant dense<0.000000e+00> : vector<48xf32>
    %350 = vector.multi_reduction <add>, %345, %cst_151 [1] : vector<48x32xf32> to vector<48xf32>
    %351 = vector.shape_cast %350 : vector<48xf32> to vector<48x1xf32>
    %cst_152 = arith.constant 3.200000e+01 : f32
    %352 = vector.broadcast %cst_152 : f32 to vector<48x1xf32>
    %353 = arith.divf %351, %352 : vector<48x1xf32>
    %354 = vector.broadcast %353 : vector<48x1xf32> to vector<48x32xf32>
    %355 = arith.subf %345, %354 : vector<48x32xf32>
    %356 = arith.mulf %355, %355 : vector<48x32xf32>
    %cst_153 = arith.constant dense<0.000000e+00> : vector<48xf32>
    %357 = vector.multi_reduction <add>, %356, %cst_153 [1] : vector<48x32xf32> to vector<48xf32>
    %358 = vector.shape_cast %357 : vector<48xf32> to vector<48x1xf32>
    %cst_154 = arith.constant 3.200000e+01 : f32
    %359 = vector.broadcast %cst_154 : f32 to vector<48x1xf32>
    %360 = arith.divf %358, %359 : vector<48x1xf32>
    %361 = vector.broadcast %353 : vector<48x1xf32> to vector<48x32xf32>
    %362 = arith.subf %345, %361 : vector<48x32xf32>
    %cst_155 = arith.constant 9.99999997E-7 : f32
    %363 = vector.broadcast %cst_155 : f32 to vector<48x1xf32>
    %364 = arith.addf %360, %363 : vector<48x1xf32>
    %365 = math.rsqrt %364 : vector<48x1xf32>
    %366 = vector.broadcast %365 : vector<48x1xf32> to vector<48x32xf32>
    %367 = arith.mulf %362, %366 : vector<48x32xf32>
    %368 = vector.broadcast %347 : vector<1x32xf32> to vector<48x32xf32>
    %369 = arith.mulf %367, %368 : vector<48x32xf32>
    %370 = vector.broadcast %349 : vector<1x32xf32> to vector<48x32xf32>
    %371 = arith.addf %369, %370 : vector<48x32xf32>
    %c1_156 = arith.constant 1 : index
    %c0_157 = arith.constant 0 : index
    %c0_158 = arith.constant 0 : index
    %372 = vector.load %arg12[%c1_156, %c0_157, %c0_158] : memref<2x32x64xf32, #tpu.memory_space<vmem>>, vector<1x32x64xf32>
    %373 = vector.shape_cast %372 : vector<1x32x64xf32> to vector<32x64xf32>
    %cst_159 = arith.constant dense<0.000000e+00> : vector<48x64xf32>
    %374 = tpu.matmul %371, %373, %cst_159 {dimension_numbers = #tpu.dot_dimension_numbers<[1], [0], [0], [1], [0, 0, 1, 1], [], []>} : vector<48x32xf32>, vector<32x64xf32>, vector<48x64xf32> -> vector<48x64xf32>
    %c1_160 = arith.constant 1 : index
    %c0_161 = arith.constant 0 : index
    %c0_162 = arith.constant 0 : index
    %375 = vector.load %arg13[%c1_160, %c0_161, %c0_162] : memref<2x1x64xf32, #tpu.memory_space<vmem>>, vector<1x1x64xf32>
    %376 = vector.shape_cast %375 : vector<1x1x64xf32> to vector<1x64xf32>
    %377 = vector.broadcast %376 : vector<1x64xf32> to vector<48x64xf32>
    %378 = arith.addf %374, %377 : vector<48x64xf32>
    %cst_163 = arith.constant 5.000000e-01 : f32
    %379 = vector.broadcast %cst_163 : f32 to vector<48x64xf32>
    %380 = arith.mulf %379, %378 : vector<48x64xf32>
    %cst_164 = arith.constant 2.000000e+00 : f32
    %381 = math.sqrt %cst_164 : f32
    %cst_165 = arith.constant 1.000000e+00 : f32
    %382 = arith.divf %cst_165, %381 : f32
    %383 = vector.broadcast %382 : f32 to vector<48x64xf32>
    %384 = arith.mulf %378, %383 : vector<48x64xf32>
    %cst_166 = arith.constant 0.000000e+00 : f32
    %385 = vector.broadcast %cst_166 : f32 to vector<48x64xf32>
    %386 = arith.cmpf oge, %384, %385 : vector<48x64xf32>
    %cst_167 = arith.constant 1.000000e+00 : f32
    %cst_168 = arith.constant -1.000000e+00 : f32
    %387 = vector.broadcast %cst_167 : f32 to vector<48x64xf32>
    %388 = vector.broadcast %cst_168 : f32 to vector<48x64xf32>
    %389 = arith.select %386, %387, %388 : vector<48x64xi1>, vector<48x64xf32>
    %390 = math.absf %384 : vector<48x64xf32>
    %cst_169 = arith.constant 0.327591091 : f32
    %391 = vector.broadcast %cst_169 : f32 to vector<48x64xf32>
    %392 = arith.mulf %391, %390 : vector<48x64xf32>
    %cst_170 = arith.constant 1.000000e+00 : f32
    %393 = vector.broadcast %cst_170 : f32 to vector<48x64xf32>
    %394 = arith.addf %393, %392 : vector<48x64xf32>
    %cst_171 = arith.constant 1.000000e+00 : f32
    %395 = vector.broadcast %cst_171 : f32 to vector<48x64xf32>
    %396 = arith.divf %395, %394 : vector<48x64xf32>
    %cst_172 = arith.constant 1.06140542 : f32
    %397 = vector.broadcast %cst_172 : f32 to vector<48x64xf32>
    %398 = arith.mulf %397, %396 : vector<48x64xf32>
    %cst_173 = arith.constant -1.45315206 : f32
    %399 = vector.broadcast %cst_173 : f32 to vector<48x64xf32>
    %400 = arith.addf %398, %399 : vector<48x64xf32>
    %401 = arith.mulf %400, %396 : vector<48x64xf32>
    %cst_174 = arith.constant 1.42141378 : f32
    %402 = vector.broadcast %cst_174 : f32 to vector<48x64xf32>
    %403 = arith.addf %401, %402 : vector<48x64xf32>
    %404 = arith.mulf %403, %396 : vector<48x64xf32>
    %cst_175 = arith.constant -0.284496725 : f32
    %405 = vector.broadcast %cst_175 : f32 to vector<48x64xf32>
    %406 = arith.addf %404, %405 : vector<48x64xf32>
    %407 = arith.mulf %406, %396 : vector<48x64xf32>
    %cst_176 = arith.constant 0.254829586 : f32
    %408 = vector.broadcast %cst_176 : f32 to vector<48x64xf32>
    %409 = arith.addf %407, %408 : vector<48x64xf32>
    %410 = arith.mulf %409, %396 : vector<48x64xf32>
    %cst_177 = arith.constant 0.000000e+00 : f32
    %411 = vector.broadcast %cst_177 : f32 to vector<48x64xf32>
    %412 = arith.subf %411, %390 : vector<48x64xf32>
    %413 = arith.mulf %412, %390 : vector<48x64xf32>
    %414 = math.exp %413 : vector<48x64xf32>
    %415 = arith.mulf %410, %414 : vector<48x64xf32>
    %cst_178 = arith.constant 1.000000e+00 : f32
    %416 = vector.broadcast %cst_178 : f32 to vector<48x64xf32>
    %417 = arith.subf %416, %415 : vector<48x64xf32>
    %418 = arith.mulf %389, %417 : vector<48x64xf32>
    %cst_179 = arith.constant 1.000000e+00 : f32
    %419 = vector.broadcast %cst_179 : f32 to vector<48x64xf32>
    %420 = arith.addf %419, %418 : vector<48x64xf32>
    %421 = arith.mulf %380, %420 : vector<48x64xf32>
    %c1_180 = arith.constant 1 : index
    %c0_181 = arith.constant 0 : index
    %c0_182 = arith.constant 0 : index
    %422 = vector.load %arg14[%c1_180, %c0_181, %c0_182] : memref<2x64x32xf32, #tpu.memory_space<vmem>>, vector<1x64x32xf32>
    %423 = vector.shape_cast %422 : vector<1x64x32xf32> to vector<64x32xf32>
    %cst_183 = arith.constant dense<0.000000e+00> : vector<48x32xf32>
    %424 = tpu.matmul %421, %423, %cst_183 {dimension_numbers = #tpu.dot_dimension_numbers<[1], [0], [0], [1], [0, 0, 1, 1], [], []>} : vector<48x64xf32>, vector<64x32xf32>, vector<48x32xf32> -> vector<48x32xf32>
    %c1_184 = arith.constant 1 : index
    %c0_185 = arith.constant 0 : index
    %c0_186 = arith.constant 0 : index
    %425 = vector.load %arg15[%c1_184, %c0_185, %c0_186] : memref<2x1x32xf32, #tpu.memory_space<vmem>>, vector<1x1x32xf32>
    %426 = vector.shape_cast %425 : vector<1x1x32xf32> to vector<1x32xf32>
    %427 = vector.broadcast %426 : vector<1x32xf32> to vector<48x32xf32>
    %428 = arith.addf %424, %427 : vector<48x32xf32>
    %429 = arith.addf %345, %428 : vector<48x32xf32>
    %430 = vector.extract_strided_slice %429 {offsets = [0, 0], sizes = [1, 32], strides = [1, 1]} : vector<48x32xf32> to vector<1x32xf32>
    %431 = vector.extract_strided_slice %429 {offsets = [24, 0], sizes = [1, 32], strides = [1, 1]} : vector<48x32xf32> to vector<1x32xf32>
    %432 = tpu.concatenate %430, %431 in 0 : vector<1x32xf32>, vector<1x32xf32> -> vector<2x32xf32>
    %c0_187 = arith.constant 0 : index
    %c0_188 = arith.constant 0 : index
    %433 = vector.load %arg16[%c0_187, %c0_188] : memref<1x32xf32, #tpu.memory_space<vmem>>, vector<1x32xf32>
    %c0_189 = arith.constant 0 : index
    %c0_190 = arith.constant 0 : index
    %434 = vector.load %arg17[%c0_189, %c0_190] : memref<1x32xf32, #tpu.memory_space<vmem>>, vector<1x32xf32>
    %cst_191 = arith.constant dense<0.000000e+00> : vector<2xf32>
    %435 = vector.multi_reduction <add>, %432, %cst_191 [1] : vector<2x32xf32> to vector<2xf32>
    %436 = vector.shape_cast %435 : vector<2xf32> to vector<2x1xf32>
    %cst_192 = arith.constant 3.200000e+01 : f32
    %437 = vector.broadcast %cst_192 : f32 to vector<2x1xf32>
    %438 = arith.divf %436, %437 : vector<2x1xf32>
    %439 = vector.broadcast %438 : vector<2x1xf32> to vector<2x32xf32>
    %440 = arith.subf %432, %439 : vector<2x32xf32>
    %441 = arith.mulf %440, %440 : vector<2x32xf32>
    %cst_193 = arith.constant dense<0.000000e+00> : vector<2xf32>
    %442 = vector.multi_reduction <add>, %441, %cst_193 [1] : vector<2x32xf32> to vector<2xf32>
    %443 = vector.shape_cast %442 : vector<2xf32> to vector<2x1xf32>
    %cst_194 = arith.constant 3.200000e+01 : f32
    %444 = vector.broadcast %cst_194 : f32 to vector<2x1xf32>
    %445 = arith.divf %443, %444 : vector<2x1xf32>
    %446 = vector.broadcast %438 : vector<2x1xf32> to vector<2x32xf32>
    %447 = arith.subf %432, %446 : vector<2x32xf32>
    %cst_195 = arith.constant 9.99999997E-7 : f32
    %448 = vector.broadcast %cst_195 : f32 to vector<2x1xf32>
    %449 = arith.addf %445, %448 : vector<2x1xf32>
    %450 = math.rsqrt %449 : vector<2x1xf32>
    %451 = vector.broadcast %450 : vector<2x1xf32> to vector<2x32xf32>
    %452 = arith.mulf %447, %451 : vector<2x32xf32>
    %453 = vector.broadcast %433 : vector<1x32xf32> to vector<2x32xf32>
    %454 = arith.mulf %452, %453 : vector<2x32xf32>
    %455 = vector.broadcast %434 : vector<1x32xf32> to vector<2x32xf32>
    %456 = arith.addf %454, %455 : vector<2x32xf32>
    %c0_196 = arith.constant 0 : index
    %c0_197 = arith.constant 0 : index
    %457 = vector.load %arg18[%c0_196, %c0_197] : memref<32x64xf32, #tpu.memory_space<vmem>>, vector<32x64xf32>
    %cst_198 = arith.constant dense<0.000000e+00> : vector<2x64xf32>
    %458 = tpu.matmul %456, %457, %cst_198 {dimension_numbers = #tpu.dot_dimension_numbers<[1], [0], [0], [1], [0, 0, 1, 1], [], []>} : vector<2x32xf32>, vector<32x64xf32>, vector<2x64xf32> -> vector<2x64xf32>
    %c0_199 = arith.constant 0 : index
    %c0_200 = arith.constant 0 : index
    %459 = vector.load %arg19[%c0_199, %c0_200] : memref<1x64xf32, #tpu.memory_space<vmem>>, vector<1x64xf32>
    %460 = vector.broadcast %459 : vector<1x64xf32> to vector<2x64xf32>
    %461 = arith.addf %458, %460 : vector<2x64xf32>
    %cst_201 = arith.constant 0.000000e+00 : f32
    %462 = vector.broadcast %cst_201 : f32 to vector<2x64xf32>
    %463 = arith.maximumf %461, %462 : vector<2x64xf32>
    %c0_202 = arith.constant 0 : index
    %c0_203 = arith.constant 0 : index
    %464 = vector.load %arg20[%c0_202, %c0_203] : memref<2x64xf32, #tpu.memory_space<vmem>>, vector<2x64xf32>
    tpu.vector_store %arg20[%c0_202, %c0_203], %463 {strides = array<i32>} : memref<2x64xf32, #tpu.memory_space<vmem>>, vector<2x64xf32>,
    return
  }
  func.func @transform_0(%arg0: i32) -> (i32, i32, i32) {
    %c0_i32 = arith.constant 0 : i32
    %c0_i32_0 = arith.constant 0 : i32
    %c0_i32_1 = arith.constant 0 : i32
    return %arg0, %c0_i32, %c0_i32_0 : i32, i32, i32
  }
  func.func @transform_1(%arg0: i32) -> (i32, i32) {
    %c0_i32 = arith.constant 0 : i32
    %c0_i32_0 = arith.constant 0 : i32
    %c0_i32_1 = arith.constant 0 : i32
    return %c0_i32, %c0_i32_0 : i32, i32
  }
  func.func @transform_2(%arg0: i32) -> (i32, i32) {
    %c0_i32 = arith.constant 0 : i32
    %c0_i32_0 = arith.constant 0 : i32
    %c0_i32_1 = arith.constant 0 : i32
    return %c0_i32, %c0_i32_0 : i32, i32
  }
  func.func @transform_3(%arg0: i32) -> (i32, i32, i32) {
    %c0_i32 = arith.constant 0 : i32
    %c0_i32_0 = arith.constant 0 : i32
    %c0_i32_1 = arith.constant 0 : i32
    %c0_i32_2 = arith.constant 0 : i32
    return %c0_i32, %c0_i32_0, %c0_i32_1 : i32, i32, i32
  }
  func.func @transform_4(%arg0: i32) -> (i32, i32, i32) {
    %c0_i32 = arith.constant 0 : i32
    %c0_i32_0 = arith.constant 0 : i32
    %c0_i32_1 = arith.constant 0 : i32
    %c0_i32_2 = arith.constant 0 : i32
    return %c0_i32, %c0_i32_0, %c0_i32_1 : i32, i32, i32
  }
  func.func @transform_5(%arg0: i32) -> (i32, i32, i32) {
    %c0_i32 = arith.constant 0 : i32
    %c0_i32_0 = arith.constant 0 : i32
    %c0_i32_1 = arith.constant 0 : i32
    %c0_i32_2 = arith.constant 0 : i32
    return %c0_i32, %c0_i32_0, %c0_i32_1 : i32, i32, i32
  }
  func.func @transform_6(%arg0: i32) -> (i32, i32, i32) {
    %c0_i32 = arith.constant 0 : i32
    %c0_i32_0 = arith.constant 0 : i32
    %c0_i32_1 = arith.constant 0 : i32
    %c0_i32_2 = arith.constant 0 : i32
    return %c0_i32, %c0_i32_0, %c0_i32_1 : i32, i32, i32
  }
  func.func @transform_7(%arg0: i32) -> (i32, i32, i32) {
    %c0_i32 = arith.constant 0 : i32
    %c0_i32_0 = arith.constant 0 : i32
    %c0_i32_1 = arith.constant 0 : i32
    %c0_i32_2 = arith.constant 0 : i32
    return %c0_i32, %c0_i32_0, %c0_i32_1 : i32, i32, i32
  }
  func.func @transform_8(%arg0: i32) -> (i32, i32, i32) {
    %c0_i32 = arith.constant 0 : i32
    %c0_i32_0 = arith.constant 0 : i32
    %c0_i32_1 = arith.constant 0 : i32
    %c0_i32_2 = arith.constant 0 : i32
    return %c0_i32, %c0_i32_0, %c0_i32_1 : i32, i32, i32
  }
  func.func @transform_9(%arg0: i32) -> (i32, i32, i32) {
    %c0_i32 = arith.constant 0 : i32
    %c0_i32_0 = arith.constant 0 : i32
    %c0_i32_1 = arith.constant 0 : i32
    %c0_i32_2 = arith.constant 0 : i32
    return %c0_i32, %c0_i32_0, %c0_i32_1 : i32, i32, i32
  }
  func.func @transform_10(%arg0: i32) -> (i32, i32, i32) {
    %c0_i32 = arith.constant 0 : i32
    %c0_i32_0 = arith.constant 0 : i32
    %c0_i32_1 = arith.constant 0 : i32
    %c0_i32_2 = arith.constant 0 : i32
    return %c0_i32, %c0_i32_0, %c0_i32_1 : i32, i32, i32
  }
  func.func @transform_11(%arg0: i32) -> (i32, i32, i32) {
    %c0_i32 = arith.constant 0 : i32
    %c0_i32_0 = arith.constant 0 : i32
    %c0_i32_1 = arith.constant 0 : i32
    %c0_i32_2 = arith.constant 0 : i32
    return %c0_i32, %c0_i32_0, %c0_i32_1 : i32, i32, i32
  }
  func.func @transform_12(%arg0: i32) -> (i32, i32, i32) {
    %c0_i32 = arith.constant 0 : i32
    %c0_i32_0 = arith.constant 0 : i32
    %c0_i32_1 = arith.constant 0 : i32
    %c0_i32_2 = arith.constant 0 : i32
    return %c0_i32, %c0_i32_0, %c0_i32_1 : i32, i32, i32
  }
  func.func @transform_13(%arg0: i32) -> (i32, i32, i32) {
    %c0_i32 = arith.constant 0 : i32
    %c0_i32_0 = arith.constant 0 : i32
    %c0_i32_1 = arith.constant 0 : i32
    %c0_i32_2 = arith.constant 0 : i32
    return %c0_i32, %c0_i32_0, %c0_i32_1 : i32, i32, i32
  }
  func.func @transform_14(%arg0: i32) -> (i32, i32, i32) {
    %c0_i32 = arith.constant 0 : i32
    %c0_i32_0 = arith.constant 0 : i32
    %c0_i32_1 = arith.constant 0 : i32
    %c0_i32_2 = arith.constant 0 : i32
    return %c0_i32, %c0_i32_0, %c0_i32_1 : i32, i32, i32
  }
  func.func @transform_15(%arg0: i32) -> (i32, i32) {
    %c0_i32 = arith.constant 0 : i32
    %c0_i32_0 = arith.constant 0 : i32
    %c0_i32_1 = arith.constant 0 : i32
    return %c0_i32, %c0_i32_0 : i32, i32
  }
  func.func @transform_16(%arg0: i32) -> (i32, i32) {
    %c0_i32 = arith.constant 0 : i32
    %c0_i32_0 = arith.constant 0 : i32
    %c0_i32_1 = arith.constant 0 : i32
    return %c0_i32, %c0_i32_0 : i32, i32
  }
  func.func @transform_17(%arg0: i32) -> (i32, i32) {
    %c0_i32 = arith.constant 0 : i32
    %c0_i32_0 = arith.constant 0 : i32
    %c0_i32_1 = arith.constant 0 : i32
    return %c0_i32, %c0_i32_0 : i32, i32
  }
  func.func @transform_18(%arg0: i32) -> (i32, i32) {
    %c0_i32 = arith.constant 0 : i32
    %c0_i32_0 = arith.constant 0 : i32
    %c0_i32_1 = arith.constant 0 : i32
    return %c0_i32, %c0_i32_0 : i32, i32
  }
  func.func @transform_19(%arg0: i32) -> (i32, i32) {
    %c0_i32 = arith.constant 0 : i32
    %c0_i32_0 = arith.constant 0 : i32
    return %arg0, %c0_i32 : i32, i32
  }
}

module attributes {stable_mosaic.version = 11 : i64} {
  func.func @decoder_out_kernel(%arg0: i32, %arg1: memref<2x64xf32, #tpu.memory_space<vmem>>, %arg2: memref<64x6144xbf16, #tpu.memory_space<vmem>>, %arg3: memref<1x6144xf32, #tpu.memory_space<vmem>>, %arg4: memref<2x6144xf32, #tpu.memory_space<vmem>>) attributes {dimension_semantics = [#tpu.dimension_semantics<parallel>], iteration_bounds = array<i64: 2>, scalar_prefetch = 0 : i64, scratch_operands = 0 : i64, tpu.core_type = #tpu.core_type<tc>, window_params = [{pipeline_mode = #tpu.pipeline_mode<synchronous>, transform_indices = @transform_0, window_bounds = array<i64: 2, 64>}, {transform_indices = @transform_1, window_bounds = array<i64: 64, 6144>}, {transform_indices = @transform_2, window_bounds = array<i64: 1, 6144>}, {transform_indices = @transform_3, window_bounds = array<i64: 2, 6144>}]} {
    %c0 = arith.constant 0 : index
    %c0_0 = arith.constant 0 : index
    %0 = vector.load %arg1[%c0, %c0_0] : memref<2x64xf32, #tpu.memory_space<vmem>>, vector<2x64xf32>
    %1 = arith.truncf %0 : vector<2x64xf32> to vector<2x64xbf16>
    %c0_1 = arith.constant 0 : index
    %c0_2 = arith.constant 0 : index
    %2 = vector.load %arg2[%c0_1, %c0_2] : memref<64x6144xbf16, #tpu.memory_space<vmem>>, vector<64x6144xbf16>
    %cst = arith.constant dense<0.000000e+00> : vector<2x6144xf32>
    %3 = tpu.matmul %1, %2, %cst {dimension_numbers = #tpu.dot_dimension_numbers<[1], [0], [0], [1], [0, 0, 1, 1], [], []>} : vector<2x64xbf16>, vector<64x6144xbf16>, vector<2x6144xf32> -> vector<2x6144xf32>
    %c0_3 = arith.constant 0 : index
    %c0_4 = arith.constant 0 : index
    %4 = vector.load %arg3[%c0_3, %c0_4] : memref<1x6144xf32, #tpu.memory_space<vmem>>, vector<1x6144xf32>
    %5 = vector.broadcast %4 : vector<1x6144xf32> to vector<2x6144xf32>
    %6 = arith.addf %3, %5 : vector<2x6144xf32>
    %7 = arith.negf %6 : vector<2x6144xf32>
    %8 = math.exp %7 : vector<2x6144xf32>
    %cst_5 = arith.constant 1.000000e+00 : f32
    %9 = vector.broadcast %cst_5 : f32 to vector<2x6144xf32>
    %10 = arith.addf %9, %8 : vector<2x6144xf32>
    %11 = arith.divf %9, %10 : vector<2x6144xf32>
    %c0_6 = arith.constant 0 : index
    %c0_7 = arith.constant 0 : index
    %12 = vector.load %arg4[%c0_6, %c0_7] : memref<2x6144xf32, #tpu.memory_space<vmem>>, vector<2x6144xf32>
    tpu.vector_store %arg4[%c0_6, %c0_7], %11 {strides = array<i32>} : memref<2x6144xf32, #tpu.memory_space<vmem>>, vector<2x6144xf32>,
    return
  }
  func.func @transform_0(%arg0: i32) -> (i32, i32) {
    %c0_i32 = arith.constant 0 : i32
    %c0_i32_0 = arith.constant 0 : i32
    %c0_i32_1 = arith.constant 0 : i32
    return %c0_i32, %c0_i32_0 : i32, i32
  }
  func.func @transform_1(%arg0: i32) -> (i32, i32) {
    %c0_i32 = arith.constant 0 : i32
    %c0_i32_0 = arith.constant 0 : i32
    return %c0_i32, %arg0 : i32, i32
  }
  func.func @transform_2(%arg0: i32) -> (i32, i32) {
    %c0_i32 = arith.constant 0 : i32
    %c0_i32_0 = arith.constant 0 : i32
    return %c0_i32, %arg0 : i32, i32
  }
  func.func @transform_3(%arg0: i32) -> (i32, i32) {
    %c0_i32 = arith.constant 0 : i32
    %c0_i32_0 = arith.constant 0 : i32
    return %c0_i32, %arg0 : i32, i32
  }
}

</mosaic_0001>

<llo_original>
// kernel: vit_autoencoder_forward.3
$region0: #{vit_autoencoder_forward.3}
  #allocation0 [shape = 'u32[]', space=smem, size = 0x4, offset = 0x4, fixed_abs, tag = 'smem constant byte address 0x4 - core index']
  #allocation1 [shape = 'u32[72,128]{1,0:T(1,128)}', space=vmem, size = 0x9000, scoped, tag = 'internal scratch']
  %s0 = inlined_call_operand.vmem [shape: f32[2,64], index: 0, kind: input, shape index: {}]
  %s1 = inlined_call_operand.vmem [shape: bf16[64,12288], index: 1, kind: input, shape index: {}]
  %s2 = inlined_call_operand.vmem [shape: f32[1,12288], index: 2, kind: input, shape index: {}]
  %s3 = inlined_call_operand.vmem [shape: f32[2,12288], index: 3, kind: output, shape index: {}]
  %s4 = sld [smem:[#allocation0]]
  $region68: #{vit_autoencoder_forward.3} parent=0
    _
  %s6 = ssub.s32 1, %s4
  %s7 = scalar_select 0, %s6, %s4
  $region1: #{vit_autoencoder_forward.3} parent=0
    #allocation2 [shape = 'u8[1572864]{0}', space=vmem, size = 0x180000, scoped, tag = 'input window, operand 1']
    loop: start=0, step=1, limit=4
    $region2: #{vit_autoencoder_forward.3} parent=1 // loop_pre_header
      _
    $region3: #{vit_autoencoder_forward.3} parent=1 // loop_header
      %s9 = sphi 0, %s13
      %p10 = scmp.ge.s32.totalorder %s9, 4
      %s17 = sphi 0, %s17
      %s19 = sphi 0, %s17
      %s20 = sphi 0, %s19
      %s34 = sphi 0, %s20
      %s40 = sphi 0, %s42
      %s43 = sphi 0, %s40
      %s44 = sphi 0, %s43
      %s60 = sphi 0, %s44
      %s66 = sphi 0, %s68
      %s69 = sphi 0, %s66
      %s70 = sphi 0, %s69
      %s86 = sphi 0, %s70
      %s92 = sphi 0, %s94
      %s95 = sphi 0, %s92
      %s96 = sphi 0, %s95
      %s112 = sphi 0, %s96
    $region4: #{vit_autoencoder_forward.3} parent=1 // loop_header_branch
      %12 = sbr.rel (%p10) target = $region8
    $region5: #{vit_autoencoder_forward.3} parent=1 // loop_body
      %s14 = ssub.s32 %s9, 1
      %s15 = ssub.s32 %s9, 2
      %s16 = sadd.s32 %s9, 1
      %s18 = sadd.s32 %s17, 1
      %p21 = scmp.eq.s32.totalorder %s9, 1
      %p22 = scmp.ne.s32.totalorder %s17, %s19
      %p23 = scmp.eq.s32.totalorder %s9, 0
      %p24 = por %p22, %p23
      %p25 = scmp.ne.s32.totalorder %s17, %s19
      %p26 = scmp.eq.s32.totalorder %s14, 1
      %p27 = por %p25, %p26
      %p28 = scmp.ne.s32.totalorder %s19, %s20
      %p29 = scmp.eq.s32.totalorder %s14, 0
      %p30 = por %p28, %p29
      %p31 = scmp.ne.s32.totalorder %s19, %s20
      %p32 = scmp.eq.s32.totalorder %s15, 1
      %p33 = por %p31, %p32
      %p35 = scmp.ne.s32.totalorder %s20, %s34
      %p36 = scmp.eq.s32.totalorder %s15, 0
      %p37 = por %p35, %p36
      %s38 = ssub.s32 %s9, %s16
      %p39 = scmp.eq.s32.totalorder %s38, 0
      %s41 = sadd.s32 %s40, 1
      %s42 = scalar_select %p39, %s40, %s41
      %p45 = pneg %p39
      %p46 = scmp.eq.s32.totalorder %s9, 1
      %p47 = por %p45, %p46
      %p48 = scmp.ne.s32.totalorder %s40, %s43
      %p49 = scmp.eq.s32.totalorder %s9, 0
      %p50 = por %p48, %p49
      %p51 = scmp.ne.s32.totalorder %s40, %s43
      %p52 = scmp.eq.s32.totalorder %s14, 1
      %p53 = por %p51, %p52
      %p54 = scmp.ne.s32.totalorder %s43, %s44
      %p55 = scmp.eq.s32.totalorder %s14, 0
      %p56 = por %p54, %p55
      %p57 = scmp.ne.s32.totalorder %s43, %s44
      %p58 = scmp.eq.s32.totalorder %s15, 1
      %p59 = por %p57, %p58
      %p61 = scmp.ne.s32.totalorder %s44, %s60
      %p62 = scmp.eq.s32.totalorder %s15, 0
      %p63 = por %p61, %p62
      %s64 = ssub.s32 %s9, %s16
      %p65 = scmp.eq.s32.totalorder %s64, 0
      %s67 = sadd.s32 %s66, 1
      %s68 = scalar_select %p65, %s66, %s67
      %p71 = pneg %p65
      %p72 = scmp.eq.s32.totalorder %s9, 1
      %p73 = por %p71, %p72
      %p74 = scmp.ne.s32.totalorder %s66, %s69
      %p75 = scmp.eq.s32.totalorder %s9, 0
      %p76 = por %p74, %p75
      %p77 = scmp.ne.s32.totalorder %s66, %s69
      %p78 = scmp.eq.s32.totalorder %s14, 1
      %p79 = por %p77, %p78
      %p80 = scmp.ne.s32.totalorder %s69, %s70
      %p81 = scmp.eq.s32.totalorder %s14, 0
      %p82 = por %p80, %p81
      %p83 = scmp.ne.s32.totalorder %s69, %s70
      %p84 = scmp.eq.s32.totalorder %s15, 1
      %p85 = por %p83, %p84
      %p87 = scmp.ne.s32.totalorder %s70, %s86
      %p88 = scmp.eq.s32.totalorder %s15, 0
      %p89 = por %p87, %p88
      %s90 = ssub.s32 %s9, %s16
      %p91 = scmp.eq.s32.totalorder %s90, 0
      %s93 = sadd.s32 %s92, 1
      %s94 = scalar_select %p91, %s92, %s93
      %p97 = pneg %p91
      %p98 = scmp.eq.s32.totalorder %s9, 1
      %p99 = por %p97, %p98
      %p100 = scmp.ne.s32.totalorder %s92, %s95
      %p101 = scmp.eq.s32.totalorder %s9, 0
      %p102 = por %p100, %p101
      %p103 = scmp.ne.s32.totalorder %s92, %s95
      %p104 = scmp.eq.s32.totalorder %s14, 1
      %p105 = por %p103, %p104
      %p106 = scmp.ne.s32.totalorder %s95, %s96
      %p107 = scmp.eq.s32.totalorder %s14, 0
      %p108 = por %p106, %p107
      %p109 = scmp.ne.s32.totalorder %s95, %s96
      %p110 = scmp.eq.s32.totalorder %s15, 1
      %p111 = por %p109, %p110
      %p113 = scmp.ne.s32.totalorder %s96, %s112
      %p114 = scmp.eq.s32.totalorder %s15, 0
      %p115 = por %p113, %p114
      %p116 = scmp.le.s32.totalorder 1, %s9
      %p117 = scmp.lt.s32.totalorder %s9, 3
      %p118 = pnand %p116, %p117
      %p119 = pneg %p118
      // Predicated region
      $region9: #{vit_autoencoder_forward.3} parent=5 // pred_check
        _
      $region10: #{vit_autoencoder_forward.3} parent=5 // pred_check_branch
        %121 = sbr.rel (%p118) target = $region12
      $region11: #{vit_autoencoder_forward.3} parent=5 // pred_region
        %s122 = ssub.s32 %s9, 1
        // Predicated region
        $region13: #{vit_autoencoder_forward.3} parent=11 // pred_check
          %p123 = pneg %p30
        $region14: #{vit_autoencoder_forward.3} parent=11 // pred_check_branch
          %125 = sbr.rel (%p123) target = $region16
        $region15: #{vit_autoencoder_forward.3} parent=11 // pred_region
          _
        $region16: #{vit_autoencoder_forward.3} parent=11 // pred_fallthru
          _
      $region12: #{vit_autoencoder_forward.3} parent=5 // pred_fallthru
        _
      %p126 = scmp.lt.s32.totalorder %s9, 2
      // Predicated region
      $region17: #{vit_autoencoder_forward.3} parent=5 // pred_check
        %p127 = pneg %p126
      $region18: #{vit_autoencoder_forward.3} parent=5 // pred_check_branch
        %129 = sbr.rel (%p127) target = $region20
      $region19: #{vit_autoencoder_forward.3} parent=5 // pred_region
        // Predicated region
        $region21: #{vit_autoencoder_forward.3} parent=19 // pred_check
          %p130 = pneg %p50
        $region22: #{vit_autoencoder_forward.3} parent=19 // pred_check_branch
          %132 = sbr.rel (%p130) target = $region24
        $region23: #{vit_autoencoder_forward.3} parent=19 // pred_region
          %s133 = sand.u32 %s40, 1
          %s134 = sand.u32 %s40, 1
          %s135 = smul.addr %s134, 1536
          %s136 = scalar_lea.vmem [#allocation2], %s135
          %s137 = smul.u32 48, %s9
          %s138 = smul.addr %s137, 4
          %s139 = scalar_lea.vmem %s1, %s138
          // Predicated region
          $region25: #{vit_autoencoder_forward.3} parent=23 // pred_check
            _
          $region26: #{vit_autoencoder_forward.3} parent=23 // pred_check_branch
            %141 = sbr.rel (0) target = $region28
          $region27: #{vit_autoencoder_forward.3} parent=23 // pred_region
            // Predicated region
            $region29: #{vit_autoencoder_forward.3} parent=27 // pred_check
              _
            $region30: #{vit_autoencoder_forward.3} parent=27 // pred_check_branch
              %143 = sbr.rel (0) target = $region32
            $region31: #{vit_autoencoder_forward.3} parent=27 // pred_region
              loop: start=0, step=1, limit=1
              $region33: #{vit_autoencoder_forward.3} parent=31 // loop_pre_header
                _
              $region34: #{vit_autoencoder_forward.3} parent=31 // loop_header
                %s145 = sphi 0, %s149
                %p146 = scmp.ge.s32.totalorder %s145, 1
                %s150 = sphi %s139, %s139
                %s151 = sphi %s136, %s136
              $region35: #{vit_autoencoder_forward.3} parent=31 // loop_header_branch
                %148 = sbr.rel (%p146) target = $region39
              $region36: #{vit_autoencoder_forward.3} parent=31 // loop_body
                %v152 = vld [vmem:[%s150] sm:$0xff]
                %153 = vst [vmem:[%s151] sm:$0xff] %v152
                %v154 = vld [vmem:[%s150 + $0x8] sm:$0xff]
                %155 = vst [vmem:[%s151 + $0x8] sm:$0xff] %v154
                %v156 = vld [vmem:[%s150 + $0x10] sm:$0xff]
                %157 = vst [vmem:[%s151 + $0x10] sm:$0xff] %v156
                %v158 = vld [vmem:[%s150 + $0x18] sm:$0xff]
                %159 = vst [vmem:[%s151 + $0x18] sm:$0xff] %v158
                %v160 = vld [vmem:[%s150 + $0x20] sm:$0xff]
                %161 = vst [vmem:[%s151 + $0x20] sm:$0xff] %v160
                %v162 = vld [vmem:[%s150 + $0x28] sm:$0xff]
                %163 = vst [vmem:[%s151 + $0x28] sm:$0xff] %v162
                %v164 = vld [vmem:[%s150 + $0x30] sm:$0xff]
                %165 = vst [vmem:[%s151 + $0x30] sm:$0xff] %v164
                %v166 = vld [vmem:[%s150 + $0x38] sm:$0xff]
                %167 = vst [vmem:[%s151 + $0x38] sm:$0xff] %v166
                %v168 = vld [vmem:[%s150 + $0x40] sm:$0xff]
                %169 = vst [vmem:[%s151 + $0x40] sm:$0xff] %v168
                %v170 = vld [vmem:[%s150 + $0x48] sm:$0xff]
                %171 = vst [vmem:[%s151 + $0x48] sm:$0xff] %v170
                %v172 = vld [vmem:[%s150 + $0x50] sm:$0xff]
                %173 = vst [vmem:[%s151 + $0x50] sm:$0xff] %v172
                %v174 = vld [vmem:[%s150 + $0x58] sm:$0xff]
                %175 = vst [vmem:[%s151 + $0x58] sm:$0xff] %v174
                %v176 = vld [vmem:[%s150 + $0x60] sm:$0xff]
                %177 = vst [vmem:[%s151 + $0x60] sm:$0xff] %v176
                %v178 = vld [vmem:[%s150 + $0x68] sm:$0xff]
                %179 = vst [vmem:[%s151 + $0x68] sm:$0xff] %v178
                %v180 = vld [vmem:[%s150 + $0x70] sm:$0xff]
                %181 = vst [vmem:[%s151 + $0x70] sm:$0xff] %v180
                %v182 = vld [vmem:[%s150 + $0x78] sm:$0xff]
                %183 = vst [vmem:[%s151 + $0x78] sm:$0xff] %v182
                %v184 = vld [vmem:[%s150 + $0x80] sm:$0xff]
                %185 = vst [vmem:[%s151 + $0x80] sm:$0xff] %v184
                %v186 = vld [vmem:[%s150 + $0x88] sm:$0xff]
                %187 = vst [vmem:[%s151 + $0x88] sm:$0xff] %v186
                %v188 = vld [vmem:[%s150 + $0x90] sm:$0xff]
                %189 = vst [vmem:[%s151 + $0x90] sm:$0xff] %v188
                %v190 = vld [vmem:[%s150 + $0x98] sm:$0xff]
                %191 = vst [vmem:[%s151 + $0x98] sm:$0xff] %v190
                %v192 = vld [vmem:[%s150 + $0xa0] sm:$0xff]
                %193 = vst [vmem:[%s151 + $0xa0] sm:$0xff] %v192
                %v194 = vld [vmem:[%s150 + $0xa8] sm:$0xff]
                %195 = vst [vmem:[%s151 + $0xa8] sm:$0xff] %v194
                %v196 = vld [vmem:[%s150 + $0xb0] sm:$0xff]
                %197 = vst [vmem:[%s151 + $0xb0] sm:$0xff] %v196
                %v198 = vld [vmem:[%s150 + $0xb8] sm:$0xff]
                %199 = vst [vmem:[%s151 + $0xb8] sm:$0xff] %v198
                %v200 = vld [vmem:[%s150 + $0x180] sm:$0xff]
                %201 = vst [vmem:[%s151 + $0xc0] sm:$0xff] %v200
                %v202 = vld [vmem:[%s150 + $0x188] sm:$0xff]
                %203 = vst [vmem:[%s151 + $0xc8] sm:$0xff] %v202
                %v204 = vld [vmem:[%s150 + $0x190] sm:$0xff]
                %205 = vst [vmem:[%s151 + $0xd0] sm:$0xff] %v204
                %v206 = vld [vmem:[%s150 + $0x198] sm:$0xff]
                %207 = vst [vmem:[%s151 + $0xd8] sm:$0xff] %v206
                %v208 = vld [vmem:[%s150 + $0x1a0] sm:$0xff]
                %209 = vst [vmem:[%s151 + $0xe0] sm:$0xff] %v208
                %v210 = vld [vmem:[%s150 + $0x1a8] sm:$0xff]
                %211 = vst [vmem:[%s151 + $0xe8] sm:$0xff] %v210
                %v212 = vld [vmem:[%s150 + $0x1b0] sm:$0xff]
                %213 = vst [vmem:[%s151 + $0xf0] sm:$0xff] %v212
                %v214 = vld [vmem:[%s150 + $0x1b8] sm:$0xff]
                %215 = vst [vmem:[%s151 + $0xf8] sm:$0xff] %v214
                %v216 = vld [vmem:[%s150 + $0x1c0] sm:$0xff]
                %217 = vst [vmem:[%s151 + $0x100] sm:$0xff] %v216
                %v218 = vld [vmem:[%s150 + $0x1c8] sm:$0xff]
                %219 = vst [vmem:[%s151 + $0x108] sm:$0xff] %v218
                %v220 = vld [vmem:[%s150 + $0x1d0] sm:$0xff]
                %221 = vst [vmem:[%s151 + $0x110] sm:$0xff] %v220
                %v222 = vld [vmem:[%s150 + $0x1d8] sm:$0xff]
                %223 = vst [vmem:[%s151 + $0x118] sm:$0xff] %v222
                %v224 = vld [vmem:[%s150 + $0x1e0] sm:$0xff]
                %225 = vst [vmem:[%s151 + $0x120] sm:$0xff] %v224
                %v226 = vld [vmem:[%s150 + $0x1e8] sm:$0xff]
                %227 = vst [vmem:[%s151 + $0x128] sm:$0xff] %v226
                %v228 = vld [vmem:[%s150 + $0x1f0] sm:$0xff]
                %229 = vst [vmem:[%s151 + $0x130] sm:$0xff] %v228
                %v230 = vld [vmem:[%s150 + $0x1f8] sm:$0xff]
                %231 = vst [vmem:[%s151 + $0x138] sm:$0xff] %v230
                %v232 = vld [vmem:[%s150 + $0x200] sm:$0xff]
                %233 = vst [vmem:[%s151 + $0x140] sm:$0xff] %v232
                %v234 = vld [vmem:[%s150 + $0x208] sm:$0xff]
                %235 = vst [vmem:[%s151 + $0x148] sm:$0xff] %v234
                %v236 = vld [vmem:[%s150 + $0x210] sm:$0xff]
                %237 = vst [vmem:[%s151 + $0x150] sm:$0xff] %v236
                %v238 = vld [vmem:[%s150 + $0x218] sm:$0xff]
                %239 = vst [vmem:[%s151 + $0x158] sm:$0xff] %v238
                %v240 = vld [vmem:[%s150 + $0x220] sm:$0xff]
                %241 = vst [vmem:[%s151 + $0x160] sm:$0xff] %v240
                %v242 = vld [vmem:[%s150 + $0x228] sm:$0xff]
                %243 = vst [vmem:[%s151 + $0x168] sm:$0xff] %v242
                %v244 = vld [vmem:[%s150 + $0x230] sm:$0xff]
                %245 = vst [vmem:[%s151 + $0x170] sm:$0xff] %v244
                %v246 = vld [vmem:[%s150 + $0x238] sm:$0xff]
                %247 = vst [vmem:[%s151 + $0x178] sm:$0xff] %v246
                %v248 = vld [vmem:[%s150 + $0x300] sm:$0xff]
                %249 = vst [vmem:[%s151 + $0x180] sm:$0xff] %v248
                %v250 = vld [vmem:[%s150 + $0x308] sm:$0xff]
                %251 = vst [vmem:[%s151 + $0x188] sm:$0xff] %v250
                %v252 = vld [vmem:[%s150 + $0x310] sm:$0xff]
                %253 = vst [vmem:[%s151 + $0x190] sm:$0xff] %v252
                %v254 = vld [vmem:[%s150 + $0x318] sm:$0xff]
                %255 = vst [vmem:[%s151 + $0x198] sm:$0xff] %v254
                %v256 = vld [vmem:[%s150 + $0x320] sm:$0xff]
                %257 = vst [vmem:[%s151 + $0x1a0] sm:$0xff] %v256
                %v258 = vld [vmem:[%s150 + $0x328] sm:$0xff]
                %259 = vst [vmem:[%s151 + $0x1a8] sm:$0xff] %v258
                %v260 = vld [vmem:[%s150 + $0x330] sm:$0xff]
                %261 = vst [vmem:[%s151 + $0x1b0] sm:$0xff] %v260
                %v262 = vld [vmem:[%s150 + $0x338] sm:$0xff]
                %263 = vst [vmem:[%s151 + $0x1b8] sm:$0xff] %v262
                %v264 = vld [vmem:[%s150 + $0x340] sm:$0xff]
                %265 = vst [vmem:[%s151 + $0x1c0] sm:$0xff] %v264
                %v266 = vld [vmem:[%s150 + $0x348] sm:$0xff]
                %267 = vst [vmem:[%s151 + $0x1c8] sm:$0xff] %v266
                %v268 = vld [vmem:[%s150 + $0x350] sm:$0xff]
                %269 = vst [vmem:[%s151 + $0x1d0] sm:$0xff] %v268
                %v270 = vld [vmem:[%s150 + $0x358] sm:$0xff]
                %271 = vst [vmem:[%s151 + $0x1d8] sm:$0xff] %v270
                %v272 = vld [vmem:[%s150 + $0x360] sm:$0xff]
                %273 = vst [vmem:[%s151 + $0x1e0] sm:$0xff] %v272
                %v274 = vld [vmem:[%s150 + $0x368] sm:$0xff]
                %275 = vst [vmem:[%s151 + $0x1e8] sm:$0xff] %v274
                %v276 = vld [vmem:[%s150 + $0x370] sm:$0xff]
                %277 = vst [vmem:[%s151 + $0x1f0] sm:$0xff] %v276
                %v278 = vld [vmem:[%s150 + $0x378] sm:$0xff]
                %279 = vst [vmem:[%s151 + $0x1f8] sm:$0xff] %v278
                %v280 = vld [vmem:[%s150 + $0x380] sm:$0xff]
                %281 = vst [vmem:[%s151 + $0x200] sm:$0xff] %v280
                %v282 = vld [vmem:[%s150 + $0x388] sm:$0xff]
                %283 = vst [vmem:[%s151 + $0x208] sm:$0xff] %v282
                %v284 = vld [vmem:[%s150 + $0x390] sm:$0xff]
                %285 = vst [vmem:[%s151 + $0x210] sm:$0xff] %v284
                %v286 = vld [vmem:[%s150 + $0x398] sm:$0xff]
                %287 = vst [vmem:[%s151 + $0x218] sm:$0xff] %v286
                %v288 = vld [vmem:[%s150 + $0x3a0] sm:$0xff]
                %289 = vst [vmem:[%s151 + $0x220] sm:$0xff] %v288
                %v290 = vld [vmem:[%s150 + $0x3a8] sm:$0xff]
                %291 = vst [vmem:[%s151 + $0x228] sm:$0xff] %v290
                %v292 = vld [vmem:[%s150 + $0x3b0] sm:$0xff]
                %293 = vst [vmem:[%s151 + $0x230] sm:$0xff] %v292
                %v294 = vld [vmem:[%s150 + $0x3b8] sm:$0xff]
                %295 = vst [vmem:[%s151 + $0x238] sm:$0xff] %v294
                %v296 = vld [vmem:[%s150 + $0x480] sm:$0xff]
                %297 = vst [vmem:[%s151 + $0x240] sm:$0xff] %v296
                %v298 = vld [vmem:[%s150 + $0x488] sm:$0xff]
                %299 = vst [vmem:[%s151 + $0x248] sm:$0xff] %v298
                %v300 = vld [vmem:[%s150 + $0x490] sm:$0xff]
                %301 = vst [vmem:[%s151 + $0x250] sm:$0xff] %v300
                %v302 = vld [vmem:[%s150 + $0x498] sm:$0xff]
                %303 = vst [vmem:[%s151 + $0x258] sm:$0xff] %v302
                %v304 = vld [vmem:[%s150 + $0x4a0] sm:$0xff]
                %305 = vst [vmem:[%s151 + $0x260] sm:$0xff] %v304
                %v306 = vld [vmem:[%s150 + $0x4a8] sm:$0xff]
                %307 = vst [vmem:[%s151 + $0x268] sm:$0xff] %v306
                %v308 = vld [vmem:[%s150 + $0x4b0] sm:$0xff]
                %309 = vst [vmem:[%s151 + $0x270] sm:$0xff] %v308
                %v310 = vld [vmem:[%s150 + $0x4b8] sm:$0xff]
                %311 = vst [vmem:[%s151 + $0x278] sm:$0xff] %v310
                %v312 = vld [vmem:[%s150 + $0x4c0] sm:$0xff]
                %313 = vst [vmem:[%s151 + $0x280] sm:$0xff] %v312
                %v314 = vld [vmem:[%s150 + $0x4c8] sm:$0xff]
                %315 = vst [vmem:[%s151 + $0x288] sm:$0xff] %v314
                %v316 = vld [vmem:[%s150 + $0x4d0] sm:$0xff]
                %317 = vst [vmem:[%s151 + $0x290] sm:$0xff] %v316
                %v318 = vld [vmem:[%s150 + $0x4d8] sm:$0xff]
                %319 = vst [vmem:[%s151 + $0x298] sm:$0xff] %v318
                %v320 = vld [vmem:[%s150 + $0x4e0] sm:$0xff]
                %321 = vst [vmem:[%s151 + $0x2a0] sm:$0xff] %v320
                %v322 = vld [vmem:[%s150 + $0x4e8] sm:$0xff]
                %323 = vst [vmem:[%s151 + $0x2a8] sm:$0xff] %v322
                %v324 = vld [vmem:[%s150 + $0x4f0] sm:$0xff]
                %325 = vst [vmem:[%s151 + $0x2b0] sm:$0xff] %v324
                %v326 = vld [vmem:[%s150 + $0x4f8] sm:$0xff]
                %327 = vst [vmem:[%s151 + $0x2b8] sm:$0xff] %v326
                %v328 = vld [vmem:[%s150 + $0x500] sm:$0xff]
                %329 = vst [vmem:[%s151 + $0x2c0] sm:$0xff] %v328
                %v330 = vld [vmem:[%s150 + $0x508] sm:$0xff]
                %331 = vst [vmem:[%s151 + $0x2c8] sm:$0xff] %v330
                %v332 = vld [vmem:[%s150 + $0x510] sm:$0xff]
                %333 = vst [vmem:[%s151 + $0x2d0] sm:$0xff] %v332
                %v334 = vld [vmem:[%s150 + $0x518] sm:$0xff]
                %335 = vst [vmem:[%s151 + $0x2d8] sm:$0xff] %v334
                %v336 = vld [vmem:[%s150 + $0x520] sm:$0xff]
                %337 = vst [vmem:[%s151 + $0x2e0] sm:$0xff] %v336
                %v338 = vld [vmem:[%s150 + $0x528] sm:$0xff]
                %339 = vst [vmem:[%s151 + $0x2e8] sm:$0xff] %v338
                %v340 = vld [vmem:[%s150 + $0x530] sm:$0xff]
                %341 = vst [vmem:[%s151 + $0x2f0] sm:$0xff] %v340
                %v342 = vld [vmem:[%s150 + $0x538] sm:$0xff]
                %343 = vst [vmem:[%s151 + $0x2f8] sm:$0xff] %v342
                %v344 = vld [vmem:[%s150 + $0x600] sm:$0xff]
                %345 = vst [vmem:[%s151 + $0x300] sm:$0xff] %v344
                %v346 = vld [vmem:[%s150 + $0x608] sm:$0xff]
                %347 = vst [vmem:[%s151 + $0x308] sm:$0xff] %v346
                %v348 = vld [vmem:[%s150 + $0x610] sm:$0xff]
                %349 = vst [vmem:[%s151 + $0x310] sm:$0xff] %v348
                %v350 = vld [vmem:[%s150 + $0x618] sm:$0xff]
                %351 = vst [vmem:[%s151 + $0x318] sm:$0xff] %v350
                %v352 = vld [vmem:[%s150 + $0x620] sm:$0xff]
                %353 = vst [vmem:[%s151 + $0x320] sm:$0xff] %v352
                %v354 = vld [vmem:[%s150 + $0x628] sm:$0xff]
                %355 = vst [vmem:[%s151 + $0x328] sm:$0xff] %v354
                %v356 = vld [vmem:[%s150 + $0x630] sm:$0xff]
                %357 = vst [vmem:[%s151 + $0x330] sm:$0xff] %v356
                %v358 = vld [vmem:[%s150 + $0x638] sm:$0xff]
                %359 = vst [vmem:[%s151 + $0x338] sm:$0xff] %v358
                %v360 = vld [vmem:[%s150 + $0x640] sm:$0xff]
                %361 = vst [vmem:[%s151 + $0x340] sm:$0xff] %v360
                %v362 = vld [vmem:[%s150 + $0x648] sm:$0xff]
                %363 = vst [vmem:[%s151 + $0x348] sm:$0xff] %v362
                %v364 = vld [vmem:[%s150 + $0x650] sm:$0xff]
                %365 = vst [vmem:[%s151 + $0x350] sm:$0xff] %v364
                %v366 = vld [vmem:[%s150 + $0x658] sm:$0xff]
                %367 = vst [vmem:[%s151 + $0x358] sm:$0xff] %v366
                %v368 = vld [vmem:[%s150 + $0x660] sm:$0xff]
                %369 = vst [vmem:[%s151 + $0x360] sm:$0xff] %v368
                %v370 = vld [vmem:[%s150 + $0x668] sm:$0xff]
                %371 = vst [vmem:[%s151 + $0x368] sm:$0xff] %v370
                %v372 = vld [vmem:[%s150 + $0x670] sm:$0xff]
                %373 = vst [vmem:[%s151 + $0x370] sm:$0xff] %v372
                %v374 = vld [vmem:[%s150 + $0x678] sm:$0xff]
                %375 = vst [vmem:[%s151 + $0x378] sm:$0xff] %v374
                %v376 = vld [vmem:[%s150 + $0x680] sm:$0xff]
                %377 = vst [vmem:[%s151 + $0x380] sm:$0xff] %v376
                %v378 = vld [vmem:[%s150 + $0x688] sm:$0xff]
                %379 = vst [vmem:[%s151 + $0x388] sm:$0xff] %v378
                %v380 = vld [vmem:[%s150 + $0x690] sm:$0xff]
                %381 = vst [vmem:[%s151 + $0x390] sm:$0xff] %v380
                %v382 = vld [vmem:[%s150 + $0x698] sm:$0xff]
                %383 = vst [vmem:[%s151 + $0x398] sm:$0xff] %v382
                %v384 = vld [vmem:[%s150 + $0x6a0] sm:$0xff]
                %385 = vst [vmem:[%s151 + $0x3a0] sm:$0xff] %v384
                %v386 = vld [vmem:[%s150 + $0x6a8] sm:$0xff]
                %387 = vst [vmem:[%s151 + $0x3a8] sm:$0xff] %v386
                %v388 = vld [vmem:[%s150 + $0x6b0] sm:$0xff]
                %389 = vst [vmem:[%s151 + $0x3b0] sm:$0xff] %v388
                %v390 = vld [vmem:[%s150 + $0x6b8] sm:$0xff]
                %391 = vst [vmem:[%s151 + $0x3b8] sm:$0xff] %v390
                %v392 = vld [vmem:[%s150 + $0x780] sm:$0xff]
                %393 = vst [vmem:[%s151 + $0x3c0] sm:$0xff] %v392
                %v394 = vld [vmem:[%s150 + $0x788] sm:$0xff]
                %395 = vst [vmem:[%s151 + $0x3c8] sm:$0xff] %v394
                %v396 = vld [vmem:[%s150 + $0x790] sm:$0xff]
                %397 = vst [vmem:[%s151 + $0x3d0] sm:$0xff] %v396
                %v398 = vld [vmem:[%s150 + $0x798] sm:$0xff]
                %399 = vst [vmem:[%s151 + $0x3d8] sm:$0xff] %v398
                %v400 = vld [vmem:[%s150 + $0x7a0] sm:$0xff]
                %401 = vst [vmem:[%s151 + $0x3e0] sm:$0xff] %v400
                %v402 = vld [vmem:[%s150 + $0x7a8] sm:$0xff]
                %403 = vst [vmem:[%s151 + $0x3e8] sm:$0xff] %v402
                %v404 = vld [vmem:[%s150 + $0x7b0] sm:$0xff]
                %405 = vst [vmem:[%s151 + $0x3f0] sm:$0xff] %v404
                %v406 = vld [vmem:[%s150 + $0x7b8] sm:$0xff]
                %407 = vst [vmem:[%s151 + $0x3f8] sm:$0xff] %v406
                %v408 = vld [vmem:[%s150 + $0x7c0] sm:$0xff]
                %409 = vst [vmem:[%s151 + $0x400] sm:$0xff] %v408
                %v410 = vld [vmem:[%s150 + $0x7c8] sm:$0xff]
                %411 = vst [vmem:[%s151 + $0x408] sm:$0xff] %v410
                %v412 = vld [vmem:[%s150 + $0x7d0] sm:$0xff]
                %413 = vst [vmem:[%s151 + $0x410] sm:$0xff] %v412
                %v414 = vld [vmem:[%s150 + $0x7d8] sm:$0xff]
                %415 = vst [vmem:[%s151 + $0x418] sm:$0xff] %v414
                %v416 = vld [vmem:[%s150 + $0x7e0] sm:$0xff]
                %417 = vst [vmem:[%s151 + $0x420] sm:$0xff] %v416
                %v418 = vld [vmem:[%s150 + $0x7e8] sm:$0xff]
                %419 = vst [vmem:[%s151 + $0x428] sm:$0xff] %v418
                %v420 = vld [vmem:[%s150 + $0x7f0] sm:$0xff]
                %421 = vst [vmem:[%s151 + $0x430] sm:$0xff] %v420
                %v422 = vld [vmem:[%s150 + $0x7f8] sm:$0xff]
                %423 = vst [vmem:[%s151 + $0x438] sm:$0xff] %v422
                %v424 = vld [vmem:[%s150 + $0x800] sm:$0xff]
                %425 = vst [vmem:[%s151 + $0x440] sm:$0xff] %v424
                %v426 = vld [vmem:[%s150 + $0x808] sm:$0xff]
                %427 = vst [vmem:[%s151 + $0x448] sm:$0xff] %v426
                %v428 = vld [vmem:[%s150 + $0x810] sm:$0xff]
                %429 = vst [vmem:[%s151 + $0x450] sm:$0xff] %v428
                %v430 = vld [vmem:[%s150 + $0x818] sm:$0xff]
                %431 = vst [vmem:[%s151 + $0x458] sm:$0xff] %v430
                %v432 = vld [vmem:[%s150 + $0x820] sm:$0xff]
                %433 = vst [vmem:[%s151 + $0x460] sm:$0xff] %v432
                %v434 = vld [vmem:[%s150 + $0x828] sm:$0xff]
                %435 = vst [vmem:[%s151 + $0x468] sm:$0xff] %v434
                %v436 = vld [vmem:[%s150 + $0x830] sm:$0xff]
                %437 = vst [vmem:[%s151 + $0x470] sm:$0xff] %v436
                %v438 = vld [vmem:[%s150 + $0x838] sm:$0xff]
                %439 = vst [vmem:[%s151 + $0x478] sm:$0xff] %v438
                %v440 = vld [vmem:[%s150 + $0x900] sm:$0xff]
                %441 = vst [vmem:[%s151 + $0x480] sm:$0xff] %v440
                %v442 = vld [vmem:[%s150 + $0x908] sm:$0xff]
                %443 = vst [vmem:[%s151 + $0x488] sm:$0xff] %v442
                %v444 = vld [vmem:[%s150 + $0x910] sm:$0xff]
                %445 = vst [vmem:[%s151 + $0x490] sm:$0xff] %v444
                %v446 = vld [vmem:[%s150 + $0x918] sm:$0xff]
                %447 = vst [vmem:[%s151 + $0x498] sm:$0xff] %v446
                %v448 = vld [vmem:[%s150 + $0x920] sm:$0xff]
                %449 = vst [vmem:[%s151 + $0x4a0] sm:$0xff] %v448
                %v450 = vld [vmem:[%s150 + $0x928] sm:$0xff]
                %451 = vst [vmem:[%s151 + $0x4a8] sm:$0xff] %v450
                %v452 = vld [vmem:[%s150 + $0x930] sm:$0xff]
                %453 = vst [vmem:[%s151 + $0x4b0] sm:$0xff] %v452
                %v454 = vld [vmem:[%s150 + $0x938] sm:$0xff]
                %455 = vst [vmem:[%s151 + $0x4b8] sm:$0xff] %v454
                %v456 = vld [vmem:[%s150 + $0x940] sm:$0xff]
                %457 = vst [vmem:[%s151 + $0x4c0] sm:$0xff] %v456
                %v458 = vld [vmem:[%s150 + $0x948] sm:$0xff]
                %459 = vst [vmem:[%s151 + $0x4c8] sm:$0xff] %v458
                %v460 = vld [vmem:[%s150 + $0x950] sm:$0xff]
                %461 = vst [vmem:[%s151 + $0x4d0] sm:$0xff] %v460
                %v462 = vld [vmem:[%s150 + $0x958] sm:$0xff]
                %463 = vst [vmem:[%s151 + $0x4d8] sm:$0xff] %v462
                %v464 = vld [vmem:[%s150 + $0x960] sm:$0xff]
                %465 = vst [vmem:[%s151 + $0x4e0] sm:$0xff] %v464
                %v466 = vld [vmem:[%s150 + $0x968] sm:$0xff]
                %467 = vst [vmem:[%s151 + $0x4e8] sm:$0xff] %v466
                %v468 = vld [vmem:[%s150 + $0x970] sm:$0xff]
                %469 = vst [vmem:[%s151 + $0x4f0] sm:$0xff] %v468
                %v470 = vld [vmem:[%s150 + $0x978] sm:$0xff]
                %471 = vst [vmem:[%s151 + $0x4f8] sm:$0xff] %v470
                %v472 = vld [vmem:[%s150 + $0x980] sm:$0xff]
                %473 = vst [vmem:[%s151 + $0x500] sm:$0xff] %v472
                %v474 = vld [vmem:[%s150 + $0x988] sm:$0xff]
                %475 = vst [vmem:[%s151 + $0x508] sm:$0xff] %v474
                %v476 = vld [vmem:[%s150 + $0x990] sm:$0xff]
                %477 = vst [vmem:[%s151 + $0x510] sm:$0xff] %v476
                %v478 = vld [vmem:[%s150 + $0x998] sm:$0xff]
                %479 = vst [vmem:[%s151 + $0x518] sm:$0xff] %v478
                %v480 = vld [vmem:[%s150 + $0x9a0] sm:$0xff]
                %481 = vst [vmem:[%s151 + $0x520] sm:$0xff] %v480
                %v482 = vld [vmem:[%s150 + $0x9a8] sm:$0xff]
                %483 = vst [vmem:[%s151 + $0x528] sm:$0xff] %v482
                %v484 = vld [vmem:[%s150 + $0x9b0] sm:$0xff]
                %485 = vst [vmem:[%s151 + $0x530] sm:$0xff] %v484
                %v486 = vld [vmem:[%s150 + $0x9b8] sm:$0xff]
                %487 = vst [vmem:[%s151 + $0x538] sm:$0xff] %v486
                %v488 = vld [vmem:[%s150 + $0xa80] sm:$0xff]
                %489 = vst [vmem:[%s151 + $0x540] sm:$0xff] %v488
                %v490 = vld [vmem:[%s150 + $0xa88] sm:$0xff]
                %491 = vst [vmem:[%s151 + $0x548] sm:$0xff] %v490
                %v492 = vld [vmem:[%s150 + $0xa90] sm:$0xff]
                %493 = vst [vmem:[%s151 + $0x550] sm:$0xff] %v492
                %v494 = vld [vmem:[%s150 + $0xa98] sm:$0xff]
                %495 = vst [vmem:[%s151 + $0x558] sm:$0xff] %v494
                %v496 = vld [vmem:[%s150 + $0xaa0] sm:$0xff]
                %497 = vst [vmem:[%s151 + $0x560] sm:$0xff] %v496
                %v498 = vld [vmem:[%s150 + $0xaa8] sm:$0xff]
                %499 = vst [vmem:[%s151 + $0x568] sm:$0xff] %v498
                %v500 = vld [vmem:[%s150 + $0xab0] sm:$0xff]
                %501 = vst [vmem:[%s151 + $0x570] sm:$0xff] %v500
                %v502 = vld [vmem:[%s150 + $0xab8] sm:$0xff]
                %503 = vst [vmem:[%s151 + $0x578] sm:$0xff] %v502
                %v504 = vld [vmem:[%s150 + $0xac0] sm:$0xff]
                %505 = vst [vmem:[%s151 + $0x580] sm:$0xff] %v504
                %v506 = vld [vmem:[%s150 + $0xac8] sm:$0xff]
                %507 = vst [vmem:[%s151 + $0x588] sm:$0xff] %v506
                %v508 = vld [vmem:[%s150 + $0xad0] sm:$0xff]
                %509 = vst [vmem:[%s151 + $0x590] sm:$0xff] %v508
                %v510 = vld [vmem:[%s150 + $0xad8] sm:$0xff]
                %511 = vst [vmem:[%s151 + $0x598] sm:$0xff] %v510
                %v512 = vld [vmem:[%s150 + $0xae0] sm:$0xff]
                %513 = vst [vmem:[%s151 + $0x5a0] sm:$0xff] %v512
                %v514 = vld [vmem:[%s150 + $0xae8] sm:$0xff]
                %515 = vst [vmem:[%s151 + $0x5a8] sm:$0xff] %v514
                %v516 = vld [vmem:[%s150 + $0xaf0] sm:$0xff]
                %517 = vst [vmem:[%s151 + $0x5b0] sm:$0xff] %v516
                %v518 = vld [vmem:[%s150 + $0xaf8] sm:$0xff]
                %519 = vst [vmem:[%s151 + $0x5b8] sm:$0xff] %v518
                %v520 = vld [vmem:[%s150 + $0xb00] sm:$0xff]
                %521 = vst [vmem:[%s151 + $0x5c0] sm:$0xff] %v520
                %v522 = vld [vmem:[%s150 + $0xb08] sm:$0xff]
                %523 = vst [vmem:[%s151 + $0x5c8] sm:$0xff] %v522
                %v524 = vld [vmem:[%s150 + $0xb10] sm:$0xff]
                %525 = vst [vmem:[%s151 + $0x5d0] sm:$0xff] %v524
                %v526 = vld [vmem:[%s150 + $0xb18] sm:$0xff]
                %527 = vst [vmem:[%s151 + $0x5d8] sm:$0xff] %v526
                %v528 = vld [vmem:[%s150 + $0xb20] sm:$0xff]
                %529 = vst [vmem:[%s151 + $0x5e0] sm:$0xff] %v528
                %v530 = vld [vmem:[%s150 + $0xb28] sm:$0xff]
                %531 = vst [vmem:[%s151 + $0x5e8] sm:$0xff] %v530
                %v532 = vld [vmem:[%s150 + $0xb30] sm:$0xff]
                %533 = vst [vmem:[%s151 + $0x5f0] sm:$0xff] %v532
                %v534 = vld [vmem:[%s150 + $0xb38] sm:$0xff]
                %535 = vst [vmem:[%s151 + $0x5f8] sm:$0xff] %v534
              $region37: #{vit_autoencoder_forward.3} parent=31 // loop_footer
                %s149 = sadd.s32 1, %s145
              $region38: #{vit_autoencoder_forward.3} parent=31 // loop_footer_branch
                %144 = sbr.rel target = $region34
              $region39: #{vit_autoencoder_forward.3} parent=31 // loop_exit
                _
            $region32: #{vit_autoencoder_forward.3} parent=27 // pred_fallthru
              _
            // Predicated region
            $region40: #{vit_autoencoder_forward.3} parent=27 // pred_check
              _
            $region41: #{vit_autoencoder_forward.3} parent=27 // pred_check_branch
              %537 = sbr.rel target = $region43
            $region42: #{vit_autoencoder_forward.3} parent=27 // pred_region
              _
            $region43: #{vit_autoencoder_forward.3} parent=27 // pred_fallthru
              _
          $region28: #{vit_autoencoder_forward.3} parent=23 // pred_fallthru
            _
          %538 = vnop
        $region24: #{vit_autoencoder_forward.3} parent=19 // pred_fallthru
          _
        // Predicated region
        $region44: #{vit_autoencoder_forward.3} parent=19 // pred_check
          %p539 = pneg %p76
        $region45: #{vit_autoencoder_forward.3} parent=19 // pred_check_branch
          %541 = sbr.rel (%p539) target = $region47
        $region46: #{vit_autoencoder_forward.3} parent=19 // pred_region
          %s542 = smul.u32 48, %s9
          %p543 = scmp.lt.s32.totalorder %s542, 95
          %s544 = scalar_select %p543, %s542, 95
          %s545 = scalar_lea.vmem %s2, %s544
          %s546 = smul.u32 48, %s9
        $region47: #{vit_autoencoder_forward.3} parent=19 // pred_fallthru
          _
      $region20: #{vit_autoencoder_forward.3} parent=5 // pred_fallthru
        _
      %p547 = scmp.le.s32.totalorder 1, %s9
      %p548 = scmp.lt.s32.totalorder %s9, 3
      %p549 = pnand %p547, %p548
      %p550 = pneg %p549
      // Predicated region
      $region48: #{vit_autoencoder_forward.3} parent=5 // pred_check
        _
      $region49: #{vit_autoencoder_forward.3} parent=5 // pred_check_branch
        %552 = sbr.rel (%p549) target = $region51
      $region50: #{vit_autoencoder_forward.3} parent=5 // pred_region
        %s553 = ssub.s32 %s9, 1
        %s554 = sand.u32 %s43, 1
        %s555 = sand.u32 %s43, 1
        %s556 = smul.addr %s555, 1536
        %s557 = scalar_lea.vmem [#allocation2], %s556
        // Predicated region
        $region52: #{vit_autoencoder_forward.3} parent=50 // pred_check
          %p558 = pneg %p56
        $region53: #{vit_autoencoder_forward.3} parent=50 // pred_check_branch
          %560 = sbr.rel (%p558) target = $region55
        $region54: #{vit_autoencoder_forward.3} parent=50 // pred_region
          _
        $region55: #{vit_autoencoder_forward.3} parent=50 // pred_fallthru
          _
        %p561 = pneg %p30
        %p562 = pneg %p27
        %s563 = sand.u32 %s43, 1
        %s564 = sand.u32 %s43, 1
        %s565 = smul.addr %s564, 1536
        %s566 = scalar_lea.vmem [#allocation2], %s565
        %p567 = pneg %p56
        %p568 = pneg %p53
        %s569 = smul.u32 48, %s14
        %p570 = scmp.lt.s32.totalorder %s569, 95
        %s571 = scalar_select %p570, %s569, 95
        %s572 = scalar_lea.vmem %s2, %s571
        %p573 = pneg %p82
        %p574 = pneg %p79
        %p575 = pneg %p108
        %p576 = pneg %p105
        %s577 = smul.u32 48, %s14
        %p578 = scmp.lt.s32.totalorder %s577, 95
        %s579 = scalar_select %p578, %s577, 95
        %s580 = smul.addr %s579, 2
        %s581 = scalar_lea.vmem %s3, %s580
        %s582 = smul.u32 48, %s14
        %s583 = smul.u32 48, %s14
        %p584 = scmp.lt.s32.totalorder %s583, 95
        %s585 = scalar_select %p584, %s583, 95
        %s586 = scalar_lea.vmem %s2, %s585
        %s587 = smul.u32 48, %s14
        %s588 = smul.u32 48, %s14
        %p589 = scmp.lt.s32.totalorder %s588, 95
        %s590 = scalar_select %p589, %s588, 95
        %s591 = smul.addr %s590, 2
        %s592 = scalar_lea.vmem %s3, %s591
        %s593 = smul.u32 48, %s14
        %v595 = vld [vmem:[%s0] sm:$0x3]
        %v596 = vpack.c.bf16 %v595, %v595
        %v597 = vld [vmem:[%s557] sm:$0xff]
        %v598 = vld [vmem:[%s557 + $0x8] sm:$0xff]
        %v599 = vld [vmem:[%s557 + $0x10] sm:$0xff]
        %v600 = vld [vmem:[%s557 + $0x18] sm:$0xff]
        %v601 = vld [vmem:[%s557 + $0x20] sm:$0xff]
        %v602 = vld [vmem:[%s557 + $0x28] sm:$0xff]
        %v603 = vld [vmem:[%s557 + $0x30] sm:$0xff]
        %v604 = vld [vmem:[%s557 + $0x38] sm:$0xff]
        %v605 = vld [vmem:[%s557 + $0x40] sm:$0xff]
        %v606 = vld [vmem:[%s557 + $0x48] sm:$0xff]
        %v607 = vld [vmem:[%s557 + $0x50] sm:$0xff]
        %v608 = vld [vmem:[%s557 + $0x58] sm:$0xff]
        %v609 = vld [vmem:[%s557 + $0x60] sm:$0xff]
        %v610 = vld [vmem:[%s557 + $0x68] sm:$0xff]
        %v611 = vld [vmem:[%s557 + $0x70] sm:$0xff]
        %v612 = vld [vmem:[%s557 + $0x78] sm:$0xff]
        %v613 = vld [vmem:[%s557 + $0x80] sm:$0xff]
        %v614 = vld [vmem:[%s557 + $0x88] sm:$0xff]
        %v615 = vld [vmem:[%s557 + $0x90] sm:$0xff]
        %v616 = vld [vmem:[%s557 + $0x98] sm:$0xff]
        %v617 = vld [vmem:[%s557 + $0xa0] sm:$0xff]
        %v618 = vld [vmem:[%s557 + $0xa8] sm:$0xff]
        %v619 = vld [vmem:[%s557 + $0xb0] sm:$0xff]
        %v620 = vld [vmem:[%s557 + $0xb8] sm:$0xff]
        %v621 = vld [vmem:[%s557 + $0xc0] sm:$0xff]
        %v622 = vld [vmem:[%s557 + $0xc8] sm:$0xff]
        %v623 = vld [vmem:[%s557 + $0xd0] sm:$0xff]
        %v624 = vld [vmem:[%s557 + $0xd8] sm:$0xff]
        %v625 = vld [vmem:[%s557 + $0xe0] sm:$0xff]
        %v626 = vld [vmem:[%s557 + $0xe8] sm:$0xff]
        %v627 = vld [vmem:[%s557 + $0xf0] sm:$0xff]
        %v628 = vld [vmem:[%s557 + $0xf8] sm:$0xff]
        %v629 = vld [vmem:[%s557 + $0x100] sm:$0xff]
        %v630 = vld [vmem:[%s557 + $0x108] sm:$0xff]
        %v631 = vld [vmem:[%s557 + $0x110] sm:$0xff]
        %v632 = vld [vmem:[%s557 + $0x118] sm:$0xff]
        %v633 = vld [vmem:[%s557 + $0x120] sm:$0xff]
        %v634 = vld [vmem:[%s557 + $0x128] sm:$0xff]
        %v635 = vld [vmem:[%s557 + $0x130] sm:$0xff]
        %v636 = vld [vmem:[%s557 + $0x138] sm:$0xff]
        %v637 = vld [vmem:[%s557 + $0x140] sm:$0xff]
        %v638 = vld [vmem:[%s557 + $0x148] sm:$0xff]
        %v639 = vld [vmem:[%s557 + $0x150] sm:$0xff]
        %v640 = vld [vmem:[%s557 + $0x158] sm:$0xff]
        %v641 = vld [vmem:[%s557 + $0x160] sm:$0xff]
        %v642 = vld [vmem:[%s557 + $0x168] sm:$0xff]
        %v643 = vld [vmem:[%s557 + $0x170] sm:$0xff]
        %v644 = vld [vmem:[%s557 + $0x178] sm:$0xff]
        %v645 = vld [vmem:[%s557 + $0x180] sm:$0xff]
        %v646 = vld [vmem:[%s557 + $0x188] sm:$0xff]
        %v647 = vld [vmem:[%s557 + $0x190] sm:$0xff]
        %v648 = vld [vmem:[%s557 + $0x198] sm:$0xff]
        %v649 = vld [vmem:[%s557 + $0x1a0] sm:$0xff]
        %v650 = vld [vmem:[%s557 + $0x1a8] sm:$0xff]
        %v651 = vld [vmem:[%s557 + $0x1b0] sm:$0xff]
        %v652 = vld [vmem:[%s557 + $0x1b8] sm:$0xff]
        %v653 = vld [vmem:[%s557 + $0x1c0] sm:$0xff]
        %v654 = vld [vmem:[%s557 + $0x1c8] sm:$0xff]
        %v655 = vld [vmem:[%s557 + $0x1d0] sm:$0xff]
        %v656 = vld [vmem:[%s557 + $0x1d8] sm:$0xff]
        %v657 = vld [vmem:[%s557 + $0x1e0] sm:$0xff]
        %v658 = vld [vmem:[%s557 + $0x1e8] sm:$0xff]
        %v659 = vld [vmem:[%s557 + $0x1f0] sm:$0xff]
        %v660 = vld [vmem:[%s557 + $0x1f8] sm:$0xff]
        %v661 = vld [vmem:[%s557 + $0x200] sm:$0xff]
        %v662 = vld [vmem:[%s557 + $0x208] sm:$0xff]
        %v663 = vld [vmem:[%s557 + $0x210] sm:$0xff]
        %v664 = vld [vmem:[%s557 + $0x218] sm:$0xff]
        %v665 = vld [vmem:[%s557 + $0x220] sm:$0xff]
        %v666 = vld [vmem:[%s557 + $0x228] sm:$0xff]
        %v667 = vld [vmem:[%s557 + $0x230] sm:$0xff]
        %v668 = vld [vmem:[%s557 + $0x238] sm:$0xff]
        %v669 = vld [vmem:[%s557 + $0x240] sm:$0xff]
        %v670 = vld [vmem:[%s557 + $0x248] sm:$0xff]
        %v671 = vld [vmem:[%s557 + $0x250] sm:$0xff]
        %v672 = vld [vmem:[%s557 + $0x258] sm:$0xff]
        %v673 = vld [vmem:[%s557 + $0x260] sm:$0xff]
        %v674 = vld [vmem:[%s557 + $0x268] sm:$0xff]
        %v675 = vld [vmem:[%s557 + $0x270] sm:$0xff]
        %v676 = vld [vmem:[%s557 + $0x278] sm:$0xff]
        %v677 = vld [vmem:[%s557 + $0x280] sm:$0xff]
        %v678 = vld [vmem:[%s557 + $0x288] sm:$0xff]
        %v679 = vld [vmem:[%s557 + $0x290] sm:$0xff]
        %v680 = vld [vmem:[%s557 + $0x298] sm:$0xff]
        %v681 = vld [vmem:[%s557 + $0x2a0] sm:$0xff]
        %v682 = vld [vmem:[%s557 + $0x2a8] sm:$0xff]
        %v683 = vld [vmem:[%s557 + $0x2b0] sm:$0xff]
        %v684 = vld [vmem:[%s557 + $0x2b8] sm:$0xff]
        %v685 = vld [vmem:[%s557 + $0x2c0] sm:$0xff]
        %v686 = vld [vmem:[%s557 + $0x2c8] sm:$0xff]
        %v687 = vld [vmem:[%s557 + $0x2d0] sm:$0xff]
        %v688 = vld [vmem:[%s557 + $0x2d8] sm:$0xff]
        %v689 = vld [vmem:[%s557 + $0x2e0] sm:$0xff]
        %v690 = vld [vmem:[%s557 + $0x2e8] sm:$0xff]
        %v691 = vld [vmem:[%s557 + $0x2f0] sm:$0xff]
        %v692 = vld [vmem:[%s557 + $0x2f8] sm:$0xff]
        %v693 = vld [vmem:[%s557 + $0x300] sm:$0xff]
        %v694 = vld [vmem:[%s557 + $0x308] sm:$0xff]
        %v695 = vld [vmem:[%s557 + $0x310] sm:$0xff]
        %v696 = vld [vmem:[%s557 + $0x318] sm:$0xff]
        %v697 = vld [vmem:[%s557 + $0x320] sm:$0xff]
        %v698 = vld [vmem:[%s557 + $0x328] sm:$0xff]
        %v699 = vld [vmem:[%s557 + $0x330] sm:$0xff]
        %v700 = vld [vmem:[%s557 + $0x338] sm:$0xff]
        %v701 = vld [vmem:[%s557 + $0x340] sm:$0xff]
        %v702 = vld [vmem:[%s557 + $0x348] sm:$0xff]
        %v703 = vld [vmem:[%s557 + $0x350] sm:$0xff]
        %v704 = vld [vmem:[%s557 + $0x358] sm:$0xff]
        %v705 = vld [vmem:[%s557 + $0x360] sm:$0xff]
        %v706 = vld [vmem:[%s557 + $0x368] sm:$0xff]
        %v707 = vld [vmem:[%s557 + $0x370] sm:$0xff]
        %v708 = vld [vmem:[%s557 + $0x378] sm:$0xff]
        %v709 = vld [vmem:[%s557 + $0x380] sm:$0xff]
        %v710 = vld [vmem:[%s557 + $0x388] sm:$0xff]
        %v711 = vld [vmem:[%s557 + $0x390] sm:$0xff]
        %v712 = vld [vmem:[%s557 + $0x398] sm:$0xff]
        %v713 = vld [vmem:[%s557 + $0x3a0] sm:$0xff]
        %v714 = vld [vmem:[%s557 + $0x3a8] sm:$0xff]
        %v715 = vld [vmem:[%s557 + $0x3b0] sm:$0xff]
        %v716 = vld [vmem:[%s557 + $0x3b8] sm:$0xff]
        %v717 = vld [vmem:[%s557 + $0x3c0] sm:$0xff]
        %v718 = vld [vmem:[%s557 + $0x3c8] sm:$0xff]
        %v719 = vld [vmem:[%s557 + $0x3d0] sm:$0xff]
        %v720 = vld [vmem:[%s557 + $0x3d8] sm:$0xff]
        %v721 = vld [vmem:[%s557 + $0x3e0] sm:$0xff]
        %v722 = vld [vmem:[%s557 + $0x3e8] sm:$0xff]
        %v723 = vld [vmem:[%s557 + $0x3f0] sm:$0xff]
        %v724 = vld [vmem:[%s557 + $0x3f8] sm:$0xff]
        %v725 = vld [vmem:[%s557 + $0x400] sm:$0xff]
        %v726 = vld [vmem:[%s557 + $0x408] sm:$0xff]
        %v727 = vld [vmem:[%s557 + $0x410] sm:$0xff]
        %v728 = vld [vmem:[%s557 + $0x418] sm:$0xff]
        %v729 = vld [vmem:[%s557 + $0x420] sm:$0xff]
        %v730 = vld [vmem:[%s557 + $0x428] sm:$0xff]
        %v731 = vld [vmem:[%s557 + $0x430] sm:$0xff]
        %v732 = vld [vmem:[%s557 + $0x438] sm:$0xff]
        %v733 = vld [vmem:[%s557 + $0x440] sm:$0xff]
        %v734 = vld [vmem:[%s557 + $0x448] sm:$0xff]
        %v735 = vld [vmem:[%s557 + $0x450] sm:$0xff]
        %v736 = vld [vmem:[%s557 + $0x458] sm:$0xff]
        %v737 = vld [vmem:[%s557 + $0x460] sm:$0xff]
        %v738 = vld [vmem:[%s557 + $0x468] sm:$0xff]
        %v739 = vld [vmem:[%s557 + $0x470] sm:$0xff]
        %v740 = vld [vmem:[%s557 + $0x478] sm:$0xff]
        %v741 = vld [vmem:[%s557 + $0x480] sm:$0xff]
        %v742 = vld [vmem:[%s557 + $0x488] sm:$0xff]
        %v743 = vld [vmem:[%s557 + $0x490] sm:$0xff]
        %v744 = vld [vmem:[%s557 + $0x498] sm:$0xff]
        %v745 = vld [vmem:[%s557 + $0x4a0] sm:$0xff]
        %v746 = vld [vmem:[%s557 + $0x4a8] sm:$0xff]
        %v747 = vld [vmem:[%s557 + $0x4b0] sm:$0xff]
        %v748 = vld [vmem:[%s557 + $0x4b8] sm:$0xff]
        %v749 = vld [vmem:[%s557 + $0x4c0] sm:$0xff]
        %v750 = vld [vmem:[%s557 + $0x4c8] sm:$0xff]
        %v751 = vld [vmem:[%s557 + $0x4d0] sm:$0xff]
        %v752 = vld [vmem:[%s557 + $0x4d8] sm:$0xff]
        %v753 = vld [vmem:[%s557 + $0x4e0] sm:$0xff]
        %v754 = vld [vmem:[%s557 + $0x4e8] sm:$0xff]
        %v755 = vld [vmem:[%s557 + $0x4f0] sm:$0xff]
        %v756 = vld [vmem:[%s557 + $0x4f8] sm:$0xff]
        %v757 = vld [vmem:[%s557 + $0x500] sm:$0xff]
        %v758 = vld [vmem:[%s557 + $0x508] sm:$0xff]
        %v759 = vld [vmem:[%s557 + $0x510] sm:$0xff]
        %v760 = vld [vmem:[%s557 + $0x518] sm:$0xff]
        %v761 = vld [vmem:[%s557 + $0x520] sm:$0xff]
        %v762 = vld [vmem:[%s557 + $0x528] sm:$0xff]
        %v763 = vld [vmem:[%s557 + $0x530] sm:$0xff]
        %v764 = vld [vmem:[%s557 + $0x538] sm:$0xff]
        %v765 = vld [vmem:[%s557 + $0x540] sm:$0xff]
        %v766 = vld [vmem:[%s557 + $0x548] sm:$0xff]
        %v767 = vld [vmem:[%s557 + $0x550] sm:$0xff]
        %v768 = vld [vmem:[%s557 + $0x558] sm:$0xff]
        %v769 = vld [vmem:[%s557 + $0x560] sm:$0xff]
        %v770 = vld [vmem:[%s557 + $0x568] sm:$0xff]
        %v771 = vld [vmem:[%s557 + $0x570] sm:$0xff]
        %v772 = vld [vmem:[%s557 + $0x578] sm:$0xff]
        %v773 = vld [vmem:[%s557 + $0x580] sm:$0xff]
        %v774 = vld [vmem:[%s557 + $0x588] sm:$0xff]
        %v775 = vld [vmem:[%s557 + $0x590] sm:$0xff]
        %v776 = vld [vmem:[%s557 + $0x598] sm:$0xff]
        %v777 = vld [vmem:[%s557 + $0x5a0] sm:$0xff]
        %v778 = vld [vmem:[%s557 + $0x5a8] sm:$0xff]
        %v779 = vld [vmem:[%s557 + $0x5b0] sm:$0xff]
        %v780 = vld [vmem:[%s557 + $0x5b8] sm:$0xff]
        %v781 = vld [vmem:[%s557 + $0x5c0] sm:$0xff]
        %v782 = vld [vmem:[%s557 + $0x5c8] sm:$0xff]
        %v783 = vld [vmem:[%s557 + $0x5d0] sm:$0xff]
        %v784 = vld [vmem:[%s557 + $0x5d8] sm:$0xff]
        %v785 = vld [vmem:[%s557 + $0x5e0] sm:$0xff]
        %v786 = vld [vmem:[%s557 + $0x5e8] sm:$0xff]
        %v787 = vld [vmem:[%s557 + $0x5f0] sm:$0xff]
        %v788 = vld [vmem:[%s557 + $0x5f8] sm:$0xff]
        %v789 = vld [vmem:[%s586] sm:$0xff]
        %v790 = vld [vmem:[%s586 + $0x8] sm:$0xff]
        %v791 = vld [vmem:[%s586 + $0x10] sm:$0xff]
        %v792 = vld [vmem:[%s586 + $0x18] sm:$0xff]
        %v793 = vld [vmem:[%s586 + $0x20] sm:$0xff]
        %v794 = vld [vmem:[%s586 + $0x28] sm:$0xff]
        %v801 = vperm.slane %v789, 0
        %v802 = vperm.slane %v789, 1
        %v803 = vperm.slane %v789, 2
        %v804 = vperm.slane %v789, 3
        %v805 = vperm.slane %v789, 4
        %v806 = vperm.slane %v789, 5
        %v807 = vperm.slane %v789, 6
        %v808 = vperm.slane %v789, 7
        %v809 = vperm.slane %v790, 0
        %v810 = vperm.slane %v790, 1
        %v811 = vperm.slane %v790, 2
        %v812 = vperm.slane %v790, 3
        %v813 = vperm.slane %v790, 4
        %v814 = vperm.slane %v790, 5
        %v815 = vperm.slane %v790, 6
        %v816 = vperm.slane %v790, 7
        %v817 = vperm.slane %v791, 0
        %v818 = vperm.slane %v791, 1
        %v819 = vperm.slane %v791, 2
        %v820 = vperm.slane %v791, 3
        %v821 = vperm.slane %v791, 4
        %v822 = vperm.slane %v791, 5
        %v823 = vperm.slane %v791, 6
        %v824 = vperm.slane %v791, 7
        %v825 = vperm.slane %v792, 0
        %v826 = vperm.slane %v792, 1
        %v827 = vperm.slane %v792, 2
        %v828 = vperm.slane %v792, 3
        %v829 = vperm.slane %v792, 4
        %v830 = vperm.slane %v792, 5
        %v831 = vperm.slane %v792, 6
        %v832 = vperm.slane %v792, 7
        %v833 = vperm.slane %v793, 0
        %v834 = vperm.slane %v793, 1
        %v835 = vperm.slane %v793, 2
        %v836 = vperm.slane %v793, 3
        %v837 = vperm.slane %v793, 4
        %v838 = vperm.slane %v793, 5
        %v839 = vperm.slane %v793, 6
        %v840 = vperm.slane %v793, 7
        %v841 = vperm.slane %v794, 0
        %v842 = vperm.slane %v794, 1
        %v843 = vperm.slane %v794, 2
        %v844 = vperm.slane %v794, 3
        %v845 = vperm.slane %v794, 4
        %v846 = vperm.slane %v794, 5
        %v847 = vperm.slane %v794, 6
        %v848 = vperm.slane %v794, 7
        %v1089 = vunpack.c.l.b16 %v597
        %v1090 = vunpack.c.h.b16 %v597
        %v1091 = vunpack.c.l.b16 %v598
        %v1092 = vunpack.c.h.b16 %v598
        %v1093 = vunpack.c.l.b16 %v599
        %v1094 = vunpack.c.h.b16 %v599
        %v1095 = vunpack.c.l.b16 %v600
        %v1096 = vunpack.c.h.b16 %v600
        %v1097 = vunpack.c.l.b16 %v601
        %v1098 = vunpack.c.h.b16 %v601
        %v1099 = vunpack.c.l.b16 %v602
        %v1100 = vunpack.c.h.b16 %v602
        %v1101 = vunpack.c.l.b16 %v603
        %v1102 = vunpack.c.h.b16 %v603
        %v1103 = vunpack.c.l.b16 %v604
        %v1104 = vunpack.c.h.b16 %v604
        %v1105 = vunpack.c.l.b16 %v605
        %v1106 = vunpack.c.h.b16 %v605
        %v1107 = vunpack.c.l.b16 %v606
        %v1108 = vunpack.c.h.b16 %v606
        %v1109 = vunpack.c.l.b16 %v607
        %v1110 = vunpack.c.h.b16 %v607
        %v1111 = vunpack.c.l.b16 %v608
        %v1112 = vunpack.c.h.b16 %v608
        %v1113 = vunpack.c.l.b16 %v609
        %v1114 = vunpack.c.h.b16 %v609
        %v1115 = vunpack.c.l.b16 %v610
        %v1116 = vunpack.c.h.b16 %v610
        %v1117 = vunpack.c.l.b16 %v611
        %v1118 = vunpack.c.h.b16 %v611
        %v1119 = vunpack.c.l.b16 %v612
        %v1120 = vunpack.c.h.b16 %v612
        %v1121 = vunpack.c.l.b16 %v613
        %v1122 = vunpack.c.h.b16 %v613
        %v1123 = vunpack.c.l.b16 %v614
        %v1124 = vunpack.c.h.b16 %v614
        %v1125 = vunpack.c.l.b16 %v615
        %v1126 = vunpack.c.h.b16 %v615
        %v1127 = vunpack.c.l.b16 %v616
        %v1128 = vunpack.c.h.b16 %v616
        %v1129 = vunpack.c.l.b16 %v617
        %v1130 = vunpack.c.h.b16 %v617
        %v1131 = vunpack.c.l.b16 %v618
        %v1132 = vunpack.c.h.b16 %v618
        %v1133 = vunpack.c.l.b16 %v619
        %v1134 = vunpack.c.h.b16 %v619
        %v1135 = vunpack.c.l.b16 %v620
        %v1136 = vunpack.c.h.b16 %v620
        %v1137 = vunpack.c.l.b16 %v621
        %v1138 = vunpack.c.h.b16 %v621
        %v1139 = vunpack.c.l.b16 %v622
        %v1140 = vunpack.c.h.b16 %v622
        %v1141 = vunpack.c.l.b16 %v623
        %v1142 = vunpack.c.h.b16 %v623
        %v1143 = vunpack.c.l.b16 %v624
        %v1144 = vunpack.c.h.b16 %v624
        %v1145 = vunpack.c.l.b16 %v625
        %v1146 = vunpack.c.h.b16 %v625
        %v1147 = vunpack.c.l.b16 %v626
        %v1148 = vunpack.c.h.b16 %v626
        %v1149 = vunpack.c.l.b16 %v627
        %v1150 = vunpack.c.h.b16 %v627
        %v1151 = vunpack.c.l.b16 %v628
        %v1152 = vunpack.c.h.b16 %v628
        %v1153 = vunpack.c.l.b16 %v629
        %v1154 = vunpack.c.h.b16 %v629
        %v1155 = vunpack.c.l.b16 %v630
        %v1156 = vunpack.c.h.b16 %v630
        %v1157 = vunpack.c.l.b16 %v631
        %v1158 = vunpack.c.h.b16 %v631
        %v1159 = vunpack.c.l.b16 %v632
        %v1160 = vunpack.c.h.b16 %v632
        %v1161 = vunpack.c.l.b16 %v633
        %v1162 = vunpack.c.h.b16 %v633
        %v1163 = vunpack.c.l.b16 %v634
        %v1164 = vunpack.c.h.b16 %v634
        %v1165 = vunpack.c.l.b16 %v635
        %v1166 = vunpack.c.h.b16 %v635
        %v1167 = vunpack.c.l.b16 %v636
        %v1168 = vunpack.c.h.b16 %v636
        %v1169 = vunpack.c.l.b16 %v637
        %v1170 = vunpack.c.h.b16 %v637
        %v1171 = vunpack.c.l.b16 %v638
        %v1172 = vunpack.c.h.b16 %v638
        %v1173 = vunpack.c.l.b16 %v639
        %v1174 = vunpack.c.h.b16 %v639
        %v1175 = vunpack.c.l.b16 %v640
        %v1176 = vunpack.c.h.b16 %v640
        %v1177 = vunpack.c.l.b16 %v641
        %v1178 = vunpack.c.h.b16 %v641
        %v1179 = vunpack.c.l.b16 %v642
        %v1180 = vunpack.c.h.b16 %v642
        %v1181 = vunpack.c.l.b16 %v643
        %v1182 = vunpack.c.h.b16 %v643
        %v1183 = vunpack.c.l.b16 %v644
        %v1184 = vunpack.c.h.b16 %v644
        %v1185 = vunpack.c.l.b16 %v645
        %v1186 = vunpack.c.h.b16 %v645
        %v1187 = vunpack.c.l.b16 %v646
        %v1188 = vunpack.c.h.b16 %v646
        %v1189 = vunpack.c.l.b16 %v647
        %v1190 = vunpack.c.h.b16 %v647
        %v1191 = vunpack.c.l.b16 %v648
        %v1192 = vunpack.c.h.b16 %v648
        %v1193 = vunpack.c.l.b16 %v649
        %v1194 = vunpack.c.h.b16 %v649
        %v1195 = vunpack.c.l.b16 %v650
        %v1196 = vunpack.c.h.b16 %v650
        %v1197 = vunpack.c.l.b16 %v651
        %v1198 = vunpack.c.h.b16 %v651
        %v1199 = vunpack.c.l.b16 %v652
        %v1200 = vunpack.c.h.b16 %v652
        %v1201 = vunpack.c.l.b16 %v653
        %v1202 = vunpack.c.h.b16 %v653
        %v1203 = vunpack.c.l.b16 %v654
        %v1204 = vunpack.c.h.b16 %v654
        %v1205 = vunpack.c.l.b16 %v655
        %v1206 = vunpack.c.h.b16 %v655
        %v1207 = vunpack.c.l.b16 %v656
        %v1208 = vunpack.c.h.b16 %v656
        %v1209 = vunpack.c.l.b16 %v657
        %v1210 = vunpack.c.h.b16 %v657
        %v1211 = vunpack.c.l.b16 %v658
        %v1212 = vunpack.c.h.b16 %v658
        %v1213 = vunpack.c.l.b16 %v659
        %v1214 = vunpack.c.h.b16 %v659
        %v1215 = vunpack.c.l.b16 %v660
        %v1216 = vunpack.c.h.b16 %v660
        %v1217 = vunpack.c.l.b16 %v661
        %v1218 = vunpack.c.h.b16 %v661
        %v1219 = vunpack.c.l.b16 %v662
        %v1220 = vunpack.c.h.b16 %v662
        %v1221 = vunpack.c.l.b16 %v663
        %v1222 = vunpack.c.h.b16 %v663
        %v1223 = vunpack.c.l.b16 %v664
        %v1224 = vunpack.c.h.b16 %v664
        %v1225 = vunpack.c.l.b16 %v665
        %v1226 = vunpack.c.h.b16 %v665
        %v1227 = vunpack.c.l.b16 %v666
        %v1228 = vunpack.c.h.b16 %v666
        %v1229 = vunpack.c.l.b16 %v667
        %v1230 = vunpack.c.h.b16 %v667
        %v1231 = vunpack.c.l.b16 %v668
        %v1232 = vunpack.c.h.b16 %v668
        %v1233 = vunpack.c.l.b16 %v669
        %v1234 = vunpack.c.h.b16 %v669
        %v1235 = vunpack.c.l.b16 %v670
        %v1236 = vunpack.c.h.b16 %v670
        %v1237 = vunpack.c.l.b16 %v671
        %v1238 = vunpack.c.h.b16 %v671
        %v1239 = vunpack.c.l.b16 %v672
        %v1240 = vunpack.c.h.b16 %v672
        %v1241 = vunpack.c.l.b16 %v673
        %v1242 = vunpack.c.h.b16 %v673
        %v1243 = vunpack.c.l.b16 %v674
        %v1244 = vunpack.c.h.b16 %v674
        %v1245 = vunpack.c.l.b16 %v675
        %v1246 = vunpack.c.h.b16 %v675
        %v1247 = vunpack.c.l.b16 %v676
        %v1248 = vunpack.c.h.b16 %v676
        %v1249 = vunpack.c.l.b16 %v677
        %v1250 = vunpack.c.h.b16 %v677
        %v1251 = vunpack.c.l.b16 %v678
        %v1252 = vunpack.c.h.b16 %v678
        %v1253 = vunpack.c.l.b16 %v679
        %v1254 = vunpack.c.h.b16 %v679
        %v1255 = vunpack.c.l.b16 %v680
        %v1256 = vunpack.c.h.b16 %v680
        %v1257 = vunpack.c.l.b16 %v681
        %v1258 = vunpack.c.h.b16 %v681
        %v1259 = vunpack.c.l.b16 %v682
        %v1260 = vunpack.c.h.b16 %v682
        %v1261 = vunpack.c.l.b16 %v683
        %v1262 = vunpack.c.h.b16 %v683
        %v1263 = vunpack.c.l.b16 %v684
        %v1264 = vunpack.c.h.b16 %v684
        %v1265 = vunpack.c.l.b16 %v685
        %v1266 = vunpack.c.h.b16 %v685
        %v1267 = vunpack.c.l.b16 %v686
        %v1268 = vunpack.c.h.b16 %v686
        %v1269 = vunpack.c.l.b16 %v687
        %v1270 = vunpack.c.h.b16 %v687
        %v1271 = vunpack.c.l.b16 %v688
        %v1272 = vunpack.c.h.b16 %v688
        %v1273 = vunpack.c.l.b16 %v689
        %v1274 = vunpack.c.h.b16 %v689
        %v1275 = vunpack.c.l.b16 %v690
        %v1276 = vunpack.c.h.b16 %v690
        %v1277 = vunpack.c.l.b16 %v691
        %v1278 = vunpack.c.h.b16 %v691
        %v1279 = vunpack.c.l.b16 %v692
        %v1280 = vunpack.c.h.b16 %v692
        %v1281 = vunpack.c.l.b16 %v693
        %v1282 = vunpack.c.h.b16 %v693
        %v1283 = vunpack.c.l.b16 %v694
        %v1284 = vunpack.c.h.b16 %v694
        %v1285 = vunpack.c.l.b16 %v695
        %v1286 = vunpack.c.h.b16 %v695
        %v1287 = vunpack.c.l.b16 %v696
        %v1288 = vunpack.c.h.b16 %v696
        %v1289 = vunpack.c.l.b16 %v697
        %v1290 = vunpack.c.h.b16 %v697
        %v1291 = vunpack.c.l.b16 %v698
        %v1292 = vunpack.c.h.b16 %v698
        %v1293 = vunpack.c.l.b16 %v699
        %v1294 = vunpack.c.h.b16 %v699
        %v1295 = vunpack.c.l.b16 %v700
        %v1296 = vunpack.c.h.b16 %v700
        %v1297 = vunpack.c.l.b16 %v701
        %v1298 = vunpack.c.h.b16 %v701
        %v1299 = vunpack.c.l.b16 %v702
        %v1300 = vunpack.c.h.b16 %v702
        %v1301 = vunpack.c.l.b16 %v703
        %v1302 = vunpack.c.h.b16 %v703
        %v1303 = vunpack.c.l.b16 %v704
        %v1304 = vunpack.c.h.b16 %v704
        %v1305 = vunpack.c.l.b16 %v705
        %v1306 = vunpack.c.h.b16 %v705
        %v1307 = vunpack.c.l.b16 %v706
        %v1308 = vunpack.c.h.b16 %v706
        %v1309 = vunpack.c.l.b16 %v707
        %v1310 = vunpack.c.h.b16 %v707
        %v1311 = vunpack.c.l.b16 %v708
        %v1312 = vunpack.c.h.b16 %v708
        %v1313 = vunpack.c.l.b16 %v709
        %v1314 = vunpack.c.h.b16 %v709
        %v1315 = vunpack.c.l.b16 %v710
        %v1316 = vunpack.c.h.b16 %v710
        %v1317 = vunpack.c.l.b16 %v711
        %v1318 = vunpack.c.h.b16 %v711
        %v1319 = vunpack.c.l.b16 %v712
        %v1320 = vunpack.c.h.b16 %v712
        %v1321 = vunpack.c.l.b16 %v713
        %v1322 = vunpack.c.h.b16 %v713
        %v1323 = vunpack.c.l.b16 %v714
        %v1324 = vunpack.c.h.b16 %v714
        %v1325 = vunpack.c.l.b16 %v715
        %v1326 = vunpack.c.h.b16 %v715
        %v1327 = vunpack.c.l.b16 %v716
        %v1328 = vunpack.c.h.b16 %v716
        %v1329 = vunpack.c.l.b16 %v717
        %v1330 = vunpack.c.h.b16 %v717
        %v1331 = vunpack.c.l.b16 %v718
        %v1332 = vunpack.c.h.b16 %v718
        %v1333 = vunpack.c.l.b16 %v719
        %v1334 = vunpack.c.h.b16 %v719
        %v1335 = vunpack.c.l.b16 %v720
        %v1336 = vunpack.c.h.b16 %v720
        %v1337 = vunpack.c.l.b16 %v721
        %v1338 = vunpack.c.h.b16 %v721
        %v1339 = vunpack.c.l.b16 %v722
        %v1340 = vunpack.c.h.b16 %v722
        %v1341 = vunpack.c.l.b16 %v723
        %v1342 = vunpack.c.h.b16 %v723
        %v1343 = vunpack.c.l.b16 %v724
        %v1344 = vunpack.c.h.b16 %v724
        %v1345 = vunpack.c.l.b16 %v725
        %v1346 = vunpack.c.h.b16 %v725
        %v1347 = vunpack.c.l.b16 %v726
        %v1348 = vunpack.c.h.b16 %v726
        %v1349 = vunpack.c.l.b16 %v727
        %v1350 = vunpack.c.h.b16 %v727
        %v1351 = vunpack.c.l.b16 %v728
        %v1352 = vunpack.c.h.b16 %v728
        %v1353 = vunpack.c.l.b16 %v729
        %v1354 = vunpack.c.h.b16 %v729
        %v1355 = vunpack.c.l.b16 %v730
        %v1356 = vunpack.c.h.b16 %v730
        %v1357 = vunpack.c.l.b16 %v731
        %v1358 = vunpack.c.h.b16 %v731
        %v1359 = vunpack.c.l.b16 %v732
        %v1360 = vunpack.c.h.b16 %v732
        %v1361 = vunpack.c.l.b16 %v733
        %v1362 = vunpack.c.h.b16 %v733
        %v1363 = vunpack.c.l.b16 %v734
        %v1364 = vunpack.c.h.b16 %v734
        %v1365 = vunpack.c.l.b16 %v735
        %v1366 = vunpack.c.h.b16 %v735
        %v1367 = vunpack.c.l.b16 %v736
        %v1368 = vunpack.c.h.b16 %v736
        %v1369 = vunpack.c.l.b16 %v737
        %v1370 = vunpack.c.h.b16 %v737
        %v1371 = vunpack.c.l.b16 %v738
        %v1372 = vunpack.c.h.b16 %v738
        %v1373 = vunpack.c.l.b16 %v739
        %v1374 = vunpack.c.h.b16 %v739
        %v1375 = vunpack.c.l.b16 %v740
        %v1376 = vunpack.c.h.b16 %v740
        %v1377 = vunpack.c.l.b16 %v741
        %v1378 = vunpack.c.h.b16 %v741
        %v1379 = vunpack.c.l.b16 %v742
        %v1380 = vunpack.c.h.b16 %v742
        %v1381 = vunpack.c.l.b16 %v743
        %v1382 = vunpack.c.h.b16 %v743
        %v1383 = vunpack.c.l.b16 %v744
        %v1384 = vunpack.c.h.b16 %v744
        %v1385 = vunpack.c.l.b16 %v745
        %v1386 = vunpack.c.h.b16 %v745
        %v1387 = vunpack.c.l.b16 %v746
        %v1388 = vunpack.c.h.b16 %v746
        %v1389 = vunpack.c.l.b16 %v747
        %v1390 = vunpack.c.h.b16 %v747
        %v1391 = vunpack.c.l.b16 %v748
        %v1392 = vunpack.c.h.b16 %v748
        %v1393 = vunpack.c.l.b16 %v749
        %v1394 = vunpack.c.h.b16 %v749
        %v1395 = vunpack.c.l.b16 %v750
        %v1396 = vunpack.c.h.b16 %v750
        %v1397 = vunpack.c.l.b16 %v751
        %v1398 = vunpack.c.h.b16 %v751
        %v1399 = vunpack.c.l.b16 %v752
        %v1400 = vunpack.c.h.b16 %v752
        %v1401 = vunpack.c.l.b16 %v753
        %v1402 = vunpack.c.h.b16 %v753
        %v1403 = vunpack.c.l.b16 %v754
        %v1404 = vunpack.c.h.b16 %v754
        %v1405 = vunpack.c.l.b16 %v755
        %v1406 = vunpack.c.h.b16 %v755
        %v1407 = vunpack.c.l.b16 %v756
        %v1408 = vunpack.c.h.b16 %v756
        %v1409 = vunpack.c.l.b16 %v757
        %v1410 = vunpack.c.h.b16 %v757
        %v1411 = vunpack.c.l.b16 %v758
        %v1412 = vunpack.c.h.b16 %v758
        %v1413 = vunpack.c.l.b16 %v759
        %v1414 = vunpack.c.h.b16 %v759
        %v1415 = vunpack.c.l.b16 %v760
        %v1416 = vunpack.c.h.b16 %v760
        %v1417 = vunpack.c.l.b16 %v761
        %v1418 = vunpack.c.h.b16 %v761
        %v1419 = vunpack.c.l.b16 %v762
        %v1420 = vunpack.c.h.b16 %v762
        %v1421 = vunpack.c.l.b16 %v763
        %v1422 = vunpack.c.h.b16 %v763
        %v1423 = vunpack.c.l.b16 %v764
        %v1424 = vunpack.c.h.b16 %v764
        %v1425 = vunpack.c.l.b16 %v765
        %v1426 = vunpack.c.h.b16 %v765
        %v1427 = vunpack.c.l.b16 %v766
        %v1428 = vunpack.c.h.b16 %v766
        %v1429 = vunpack.c.l.b16 %v767
        %v1430 = vunpack.c.h.b16 %v767
        %v1431 = vunpack.c.l.b16 %v768
        %v1432 = vunpack.c.h.b16 %v768
        %v1433 = vunpack.c.l.b16 %v769
        %v1434 = vunpack.c.h.b16 %v769
        %v1435 = vunpack.c.l.b16 %v770
        %v1436 = vunpack.c.h.b16 %v770
        %v1437 = vunpack.c.l.b16 %v771
        %v1438 = vunpack.c.h.b16 %v771
        %v1439 = vunpack.c.l.b16 %v772
        %v1440 = vunpack.c.h.b16 %v772
        %v1441 = vunpack.c.l.b16 %v773
        %v1442 = vunpack.c.h.b16 %v773
        %v1443 = vunpack.c.l.b16 %v774
        %v1444 = vunpack.c.h.b16 %v774
        %v1445 = vunpack.c.l.b16 %v775
        %v1446 = vunpack.c.h.b16 %v775
        %v1447 = vunpack.c.l.b16 %v776
        %v1448 = vunpack.c.h.b16 %v776
        %v1449 = vunpack.c.l.b16 %v777
        %v1450 = vunpack.c.h.b16 %v777
        %v1451 = vunpack.c.l.b16 %v778
        %v1452 = vunpack.c.h.b16 %v778
        %v1453 = vunpack.c.l.b16 %v779
        %v1454 = vunpack.c.h.b16 %v779
        %v1455 = vunpack.c.l.b16 %v780
        %v1456 = vunpack.c.h.b16 %v780
        %v1457 = vunpack.c.l.b16 %v781
        %v1458 = vunpack.c.h.b16 %v781
        %v1459 = vunpack.c.l.b16 %v782
        %v1460 = vunpack.c.h.b16 %v782
        %v1461 = vunpack.c.l.b16 %v783
        %v1462 = vunpack.c.h.b16 %v783
        %v1463 = vunpack.c.l.b16 %v784
        %v1464 = vunpack.c.h.b16 %v784
        %v1465 = vunpack.c.l.b16 %v785
        %v1466 = vunpack.c.h.b16 %v785
        %v1467 = vunpack.c.l.b16 %v786
        %v1468 = vunpack.c.h.b16 %v786
        %v1469 = vunpack.c.l.b16 %v787
        %v1470 = vunpack.c.h.b16 %v787
        %v1471 = vunpack.c.l.b16 %v788
        %v1472 = vunpack.c.h.b16 %v788
        %v1473 = vpack.c.b16 %v1137, %v1089
        %v1474 = vpack.c.b16 %v1138, %v1090
        %v1475 = vpack.c.b16 %v1139, %v1091
        %v1476 = vpack.c.b16 %v1140, %v1092
        %v1477 = vpack.c.b16 %v1141, %v1093
        %v1478 = vpack.c.b16 %v1142, %v1094
        %v1479 = vpack.c.b16 %v1143, %v1095
        %v1480 = vpack.c.b16 %v1144, %v1096
        %v1481 = vpack.c.b16 %v1145, %v1097
        %v1482 = vpack.c.b16 %v1146, %v1098
        %v1483 = vpack.c.b16 %v1147, %v1099
        %v1484 = vpack.c.b16 %v1148, %v1100
        %v1485 = vpack.c.b16 %v1149, %v1101
        %v1486 = vpack.c.b16 %v1150, %v1102
        %v1487 = vpack.c.b16 %v1151, %v1103
        %v1488 = vpack.c.b16 %v1152, %v1104
        %v1489 = vpack.c.b16 %v1153, %v1105
        %v1490 = vpack.c.b16 %v1154, %v1106
        %v1491 = vpack.c.b16 %v1155, %v1107
        %v1492 = vpack.c.b16 %v1156, %v1108
        %v1493 = vpack.c.b16 %v1157, %v1109
        %v1494 = vpack.c.b16 %v1158, %v1110
        %v1495 = vpack.c.b16 %v1159, %v1111
        %v1496 = vpack.c.b16 %v1160, %v1112
        %v1497 = vpack.c.b16 %v1161, %v1113
        %v1498 = vpack.c.b16 %v1162, %v1114
        %v1499 = vpack.c.b16 %v1163, %v1115
        %v1500 = vpack.c.b16 %v1164, %v1116
        %v1501 = vpack.c.b16 %v1165, %v1117
        %v1502 = vpack.c.b16 %v1166, %v1118
        %v1503 = vpack.c.b16 %v1167, %v1119
        %v1504 = vpack.c.b16 %v1168, %v1120
        %v1505 = vpack.c.b16 %v1169, %v1121
        %v1506 = vpack.c.b16 %v1170, %v1122
        %v1507 = vpack.c.b16 %v1171, %v1123
        %v1508 = vpack.c.b16 %v1172, %v1124
        %v1509 = vpack.c.b16 %v1173, %v1125
        %v1510 = vpack.c.b16 %v1174, %v1126
        %v1511 = vpack.c.b16 %v1175, %v1127
        %v1512 = vpack.c.b16 %v1176, %v1128
        %v1513 = vpack.c.b16 %v1177, %v1129
        %v1514 = vpack.c.b16 %v1178, %v1130
        %v1515 = vpack.c.b16 %v1179, %v1131
        %v1516 = vpack.c.b16 %v1180, %v1132
        %v1517 = vpack.c.b16 %v1181, %v1133
        %v1518 = vpack.c.b16 %v1182, %v1134
        %v1519 = vpack.c.b16 %v1183, %v1135
        %v1520 = vpack.c.b16 %v1184, %v1136
        %v1521 = vpack.c.b16 %v1233, %v1185
        %v1522 = vpack.c.b16 %v1234, %v1186
        %v1523 = vpack.c.b16 %v1235, %v1187
        %v1524 = vpack.c.b16 %v1236, %v1188
        %v1525 = vpack.c.b16 %v1237, %v1189
        %v1526 = vpack.c.b16 %v1238, %v1190
        %v1527 = vpack.c.b16 %v1239, %v1191
        %v1528 = vpack.c.b16 %v1240, %v1192
        %v1529 = vpack.c.b16 %v1241, %v1193
        %v1530 = vpack.c.b16 %v1242, %v1194
        %v1531 = vpack.c.b16 %v1243, %v1195
        %v1532 = vpack.c.b16 %v1244, %v1196
        %v1533 = vpack.c.b16 %v1245, %v1197
        %v1534 = vpack.c.b16 %v1246, %v1198
        %v1535 = vpack.c.b16 %v1247, %v1199
        %v1536 = vpack.c.b16 %v1248, %v1200
        %v1537 = vpack.c.b16 %v1249, %v1201
        %v1538 = vpack.c.b16 %v1250, %v1202
        %v1539 = vpack.c.b16 %v1251, %v1203
        %v1540 = vpack.c.b16 %v1252, %v1204
        %v1541 = vpack.c.b16 %v1253, %v1205
        %v1542 = vpack.c.b16 %v1254, %v1206
        %v1543 = vpack.c.b16 %v1255, %v1207
        %v1544 = vpack.c.b16 %v1256, %v1208
        %v1545 = vpack.c.b16 %v1257, %v1209
        %v1546 = vpack.c.b16 %v1258, %v1210
        %v1547 = vpack.c.b16 %v1259, %v1211
        %v1548 = vpack.c.b16 %v1260, %v1212
        %v1549 = vpack.c.b16 %v1261, %v1213
        %v1550 = vpack.c.b16 %v1262, %v1214
        %v1551 = vpack.c.b16 %v1263, %v1215
        %v1552 = vpack.c.b16 %v1264, %v1216
        %v1553 = vpack.c.b16 %v1265, %v1217
        %v1554 = vpack.c.b16 %v1266, %v1218
        %v1555 = vpack.c.b16 %v1267, %v1219
        %v1556 = vpack.c.b16 %v1268, %v1220
        %v1557 = vpack.c.b16 %v1269, %v1221
        %v1558 = vpack.c.b16 %v1270, %v1222
        %v1559 = vpack.c.b16 %v1271, %v1223
        %v1560 = vpack.c.b16 %v1272, %v1224
        %v1561 = vpack.c.b16 %v1273, %v1225
        %v1562 = vpack.c.b16 %v1274, %v1226
        %v1563 = vpack.c.b16 %v1275, %v1227
        %v1564 = vpack.c.b16 %v1276, %v1228
        %v1565 = vpack.c.b16 %v1277, %v1229
        %v1566 = vpack.c.b16 %v1278, %v1230
        %v1567 = vpack.c.b16 %v1279, %v1231
        %v1568 = vpack.c.b16 %v1280, %v1232
        %v1569 = vpack.c.b16 %v1329, %v1281
        %v1570 = vpack.c.b16 %v1330, %v1282
        %v1571 = vpack.c.b16 %v1331, %v1283
        %v1572 = vpack.c.b16 %v1332, %v1284
        %v1573 = vpack.c.b16 %v1333, %v1285
        %v1574 = vpack.c.b16 %v1334, %v1286
        %v1575 = vpack.c.b16 %v1335, %v1287
        %v1576 = vpack.c.b16 %v1336, %v1288
        %v1577 = vpack.c.b16 %v1337, %v1289
        %v1578 = vpack.c.b16 %v1338, %v1290
        %v1579 = vpack.c.b16 %v1339, %v1291
        %v1580 = vpack.c.b16 %v1340, %v1292
        %v1581 = vpack.c.b16 %v1341, %v1293
        %v1582 = vpack.c.b16 %v1342, %v1294
        %v1583 = vpack.c.b16 %v1343, %v1295
        %v1584 = vpack.c.b16 %v1344, %v1296
        %v1585 = vpack.c.b16 %v1345, %v1297
        %v1586 = vpack.c.b16 %v1346, %v1298
        %v1587 = vpack.c.b16 %v1347, %v1299
        %v1588 = vpack.c.b16 %v1348, %v1300
        %v1589 = vpack.c.b16 %v1349, %v1301
        %v1590 = vpack.c.b16 %v1350, %v1302
        %v1591 = vpack.c.b16 %v1351, %v1303
        %v1592 = vpack.c.b16 %v1352, %v1304
        %v1593 = vpack.c.b16 %v1353, %v1305
        %v1594 = vpack.c.b16 %v1354, %v1306
        %v1595 = vpack.c.b16 %v1355, %v1307
        %v1596 = vpack.c.b16 %v1356, %v1308
        %v1597 = vpack.c.b16 %v1357, %v1309
        %v1598 = vpack.c.b16 %v1358, %v1310
        %v1599 = vpack.c.b16 %v1359, %v1311
        %v1600 = vpack.c.b16 %v1360, %v1312
        %v1601 = vpack.c.b16 %v1361, %v1313
        %v1602 = vpack.c.b16 %v1362, %v1314
        %v1603 = vpack.c.b16 %v1363, %v1315
        %v1604 = vpack.c.b16 %v1364, %v1316
        %v1605 = vpack.c.b16 %v1365, %v1317
        %v1606 = vpack.c.b16 %v1366, %v1318
        %v1607 = vpack.c.b16 %v1367, %v1319
        %v1608 = vpack.c.b16 %v1368, %v1320
        %v1609 = vpack.c.b16 %v1369, %v1321
        %v1610 = vpack.c.b16 %v1370, %v1322
        %v1611 = vpack.c.b16 %v1371, %v1323
        %v1612 = vpack.c.b16 %v1372, %v1324
        %v1613 = vpack.c.b16 %v1373, %v1325
        %v1614 = vpack.c.b16 %v1374, %v1326
        %v1615 = vpack.c.b16 %v1375, %v1327
        %v1616 = vpack.c.b16 %v1376, %v1328
        %v1617 = vpack.c.b16 %v1425, %v1377
        %v1618 = vpack.c.b16 %v1426, %v1378
        %v1619 = vpack.c.b16 %v1427, %v1379
        %v1620 = vpack.c.b16 %v1428, %v1380
        %v1621 = vpack.c.b16 %v1429, %v1381
        %v1622 = vpack.c.b16 %v1430, %v1382
        %v1623 = vpack.c.b16 %v1431, %v1383
        %v1624 = vpack.c.b16 %v1432, %v1384
        %v1625 = vpack.c.b16 %v1433, %v1385
        %v1626 = vpack.c.b16 %v1434, %v1386
        %v1627 = vpack.c.b16 %v1435, %v1387
        %v1628 = vpack.c.b16 %v1436, %v1388
        %v1629 = vpack.c.b16 %v1437, %v1389
        %v1630 = vpack.c.b16 %v1438, %v1390
        %v1631 = vpack.c.b16 %v1439, %v1391
        %v1632 = vpack.c.b16 %v1440, %v1392
        %v1633 = vpack.c.b16 %v1441, %v1393
        %v1634 = vpack.c.b16 %v1442, %v1394
        %v1635 = vpack.c.b16 %v1443, %v1395
        %v1636 = vpack.c.b16 %v1444, %v1396
        %v1637 = vpack.c.b16 %v1445, %v1397
        %v1638 = vpack.c.b16 %v1446, %v1398
        %v1639 = vpack.c.b16 %v1447, %v1399
        %v1640 = vpack.c.b16 %v1448, %v1400
        %v1641 = vpack.c.b16 %v1449, %v1401
        %v1642 = vpack.c.b16 %v1450, %v1402
        %v1643 = vpack.c.b16 %v1451, %v1403
        %v1644 = vpack.c.b16 %v1452, %v1404
        %v1645 = vpack.c.b16 %v1453, %v1405
        %v1646 = vpack.c.b16 %v1454, %v1406
        %v1647 = vpack.c.b16 %v1455, %v1407
        %v1648 = vpack.c.b16 %v1456, %v1408
        %v1649 = vpack.c.b16 %v1457, %v1409
        %v1650 = vpack.c.b16 %v1458, %v1410
        %v1651 = vpack.c.b16 %v1459, %v1411
        %v1652 = vpack.c.b16 %v1460, %v1412
        %v1653 = vpack.c.b16 %v1461, %v1413
        %v1654 = vpack.c.b16 %v1462, %v1414
        %v1655 = vpack.c.b16 %v1463, %v1415
        %v1656 = vpack.c.b16 %v1464, %v1416
        %v1657 = vpack.c.b16 %v1465, %v1417
        %v1658 = vpack.c.b16 %v1466, %v1418
        %v1659 = vpack.c.b16 %v1467, %v1419
        %v1660 = vpack.c.b16 %v1468, %v1420
        %v1661 = vpack.c.b16 %v1469, %v1421
        %v1662 = vpack.c.b16 %v1470, %v1422
        %v1663 = vpack.c.b16 %v1471, %v1423
        %v1664 = vpack.c.b16 %v1472, %v1424
        %vm1857 = vcmask 523264
        %v1859 = vsel %vm1857, %v596, 0
        %1861 = vmatpush.bf16.msra.mxu0 0
        %1862 = vmatpush.bf16.msra.mxu0 0
        %1863 = vmatpush.bf16.msra.mxu0 0
        %1864 = vmatpush.bf16.msra.mxu0 0
        %1865 = vmatpush.bf16.msra.mxu0 %v1617
        %1866 = vmatpush.bf16.msra.mxu0 %v1569
        %1867 = vmatpush.bf16.msra.mxu0 %v1521
        %1868 = vmatpush.bf16.msra.mxu0 %v1473
        %1869 = vmatmul.bf16.gmra.mxu0 %v1859
        %v1870 = vpop.f32.mrf.mxu0
        %v1871 = vadd.f32 %v801, %v1870
        %v1872 = vpop.f32.mrf.mxu0
        %1873 = vdwg.mxu0
        %1874 = vmatpush.bf16.msra.mxu0 0
        %1875 = vmatpush.bf16.msra.mxu0 0
        %1876 = vmatpush.bf16.msra.mxu0 0
        %1877 = vmatpush.bf16.msra.mxu0 0
        %1878 = vmatpush.bf16.msra.mxu0 %v1618
        %1879 = vmatpush.bf16.msra.mxu0 %v1570
        %1880 = vmatpush.bf16.msra.mxu0 %v1522
        %1881 = vmatpush.bf16.msra.mxu0 %v1474
        %1882 = vmatmul.bf16.gmra.mxu0 %v1859
        %v1883 = vpop.f32.mrf.mxu0
        %v1884 = vadd.f32 %v802, %v1883
        %v1885 = vpop.f32.mrf.mxu0
        %1886 = vdwg.mxu0
        %1887 = vmatpush.bf16.msra.mxu0 0
        %1888 = vmatpush.bf16.msra.mxu0 0
        %1889 = vmatpush.bf16.msra.mxu0 0
        %1890 = vmatpush.bf16.msra.mxu0 0
        %1891 = vmatpush.bf16.msra.mxu0 %v1619
        %1892 = vmatpush.bf16.msra.mxu0 %v1571
        %1893 = vmatpush.bf16.msra.mxu0 %v1523
        %1894 = vmatpush.bf16.msra.mxu0 %v1475
        %1895 = vmatmul.bf16.gmra.mxu0 %v1859
        %v1896 = vpop.f32.mrf.mxu0
        %v1897 = vadd.f32 %v803, %v1896
        %v1898 = vpop.f32.mrf.mxu0
        %1899 = vdwg.mxu0
        %1900 = vmatpush.bf16.msra.mxu0 0
        %1901 = vmatpush.bf16.msra.mxu0 0
        %1902 = vmatpush.bf16.msra.mxu0 0
        %1903 = vmatpush.bf16.msra.mxu0 0
        %1904 = vmatpush.bf16.msra.mxu0 %v1620
        %1905 = vmatpush.bf16.msra.mxu0 %v1572
        %1906 = vmatpush.bf16.msra.mxu0 %v1524
        %1907 = vmatpush.bf16.msra.mxu0 %v1476
        %1908 = vmatmul.bf16.gmra.mxu0 %v1859
        %v1909 = vpop.f32.mrf.mxu0
        %v1910 = vadd.f32 %v804, %v1909
        %v1911 = vpop.f32.mrf.mxu0
        %1912 = vdwg.mxu0
        %1913 = vmatpush.bf16.msra.mxu0 0
        %1914 = vmatpush.bf16.msra.mxu0 0
        %1915 = vmatpush.bf16.msra.mxu0 0
        %1916 = vmatpush.bf16.msra.mxu0 0
        %1917 = vmatpush.bf16.msra.mxu0 %v1621
        %1918 = vmatpush.bf16.msra.mxu0 %v1573
        %1919 = vmatpush.bf16.msra.mxu0 %v1525
        %1920 = vmatpush.bf16.msra.mxu0 %v1477
        %1921 = vmatmul.bf16.gmra.mxu0 %v1859
        %v1922 = vpop.f32.mrf.mxu0
        %v1923 = vadd.f32 %v805, %v1922
        %v1924 = vpop.f32.mrf.mxu0
        %1925 = vdwg.mxu0
        %1926 = vmatpush.bf16.msra.mxu0 0
        %1927 = vmatpush.bf16.msra.mxu0 0
        %1928 = vmatpush.bf16.msra.mxu0 0
        %1929 = vmatpush.bf16.msra.mxu0 0
        %1930 = vmatpush.bf16.msra.mxu0 %v1622
        %1931 = vmatpush.bf16.msra.mxu0 %v1574
        %1932 = vmatpush.bf16.msra.mxu0 %v1526
        %1933 = vmatpush.bf16.msra.mxu0 %v1478
        %1934 = vmatmul.bf16.gmra.mxu0 %v1859
        %v1935 = vpop.f32.mrf.mxu0
        %v1936 = vadd.f32 %v806, %v1935
        %v1937 = vpop.f32.mrf.mxu0
        %1938 = vdwg.mxu0
        %1939 = vmatpush.bf16.msra.mxu0 0
        %1940 = vmatpush.bf16.msra.mxu0 0
        %1941 = vmatpush.bf16.msra.mxu0 0
        %1942 = vmatpush.bf16.msra.mxu0 0
        %1943 = vmatpush.bf16.msra.mxu0 %v1623
        %1944 = vmatpush.bf16.msra.mxu0 %v1575
        %1945 = vmatpush.bf16.msra.mxu0 %v1527
        %1946 = vmatpush.bf16.msra.mxu0 %v1479
        %1947 = vmatmul.bf16.gmra.mxu0 %v1859
        %v1948 = vpop.f32.mrf.mxu0
        %v1949 = vadd.f32 %v807, %v1948
        %v1950 = vpop.f32.mrf.mxu0
        %1951 = vdwg.mxu0
        %1952 = vmatpush.bf16.msra.mxu0 0
        %1953 = vmatpush.bf16.msra.mxu0 0
        %1954 = vmatpush.bf16.msra.mxu0 0
        %1955 = vmatpush.bf16.msra.mxu0 0
        %1956 = vmatpush.bf16.msra.mxu0 %v1624
        %1957 = vmatpush.bf16.msra.mxu0 %v1576
        %1958 = vmatpush.bf16.msra.mxu0 %v1528
        %1959 = vmatpush.bf16.msra.mxu0 %v1480
        %1960 = vmatmul.bf16.gmra.mxu0 %v1859
        %v1961 = vpop.f32.mrf.mxu0
        %v1962 = vadd.f32 %v808, %v1961
        %v1963 = vpop.f32.mrf.mxu0
        %1964 = vdwg.mxu0
        %1965 = vmatpush.bf16.msra.mxu0 0
        %1966 = vmatpush.bf16.msra.mxu0 0
        %1967 = vmatpush.bf16.msra.mxu0 0
        %1968 = vmatpush.bf16.msra.mxu0 0
        %1969 = vmatpush.bf16.msra.mxu0 %v1625
        %1970 = vmatpush.bf16.msra.mxu0 %v1577
        %1971 = vmatpush.bf16.msra.mxu0 %v1529
        %1972 = vmatpush.bf16.msra.mxu0 %v1481
        %1973 = vmatmul.bf16.gmra.mxu0 %v1859
        %v1974 = vpop.f32.mrf.mxu0
        %v1975 = vadd.f32 %v809, %v1974
        %v1976 = vpop.f32.mrf.mxu0
        %1977 = vdwg.mxu0
        %1978 = vmatpush.bf16.msra.mxu0 0
        %1979 = vmatpush.bf16.msra.mxu0 0
        %1980 = vmatpush.bf16.msra.mxu0 0
        %1981 = vmatpush.bf16.msra.mxu0 0
        %1982 = vmatpush.bf16.msra.mxu0 %v1626
        %1983 = vmatpush.bf16.msra.mxu0 %v1578
        %1984 = vmatpush.bf16.msra.mxu0 %v1530
        %1985 = vmatpush.bf16.msra.mxu0 %v1482
        %1986 = vmatmul.bf16.gmra.mxu0 %v1859
        %v1987 = vpop.f32.mrf.mxu0
        %v1988 = vadd.f32 %v810, %v1987
        %v1989 = vpop.f32.mrf.mxu0
        %1990 = vdwg.mxu0
        %1991 = vmatpush.bf16.msra.mxu0 0
        %1992 = vmatpush.bf16.msra.mxu0 0
        %1993 = vmatpush.bf16.msra.mxu0 0
        %1994 = vmatpush.bf16.msra.mxu0 0
        %1995 = vmatpush.bf16.msra.mxu0 %v1627
        %1996 = vmatpush.bf16.msra.mxu0 %v1579
        %1997 = vmatpush.bf16.msra.mxu0 %v1531
        %1998 = vmatpush.bf16.msra.mxu0 %v1483
        %1999 = vmatmul.bf16.gmra.mxu0 %v1859
        %v2000 = vpop.f32.mrf.mxu0
        %v2001 = vadd.f32 %v811, %v2000
        %v2002 = vpop.f32.mrf.mxu0
        %2003 = vdwg.mxu0
        %2004 = vmatpush.bf16.msra.mxu0 0
        %2005 = vmatpush.bf16.msra.mxu0 0
        %2006 = vmatpush.bf16.msra.mxu0 0
        %2007 = vmatpush.bf16.msra.mxu0 0
        %2008 = vmatpush.bf16.msra.mxu0 %v1628
        %2009 = vmatpush.bf16.msra.mxu0 %v1580
        %2010 = vmatpush.bf16.msra.mxu0 %v1532
        %2011 = vmatpush.bf16.msra.mxu0 %v1484
        %2012 = vmatmul.bf16.gmra.mxu0 %v1859
        %v2013 = vpop.f32.mrf.mxu0
        %v2014 = vadd.f32 %v812, %v2013
        %v2015 = vpop.f32.mrf.mxu0
        %2016 = vdwg.mxu0
        %2017 = vmatpush.bf16.msra.mxu0 0
        %2018 = vmatpush.bf16.msra.mxu0 0
        %2019 = vmatpush.bf16.msra.mxu0 0
        %2020 = vmatpush.bf16.msra.mxu0 0
        %2021 = vmatpush.bf16.msra.mxu0 %v1629
        %2022 = vmatpush.bf16.msra.mxu0 %v1581
        %2023 = vmatpush.bf16.msra.mxu0 %v1533
        %2024 = vmatpush.bf16.msra.mxu0 %v1485
        %2025 = vmatmul.bf16.gmra.mxu0 %v1859
        %v2026 = vpop.f32.mrf.mxu0
        %v2027 = vadd.f32 %v813, %v2026
        %v2028 = vpop.f32.mrf.mxu0
        %2029 = vdwg.mxu0
        %2030 = vmatpush.bf16.msra.mxu0 0
        %2031 = vmatpush.bf16.msra.mxu0 0
        %2032 = vmatpush.bf16.msra.mxu0 0
        %2033 = vmatpush.bf16.msra.mxu0 0
        %2034 = vmatpush.bf16.msra.mxu0 %v1630
        %2035 = vmatpush.bf16.msra.mxu0 %v1582
        %2036 = vmatpush.bf16.msra.mxu0 %v1534
        %2037 = vmatpush.bf16.msra.mxu0 %v1486
        %2038 = vmatmul.bf16.gmra.mxu0 %v1859
        %v2039 = vpop.f32.mrf.mxu0
        %v2040 = vadd.f32 %v814, %v2039
        %v2041 = vpop.f32.mrf.mxu0
        %2042 = vdwg.mxu0
        %2043 = vmatpush.bf16.msra.mxu0 0
        %2044 = vmatpush.bf16.msra.mxu0 0
        %2045 = vmatpush.bf16.msra.mxu0 0
        %2046 = vmatpush.bf16.msra.mxu0 0
        %2047 = vmatpush.bf16.msra.mxu0 %v1631
        %2048 = vmatpush.bf16.msra.mxu0 %v1583
        %2049 = vmatpush.bf16.msra.mxu0 %v1535
        %2050 = vmatpush.bf16.msra.mxu0 %v1487
        %2051 = vmatmul.bf16.gmra.mxu0 %v1859
        %v2052 = vpop.f32.mrf.mxu0
        %v2053 = vadd.f32 %v815, %v2052
        %v2054 = vpop.f32.mrf.mxu0
        %2055 = vdwg.mxu0
        %2056 = vmatpush.bf16.msra.mxu0 0
        %2057 = vmatpush.bf16.msra.mxu0 0
        %2058 = vmatpush.bf16.msra.mxu0 0
        %2059 = vmatpush.bf16.msra.mxu0 0
        %2060 = vmatpush.bf16.msra.mxu0 %v1632
        %2061 = vmatpush.bf16.msra.mxu0 %v1584
        %2062 = vmatpush.bf16.msra.mxu0 %v1536
        %2063 = vmatpush.bf16.msra.mxu0 %v1488
        %2064 = vmatmul.bf16.gmra.mxu0 %v1859
        %v2065 = vpop.f32.mrf.mxu0
        %v2066 = vadd.f32 %v816, %v2065
        %v2067 = vpop.f32.mrf.mxu0
        %2068 = vdwg.mxu0
        %2069 = vmatpush.bf16.msra.mxu0 0
        %2070 = vmatpush.bf16.msra.mxu0 0
        %2071 = vmatpush.bf16.msra.mxu0 0
        %2072 = vmatpush.bf16.msra.mxu0 0
        %2073 = vmatpush.bf16.msra.mxu0 %v1633
        %2074 = vmatpush.bf16.msra.mxu0 %v1585
        %2075 = vmatpush.bf16.msra.mxu0 %v1537
        %2076 = vmatpush.bf16.msra.mxu0 %v1489
        %2077 = vmatmul.bf16.gmra.mxu0 %v1859
        %v2078 = vpop.f32.mrf.mxu0
        %v2079 = vadd.f32 %v817, %v2078
        %v2080 = vpop.f32.mrf.mxu0
        %2081 = vdwg.mxu0
        %2082 = vmatpush.bf16.msra.mxu0 0
        %2083 = vmatpush.bf16.msra.mxu0 0
        %2084 = vmatpush.bf16.msra.mxu0 0
        %2085 = vmatpush.bf16.msra.mxu0 0
        %2086 = vmatpush.bf16.msra.mxu0 %v1634
        %2087 = vmatpush.bf16.msra.mxu0 %v1586
        %2088 = vmatpush.bf16.msra.mxu0 %v1538
        %2089 = vmatpush.bf16.msra.mxu0 %v1490
        %2090 = vmatmul.bf16.gmra.mxu0 %v1859
        %v2091 = vpop.f32.mrf.mxu0
        %v2092 = vadd.f32 %v818, %v2091
        %v2093 = vpop.f32.mrf.mxu0
        %2094 = vdwg.mxu0
        %2095 = vmatpush.bf16.msra.mxu0 0
        %2096 = vmatpush.bf16.msra.mxu0 0
        %2097 = vmatpush.bf16.msra.mxu0 0
        %2098 = vmatpush.bf16.msra.mxu0 0
        %2099 = vmatpush.bf16.msra.mxu0 %v1635
        %2100 = vmatpush.bf16.msra.mxu0 %v1587
        %2101 = vmatpush.bf16.msra.mxu0 %v1539
        %2102 = vmatpush.bf16.msra.mxu0 %v1491
        %2103 = vmatmul.bf16.gmra.mxu0 %v1859
        %v2104 = vpop.f32.mrf.mxu0
        %v2105 = vadd.f32 %v819, %v2104
        %v2106 = vpop.f32.mrf.mxu0
        %2107 = vdwg.mxu0
        %2108 = vmatpush.bf16.msra.mxu0 0
        %2109 = vmatpush.bf16.msra.mxu0 0
        %2110 = vmatpush.bf16.msra.mxu0 0
        %2111 = vmatpush.bf16.msra.mxu0 0
        %2112 = vmatpush.bf16.msra.mxu0 %v1636
        %2113 = vmatpush.bf16.msra.mxu0 %v1588
        %2114 = vmatpush.bf16.msra.mxu0 %v1540
        %2115 = vmatpush.bf16.msra.mxu0 %v1492
        %2116 = vmatmul.bf16.gmra.mxu0 %v1859
        %v2117 = vpop.f32.mrf.mxu0
        %v2118 = vadd.f32 %v820, %v2117
        %v2119 = vpop.f32.mrf.mxu0
        %2120 = vdwg.mxu0
        %2121 = vmatpush.bf16.msra.mxu0 0
        %2122 = vmatpush.bf16.msra.mxu0 0
        %2123 = vmatpush.bf16.msra.mxu0 0
        %2124 = vmatpush.bf16.msra.mxu0 0
        %2125 = vmatpush.bf16.msra.mxu0 %v1637
        %2126 = vmatpush.bf16.msra.mxu0 %v1589
        %2127 = vmatpush.bf16.msra.mxu0 %v1541
        %2128 = vmatpush.bf16.msra.mxu0 %v1493
        %2129 = vmatmul.bf16.gmra.mxu0 %v1859
        %v2130 = vpop.f32.mrf.mxu0
        %v2131 = vadd.f32 %v821, %v2130
        %v2132 = vpop.f32.mrf.mxu0
        %2133 = vdwg.mxu0
        %2134 = vmatpush.bf16.msra.mxu0 0
        %2135 = vmatpush.bf16.msra.mxu0 0
        %2136 = vmatpush.bf16.msra.mxu0 0
        %2137 = vmatpush.bf16.msra.mxu0 0
        %2138 = vmatpush.bf16.msra.mxu0 %v1638
        %2139 = vmatpush.bf16.msra.mxu0 %v1590
        %2140 = vmatpush.bf16.msra.mxu0 %v1542
        %2141 = vmatpush.bf16.msra.mxu0 %v1494
        %2142 = vmatmul.bf16.gmra.mxu0 %v1859
        %v2143 = vpop.f32.mrf.mxu0
        %v2144 = vadd.f32 %v822, %v2143
        %v2145 = vpop.f32.mrf.mxu0
        %2146 = vdwg.mxu0
        %2147 = vmatpush.bf16.msra.mxu0 0
        %2148 = vmatpush.bf16.msra.mxu0 0
        %2149 = vmatpush.bf16.msra.mxu0 0
        %2150 = vmatpush.bf16.msra.mxu0 0
        %2151 = vmatpush.bf16.msra.mxu0 %v1639
        %2152 = vmatpush.bf16.msra.mxu0 %v1591
        %2153 = vmatpush.bf16.msra.mxu0 %v1543
        %2154 = vmatpush.bf16.msra.mxu0 %v1495
        %2155 = vmatmul.bf16.gmra.mxu0 %v1859
        %v2156 = vpop.f32.mrf.mxu0
        %v2157 = vadd.f32 %v823, %v2156
        %v2158 = vpop.f32.mrf.mxu0
        %2159 = vdwg.mxu0
        %2160 = vmatpush.bf16.msra.mxu0 0
        %2161 = vmatpush.bf16.msra.mxu0 0
        %2162 = vmatpush.bf16.msra.mxu0 0
        %2163 = vmatpush.bf16.msra.mxu0 0
        %2164 = vmatpush.bf16.msra.mxu0 %v1640
        %2165 = vmatpush.bf16.msra.mxu0 %v1592
        %2166 = vmatpush.bf16.msra.mxu0 %v1544
        %2167 = vmatpush.bf16.msra.mxu0 %v1496
        %2168 = vmatmul.bf16.gmra.mxu0 %v1859
        %v2169 = vpop.f32.mrf.mxu0
        %v2170 = vadd.f32 %v824, %v2169
        %v2171 = vpop.f32.mrf.mxu0
        %2172 = vdwg.mxu0
        %2173 = vmatpush.bf16.msra.mxu0 0
        %2174 = vmatpush.bf16.msra.mxu0 0
        %2175 = vmatpush.bf16.msra.mxu0 0
        %2176 = vmatpush.bf16.msra.mxu0 0
        %2177 = vmatpush.bf16.msra.mxu0 %v1641
        %2178 = vmatpush.bf16.msra.mxu0 %v1593
        %2179 = vmatpush.bf16.msra.mxu0 %v1545
        %2180 = vmatpush.bf16.msra.mxu0 %v1497
        %2181 = vmatmul.bf16.gmra.mxu0 %v1859
        %v2182 = vpop.f32.mrf.mxu0
        %v2183 = vadd.f32 %v825, %v2182
        %v2184 = vpop.f32.mrf.mxu0
        %2185 = vdwg.mxu0
        %2186 = vmatpush.bf16.msra.mxu0 0
        %2187 = vmatpush.bf16.msra.mxu0 0
        %2188 = vmatpush.bf16.msra.mxu0 0
        %2189 = vmatpush.bf16.msra.mxu0 0
        %2190 = vmatpush.bf16.msra.mxu0 %v1642
        %2191 = vmatpush.bf16.msra.mxu0 %v1594
        %2192 = vmatpush.bf16.msra.mxu0 %v1546
        %2193 = vmatpush.bf16.msra.mxu0 %v1498
        %2194 = vmatmul.bf16.gmra.mxu0 %v1859
        %v2195 = vpop.f32.mrf.mxu0
        %v2196 = vadd.f32 %v826, %v2195
        %v2197 = vpop.f32.mrf.mxu0
        %2198 = vdwg.mxu0
        %2199 = vmatpush.bf16.msra.mxu0 0
        %2200 = vmatpush.bf16.msra.mxu0 0
        %2201 = vmatpush.bf16.msra.mxu0 0
        %2202 = vmatpush.bf16.msra.mxu0 0
        %2203 = vmatpush.bf16.msra.mxu0 %v1643
        %2204 = vmatpush.bf16.msra.mxu0 %v1595
        %2205 = vmatpush.bf16.msra.mxu0 %v1547
        %2206 = vmatpush.bf16.msra.mxu0 %v1499
        %2207 = vmatmul.bf16.gmra.mxu0 %v1859
        %v2208 = vpop.f32.mrf.mxu0
        %v2209 = vadd.f32 %v827, %v2208
        %v2210 = vpop.f32.mrf.mxu0
        %2211 = vdwg.mxu0
        %2212 = vmatpush.bf16.msra.mxu0 0
        %2213 = vmatpush.bf16.msra.mxu0 0
        %2214 = vmatpush.bf16.msra.mxu0 0
        %2215 = vmatpush.bf16.msra.mxu0 0
        %2216 = vmatpush.bf16.msra.mxu0 %v1644
        %2217 = vmatpush.bf16.msra.mxu0 %v1596
        %2218 = vmatpush.bf16.msra.mxu0 %v1548
        %2219 = vmatpush.bf16.msra.mxu0 %v1500
        %2220 = vmatmul.bf16.gmra.mxu0 %v1859
        %v2221 = vpop.f32.mrf.mxu0
        %v2222 = vadd.f32 %v828, %v2221
        %v2223 = vpop.f32.mrf.mxu0
        %2224 = vdwg.mxu0
        %2225 = vmatpush.bf16.msra.mxu0 0
        %2226 = vmatpush.bf16.msra.mxu0 0
        %2227 = vmatpush.bf16.msra.mxu0 0
        %2228 = vmatpush.bf16.msra.mxu0 0
        %2229 = vmatpush.bf16.msra.mxu0 %v1645
        %2230 = vmatpush.bf16.msra.mxu0 %v1597
        %2231 = vmatpush.bf16.msra.mxu0 %v1549
        %2232 = vmatpush.bf16.msra.mxu0 %v1501
        %2233 = vmatmul.bf16.gmra.mxu0 %v1859
        %v2234 = vpop.f32.mrf.mxu0
        %v2235 = vadd.f32 %v829, %v2234
        %v2236 = vpop.f32.mrf.mxu0
        %2237 = vdwg.mxu0
        %2238 = vmatpush.bf16.msra.mxu0 0
        %2239 = vmatpush.bf16.msra.mxu0 0
        %2240 = vmatpush.bf16.msra.mxu0 0
        %2241 = vmatpush.bf16.msra.mxu0 0
        %2242 = vmatpush.bf16.msra.mxu0 %v1646
        %2243 = vmatpush.bf16.msra.mxu0 %v1598
        %2244 = vmatpush.bf16.msra.mxu0 %v1550
        %2245 = vmatpush.bf16.msra.mxu0 %v1502
        %2246 = vmatmul.bf16.gmra.mxu0 %v1859
        %v2247 = vpop.f32.mrf.mxu0
        %v2248 = vadd.f32 %v830, %v2247
        %v2249 = vpop.f32.mrf.mxu0
        %2250 = vdwg.mxu0
        %2251 = vmatpush.bf16.msra.mxu0 0
        %2252 = vmatpush.bf16.msra.mxu0 0
        %2253 = vmatpush.bf16.msra.mxu0 0
        %2254 = vmatpush.bf16.msra.mxu0 0
        %2255 = vmatpush.bf16.msra.mxu0 %v1647
        %2256 = vmatpush.bf16.msra.mxu0 %v1599
        %2257 = vmatpush.bf16.msra.mxu0 %v1551
        %2258 = vmatpush.bf16.msra.mxu0 %v1503
        %2259 = vmatmul.bf16.gmra.mxu0 %v1859
        %v2260 = vpop.f32.mrf.mxu0
        %v2261 = vadd.f32 %v831, %v2260
        %v2262 = vpop.f32.mrf.mxu0
        %2263 = vdwg.mxu0
        %2264 = vmatpush.bf16.msra.mxu0 0
        %2265 = vmatpush.bf16.msra.mxu0 0
        %2266 = vmatpush.bf16.msra.mxu0 0
        %2267 = vmatpush.bf16.msra.mxu0 0
        %2268 = vmatpush.bf16.msra.mxu0 %v1648
        %2269 = vmatpush.bf16.msra.mxu0 %v1600
        %2270 = vmatpush.bf16.msra.mxu0 %v1552
        %2271 = vmatpush.bf16.msra.mxu0 %v1504
        %2272 = vmatmul.bf16.gmra.mxu0 %v1859
        %v2273 = vpop.f32.mrf.mxu0
        %v2274 = vadd.f32 %v832, %v2273
        %v2275 = vpop.f32.mrf.mxu0
        %2276 = vdwg.mxu0
        %2277 = vmatpush.bf16.msra.mxu0 0
        %2278 = vmatpush.bf16.msra.mxu0 0
        %2279 = vmatpush.bf16.msra.mxu0 0
        %2280 = vmatpush.bf16.msra.mxu0 0
        %2281 = vmatpush.bf16.msra.mxu0 %v1649
        %2282 = vmatpush.bf16.msra.mxu0 %v1601
        %2283 = vmatpush.bf16.msra.mxu0 %v1553
        %2284 = vmatpush.bf16.msra.mxu0 %v1505
        %2285 = vmatmul.bf16.gmra.mxu0 %v1859
        %v2286 = vpop.f32.mrf.mxu0
        %v2287 = vadd.f32 %v833, %v2286
        %v2288 = vpop.f32.mrf.mxu0
        %2289 = vdwg.mxu0
        %2290 = vmatpush.bf16.msra.mxu0 0
        %2291 = vmatpush.bf16.msra.mxu0 0
        %2292 = vmatpush.bf16.msra.mxu0 0
        %2293 = vmatpush.bf16.msra.mxu0 0
        %2294 = vmatpush.bf16.msra.mxu0 %v1650
        %2295 = vmatpush.bf16.msra.mxu0 %v1602
        %2296 = vmatpush.bf16.msra.mxu0 %v1554
        %2297 = vmatpush.bf16.msra.mxu0 %v1506
        %2298 = vmatmul.bf16.gmra.mxu0 %v1859
        %v2299 = vpop.f32.mrf.mxu0
        %v2300 = vadd.f32 %v834, %v2299
        %v2301 = vpop.f32.mrf.mxu0
        %2302 = vdwg.mxu0
        %2303 = vmatpush.bf16.msra.mxu0 0
        %2304 = vmatpush.bf16.msra.mxu0 0
        %2305 = vmatpush.bf16.msra.mxu0 0
        %2306 = vmatpush.bf16.msra.mxu0 0
        %2307 = vmatpush.bf16.msra.mxu0 %v1651
        %2308 = vmatpush.bf16.msra.mxu0 %v1603
        %2309 = vmatpush.bf16.msra.mxu0 %v1555
        %2310 = vmatpush.bf16.msra.mxu0 %v1507
        %2311 = vmatmul.bf16.gmra.mxu0 %v1859
        %v2312 = vpop.f32.mrf.mxu0
        %v2313 = vadd.f32 %v835, %v2312
        %v2314 = vpop.f32.mrf.mxu0
        %2315 = vdwg.mxu0
        %2316 = vmatpush.bf16.msra.mxu0 0
        %2317 = vmatpush.bf16.msra.mxu0 0
        %2318 = vmatpush.bf16.msra.mxu0 0
        %2319 = vmatpush.bf16.msra.mxu0 0
        %2320 = vmatpush.bf16.msra.mxu0 %v1652
        %2321 = vmatpush.bf16.msra.mxu0 %v1604
        %2322 = vmatpush.bf16.msra.mxu0 %v1556
        %2323 = vmatpush.bf16.msra.mxu0 %v1508
        %2324 = vmatmul.bf16.gmra.mxu0 %v1859
        %v2325 = vpop.f32.mrf.mxu0
        %v2326 = vadd.f32 %v836, %v2325
        %v2327 = vpop.f32.mrf.mxu0
        %2328 = vdwg.mxu0
        %2329 = vmatpush.bf16.msra.mxu0 0
        %2330 = vmatpush.bf16.msra.mxu0 0
        %2331 = vmatpush.bf16.msra.mxu0 0
        %2332 = vmatpush.bf16.msra.mxu0 0
        %2333 = vmatpush.bf16.msra.mxu0 %v1653
        %2334 = vmatpush.bf16.msra.mxu0 %v1605
        %2335 = vmatpush.bf16.msra.mxu0 %v1557
        %2336 = vmatpush.bf16.msra.mxu0 %v1509
        %2337 = vmatmul.bf16.gmra.mxu0 %v1859
        %v2338 = vpop.f32.mrf.mxu0
        %v2339 = vadd.f32 %v837, %v2338
        %v2340 = vpop.f32.mrf.mxu0
        %2341 = vdwg.mxu0
        %2342 = vmatpush.bf16.msra.mxu0 0
        %2343 = vmatpush.bf16.msra.mxu0 0
        %2344 = vmatpush.bf16.msra.mxu0 0
        %2345 = vmatpush.bf16.msra.mxu0 0
        %2346 = vmatpush.bf16.msra.mxu0 %v1654
        %2347 = vmatpush.bf16.msra.mxu0 %v1606
        %2348 = vmatpush.bf16.msra.mxu0 %v1558
        %2349 = vmatpush.bf16.msra.mxu0 %v1510
        %2350 = vmatmul.bf16.gmra.mxu0 %v1859
        %v2351 = vpop.f32.mrf.mxu0
        %v2352 = vadd.f32 %v838, %v2351
        %v2353 = vpop.f32.mrf.mxu0
        %2354 = vdwg.mxu0
        %2355 = vmatpush.bf16.msra.mxu0 0
        %2356 = vmatpush.bf16.msra.mxu0 0
        %2357 = vmatpush.bf16.msra.mxu0 0
        %2358 = vmatpush.bf16.msra.mxu0 0
        %2359 = vmatpush.bf16.msra.mxu0 %v1655
        %2360 = vmatpush.bf16.msra.mxu0 %v1607
        %2361 = vmatpush.bf16.msra.mxu0 %v1559
        %2362 = vmatpush.bf16.msra.mxu0 %v1511
        %2363 = vmatmul.bf16.gmra.mxu0 %v1859
        %v2364 = vpop.f32.mrf.mxu0
        %v2365 = vadd.f32 %v839, %v2364
        %v2366 = vpop.f32.mrf.mxu0
        %2367 = vdwg.mxu0
        %2368 = vmatpush.bf16.msra.mxu0 0
        %2369 = vmatpush.bf16.msra.mxu0 0
        %2370 = vmatpush.bf16.msra.mxu0 0
        %2371 = vmatpush.bf16.msra.mxu0 0
        %2372 = vmatpush.bf16.msra.mxu0 %v1656
        %2373 = vmatpush.bf16.msra.mxu0 %v1608
        %2374 = vmatpush.bf16.msra.mxu0 %v1560
        %2375 = vmatpush.bf16.msra.mxu0 %v1512
        %2376 = vmatmul.bf16.gmra.mxu0 %v1859
        %v2377 = vpop.f32.mrf.mxu0
        %v2378 = vadd.f32 %v840, %v2377
        %v2379 = vpop.f32.mrf.mxu0
        %2380 = vdwg.mxu0
        %2381 = vmatpush.bf16.msra.mxu0 0
        %2382 = vmatpush.bf16.msra.mxu0 0
        %2383 = vmatpush.bf16.msra.mxu0 0
        %2384 = vmatpush.bf16.msra.mxu0 0
        %2385 = vmatpush.bf16.msra.mxu0 %v1657
        %2386 = vmatpush.bf16.msra.mxu0 %v1609
        %2387 = vmatpush.bf16.msra.mxu0 %v1561
        %2388 = vmatpush.bf16.msra.mxu0 %v1513
        %2389 = vmatmul.bf16.gmra.mxu0 %v1859
        %v2390 = vpop.f32.mrf.mxu0
        %v2391 = vadd.f32 %v841, %v2390
        %v2392 = vpop.f32.mrf.mxu0
        %2393 = vdwg.mxu0
        %2394 = vmatpush.bf16.msra.mxu0 0
        %2395 = vmatpush.bf16.msra.mxu0 0
        %2396 = vmatpush.bf16.msra.mxu0 0
        %2397 = vmatpush.bf16.msra.mxu0 0
        %2398 = vmatpush.bf16.msra.mxu0 %v1658
        %2399 = vmatpush.bf16.msra.mxu0 %v1610
        %2400 = vmatpush.bf16.msra.mxu0 %v1562
        %2401 = vmatpush.bf16.msra.mxu0 %v1514
        %2402 = vmatmul.bf16.gmra.mxu0 %v1859
        %v2403 = vpop.f32.mrf.mxu0
        %v2404 = vadd.f32 %v842, %v2403
        %v2405 = vpop.f32.mrf.mxu0
        %2406 = vdwg.mxu0
        %2407 = vmatpush.bf16.msra.mxu0 0
        %2408 = vmatpush.bf16.msra.mxu0 0
        %2409 = vmatpush.bf16.msra.mxu0 0
        %2410 = vmatpush.bf16.msra.mxu0 0
        %2411 = vmatpush.bf16.msra.mxu0 %v1659
        %2412 = vmatpush.bf16.msra.mxu0 %v1611
        %2413 = vmatpush.bf16.msra.mxu0 %v1563
        %2414 = vmatpush.bf16.msra.mxu0 %v1515
        %2415 = vmatmul.bf16.gmra.mxu0 %v1859
        %v2416 = vpop.f32.mrf.mxu0
        %v2417 = vadd.f32 %v843, %v2416
        %v2418 = vpop.f32.mrf.mxu0
        %2419 = vdwg.mxu0
        %2420 = vmatpush.bf16.msra.mxu0 0
        %2421 = vmatpush.bf16.msra.mxu0 0
        %2422 = vmatpush.bf16.msra.mxu0 0
        %2423 = vmatpush.bf16.msra.mxu0 0
        %2424 = vmatpush.bf16.msra.mxu0 %v1660
        %2425 = vmatpush.bf16.msra.mxu0 %v1612
        %2426 = vmatpush.bf16.msra.mxu0 %v1564
        %2427 = vmatpush.bf16.msra.mxu0 %v1516
        %2428 = vmatmul.bf16.gmra.mxu0 %v1859
        %v2429 = vpop.f32.mrf.mxu0
        %v2430 = vadd.f32 %v844, %v2429
        %v2431 = vpop.f32.mrf.mxu0
        %2432 = vdwg.mxu0
        %2433 = vmatpush.bf16.msra.mxu0 0
        %2434 = vmatpush.bf16.msra.mxu0 0
        %2435 = vmatpush.bf16.msra.mxu0 0
        %2436 = vmatpush.bf16.msra.mxu0 0
        %2437 = vmatpush.bf16.msra.mxu0 %v1661
        %2438 = vmatpush.bf16.msra.mxu0 %v1613
        %2439 = vmatpush.bf16.msra.mxu0 %v1565
        %2440 = vmatpush.bf16.msra.mxu0 %v1517
        %2441 = vmatmul.bf16.gmra.mxu0 %v1859
        %v2442 = vpop.f32.mrf.mxu0
        %v2443 = vadd.f32 %v845, %v2442
        %v2444 = vpop.f32.mrf.mxu0
        %2445 = vdwg.mxu0
        %2446 = vmatpush.bf16.msra.mxu0 0
        %2447 = vmatpush.bf16.msra.mxu0 0
        %2448 = vmatpush.bf16.msra.mxu0 0
        %2449 = vmatpush.bf16.msra.mxu0 0
        %2450 = vmatpush.bf16.msra.mxu0 %v1662
        %2451 = vmatpush.bf16.msra.mxu0 %v1614
        %2452 = vmatpush.bf16.msra.mxu0 %v1566
        %2453 = vmatpush.bf16.msra.mxu0 %v1518
        %2454 = vmatmul.bf16.gmra.mxu0 %v1859
        %v2455 = vpop.f32.mrf.mxu0
        %v2456 = vadd.f32 %v846, %v2455
        %v2457 = vpop.f32.mrf.mxu0
        %2458 = vdwg.mxu0
        %2459 = vmatpush.bf16.msra.mxu0 0
        %2460 = vmatpush.bf16.msra.mxu0 0
        %2461 = vmatpush.bf16.msra.mxu0 0
        %2462 = vmatpush.bf16.msra.mxu0 0
        %2463 = vmatpush.bf16.msra.mxu0 %v1663
        %2464 = vmatpush.bf16.msra.mxu0 %v1615
        %2465 = vmatpush.bf16.msra.mxu0 %v1567
        %2466 = vmatpush.bf16.msra.mxu0 %v1519
        %2467 = vmatmul.bf16.gmra.mxu0 %v1859
        %v2468 = vpop.f32.mrf.mxu0
        %v2469 = vadd.f32 %v847, %v2468
        %v2470 = vpop.f32.mrf.mxu0
        %2471 = vdwg.mxu0
        %2472 = vmatpush.bf16.msra.mxu0 0
        %2473 = vmatpush.bf16.msra.mxu0 0
        %2474 = vmatpush.bf16.msra.mxu0 0
        %2475 = vmatpush.bf16.msra.mxu0 0
        %2476 = vmatpush.bf16.msra.mxu0 %v1664
        %2477 = vmatpush.bf16.msra.mxu0 %v1616
        %2478 = vmatpush.bf16.msra.mxu0 %v1568
        %2479 = vmatpush.bf16.msra.mxu0 %v1520
        %2480 = vmatmul.bf16.gmra.mxu0 %v1859
        %v2481 = vpop.f32.mrf.mxu0
        %v2482 = vadd.f32 %v848, %v2481
        %v2483 = vpop.f32.mrf.mxu0
        %2484 = vdwg.mxu0
        %v2485 = vxor.u32 %v1871, 2147483648
        %v2486 = vxor.u32 %v1884, 2147483648
        %v2487 = vxor.u32 %v1897, 2147483648
        %v2488 = vxor.u32 %v1910, 2147483648
        %v2489 = vxor.u32 %v1923, 2147483648
        %v2490 = vxor.u32 %v1936, 2147483648
        %v2491 = vxor.u32 %v1949, 2147483648
        %v2492 = vxor.u32 %v1962, 2147483648
        %v2493 = vxor.u32 %v1975, 2147483648
        %v2494 = vxor.u32 %v1988, 2147483648
        %v2495 = vxor.u32 %v2001, 2147483648
        %v2496 = vxor.u32 %v2014, 2147483648
        %v2497 = vxor.u32 %v2027, 2147483648
        %v2498 = vxor.u32 %v2040, 2147483648
        %v2499 = vxor.u32 %v2053, 2147483648
        %v2500 = vxor.u32 %v2066, 2147483648
        %v2501 = vxor.u32 %v2079, 2147483648
        %v2502 = vxor.u32 %v2092, 2147483648
        %v2503 = vxor.u32 %v2105, 2147483648
        %v2504 = vxor.u32 %v2118, 2147483648
        %v2505 = vxor.u32 %v2131, 2147483648
        %v2506 = vxor.u32 %v2144, 2147483648
        %v2507 = vxor.u32 %v2157, 2147483648
        %v2508 = vxor.u32 %v2170, 2147483648
        %v2509 = vxor.u32 %v2183, 2147483648
        %v2510 = vxor.u32 %v2196, 2147483648
        %v2511 = vxor.u32 %v2209, 2147483648
        %v2512 = vxor.u32 %v2222, 2147483648
        %v2513 = vxor.u32 %v2235, 2147483648
        %v2514 = vxor.u32 %v2248, 2147483648
        %v2515 = vxor.u32 %v2261, 2147483648
        %v2516 = vxor.u32 %v2274, 2147483648
        %v2517 = vxor.u32 %v2287, 2147483648
        %v2518 = vxor.u32 %v2300, 2147483648
        %v2519 = vxor.u32 %v2313, 2147483648
        %v2520 = vxor.u32 %v2326, 2147483648
        %v2521 = vxor.u32 %v2339, 2147483648
        %v2522 = vxor.u32 %v2352, 2147483648
        %v2523 = vxor.u32 %v2365, 2147483648
        %v2524 = vxor.u32 %v2378, 2147483648
        %v2525 = vxor.u32 %v2391, 2147483648
        %v2526 = vxor.u32 %v2404, 2147483648
        %v2527 = vxor.u32 %v2417, 2147483648
        %v2528 = vxor.u32 %v2430, 2147483648
        %v2529 = vxor.u32 %v2443, 2147483648
        %v2530 = vxor.u32 %v2456, 2147483648
        %v2531 = vxor.u32 %v2469, 2147483648
        %v2532 = vxor.u32 %v2482, 2147483648
        %v2533 = vmul.f32 %v2485, 1.442695
        %v2534 = vpow.pop %v2533
        %v2535 = vmul.f32 %v2486, 1.442695
        %v2536 = vpow.pop %v2535
        %v2537 = vmul.f32 %v2487, 1.442695
        %v2538 = vpow.pop %v2537
        %v2539 = vmul.f32 %v2488, 1.442695
        %v2540 = vpow.pop %v2539
        %v2541 = vmul.f32 %v2489, 1.442695
        %v2542 = vpow.pop %v2541
        %v2543 = vmul.f32 %v2490, 1.442695
        %v2544 = vpow.pop %v2543
        %v2545 = vmul.f32 %v2491, 1.442695
        %v2546 = vpow.pop %v2545
        %v2547 = vmul.f32 %v2492, 1.442695
        %v2548 = vpow.pop %v2547
        %v2549 = vmul.f32 %v2493, 1.442695
        %v2550 = vpow.pop %v2549
        %v2551 = vmul.f32 %v2494, 1.442695
        %v2552 = vpow.pop %v2551
        %v2553 = vmul.f32 %v2495, 1.442695
        %v2554 = vpow.pop %v2553
        %v2555 = vmul.f32 %v2496, 1.442695
        %v2556 = vpow.pop %v2555
        %v2557 = vmul.f32 %v2497, 1.442695
        %v2558 = vpow.pop %v2557
        %v2559 = vmul.f32 %v2498, 1.442695
        %v2560 = vpow.pop %v2559
        %v2561 = vmul.f32 %v2499, 1.442695
        %v2562 = vpow.pop %v2561
        %v2563 = vmul.f32 %v2500, 1.442695
        %v2564 = vpow.pop %v2563
        %v2565 = vmul.f32 %v2501, 1.442695
        %v2566 = vpow.pop %v2565
        %v2567 = vmul.f32 %v2502, 1.442695
        %v2568 = vpow.pop %v2567
        %v2569 = vmul.f32 %v2503, 1.442695
        %v2570 = vpow.pop %v2569
        %v2571 = vmul.f32 %v2504, 1.442695
        %v2572 = vpow.pop %v2571
        %v2573 = vmul.f32 %v2505, 1.442695
        %v2574 = vpow.pop %v2573
        %v2575 = vmul.f32 %v2506, 1.442695
        %v2576 = vpow.pop %v2575
        %v2577 = vmul.f32 %v2507, 1.442695
        %v2578 = vpow.pop %v2577
        %v2579 = vmul.f32 %v2508, 1.442695
        %v2580 = vpow.pop %v2579
        %v2581 = vmul.f32 %v2509, 1.442695
        %v2582 = vpow.pop %v2581
        %v2583 = vmul.f32 %v2510, 1.442695
        %v2584 = vpow.pop %v2583
        %v2585 = vmul.f32 %v2511, 1.442695
        %v2586 = vpow.pop %v2585
        %v2587 = vmul.f32 %v2512, 1.442695
        %v2588 = vpow.pop %v2587
        %v2589 = vmul.f32 %v2513, 1.442695
        %v2590 = vpow.pop %v2589
        %v2591 = vmul.f32 %v2514, 1.442695
        %v2592 = vpow.pop %v2591
        %v2593 = vmul.f32 %v2515, 1.442695
        %v2594 = vpow.pop %v2593
        %v2595 = vmul.f32 %v2516, 1.442695
        %v2596 = vpow.pop %v2595
        %v2597 = vmul.f32 %v2517, 1.442695
        %v2598 = vpow.pop %v2597
        %v2599 = vmul.f32 %v2518, 1.442695
        %v2600 = vpow.pop %v2599
        %v2601 = vmul.f32 %v2519, 1.442695
        %v2602 = vpow.pop %v2601
        %v2603 = vmul.f32 %v2520, 1.442695
        %v2604 = vpow.pop %v2603
        %v2605 = vmul.f32 %v2521, 1.442695
        %v2606 = vpow.pop %v2605
        %v2607 = vmul.f32 %v2522, 1.442695
        %v2608 = vpow.pop %v2607
        %v2609 = vmul.f32 %v2523, 1.442695
        %v2610 = vpow.pop %v2609
        %v2611 = vmul.f32 %v2524, 1.442695
        %v2612 = vpow.pop %v2611
        %v2613 = vmul.f32 %v2525, 1.442695
        %v2614 = vpow.pop %v2613
        %v2615 = vmul.f32 %v2526, 1.442695
        %v2616 = vpow.pop %v2615
        %v2617 = vmul.f32 %v2527, 1.442695
        %v2618 = vpow.pop %v2617
        %v2619 = vmul.f32 %v2528, 1.442695
        %v2620 = vpow.pop %v2619
        %v2621 = vmul.f32 %v2529, 1.442695
        %v2622 = vpow.pop %v2621
        %v2623 = vmul.f32 %v2530, 1.442695
        %v2624 = vpow.pop %v2623
        %v2625 = vmul.f32 %v2531, 1.442695
        %v2626 = vpow.pop %v2625
        %v2627 = vmul.f32 %v2532, 1.442695
        %v2628 = vpow.pop %v2627
        %v2629 = vadd.f32 %v2534, 1.0
        %v2630 = vadd.f32 %v2536, 1.0
        %v2631 = vadd.f32 %v2538, 1.0
        %v2632 = vadd.f32 %v2540, 1.0
        %v2633 = vadd.f32 %v2542, 1.0
        %v2634 = vadd.f32 %v2544, 1.0
        %v2635 = vadd.f32 %v2546, 1.0
        %v2636 = vadd.f32 %v2548, 1.0
        %v2637 = vadd.f32 %v2550, 1.0
        %v2638 = vadd.f32 %v2552, 1.0
        %v2639 = vadd.f32 %v2554, 1.0
        %v2640 = vadd.f32 %v2556, 1.0
        %v2641 = vadd.f32 %v2558, 1.0
        %v2642 = vadd.f32 %v2560, 1.0
        %v2643 = vadd.f32 %v2562, 1.0
        %v2644 = vadd.f32 %v2564, 1.0
        %v2645 = vadd.f32 %v2566, 1.0
        %v2646 = vadd.f32 %v2568, 1.0
        %v2647 = vadd.f32 %v2570, 1.0
        %v2648 = vadd.f32 %v2572, 1.0
        %v2649 = vadd.f32 %v2574, 1.0
        %v2650 = vadd.f32 %v2576, 1.0
        %v2651 = vadd.f32 %v2578, 1.0
        %v2652 = vadd.f32 %v2580, 1.0
        %v2653 = vadd.f32 %v2582, 1.0
        %v2654 = vadd.f32 %v2584, 1.0
        %v2655 = vadd.f32 %v2586, 1.0
        %v2656 = vadd.f32 %v2588, 1.0
        %v2657 = vadd.f32 %v2590, 1.0
        %v2658 = vadd.f32 %v2592, 1.0
        %v2659 = vadd.f32 %v2594, 1.0
        %v2660 = vadd.f32 %v2596, 1.0
        %v2661 = vadd.f32 %v2598, 1.0
        %v2662 = vadd.f32 %v2600, 1.0
        %v2663 = vadd.f32 %v2602, 1.0
        %v2664 = vadd.f32 %v2604, 1.0
        %v2665 = vadd.f32 %v2606, 1.0
        %v2666 = vadd.f32 %v2608, 1.0
        %v2667 = vadd.f32 %v2610, 1.0
        %v2668 = vadd.f32 %v2612, 1.0
        %v2669 = vadd.f32 %v2614, 1.0
        %v2670 = vadd.f32 %v2616, 1.0
        %v2671 = vadd.f32 %v2618, 1.0
        %v2672 = vadd.f32 %v2620, 1.0
        %v2673 = vadd.f32 %v2622, 1.0
        %v2674 = vadd.f32 %v2624, 1.0
        %v2675 = vadd.f32 %v2626, 1.0
        %v2676 = vadd.f32 %v2628, 1.0
        %v2677 = vrcp.pop %v2629
        %v2678 = vmul.f32 %v2629, %v2677
        %v2679 = vsub.f32 1.0, %v2678
        %v2680 = vmul.f32 %v2677, %v2679
        %v2681 = vadd.f32 %v2677, %v2680
        %vm2682 = vweird.f32 %v2629
        %vm2683 = vweird.f32 %v2677
        %vm2684 = vmor %vm2682, %vm2683
        %v2685 = vsel %vm2684, %v2677, %v2681
        %v2686 = vand.u32 2147483647, %v2629
        %vm2687 = vcmp.eq.f32.partialorder %v2686, 8.507059e+37
        %v2688 = vand.u32 %v2629, 2147483648
        %v2689 = vor.u32 1.1754944e-38, %v2688
        %v2690 = vsel %vm2687, %v2689, %v2685
        %v2691 = vmul.f32 1.0, %v2690
        %v2692 = vrcp.pop %v2630
        %v2693 = vmul.f32 %v2630, %v2692
        %v2694 = vsub.f32 1.0, %v2693
        %v2695 = vmul.f32 %v2692, %v2694
        %v2696 = vadd.f32 %v2692, %v2695
        %vm2697 = vweird.f32 %v2630
        %vm2698 = vweird.f32 %v2692
        %vm2699 = vmor %vm2697, %vm2698
        %v2700 = vsel %vm2699, %v2692, %v2696
        %v2701 = vand.u32 2147483647, %v2630
        %vm2702 = vcmp.eq.f32.partialorder %v2701, 8.507059e+37
        %v2703 = vand.u32 %v2630, 2147483648
        %v2704 = vor.u32 1.1754944e-38, %v2703
        %v2705 = vsel %vm2702, %v2704, %v2700
        %v2706 = vmul.f32 1.0, %v2705
        %v2707 = vrcp.pop %v2631
        %v2708 = vmul.f32 %v2631, %v2707
        %v2709 = vsub.f32 1.0, %v2708
        %v2710 = vmul.f32 %v2707, %v2709
        %v2711 = vadd.f32 %v2707, %v2710
        %vm2712 = vweird.f32 %v2631
        %vm2713 = vweird.f32 %v2707
        %vm2714 = vmor %vm2712, %vm2713
        %v2715 = vsel %vm2714, %v2707, %v2711
        %v2716 = vand.u32 2147483647, %v2631
        %vm2717 = vcmp.eq.f32.partialorder %v2716, 8.507059e+37
        %v2718 = vand.u32 %v2631, 2147483648
        %v2719 = vor.u32 1.1754944e-38, %v2718
        %v2720 = vsel %vm2717, %v2719, %v2715
        %v2721 = vmul.f32 1.0, %v2720
        %v2722 = vrcp.pop %v2632
        %v2723 = vmul.f32 %v2632, %v2722
        %v2724 = vsub.f32 1.0, %v2723
        %v2725 = vmul.f32 %v2722, %v2724
        %v2726 = vadd.f32 %v2722, %v2725
        %vm2727 = vweird.f32 %v2632
        %vm2728 = vweird.f32 %v2722
        %vm2729 = vmor %vm2727, %vm2728
        %v2730 = vsel %vm2729, %v2722, %v2726
        %v2731 = vand.u32 2147483647, %v2632
        %vm2732 = vcmp.eq.f32.partialorder %v2731, 8.507059e+37
        %v2733 = vand.u32 %v2632, 2147483648
        %v2734 = vor.u32 1.1754944e-38, %v2733
        %v2735 = vsel %vm2732, %v2734, %v2730
        %v2736 = vmul.f32 1.0, %v2735
        %v2737 = vrcp.pop %v2633
        %v2738 = vmul.f32 %v2633, %v2737
        %v2739 = vsub.f32 1.0, %v2738
        %v2740 = vmul.f32 %v2737, %v2739
        %v2741 = vadd.f32 %v2737, %v2740
        %vm2742 = vweird.f32 %v2633
        %vm2743 = vweird.f32 %v2737
        %vm2744 = vmor %vm2742, %vm2743
        %v2745 = vsel %vm2744, %v2737, %v2741
        %v2746 = vand.u32 2147483647, %v2633
        %vm2747 = vcmp.eq.f32.partialorder %v2746, 8.507059e+37
        %v2748 = vand.u32 %v2633, 2147483648
        %v2749 = vor.u32 1.1754944e-38, %v2748
        %v2750 = vsel %vm2747, %v2749, %v2745
        %v2751 = vmul.f32 1.0, %v2750
        %v2752 = vrcp.pop %v2634
        %v2753 = vmul.f32 %v2634, %v2752
        %v2754 = vsub.f32 1.0, %v2753
        %v2755 = vmul.f32 %v2752, %v2754
        %v2756 = vadd.f32 %v2752, %v2755
        %vm2757 = vweird.f32 %v2634
        %vm2758 = vweird.f32 %v2752
        %vm2759 = vmor %vm2757, %vm2758
        %v2760 = vsel %vm2759, %v2752, %v2756
        %v2761 = vand.u32 2147483647, %v2634
        %vm2762 = vcmp.eq.f32.partialorder %v2761, 8.507059e+37
        %v2763 = vand.u32 %v2634, 2147483648
        %v2764 = vor.u32 1.1754944e-38, %v2763
        %v2765 = vsel %vm2762, %v2764, %v2760
        %v2766 = vmul.f32 1.0, %v2765
        %v2767 = vrcp.pop %v2635
        %v2768 = vmul.f32 %v2635, %v2767
        %v2769 = vsub.f32 1.0, %v2768
        %v2770 = vmul.f32 %v2767, %v2769
        %v2771 = vadd.f32 %v2767, %v2770
        %vm2772 = vweird.f32 %v2635
        %vm2773 = vweird.f32 %v2767
        %vm2774 = vmor %vm2772, %vm2773
        %v2775 = vsel %vm2774, %v2767, %v2771
        %v2776 = vand.u32 2147483647, %v2635
        %vm2777 = vcmp.eq.f32.partialorder %v2776, 8.507059e+37
        %v2778 = vand.u32 %v2635, 2147483648
        %v2779 = vor.u32 1.1754944e-38, %v2778
        %v2780 = vsel %vm2777, %v2779, %v2775
        %v2781 = vmul.f32 1.0, %v2780
        %v2782 = vrcp.pop %v2636
        %v2783 = vmul.f32 %v2636, %v2782
        %v2784 = vsub.f32 1.0, %v2783
        %v2785 = vmul.f32 %v2782, %v2784
        %v2786 = vadd.f32 %v2782, %v2785
        %vm2787 = vweird.f32 %v2636
        %vm2788 = vweird.f32 %v2782
        %vm2789 = vmor %vm2787, %vm2788
        %v2790 = vsel %vm2789, %v2782, %v2786
        %v2791 = vand.u32 2147483647, %v2636
        %vm2792 = vcmp.eq.f32.partialorder %v2791, 8.507059e+37
        %v2793 = vand.u32 %v2636, 2147483648
        %v2794 = vor.u32 1.1754944e-38, %v2793
        %v2795 = vsel %vm2792, %v2794, %v2790
        %v2796 = vmul.f32 1.0, %v2795
        %v2797 = vrcp.pop %v2637
        %v2798 = vmul.f32 %v2637, %v2797
        %v2799 = vsub.f32 1.0, %v2798
        %v2800 = vmul.f32 %v2797, %v2799
        %v2801 = vadd.f32 %v2797, %v2800
        %vm2802 = vweird.f32 %v2637
        %vm2803 = vweird.f32 %v2797
        %vm2804 = vmor %vm2802, %vm2803
        %v2805 = vsel %vm2804, %v2797, %v2801
        %v2806 = vand.u32 2147483647, %v2637
        %vm2807 = vcmp.eq.f32.partialorder %v2806, 8.507059e+37
        %v2808 = vand.u32 %v2637, 2147483648
        %v2809 = vor.u32 1.1754944e-38, %v2808
        %v2810 = vsel %vm2807, %v2809, %v2805
        %v2811 = vmul.f32 1.0, %v2810
        %v2812 = vrcp.pop %v2638
        %v2813 = vmul.f32 %v2638, %v2812
        %v2814 = vsub.f32 1.0, %v2813
        %v2815 = vmul.f32 %v2812, %v2814
        %v2816 = vadd.f32 %v2812, %v2815
        %vm2817 = vweird.f32 %v2638
        %vm2818 = vweird.f32 %v2812
        %vm2819 = vmor %vm2817, %vm2818
        %v2820 = vsel %vm2819, %v2812, %v2816
        %v2821 = vand.u32 2147483647, %v2638
        %vm2822 = vcmp.eq.f32.partialorder %v2821, 8.507059e+37
        %v2823 = vand.u32 %v2638, 2147483648
        %v2824 = vor.u32 1.1754944e-38, %v2823
        %v2825 = vsel %vm2822, %v2824, %v2820
        %v2826 = vmul.f32 1.0, %v2825
        %v2827 = vrcp.pop %v2639
        %v2828 = vmul.f32 %v2639, %v2827
        %v2829 = vsub.f32 1.0, %v2828
        %v2830 = vmul.f32 %v2827, %v2829
        %v2831 = vadd.f32 %v2827, %v2830
        %vm2832 = vweird.f32 %v2639
        %vm2833 = vweird.f32 %v2827
        %vm2834 = vmor %vm2832, %vm2833
        %v2835 = vsel %vm2834, %v2827, %v2831
        %v2836 = vand.u32 2147483647, %v2639
        %vm2837 = vcmp.eq.f32.partialorder %v2836, 8.507059e+37
        %v2838 = vand.u32 %v2639, 2147483648
        %v2839 = vor.u32 1.1754944e-38, %v2838
        %v2840 = vsel %vm2837, %v2839, %v2835
        %v2841 = vmul.f32 1.0, %v2840
        %v2842 = vrcp.pop %v2640
        %v2843 = vmul.f32 %v2640, %v2842
        %v2844 = vsub.f32 1.0, %v2843
        %v2845 = vmul.f32 %v2842, %v2844
        %v2846 = vadd.f32 %v2842, %v2845
        %vm2847 = vweird.f32 %v2640
        %vm2848 = vweird.f32 %v2842
        %vm2849 = vmor %vm2847, %vm2848
        %v2850 = vsel %vm2849, %v2842, %v2846
        %v2851 = vand.u32 2147483647, %v2640
        %vm2852 = vcmp.eq.f32.partialorder %v2851, 8.507059e+37
        %v2853 = vand.u32 %v2640, 2147483648
        %v2854 = vor.u32 1.1754944e-38, %v2853
        %v2855 = vsel %vm2852, %v2854, %v2850
        %v2856 = vmul.f32 1.0, %v2855
        %v2857 = vrcp.pop %v2641
        %v2858 = vmul.f32 %v2641, %v2857
        %v2859 = vsub.f32 1.0, %v2858
        %v2860 = vmul.f32 %v2857, %v2859
        %v2861 = vadd.f32 %v2857, %v2860
        %vm2862 = vweird.f32 %v2641
        %vm2863 = vweird.f32 %v2857
        %vm2864 = vmor %vm2862, %vm2863
        %v2865 = vsel %vm2864, %v2857, %v2861
        %v2866 = vand.u32 2147483647, %v2641
        %vm2867 = vcmp.eq.f32.partialorder %v2866, 8.507059e+37
        %v2868 = vand.u32 %v2641, 2147483648
        %v2869 = vor.u32 1.1754944e-38, %v2868
        %v2870 = vsel %vm2867, %v2869, %v2865
        %v2871 = vmul.f32 1.0, %v2870
        %v2872 = vrcp.pop %v2642
        %v2873 = vmul.f32 %v2642, %v2872
        %v2874 = vsub.f32 1.0, %v2873
        %v2875 = vmul.f32 %v2872, %v2874
        %v2876 = vadd.f32 %v2872, %v2875
        %vm2877 = vweird.f32 %v2642
        %vm2878 = vweird.f32 %v2872
        %vm2879 = vmor %vm2877, %vm2878
        %v2880 = vsel %vm2879, %v2872, %v2876
        %v2881 = vand.u32 2147483647, %v2642
        %vm2882 = vcmp.eq.f32.partialorder %v2881, 8.507059e+37
        %v2883 = vand.u32 %v2642, 2147483648
        %v2884 = vor.u32 1.1754944e-38, %v2883
        %v2885 = vsel %vm2882, %v2884, %v2880
        %v2886 = vmul.f32 1.0, %v2885
        %v2887 = vrcp.pop %v2643
        %v2888 = vmul.f32 %v2643, %v2887
        %v2889 = vsub.f32 1.0, %v2888
        %v2890 = vmul.f32 %v2887, %v2889
        %v2891 = vadd.f32 %v2887, %v2890
        %vm2892 = vweird.f32 %v2643
        %vm2893 = vweird.f32 %v2887
        %vm2894 = vmor %vm2892, %vm2893
        %v2895 = vsel %vm2894, %v2887, %v2891
        %v2896 = vand.u32 2147483647, %v2643
        %vm2897 = vcmp.eq.f32.partialorder %v2896, 8.507059e+37
        %v2898 = vand.u32 %v2643, 2147483648
        %v2899 = vor.u32 1.1754944e-38, %v2898
        %v2900 = vsel %vm2897, %v2899, %v2895
        %v2901 = vmul.f32 1.0, %v2900
        %v2902 = vrcp.pop %v2644
        %v2903 = vmul.f32 %v2644, %v2902
        %v2904 = vsub.f32 1.0, %v2903
        %v2905 = vmul.f32 %v2902, %v2904
        %v2906 = vadd.f32 %v2902, %v2905
        %vm2907 = vweird.f32 %v2644
        %vm2908 = vweird.f32 %v2902
        %vm2909 = vmor %vm2907, %vm2908
        %v2910 = vsel %vm2909, %v2902, %v2906
        %v2911 = vand.u32 2147483647, %v2644
        %vm2912 = vcmp.eq.f32.partialorder %v2911, 8.507059e+37
        %v2913 = vand.u32 %v2644, 2147483648
        %v2914 = vor.u32 1.1754944e-38, %v2913
        %v2915 = vsel %vm2912, %v2914, %v2910
        %v2916 = vmul.f32 1.0, %v2915
        %v2917 = vrcp.pop %v2645
        %v2918 = vmul.f32 %v2645, %v2917
        %v2919 = vsub.f32 1.0, %v2918
        %v2920 = vmul.f32 %v2917, %v2919
        %v2921 = vadd.f32 %v2917, %v2920
        %vm2922 = vweird.f32 %v2645
        %vm2923 = vweird.f32 %v2917
        %vm2924 = vmor %vm2922, %vm2923
        %v2925 = vsel %vm2924, %v2917, %v2921
        %v2926 = vand.u32 2147483647, %v2645
        %vm2927 = vcmp.eq.f32.partialorder %v2926, 8.507059e+37
        %v2928 = vand.u32 %v2645, 2147483648
        %v2929 = vor.u32 1.1754944e-38, %v2928
        %v2930 = vsel %vm2927, %v2929, %v2925
        %v2931 = vmul.f32 1.0, %v2930
        %v2932 = vrcp.pop %v2646
        %v2933 = vmul.f32 %v2646, %v2932
        %v2934 = vsub.f32 1.0, %v2933
        %v2935 = vmul.f32 %v2932, %v2934
        %v2936 = vadd.f32 %v2932, %v2935
        %vm2937 = vweird.f32 %v2646
        %vm2938 = vweird.f32 %v2932
        %vm2939 = vmor %vm2937, %vm2938
        %v2940 = vsel %vm2939, %v2932, %v2936
        %v2941 = vand.u32 2147483647, %v2646
        %vm2942 = vcmp.eq.f32.partialorder %v2941, 8.507059e+37
        %v2943 = vand.u32 %v2646, 2147483648
        %v2944 = vor.u32 1.1754944e-38, %v2943
        %v2945 = vsel %vm2942, %v2944, %v2940
        %v2946 = vmul.f32 1.0, %v2945
        %v2947 = vrcp.pop %v2647
        %v2948 = vmul.f32 %v2647, %v2947
        %v2949 = vsub.f32 1.0, %v2948
        %v2950 = vmul.f32 %v2947, %v2949
        %v2951 = vadd.f32 %v2947, %v2950
        %vm2952 = vweird.f32 %v2647
        %vm2953 = vweird.f32 %v2947
        %vm2954 = vmor %vm2952, %vm2953
        %v2955 = vsel %vm2954, %v2947, %v2951
        %v2956 = vand.u32 2147483647, %v2647
        %vm2957 = vcmp.eq.f32.partialorder %v2956, 8.507059e+37
        %v2958 = vand.u32 %v2647, 2147483648
        %v2959 = vor.u32 1.1754944e-38, %v2958
        %v2960 = vsel %vm2957, %v2959, %v2955
        %v2961 = vmul.f32 1.0, %v2960
        %v2962 = vrcp.pop %v2648
        %v2963 = vmul.f32 %v2648, %v2962
        %v2964 = vsub.f32 1.0, %v2963
        %v2965 = vmul.f32 %v2962, %v2964
        %v2966 = vadd.f32 %v2962, %v2965
        %vm2967 = vweird.f32 %v2648
        %vm2968 = vweird.f32 %v2962
        %vm2969 = vmor %vm2967, %vm2968
        %v2970 = vsel %vm2969, %v2962, %v2966
        %v2971 = vand.u32 2147483647, %v2648
        %vm2972 = vcmp.eq.f32.partialorder %v2971, 8.507059e+37
        %v2973 = vand.u32 %v2648, 2147483648
        %v2974 = vor.u32 1.1754944e-38, %v2973
        %v2975 = vsel %vm2972, %v2974, %v2970
        %v2976 = vmul.f32 1.0, %v2975
        %v2977 = vrcp.pop %v2649
        %v2978 = vmul.f32 %v2649, %v2977
        %v2979 = vsub.f32 1.0, %v2978
        %v2980 = vmul.f32 %v2977, %v2979
        %v2981 = vadd.f32 %v2977, %v2980
        %vm2982 = vweird.f32 %v2649
        %vm2983 = vweird.f32 %v2977
        %vm2984 = vmor %vm2982, %vm2983
        %v2985 = vsel %vm2984, %v2977, %v2981
        %v2986 = vand.u32 2147483647, %v2649
        %vm2987 = vcmp.eq.f32.partialorder %v2986, 8.507059e+37
        %v2988 = vand.u32 %v2649, 2147483648
        %v2989 = vor.u32 1.1754944e-38, %v2988
        %v2990 = vsel %vm2987, %v2989, %v2985
        %v2991 = vmul.f32 1.0, %v2990
        %v2992 = vrcp.pop %v2650
        %v2993 = vmul.f32 %v2650, %v2992
        %v2994 = vsub.f32 1.0, %v2993
        %v2995 = vmul.f32 %v2992, %v2994
        %v2996 = vadd.f32 %v2992, %v2995
        %vm2997 = vweird.f32 %v2650
        %vm2998 = vweird.f32 %v2992
        %vm2999 = vmor %vm2997, %vm2998
        %v3000 = vsel %vm2999, %v2992, %v2996
        %v3001 = vand.u32 2147483647, %v2650
        %vm3002 = vcmp.eq.f32.partialorder %v3001, 8.507059e+37
        %v3003 = vand.u32 %v2650, 2147483648
        %v3004 = vor.u32 1.1754944e-38, %v3003
        %v3005 = vsel %vm3002, %v3004, %v3000
        %v3006 = vmul.f32 1.0, %v3005
        %v3007 = vrcp.pop %v2651
        %v3008 = vmul.f32 %v2651, %v3007
        %v3009 = vsub.f32 1.0, %v3008
        %v3010 = vmul.f32 %v3007, %v3009
        %v3011 = vadd.f32 %v3007, %v3010
        %vm3012 = vweird.f32 %v2651
        %vm3013 = vweird.f32 %v3007
        %vm3014 = vmor %vm3012, %vm3013
        %v3015 = vsel %vm3014, %v3007, %v3011
        %v3016 = vand.u32 2147483647, %v2651
        %vm3017 = vcmp.eq.f32.partialorder %v3016, 8.507059e+37
        %v3018 = vand.u32 %v2651, 2147483648
        %v3019 = vor.u32 1.1754944e-38, %v3018
        %v3020 = vsel %vm3017, %v3019, %v3015
        %v3021 = vmul.f32 1.0, %v3020
        %v3022 = vrcp.pop %v2652
        %v3023 = vmul.f32 %v2652, %v3022
        %v3024 = vsub.f32 1.0, %v3023
        %v3025 = vmul.f32 %v3022, %v3024
        %v3026 = vadd.f32 %v3022, %v3025
        %vm3027 = vweird.f32 %v2652
        %vm3028 = vweird.f32 %v3022
        %vm3029 = vmor %vm3027, %vm3028
        %v3030 = vsel %vm3029, %v3022, %v3026
        %v3031 = vand.u32 2147483647, %v2652
        %vm3032 = vcmp.eq.f32.partialorder %v3031, 8.507059e+37
        %v3033 = vand.u32 %v2652, 2147483648
        %v3034 = vor.u32 1.1754944e-38, %v3033
        %v3035 = vsel %vm3032, %v3034, %v3030
        %v3036 = vmul.f32 1.0, %v3035
        %v3037 = vrcp.pop %v2653
        %v3038 = vmul.f32 %v2653, %v3037
        %v3039 = vsub.f32 1.0, %v3038
        %v3040 = vmul.f32 %v3037, %v3039
        %v3041 = vadd.f32 %v3037, %v3040
        %vm3042 = vweird.f32 %v2653
        %vm3043 = vweird.f32 %v3037
        %vm3044 = vmor %vm3042, %vm3043
        %v3045 = vsel %vm3044, %v3037, %v3041
        %v3046 = vand.u32 2147483647, %v2653
        %vm3047 = vcmp.eq.f32.partialorder %v3046, 8.507059e+37
        %v3048 = vand.u32 %v2653, 2147483648
        %v3049 = vor.u32 1.1754944e-38, %v3048
        %v3050 = vsel %vm3047, %v3049, %v3045
        %v3051 = vmul.f32 1.0, %v3050
        %v3052 = vrcp.pop %v2654
        %v3053 = vmul.f32 %v2654, %v3052
        %v3054 = vsub.f32 1.0, %v3053
        %v3055 = vmul.f32 %v3052, %v3054
        %v3056 = vadd.f32 %v3052, %v3055
        %vm3057 = vweird.f32 %v2654
        %vm3058 = vweird.f32 %v3052
        %vm3059 = vmor %vm3057, %vm3058
        %v3060 = vsel %vm3059, %v3052, %v3056
        %v3061 = vand.u32 2147483647, %v2654
        %vm3062 = vcmp.eq.f32.partialorder %v3061, 8.507059e+37
        %v3063 = vand.u32 %v2654, 2147483648
        %v3064 = vor.u32 1.1754944e-38, %v3063
        %v3065 = vsel %vm3062, %v3064, %v3060
        %v3066 = vmul.f32 1.0, %v3065
        %v3067 = vrcp.pop %v2655
        %v3068 = vmul.f32 %v2655, %v3067
        %v3069 = vsub.f32 1.0, %v3068
        %v3070 = vmul.f32 %v3067, %v3069
        %v3071 = vadd.f32 %v3067, %v3070
        %vm3072 = vweird.f32 %v2655
        %vm3073 = vweird.f32 %v3067
        %vm3074 = vmor %vm3072, %vm3073
        %v3075 = vsel %vm3074, %v3067, %v3071
        %v3076 = vand.u32 2147483647, %v2655
        %vm3077 = vcmp.eq.f32.partialorder %v3076, 8.507059e+37
        %v3078 = vand.u32 %v2655, 2147483648
        %v3079 = vor.u32 1.1754944e-38, %v3078
        %v3080 = vsel %vm3077, %v3079, %v3075
        %v3081 = vmul.f32 1.0, %v3080
        %v3082 = vrcp.pop %v2656
        %v3083 = vmul.f32 %v2656, %v3082
        %v3084 = vsub.f32 1.0, %v3083
        %v3085 = vmul.f32 %v3082, %v3084
        %v3086 = vadd.f32 %v3082, %v3085
        %vm3087 = vweird.f32 %v2656
        %vm3088 = vweird.f32 %v3082
        %vm3089 = vmor %vm3087, %vm3088
        %v3090 = vsel %vm3089, %v3082, %v3086
        %v3091 = vand.u32 2147483647, %v2656
        %vm3092 = vcmp.eq.f32.partialorder %v3091, 8.507059e+37
        %v3093 = vand.u32 %v2656, 2147483648
        %v3094 = vor.u32 1.1754944e-38, %v3093
        %v3095 = vsel %vm3092, %v3094, %v3090
        %v3096 = vmul.f32 1.0, %v3095
        %v3097 = vrcp.pop %v2657
        %v3098 = vmul.f32 %v2657, %v3097
        %v3099 = vsub.f32 1.0, %v3098
        %v3100 = vmul.f32 %v3097, %v3099
        %v3101 = vadd.f32 %v3097, %v3100
        %vm3102 = vweird.f32 %v2657
        %vm3103 = vweird.f32 %v3097
        %vm3104 = vmor %vm3102, %vm3103
        %v3105 = vsel %vm3104, %v3097, %v3101
        %v3106 = vand.u32 2147483647, %v2657
        %vm3107 = vcmp.eq.f32.partialorder %v3106, 8.507059e+37
        %v3108 = vand.u32 %v2657, 2147483648
        %v3109 = vor.u32 1.1754944e-38, %v3108
        %v3110 = vsel %vm3107, %v3109, %v3105
        %v3111 = vmul.f32 1.0, %v3110
        %v3112 = vrcp.pop %v2658
        %v3113 = vmul.f32 %v2658, %v3112
        %v3114 = vsub.f32 1.0, %v3113
        %v3115 = vmul.f32 %v3112, %v3114
        %v3116 = vadd.f32 %v3112, %v3115
        %vm3117 = vweird.f32 %v2658
        %vm3118 = vweird.f32 %v3112
        %vm3119 = vmor %vm3117, %vm3118
        %v3120 = vsel %vm3119, %v3112, %v3116
        %v3121 = vand.u32 2147483647, %v2658
        %vm3122 = vcmp.eq.f32.partialorder %v3121, 8.507059e+37
        %v3123 = vand.u32 %v2658, 2147483648
        %v3124 = vor.u32 1.1754944e-38, %v3123
        %v3125 = vsel %vm3122, %v3124, %v3120
        %v3126 = vmul.f32 1.0, %v3125
        %v3127 = vrcp.pop %v2659
        %v3128 = vmul.f32 %v2659, %v3127
        %v3129 = vsub.f32 1.0, %v3128
        %v3130 = vmul.f32 %v3127, %v3129
        %v3131 = vadd.f32 %v3127, %v3130
        %vm3132 = vweird.f32 %v2659
        %vm3133 = vweird.f32 %v3127
        %vm3134 = vmor %vm3132, %vm3133
        %v3135 = vsel %vm3134, %v3127, %v3131
        %v3136 = vand.u32 2147483647, %v2659
        %vm3137 = vcmp.eq.f32.partialorder %v3136, 8.507059e+37
        %v3138 = vand.u32 %v2659, 2147483648
        %v3139 = vor.u32 1.1754944e-38, %v3138
        %v3140 = vsel %vm3137, %v3139, %v3135
        %v3141 = vmul.f32 1.0, %v3140
        %v3142 = vrcp.pop %v2660
        %v3143 = vmul.f32 %v2660, %v3142
        %v3144 = vsub.f32 1.0, %v3143
        %v3145 = vmul.f32 %v3142, %v3144
        %v3146 = vadd.f32 %v3142, %v3145
        %vm3147 = vweird.f32 %v2660
        %vm3148 = vweird.f32 %v3142
        %vm3149 = vmor %vm3147, %vm3148
        %v3150 = vsel %vm3149, %v3142, %v3146
        %v3151 = vand.u32 2147483647, %v2660
        %vm3152 = vcmp.eq.f32.partialorder %v3151, 8.507059e+37
        %v3153 = vand.u32 %v2660, 2147483648
        %v3154 = vor.u32 1.1754944e-38, %v3153
        %v3155 = vsel %vm3152, %v3154, %v3150
        %v3156 = vmul.f32 1.0, %v3155
        %v3157 = vrcp.pop %v2661
        %v3158 = vmul.f32 %v2661, %v3157
        %v3159 = vsub.f32 1.0, %v3158
        %v3160 = vmul.f32 %v3157, %v3159
        %v3161 = vadd.f32 %v3157, %v3160
        %vm3162 = vweird.f32 %v2661
        %vm3163 = vweird.f32 %v3157
        %vm3164 = vmor %vm3162, %vm3163
        %v3165 = vsel %vm3164, %v3157, %v3161
        %v3166 = vand.u32 2147483647, %v2661
        %vm3167 = vcmp.eq.f32.partialorder %v3166, 8.507059e+37
        %v3168 = vand.u32 %v2661, 2147483648
        %v3169 = vor.u32 1.1754944e-38, %v3168
        %v3170 = vsel %vm3167, %v3169, %v3165
        %v3171 = vmul.f32 1.0, %v3170
        %v3172 = vrcp.pop %v2662
        %v3173 = vmul.f32 %v2662, %v3172
        %v3174 = vsub.f32 1.0, %v3173
        %v3175 = vmul.f32 %v3172, %v3174
        %v3176 = vadd.f32 %v3172, %v3175
        %vm3177 = vweird.f32 %v2662
        %vm3178 = vweird.f32 %v3172
        %vm3179 = vmor %vm3177, %vm3178
        %v3180 = vsel %vm3179, %v3172, %v3176
        %v3181 = vand.u32 2147483647, %v2662
        %vm3182 = vcmp.eq.f32.partialorder %v3181, 8.507059e+37
        %v3183 = vand.u32 %v2662, 2147483648
        %v3184 = vor.u32 1.1754944e-38, %v3183
        %v3185 = vsel %vm3182, %v3184, %v3180
        %v3186 = vmul.f32 1.0, %v3185
        %v3187 = vrcp.pop %v2663
        %v3188 = vmul.f32 %v2663, %v3187
        %v3189 = vsub.f32 1.0, %v3188
        %v3190 = vmul.f32 %v3187, %v3189
        %v3191 = vadd.f32 %v3187, %v3190
        %vm3192 = vweird.f32 %v2663
        %vm3193 = vweird.f32 %v3187
        %vm3194 = vmor %vm3192, %vm3193
        %v3195 = vsel %vm3194, %v3187, %v3191
        %v3196 = vand.u32 2147483647, %v2663
        %vm3197 = vcmp.eq.f32.partialorder %v3196, 8.507059e+37
        %v3198 = vand.u32 %v2663, 2147483648
        %v3199 = vor.u32 1.1754944e-38, %v3198
        %v3200 = vsel %vm3197, %v3199, %v3195
        %v3201 = vmul.f32 1.0, %v3200
        %v3202 = vrcp.pop %v2664
        %v3203 = vmul.f32 %v2664, %v3202
        %v3204 = vsub.f32 1.0, %v3203
        %v3205 = vmul.f32 %v3202, %v3204
        %v3206 = vadd.f32 %v3202, %v3205
        %vm3207 = vweird.f32 %v2664
        %vm3208 = vweird.f32 %v3202
        %vm3209 = vmor %vm3207, %vm3208
        %v3210 = vsel %vm3209, %v3202, %v3206
        %v3211 = vand.u32 2147483647, %v2664
        %vm3212 = vcmp.eq.f32.partialorder %v3211, 8.507059e+37
        %v3213 = vand.u32 %v2664, 2147483648
        %v3214 = vor.u32 1.1754944e-38, %v3213
        %v3215 = vsel %vm3212, %v3214, %v3210
        %v3216 = vmul.f32 1.0, %v3215
        %v3217 = vrcp.pop %v2665
        %v3218 = vmul.f32 %v2665, %v3217
        %v3219 = vsub.f32 1.0, %v3218
        %v3220 = vmul.f32 %v3217, %v3219
        %v3221 = vadd.f32 %v3217, %v3220
        %vm3222 = vweird.f32 %v2665
        %vm3223 = vweird.f32 %v3217
        %vm3224 = vmor %vm3222, %vm3223
        %v3225 = vsel %vm3224, %v3217, %v3221
        %v3226 = vand.u32 2147483647, %v2665
        %vm3227 = vcmp.eq.f32.partialorder %v3226, 8.507059e+37
        %v3228 = vand.u32 %v2665, 2147483648
        %v3229 = vor.u32 1.1754944e-38, %v3228
        %v3230 = vsel %vm3227, %v3229, %v3225
        %v3231 = vmul.f32 1.0, %v3230
        %v3232 = vrcp.pop %v2666
        %v3233 = vmul.f32 %v2666, %v3232
        %v3234 = vsub.f32 1.0, %v3233
        %v3235 = vmul.f32 %v3232, %v3234
        %v3236 = vadd.f32 %v3232, %v3235
        %vm3237 = vweird.f32 %v2666
        %vm3238 = vweird.f32 %v3232
        %vm3239 = vmor %vm3237, %vm3238
        %v3240 = vsel %vm3239, %v3232, %v3236
        %v3241 = vand.u32 2147483647, %v2666
        %vm3242 = vcmp.eq.f32.partialorder %v3241, 8.507059e+37
        %v3243 = vand.u32 %v2666, 2147483648
        %v3244 = vor.u32 1.1754944e-38, %v3243
        %v3245 = vsel %vm3242, %v3244, %v3240
        %v3246 = vmul.f32 1.0, %v3245
        %v3247 = vrcp.pop %v2667
        %v3248 = vmul.f32 %v2667, %v3247
        %v3249 = vsub.f32 1.0, %v3248
        %v3250 = vmul.f32 %v3247, %v3249
        %v3251 = vadd.f32 %v3247, %v3250
        %vm3252 = vweird.f32 %v2667
        %vm3253 = vweird.f32 %v3247
        %vm3254 = vmor %vm3252, %vm3253
        %v3255 = vsel %vm3254, %v3247, %v3251
        %v3256 = vand.u32 2147483647, %v2667
        %vm3257 = vcmp.eq.f32.partialorder %v3256, 8.507059e+37
        %v3258 = vand.u32 %v2667, 2147483648
        %v3259 = vor.u32 1.1754944e-38, %v3258
        %v3260 = vsel %vm3257, %v3259, %v3255
        %v3261 = vmul.f32 1.0, %v3260
        %v3262 = vrcp.pop %v2668
        %v3263 = vmul.f32 %v2668, %v3262
        %v3264 = vsub.f32 1.0, %v3263
        %v3265 = vmul.f32 %v3262, %v3264
        %v3266 = vadd.f32 %v3262, %v3265
        %vm3267 = vweird.f32 %v2668
        %vm3268 = vweird.f32 %v3262
        %vm3269 = vmor %vm3267, %vm3268
        %v3270 = vsel %vm3269, %v3262, %v3266
        %v3271 = vand.u32 2147483647, %v2668
        %vm3272 = vcmp.eq.f32.partialorder %v3271, 8.507059e+37
        %v3273 = vand.u32 %v2668, 2147483648
        %v3274 = vor.u32 1.1754944e-38, %v3273
        %v3275 = vsel %vm3272, %v3274, %v3270
        %v3276 = vmul.f32 1.0, %v3275
        %v3277 = vrcp.pop %v2669
        %v3278 = vmul.f32 %v2669, %v3277
        %v3279 = vsub.f32 1.0, %v3278
        %v3280 = vmul.f32 %v3277, %v3279
        %v3281 = vadd.f32 %v3277, %v3280
        %vm3282 = vweird.f32 %v2669
        %vm3283 = vweird.f32 %v3277
        %vm3284 = vmor %vm3282, %vm3283
        %v3285 = vsel %vm3284, %v3277, %v3281
        %v3286 = vand.u32 2147483647, %v2669
        %vm3287 = vcmp.eq.f32.partialorder %v3286, 8.507059e+37
        %v3288 = vand.u32 %v2669, 2147483648
        %v3289 = vor.u32 1.1754944e-38, %v3288
        %v3290 = vsel %vm3287, %v3289, %v3285
        %v3291 = vmul.f32 1.0, %v3290
        %v3292 = vrcp.pop %v2670
        %v3293 = vmul.f32 %v2670, %v3292
        %v3294 = vsub.f32 1.0, %v3293
        %v3295 = vmul.f32 %v3292, %v3294
        %v3296 = vadd.f32 %v3292, %v3295
        %vm3297 = vweird.f32 %v2670
        %vm3298 = vweird.f32 %v3292
        %vm3299 = vmor %vm3297, %vm3298
        %v3300 = vsel %vm3299, %v3292, %v3296
        %v3301 = vand.u32 2147483647, %v2670
        %vm3302 = vcmp.eq.f32.partialorder %v3301, 8.507059e+37
        %v3303 = vand.u32 %v2670, 2147483648
        %v3304 = vor.u32 1.1754944e-38, %v3303
        %v3305 = vsel %vm3302, %v3304, %v3300
        %v3306 = vmul.f32 1.0, %v3305
        %v3307 = vrcp.pop %v2671
        %v3308 = vmul.f32 %v2671, %v3307
        %v3309 = vsub.f32 1.0, %v3308
        %v3310 = vmul.f32 %v3307, %v3309
        %v3311 = vadd.f32 %v3307, %v3310
        %vm3312 = vweird.f32 %v2671
        %vm3313 = vweird.f32 %v3307
        %vm3314 = vmor %vm3312, %vm3313
        %v3315 = vsel %vm3314, %v3307, %v3311
        %v3316 = vand.u32 2147483647, %v2671
        %vm3317 = vcmp.eq.f32.partialorder %v3316, 8.507059e+37
        %v3318 = vand.u32 %v2671, 2147483648
        %v3319 = vor.u32 1.1754944e-38, %v3318
        %v3320 = vsel %vm3317, %v3319, %v3315
        %v3321 = vmul.f32 1.0, %v3320
        %v3322 = vrcp.pop %v2672
        %v3323 = vmul.f32 %v2672, %v3322
        %v3324 = vsub.f32 1.0, %v3323
        %v3325 = vmul.f32 %v3322, %v3324
        %v3326 = vadd.f32 %v3322, %v3325
        %vm3327 = vweird.f32 %v2672
        %vm3328 = vweird.f32 %v3322
        %vm3329 = vmor %vm3327, %vm3328
        %v3330 = vsel %vm3329, %v3322, %v3326
        %v3331 = vand.u32 2147483647, %v2672
        %vm3332 = vcmp.eq.f32.partialorder %v3331, 8.507059e+37
        %v3333 = vand.u32 %v2672, 2147483648
        %v3334 = vor.u32 1.1754944e-38, %v3333
        %v3335 = vsel %vm3332, %v3334, %v3330
        %v3336 = vmul.f32 1.0, %v3335
        %v3337 = vrcp.pop %v2673
        %v3338 = vmul.f32 %v2673, %v3337
        %v3339 = vsub.f32 1.0, %v3338
        %v3340 = vmul.f32 %v3337, %v3339
        %v3341 = vadd.f32 %v3337, %v3340
        %vm3342 = vweird.f32 %v2673
        %vm3343 = vweird.f32 %v3337
        %vm3344 = vmor %vm3342, %vm3343
        %v3345 = vsel %vm3344, %v3337, %v3341
        %v3346 = vand.u32 2147483647, %v2673
        %vm3347 = vcmp.eq.f32.partialorder %v3346, 8.507059e+37
        %v3348 = vand.u32 %v2673, 2147483648
        %v3349 = vor.u32 1.1754944e-38, %v3348
        %v3350 = vsel %vm3347, %v3349, %v3345
        %v3351 = vmul.f32 1.0, %v3350
        %v3352 = vrcp.pop %v2674
        %v3353 = vmul.f32 %v2674, %v3352
        %v3354 = vsub.f32 1.0, %v3353
        %v3355 = vmul.f32 %v3352, %v3354
        %v3356 = vadd.f32 %v3352, %v3355
        %vm3357 = vweird.f32 %v2674
        %vm3358 = vweird.f32 %v3352
        %vm3359 = vmor %vm3357, %vm3358
        %v3360 = vsel %vm3359, %v3352, %v3356
        %v3361 = vand.u32 2147483647, %v2674
        %vm3362 = vcmp.eq.f32.partialorder %v3361, 8.507059e+37
        %v3363 = vand.u32 %v2674, 2147483648
        %v3364 = vor.u32 1.1754944e-38, %v3363
        %v3365 = vsel %vm3362, %v3364, %v3360
        %v3366 = vmul.f32 1.0, %v3365
        %v3367 = vrcp.pop %v2675
        %v3368 = vmul.f32 %v2675, %v3367
        %v3369 = vsub.f32 1.0, %v3368
        %v3370 = vmul.f32 %v3367, %v3369
        %v3371 = vadd.f32 %v3367, %v3370
        %vm3372 = vweird.f32 %v2675
        %vm3373 = vweird.f32 %v3367
        %vm3374 = vmor %vm3372, %vm3373
        %v3375 = vsel %vm3374, %v3367, %v3371
        %v3376 = vand.u32 2147483647, %v2675
        %vm3377 = vcmp.eq.f32.partialorder %v3376, 8.507059e+37
        %v3378 = vand.u32 %v2675, 2147483648
        %v3379 = vor.u32 1.1754944e-38, %v3378
        %v3380 = vsel %vm3377, %v3379, %v3375
        %v3381 = vmul.f32 1.0, %v3380
        %v3382 = vrcp.pop %v2676
        %v3383 = vmul.f32 %v2676, %v3382
        %v3384 = vsub.f32 1.0, %v3383
        %v3385 = vmul.f32 %v3382, %v3384
        %v3386 = vadd.f32 %v3382, %v3385
        %vm3387 = vweird.f32 %v2676
        %vm3388 = vweird.f32 %v3382
        %vm3389 = vmor %vm3387, %vm3388
        %v3390 = vsel %vm3389, %v3382, %v3386
        %v3391 = vand.u32 2147483647, %v2676
        %vm3392 = vcmp.eq.f32.partialorder %v3391, 8.507059e+37
        %v3393 = vand.u32 %v2676, 2147483648
        %v3394 = vor.u32 1.1754944e-38, %v3393
        %v3395 = vsel %vm3392, %v3394, %v3390
        %v3396 = vmul.f32 1.0, %v3395
        %v3445 = vrot.slane %v2706, 6
        %v3446 = vrot.slane %v2721, 4
        %v3447 = vrot.slane %v2736, 2
        %v3448 = vrot.slane %v2766, 6
        %v3449 = vrot.slane %v2781, 4
        %v3450 = vrot.slane %v2796, 2
        %v3451 = vrot.slane %v2826, 6
        %v3452 = vrot.slane %v2841, 4
        %v3453 = vrot.slane %v2856, 2
        %v3454 = vrot.slane %v2886, 6
        %v3455 = vrot.slane %v2901, 4
        %v3456 = vrot.slane %v2916, 2
        %v3457 = vrot.slane %v2946, 6
        %v3458 = vrot.slane %v2961, 4
        %v3459 = vrot.slane %v2976, 2
        %v3460 = vrot.slane %v3006, 6
        %v3461 = vrot.slane %v3021, 4
        %v3462 = vrot.slane %v3036, 2
        %v3463 = vrot.slane %v3066, 6
        %v3464 = vrot.slane %v3081, 4
        %v3465 = vrot.slane %v3096, 2
        %v3466 = vrot.slane %v3126, 6
        %v3467 = vrot.slane %v3141, 4
        %v3468 = vrot.slane %v3156, 2
        %v3469 = vrot.slane %v3186, 6
        %v3470 = vrot.slane %v3201, 4
        %v3471 = vrot.slane %v3216, 2
        %v3472 = vrot.slane %v3246, 6
        %v3473 = vrot.slane %v3261, 4
        %v3474 = vrot.slane %v3276, 2
        %v3475 = vrot.slane %v3306, 6
        %v3476 = vrot.slane %v3321, 4
        %v3477 = vrot.slane %v3336, 2
        %v3478 = vrot.slane %v3366, 6
        %v3479 = vrot.slane %v3381, 4
        %v3480 = vrot.slane %v3396, 2
        %vm3481 = vcmask 1041408
        %v3482 = vsel %vm3481, %v2691, %v3445
        %vm3483 = vcmask 1045508
        %v3484 = vsel %vm3483, %v3446, %v3447
        %vm3485 = vcmask 1043456
        %v3486 = vsel %vm3485, %v3482, %v3484
        %v3487 = vsel %vm3481, %v2751, %v3448
        %v3488 = vsel %vm3483, %v3449, %v3450
        %v3489 = vsel %vm3485, %v3487, %v3488
        %v3490 = vsel %vm3481, %v2811, %v3451
        %v3491 = vsel %vm3483, %v3452, %v3453
        %v3492 = vsel %vm3485, %v3490, %v3491
        %v3493 = vsel %vm3481, %v2871, %v3454
        %v3494 = vsel %vm3483, %v3455, %v3456
        %v3495 = vsel %vm3485, %v3493, %v3494
        %v3496 = vsel %vm3481, %v2931, %v3457
        %v3497 = vsel %vm3483, %v3458, %v3459
        %v3498 = vsel %vm3485, %v3496, %v3497
        %v3499 = vsel %vm3481, %v2991, %v3460
        %v3500 = vsel %vm3483, %v3461, %v3462
        %v3501 = vsel %vm3485, %v3499, %v3500
        %v3502 = vsel %vm3481, %v3051, %v3463
        %v3503 = vsel %vm3483, %v3464, %v3465
        %v3504 = vsel %vm3485, %v3502, %v3503
        %v3505 = vsel %vm3481, %v3111, %v3466
        %v3506 = vsel %vm3483, %v3467, %v3468
        %v3507 = vsel %vm3485, %v3505, %v3506
        %v3508 = vsel %vm3481, %v3171, %v3469
        %v3509 = vsel %vm3483, %v3470, %v3471
        %v3510 = vsel %vm3485, %v3508, %v3509
        %v3511 = vsel %vm3481, %v3231, %v3472
        %v3512 = vsel %vm3483, %v3473, %v3474
        %v3513 = vsel %vm3485, %v3511, %v3512
        %v3514 = vsel %vm3481, %v3291, %v3475
        %v3515 = vsel %vm3483, %v3476, %v3477
        %v3516 = vsel %vm3485, %v3514, %v3515
        %v3517 = vsel %vm3481, %v3351, %v3478
        %v3518 = vsel %vm3483, %v3479, %v3480
        %v3519 = vsel %vm3485, %v3517, %v3518
        %3532 = vst [vmem:[%s592] sm:$0xff] %v3486
        %3533 = vst [vmem:[%s592 + $0x8] sm:$0xff] %v3489
        %3534 = vst [vmem:[%s592 + $0x10] sm:$0xff] %v3492
        %3535 = vst [vmem:[%s592 + $0x18] sm:$0xff] %v3495
        %3536 = vst [vmem:[%s592 + $0x20] sm:$0xff] %v3498
        %3537 = vst [vmem:[%s592 + $0x28] sm:$0xff] %v3501
        %3538 = vst [vmem:[%s592 + $0x30] sm:$0xff] %v3504
        %3539 = vst [vmem:[%s592 + $0x38] sm:$0xff] %v3507
        %3540 = vst [vmem:[%s592 + $0x40] sm:$0xff] %v3510
        %3541 = vst [vmem:[%s592 + $0x48] sm:$0xff] %v3513
        %3542 = vst [vmem:[%s592 + $0x50] sm:$0xff] %v3516
        %3543 = vst [vmem:[%s592 + $0x58] sm:$0xff] %v3519
        %s3544 = smul.u32 48, %s14
        %p3545 = scmp.lt.s32.totalorder %s3544, 95
        %s3546 = scalar_select %p3545, %s3544, 95
        %s3547 = smul.addr %s3546, 2
        %s3548 = scalar_lea.vmem %s3, %s3547
        // Predicated region
        $region56: #{vit_autoencoder_forward.3} parent=50 // pred_check
          %p3549 = pneg %p105
        $region57: #{vit_autoencoder_forward.3} parent=50 // pred_check_branch
          %3551 = sbr.rel (%p3549) target = $region59
        $region58: #{vit_autoencoder_forward.3} parent=50 // pred_region
          %s3552 = smul.u32 48, %s14
        $region59: #{vit_autoencoder_forward.3} parent=50 // pred_fallthru
          _
      $region51: #{vit_autoencoder_forward.3} parent=5 // pred_fallthru
        _
      %p3553 = scmp.le.s32.totalorder 2, %s9
      // Predicated region
      $region60: #{vit_autoencoder_forward.3} parent=5 // pred_check
        %p3554 = pneg %p3553
      $region61: #{vit_autoencoder_forward.3} parent=5 // pred_check_branch
        %3556 = sbr.rel (%p3554) target = $region63
      $region62: #{vit_autoencoder_forward.3} parent=5 // pred_region
        %s3557 = ssub.s32 %s9, 2
        // Predicated region
        $region64: #{vit_autoencoder_forward.3} parent=62 // pred_check
          %p3558 = pneg %p111
        $region65: #{vit_autoencoder_forward.3} parent=62 // pred_check_branch
          %3560 = sbr.rel (%p3558) target = $region67
        $region66: #{vit_autoencoder_forward.3} parent=62 // pred_region
          %s3561 = smul.u32 48, %s15
          %p3562 = scmp.lt.s32.totalorder %s3561, 95
          %s3563 = scalar_select %p3562, %s3561, 95
          %s3564 = smul.addr %s3563, 2
          %s3565 = scalar_lea.vmem %s3, %s3564
        $region67: #{vit_autoencoder_forward.3} parent=62 // pred_fallthru
          _
      $region63: #{vit_autoencoder_forward.3} parent=5 // pred_fallthru
        _
    $region6: #{vit_autoencoder_forward.3} parent=1 // loop_footer
      %s13 = sadd.s32 1, %s9
    $region7: #{vit_autoencoder_forward.3} parent=1 // loop_footer_branch
      %8 = sbr.rel target = $region3
    $region8: #{vit_autoencoder_forward.3} parent=1 // loop_exit
      _

// kernel: vit_autoencoder_forward.2
$region0: #{vit_autoencoder_forward.2}
  #allocation0 [shape = 'u32[]', space=smem, size = 0x4, offset = 0x4, fixed_abs, tag = 'smem constant byte address 0x4 - core index']
  #allocation1 [shape = 'u32[72,128]{1,0:T(1,128)}', space=vmem, size = 0x9000, scoped, tag = 'internal scratch']
  %s0 = inlined_call_operand.vmem [shape: f32[2,24,768], index: 0, kind: input, shape index: {}]
  %s1 = inlined_call_operand.vmem [shape: f32[768,32], index: 1, kind: input, shape index: {}]
  %s2 = inlined_call_operand.vmem [shape: f32[24,32], index: 2, kind: input, shape index: {}]
  %s3 = inlined_call_operand.vmem [shape: f32[2,1,32], index: 3, kind: input, shape index: {}]
  %s4 = inlined_call_operand.vmem [shape: f32[2,1,32], index: 4, kind: input, shape index: {}]
  %s5 = inlined_call_operand.vmem [shape: f32[2,32,96], index: 5, kind: input, shape index: {}]
  %s6 = inlined_call_operand.vmem [shape: f32[2,1,96], index: 6, kind: input, shape index: {}]
  %s7 = inlined_call_operand.vmem [shape: f32[2,32,32], index: 7, kind: input, shape index: {}]
  %s8 = inlined_call_operand.vmem [shape: f32[2,1,32], index: 8, kind: input, shape index: {}]
  %s9 = inlined_call_operand.vmem [shape: f32[2,1,32], index: 9, kind: input, shape index: {}]
  %s10 = inlined_call_operand.vmem [shape: f32[2,1,32], index: 10, kind: input, shape index: {}]
  %s11 = inlined_call_operand.vmem [shape: f32[2,32,64], index: 11, kind: input, shape index: {}]
  %s12 = inlined_call_operand.vmem [shape: f32[2,1,64], index: 12, kind: input, shape index: {}]
  %s13 = inlined_call_operand.vmem [shape: f32[2,64,32], index: 13, kind: input, shape index: {}]
  %s14 = inlined_call_operand.vmem [shape: f32[2,1,32], index: 14, kind: input, shape index: {}]
  %s15 = inlined_call_operand.vmem [shape: f32[1,32], index: 15, kind: input, shape index: {}]
  %s16 = inlined_call_operand.vmem [shape: f32[1,32], index: 16, kind: input, shape index: {}]
  %s17 = inlined_call_operand.vmem [shape: f32[32,64], index: 17, kind: input, shape index: {}]
  %s18 = inlined_call_operand.vmem [shape: f32[1,64], index: 18, kind: input, shape index: {}]
  %s19 = inlined_call_operand.vmem [shape: f32[2,64], index: 19, kind: output, shape index: {}]
  %s20 = sld [smem:[#allocation0]]
  $region86: #{vit_autoencoder_forward.2} parent=0
    _
  %s22 = ssub.s32 1, %s20
  %s23 = scalar_select 0, %s22, %s20
  // Predicated region
  $region2: #{vit_autoencoder_forward.2} parent=0 // pred_check
    _
  $region3: #{vit_autoencoder_forward.2} parent=0 // pred_check_branch
    %25 = sbr.rel (0) target = $region5
  $region4: #{vit_autoencoder_forward.2} parent=0 // pred_region
    _
  $region5: #{vit_autoencoder_forward.2} parent=0 // pred_fallthru
    _
  // Predicated region
  $region6: #{vit_autoencoder_forward.2} parent=0 // pred_check
    _
  $region7: #{vit_autoencoder_forward.2} parent=0 // pred_check_branch
    %27 = sbr.rel (0) target = $region9
  $region8: #{vit_autoencoder_forward.2} parent=0 // pred_region
    _
  $region9: #{vit_autoencoder_forward.2} parent=0 // pred_fallthru
    _
  // Predicated region
  $region10: #{vit_autoencoder_forward.2} parent=0 // pred_check
    _
  $region11: #{vit_autoencoder_forward.2} parent=0 // pred_check_branch
    %29 = sbr.rel (0) target = $region13
  $region12: #{vit_autoencoder_forward.2} parent=0 // pred_region
    _
  $region13: #{vit_autoencoder_forward.2} parent=0 // pred_fallthru
    _
  // Predicated region
  $region14: #{vit_autoencoder_forward.2} parent=0 // pred_check
    _
  $region15: #{vit_autoencoder_forward.2} parent=0 // pred_check_branch
    %31 = sbr.rel (0) target = $region17
  $region16: #{vit_autoencoder_forward.2} parent=0 // pred_region
    _
  $region17: #{vit_autoencoder_forward.2} parent=0 // pred_fallthru
    _
  // Predicated region
  $region18: #{vit_autoencoder_forward.2} parent=0 // pred_check
    _
  $region19: #{vit_autoencoder_forward.2} parent=0 // pred_check_branch
    %33 = sbr.rel (0) target = $region21
  $region20: #{vit_autoencoder_forward.2} parent=0 // pred_region
    _
  $region21: #{vit_autoencoder_forward.2} parent=0 // pred_fallthru
    _
  // Predicated region
  $region22: #{vit_autoencoder_forward.2} parent=0 // pred_check
    _
  $region23: #{vit_autoencoder_forward.2} parent=0 // pred_check_branch
    %35 = sbr.rel (0) target = $region25
  $region24: #{vit_autoencoder_forward.2} parent=0 // pred_region
    _
  $region25: #{vit_autoencoder_forward.2} parent=0 // pred_fallthru
    _
  // Predicated region
  $region26: #{vit_autoencoder_forward.2} parent=0 // pred_check
    _
  $region27: #{vit_autoencoder_forward.2} parent=0 // pred_check_branch
    %37 = sbr.rel (0) target = $region29
  $region28: #{vit_autoencoder_forward.2} parent=0 // pred_region
    _
  $region29: #{vit_autoencoder_forward.2} parent=0 // pred_fallthru
    _
  // Predicated region
  $region30: #{vit_autoencoder_forward.2} parent=0 // pred_check
    _
  $region31: #{vit_autoencoder_forward.2} parent=0 // pred_check_branch
    %39 = sbr.rel (0) target = $region33
  $region32: #{vit_autoencoder_forward.2} parent=0 // pred_region
    _
  $region33: #{vit_autoencoder_forward.2} parent=0 // pred_fallthru
    _
  // Predicated region
  $region34: #{vit_autoencoder_forward.2} parent=0 // pred_check
    _
  $region35: #{vit_autoencoder_forward.2} parent=0 // pred_check_branch
    %41 = sbr.rel (0) target = $region37
  $region36: #{vit_autoencoder_forward.2} parent=0 // pred_region
    _
  $region37: #{vit_autoencoder_forward.2} parent=0 // pred_fallthru
    _
  // Predicated region
  $region38: #{vit_autoencoder_forward.2} parent=0 // pred_check
    _
  $region39: #{vit_autoencoder_forward.2} parent=0 // pred_check_branch
    %43 = sbr.rel (0) target = $region41
  $region40: #{vit_autoencoder_forward.2} parent=0 // pred_region
    _
  $region41: #{vit_autoencoder_forward.2} parent=0 // pred_fallthru
    _
  // Predicated region
  $region42: #{vit_autoencoder_forward.2} parent=0 // pred_check
    _
  $region43: #{vit_autoencoder_forward.2} parent=0 // pred_check_branch
    %45 = sbr.rel (0) target = $region45
  $region44: #{vit_autoencoder_forward.2} parent=0 // pred_region
    _
  $region45: #{vit_autoencoder_forward.2} parent=0 // pred_fallthru
    _
  // Predicated region
  $region46: #{vit_autoencoder_forward.2} parent=0 // pred_check
    _
  $region47: #{vit_autoencoder_forward.2} parent=0 // pred_check_branch
    %47 = sbr.rel (0) target = $region49
  $region48: #{vit_autoencoder_forward.2} parent=0 // pred_region
    _
  $region49: #{vit_autoencoder_forward.2} parent=0 // pred_fallthru
    _
  // Predicated region
  $region50: #{vit_autoencoder_forward.2} parent=0 // pred_check
    _
  $region51: #{vit_autoencoder_forward.2} parent=0 // pred_check_branch
    %49 = sbr.rel (0) target = $region53
  $region52: #{vit_autoencoder_forward.2} parent=0 // pred_region
    _
  $region53: #{vit_autoencoder_forward.2} parent=0 // pred_fallthru
    _
  // Predicated region
  $region54: #{vit_autoencoder_forward.2} parent=0 // pred_check
    _
  $region55: #{vit_autoencoder_forward.2} parent=0 // pred_check_branch
    %51 = sbr.rel (0) target = $region57
  $region56: #{vit_autoencoder_forward.2} parent=0 // pred_region
    _
  $region57: #{vit_autoencoder_forward.2} parent=0 // pred_fallthru
    _
  // Predicated region
  $region58: #{vit_autoencoder_forward.2} parent=0 // pred_check
    _
  $region59: #{vit_autoencoder_forward.2} parent=0 // pred_check_branch
    %53 = sbr.rel (0) target = $region61
  $region60: #{vit_autoencoder_forward.2} parent=0 // pred_region
    _
  $region61: #{vit_autoencoder_forward.2} parent=0 // pred_fallthru
    _
  // Predicated region
  $region62: #{vit_autoencoder_forward.2} parent=0 // pred_check
    _
  $region63: #{vit_autoencoder_forward.2} parent=0 // pred_check_branch
    %55 = sbr.rel (0) target = $region65
  $region64: #{vit_autoencoder_forward.2} parent=0 // pred_region
    _
  $region65: #{vit_autoencoder_forward.2} parent=0 // pred_fallthru
    _
  // Predicated region
  $region66: #{vit_autoencoder_forward.2} parent=0 // pred_check
    _
  $region67: #{vit_autoencoder_forward.2} parent=0 // pred_check_branch
    %57 = sbr.rel (0) target = $region69
  $region68: #{vit_autoencoder_forward.2} parent=0 // pred_region
    _
  $region69: #{vit_autoencoder_forward.2} parent=0 // pred_fallthru
    _
  // Predicated region
  $region70: #{vit_autoencoder_forward.2} parent=0 // pred_check
    _
  $region71: #{vit_autoencoder_forward.2} parent=0 // pred_check_branch
    %59 = sbr.rel (0) target = $region73
  $region72: #{vit_autoencoder_forward.2} parent=0 // pred_region
    _
  $region73: #{vit_autoencoder_forward.2} parent=0 // pred_fallthru
    _
  // Predicated region
  $region74: #{vit_autoencoder_forward.2} parent=0 // pred_check
    _
  $region75: #{vit_autoencoder_forward.2} parent=0 // pred_check_branch
    %61 = sbr.rel (0) target = $region77
  $region76: #{vit_autoencoder_forward.2} parent=0 // pred_region
    _
  $region77: #{vit_autoencoder_forward.2} parent=0 // pred_fallthru
    _
  %v62 = vld [vmem:[%s0] sm:$0xff]
  %v63 = vld [vmem:[%s0 + $0x8] sm:$0xff]
  %v64 = vld [vmem:[%s0 + $0x10] sm:$0xff]
  %v65 = vld [vmem:[%s0 + $0x18] sm:$0xff]
  %v66 = vld [vmem:[%s0 + $0x20] sm:$0xff]
  %v67 = vld [vmem:[%s0 + $0x28] sm:$0xff]
  %v68 = vld [vmem:[%s0 + $0x30] sm:$0xff]
  %v69 = vld [vmem:[%s0 + $0x38] sm:$0xff]
  %v70 = vld [vmem:[%s0 + $0x40] sm:$0xff]
  %v71 = vld [vmem:[%s0 + $0x48] sm:$0xff]
  %v72 = vld [vmem:[%s0 + $0x50] sm:$0xff]
  %v73 = vld [vmem:[%s0 + $0x58] sm:$0xff]
  %v74 = vld [vmem:[%s0 + $0x60] sm:$0xff]
  %v75 = vld [vmem:[%s0 + $0x68] sm:$0xff]
  %v76 = vld [vmem:[%s0 + $0x70] sm:$0xff]
  %v77 = vld [vmem:[%s0 + $0x78] sm:$0xff]
  %v78 = vld [vmem:[%s0 + $0x80] sm:$0xff]
  %v79 = vld [vmem:[%s0 + $0x88] sm:$0xff]
  %v80 = vld [vmem:[%s0 + $0x90] sm:$0xff]
  %v81 = vld [vmem:[%s0 + $0x98] sm:$0xff]
  %v82 = vld [vmem:[%s0 + $0xa0] sm:$0xff]
  %v83 = vld [vmem:[%s0 + $0xa8] sm:$0xff]
  %v84 = vld [vmem:[%s0 + $0xb0] sm:$0xff]
  %v85 = vld [vmem:[%s0 + $0xb8] sm:$0xff]
  %v86 = vld [vmem:[%s0 + $0xc0] sm:$0xff]
  %v87 = vld [vmem:[%s0 + $0xc8] sm:$0xff]
  %v88 = vld [vmem:[%s0 + $0xd0] sm:$0xff]
  %v89 = vld [vmem:[%s0 + $0xd8] sm:$0xff]
  %v90 = vld [vmem:[%s0 + $0xe0] sm:$0xff]
  %v91 = vld [vmem:[%s0 + $0xe8] sm:$0xff]
  %v92 = vld [vmem:[%s0 + $0xf0] sm:$0xff]
  %v93 = vld [vmem:[%s0 + $0xf8] sm:$0xff]
  %v94 = vld [vmem:[%s0 + $0x100] sm:$0xff]
  %v95 = vld [vmem:[%s0 + $0x108] sm:$0xff]
  %v96 = vld [vmem:[%s0 + $0x110] sm:$0xff]
  %v97 = vld [vmem:[%s0 + $0x118] sm:$0xff]
  %v98 = vld [vmem:[%s1] sm:$0xff]
  %v99 = vld [vmem:[%s1 + $0x8] sm:$0xff]
  %v100 = vld [vmem:[%s1 + $0x10] sm:$0xff]
  %v101 = vld [vmem:[%s1 + $0x18] sm:$0xff]
  %v102 = vld [vmem:[%s1 + $0x20] sm:$0xff]
  %v103 = vld [vmem:[%s1 + $0x28] sm:$0xff]
  %v104 = vld [vmem:[%s1 + $0x30] sm:$0xff]
  %v105 = vld [vmem:[%s1 + $0x38] sm:$0xff]
  %v106 = vld [vmem:[%s1 + $0x40] sm:$0xff]
  %v107 = vld [vmem:[%s1 + $0x48] sm:$0xff]
  %v108 = vld [vmem:[%s1 + $0x50] sm:$0xff]
  %v109 = vld [vmem:[%s1 + $0x58] sm:$0xff]
  %v110 = vld [vmem:[%s1 + $0x60] sm:$0xff]
  %v111 = vld [vmem:[%s1 + $0x68] sm:$0xff]
  %v112 = vld [vmem:[%s1 + $0x70] sm:$0xff]
  %v113 = vld [vmem:[%s1 + $0x78] sm:$0xff]
  %v114 = vld [vmem:[%s1 + $0x80] sm:$0xff]
  %v115 = vld [vmem:[%s1 + $0x88] sm:$0xff]
  %v116 = vld [vmem:[%s1 + $0x90] sm:$0xff]
  %v117 = vld [vmem:[%s1 + $0x98] sm:$0xff]
  %v118 = vld [vmem:[%s1 + $0xa0] sm:$0xff]
  %v119 = vld [vmem:[%s1 + $0xa8] sm:$0xff]
  %v120 = vld [vmem:[%s1 + $0xb0] sm:$0xff]
  %v121 = vld [vmem:[%s1 + $0xb8] sm:$0xff]
  %v122 = vld [vmem:[%s1 + $0xc0] sm:$0xff]
  %v123 = vld [vmem:[%s1 + $0xc8] sm:$0xff]
  %v124 = vld [vmem:[%s1 + $0xd0] sm:$0xff]
  %v125 = vld [vmem:[%s1 + $0xd8] sm:$0xff]
  %v126 = vld [vmem:[%s1 + $0xe0] sm:$0xff]
  %v127 = vld [vmem:[%s1 + $0xe8] sm:$0xff]
  %v128 = vld [vmem:[%s1 + $0xf0] sm:$0xff]
  %v129 = vld [vmem:[%s1 + $0xf8] sm:$0xff]
  %v130 = vld [vmem:[%s1 + $0x100] sm:$0xff]
  %v131 = vld [vmem:[%s1 + $0x108] sm:$0xff]
  %v132 = vld [vmem:[%s1 + $0x110] sm:$0xff]
  %v133 = vld [vmem:[%s1 + $0x118] sm:$0xff]
  %v134 = vld [vmem:[%s1 + $0x120] sm:$0xff]
  %v135 = vld [vmem:[%s1 + $0x128] sm:$0xff]
  %v136 = vld [vmem:[%s1 + $0x130] sm:$0xff]
  %v137 = vld [vmem:[%s1 + $0x138] sm:$0xff]
  %v138 = vld [vmem:[%s1 + $0x140] sm:$0xff]
  %v139 = vld [vmem:[%s1 + $0x148] sm:$0xff]
  %v140 = vld [vmem:[%s1 + $0x150] sm:$0xff]
  %v141 = vld [vmem:[%s1 + $0x158] sm:$0xff]
  %v142 = vld [vmem:[%s1 + $0x160] sm:$0xff]
  %v143 = vld [vmem:[%s1 + $0x168] sm:$0xff]
  %v144 = vld [vmem:[%s1 + $0x170] sm:$0xff]
  %v145 = vld [vmem:[%s1 + $0x178] sm:$0xff]
  %v146 = vld [vmem:[%s1 + $0x180] sm:$0xff]
  %v147 = vld [vmem:[%s1 + $0x188] sm:$0xff]
  %v148 = vld [vmem:[%s1 + $0x190] sm:$0xff]
  %v149 = vld [vmem:[%s1 + $0x198] sm:$0xff]
  %v150 = vld [vmem:[%s1 + $0x1a0] sm:$0xff]
  %v151 = vld [vmem:[%s1 + $0x1a8] sm:$0xff]
  %v152 = vld [vmem:[%s1 + $0x1b0] sm:$0xff]
  %v153 = vld [vmem:[%s1 + $0x1b8] sm:$0xff]
  %v154 = vld [vmem:[%s1 + $0x1c0] sm:$0xff]
  %v155 = vld [vmem:[%s1 + $0x1c8] sm:$0xff]
  %v156 = vld [vmem:[%s1 + $0x1d0] sm:$0xff]
  %v157 = vld [vmem:[%s1 + $0x1d8] sm:$0xff]
  %v158 = vld [vmem:[%s1 + $0x1e0] sm:$0xff]
  %v159 = vld [vmem:[%s1 + $0x1e8] sm:$0xff]
  %v160 = vld [vmem:[%s1 + $0x1f0] sm:$0xff]
  %v161 = vld [vmem:[%s1 + $0x1f8] sm:$0xff]
  %v162 = vld [vmem:[%s1 + $0x200] sm:$0xff]
  %v163 = vld [vmem:[%s1 + $0x208] sm:$0xff]
  %v164 = vld [vmem:[%s1 + $0x210] sm:$0xff]
  %v165 = vld [vmem:[%s1 + $0x218] sm:$0xff]
  %v166 = vld [vmem:[%s1 + $0x220] sm:$0xff]
  %v167 = vld [vmem:[%s1 + $0x228] sm:$0xff]
  %v168 = vld [vmem:[%s1 + $0x230] sm:$0xff]
  %v169 = vld [vmem:[%s1 + $0x238] sm:$0xff]
  %v170 = vld [vmem:[%s1 + $0x240] sm:$0xff]
  %v171 = vld [vmem:[%s1 + $0x248] sm:$0xff]
  %v172 = vld [vmem:[%s1 + $0x250] sm:$0xff]
  %v173 = vld [vmem:[%s1 + $0x258] sm:$0xff]
  %v174 = vld [vmem:[%s1 + $0x260] sm:$0xff]
  %v175 = vld [vmem:[%s1 + $0x268] sm:$0xff]
  %v176 = vld [vmem:[%s1 + $0x270] sm:$0xff]
  %v177 = vld [vmem:[%s1 + $0x278] sm:$0xff]
  %v178 = vld [vmem:[%s1 + $0x280] sm:$0xff]
  %v179 = vld [vmem:[%s1 + $0x288] sm:$0xff]
  %v180 = vld [vmem:[%s1 + $0x290] sm:$0xff]
  %v181 = vld [vmem:[%s1 + $0x298] sm:$0xff]
  %v182 = vld [vmem:[%s1 + $0x2a0] sm:$0xff]
  %v183 = vld [vmem:[%s1 + $0x2a8] sm:$0xff]
  %v184 = vld [vmem:[%s1 + $0x2b0] sm:$0xff]
  %v185 = vld [vmem:[%s1 + $0x2b8] sm:$0xff]
  %v186 = vld [vmem:[%s1 + $0x2c0] sm:$0xff]
  %v187 = vld [vmem:[%s1 + $0x2c8] sm:$0xff]
  %v188 = vld [vmem:[%s1 + $0x2d0] sm:$0xff]
  %v189 = vld [vmem:[%s1 + $0x2d8] sm:$0xff]
  %v190 = vld [vmem:[%s1 + $0x2e0] sm:$0xff]
  %v191 = vld [vmem:[%s1 + $0x2e8] sm:$0xff]
  %v192 = vld [vmem:[%s1 + $0x2f0] sm:$0xff]
  %v193 = vld [vmem:[%s1 + $0x2f8] sm:$0xff]
  %194 = vmatpush.msra.mxu0 %v113
  %195 = vmatpush.msra.mxu0 %v112
  %196 = vmatpush.msra.mxu0 %v111
  %197 = vmatpush.msra.mxu0 %v110
  %198 = vmatpush.msra.mxu0 %v109
  %199 = vmatpush.msra.mxu0 %v108
  %200 = vmatpush.msra.mxu0 %v107
  %201 = vmatpush.msra.mxu0 %v106
  %202 = vmatpush.msra.mxu0 %v105
  %203 = vmatpush.msra.mxu0 %v104
  %204 = vmatpush.msra.mxu0 %v103
  %205 = vmatpush.msra.mxu0 %v102
  %206 = vmatpush.msra.mxu0 %v101
  %207 = vmatpush.msra.mxu0 %v100
  %208 = vmatpush.msra.mxu0 %v99
  %209 = vmatpush.msra.mxu0 %v98
  %210 = vmatmul.f32.gmra.mxu0 %v62
  %v211 = vpop.f32.mrf.mxu0
  %v212 = vadd.f32 0.0, %v211
  %213 = vmatmul.f32.gmra.mxu0 %v68
  %v214 = vpop.f32.mrf.mxu0
  %v215 = vadd.f32 0.0, %v214
  %216 = vmatmul.f32.gmra.mxu0 %v74
  %v217 = vpop.f32.mrf.mxu0
  %v218 = vadd.f32 0.0, %v217
  %219 = vmatmul.f32.gmra.mxu0 %v80
  %v220 = vpop.f32.mrf.mxu0
  %v221 = vadd.f32 0.0, %v220
  %222 = vmatmul.f32.gmra.mxu0 %v86
  %v223 = vpop.f32.mrf.mxu0
  %v224 = vadd.f32 0.0, %v223
  %225 = vmatmul.f32.gmra.mxu0 %v92
  %v226 = vpop.f32.mrf.mxu0
  %v227 = vadd.f32 0.0, %v226
  %228 = vdwg.mxu0
  %229 = vmatpush.msra.mxu0 %v129
  %230 = vmatpush.msra.mxu0 %v128
  %231 = vmatpush.msra.mxu0 %v127
  %232 = vmatpush.msra.mxu0 %v126
  %233 = vmatpush.msra.mxu0 %v125
  %234 = vmatpush.msra.mxu0 %v124
  %235 = vmatpush.msra.mxu0 %v123
  %236 = vmatpush.msra.mxu0 %v122
  %237 = vmatpush.msra.mxu0 %v121
  %238 = vmatpush.msra.mxu0 %v120
  %239 = vmatpush.msra.mxu0 %v119
  %240 = vmatpush.msra.mxu0 %v118
  %241 = vmatpush.msra.mxu0 %v117
  %242 = vmatpush.msra.mxu0 %v116
  %243 = vmatpush.msra.mxu0 %v115
  %244 = vmatpush.msra.mxu0 %v114
  %245 = vmatmul.f32.gmra.mxu0 %v63
  %v246 = vpop.f32.mrf.mxu0
  %v247 = vadd.f32 %v212, %v246
  %248 = vmatmul.f32.gmra.mxu0 %v69
  %v249 = vpop.f32.mrf.mxu0
  %v250 = vadd.f32 %v215, %v249
  %251 = vmatmul.f32.gmra.mxu0 %v75
  %v252 = vpop.f32.mrf.mxu0
  %v253 = vadd.f32 %v218, %v252
  %254 = vmatmul.f32.gmra.mxu0 %v81
  %v255 = vpop.f32.mrf.mxu0
  %v256 = vadd.f32 %v221, %v255
  %257 = vmatmul.f32.gmra.mxu0 %v87
  %v258 = vpop.f32.mrf.mxu0
  %v259 = vadd.f32 %v224, %v258
  %260 = vmatmul.f32.gmra.mxu0 %v93
  %v261 = vpop.f32.mrf.mxu0
  %v262 = vadd.f32 %v227, %v261
  %263 = vdwg.mxu0
  %264 = vmatpush.msra.mxu0 %v145
  %265 = vmatpush.msra.mxu0 %v144
  %266 = vmatpush.msra.mxu0 %v143
  %267 = vmatpush.msra.mxu0 %v142
  %268 = vmatpush.msra.mxu0 %v141
  %269 = vmatpush.msra.mxu0 %v140
  %270 = vmatpush.msra.mxu0 %v139
  %271 = vmatpush.msra.mxu0 %v138
  %272 = vmatpush.msra.mxu0 %v137
  %273 = vmatpush.msra.mxu0 %v136
  %274 = vmatpush.msra.mxu0 %v135
  %275 = vmatpush.msra.mxu0 %v134
  %276 = vmatpush.msra.mxu0 %v133
  %277 = vmatpush.msra.mxu0 %v132
  %278 = vmatpush.msra.mxu0 %v131
  %279 = vmatpush.msra.mxu0 %v130
  %280 = vmatmul.f32.gmra.mxu0 %v64
  %v281 = vpop.f32.mrf.mxu0
  %v282 = vadd.f32 %v247, %v281
  %283 = vmatmul.f32.gmra.mxu0 %v70
  %v284 = vpop.f32.mrf.mxu0
  %v285 = vadd.f32 %v250, %v284
  %286 = vmatmul.f32.gmra.mxu0 %v76
  %v287 = vpop.f32.mrf.mxu0
  %v288 = vadd.f32 %v253, %v287
  %289 = vmatmul.f32.gmra.mxu0 %v82
  %v290 = vpop.f32.mrf.mxu0
  %v291 = vadd.f32 %v256, %v290
  %292 = vmatmul.f32.gmra.mxu0 %v88
  %v293 = vpop.f32.mrf.mxu0
  %v294 = vadd.f32 %v259, %v293
  %295 = vmatmul.f32.gmra.mxu0 %v94
  %v296 = vpop.f32.mrf.mxu0
  %v297 = vadd.f32 %v262, %v296
  %298 = vdwg.mxu0
  %299 = vmatpush.msra.mxu0 %v161
  %300 = vmatpush.msra.mxu0 %v160
  %301 = vmatpush.msra.mxu0 %v159
  %302 = vmatpush.msra.mxu0 %v158
  %303 = vmatpush.msra.mxu0 %v157
  %304 = vmatpush.msra.mxu0 %v156
  %305 = vmatpush.msra.mxu0 %v155
  %306 = vmatpush.msra.mxu0 %v154
  %307 = vmatpush.msra.mxu0 %v153
  %308 = vmatpush.msra.mxu0 %v152
  %309 = vmatpush.msra.mxu0 %v151
  %310 = vmatpush.msra.mxu0 %v150
  %311 = vmatpush.msra.mxu0 %v149
  %312 = vmatpush.msra.mxu0 %v148
  %313 = vmatpush.msra.mxu0 %v147
  %314 = vmatpush.msra.mxu0 %v146
  %315 = vmatmul.f32.gmra.mxu0 %v65
  %v316 = vpop.f32.mrf.mxu0
  %v317 = vadd.f32 %v282, %v316
  %318 = vmatmul.f32.gmra.mxu0 %v71
  %v319 = vpop.f32.mrf.mxu0
  %v320 = vadd.f32 %v285, %v319
  %321 = vmatmul.f32.gmra.mxu0 %v77
  %v322 = vpop.f32.mrf.mxu0
  %v323 = vadd.f32 %v288, %v322
  %324 = vmatmul.f32.gmra.mxu0 %v83
  %v325 = vpop.f32.mrf.mxu0
  %v326 = vadd.f32 %v291, %v325
  %327 = vmatmul.f32.gmra.mxu0 %v89
  %v328 = vpop.f32.mrf.mxu0
  %v329 = vadd.f32 %v294, %v328
  %330 = vmatmul.f32.gmra.mxu0 %v95
  %v331 = vpop.f32.mrf.mxu0
  %v332 = vadd.f32 %v297, %v331
  %333 = vdwg.mxu0
  %334 = vmatpush.msra.mxu0 %v177
  %335 = vmatpush.msra.mxu0 %v176
  %336 = vmatpush.msra.mxu0 %v175
  %337 = vmatpush.msra.mxu0 %v174
  %338 = vmatpush.msra.mxu0 %v173
  %339 = vmatpush.msra.mxu0 %v172
  %340 = vmatpush.msra.mxu0 %v171
  %341 = vmatpush.msra.mxu0 %v170
  %342 = vmatpush.msra.mxu0 %v169
  %343 = vmatpush.msra.mxu0 %v168
  %344 = vmatpush.msra.mxu0 %v167
  %345 = vmatpush.msra.mxu0 %v166
  %346 = vmatpush.msra.mxu0 %v165
  %347 = vmatpush.msra.mxu0 %v164
  %348 = vmatpush.msra.mxu0 %v163
  %349 = vmatpush.msra.mxu0 %v162
  %350 = vmatmul.f32.gmra.mxu0 %v66
  %v351 = vpop.f32.mrf.mxu0
  %v352 = vadd.f32 %v317, %v351
  %353 = vmatmul.f32.gmra.mxu0 %v72
  %v354 = vpop.f32.mrf.mxu0
  %v355 = vadd.f32 %v320, %v354
  %356 = vmatmul.f32.gmra.mxu0 %v78
  %v357 = vpop.f32.mrf.mxu0
  %v358 = vadd.f32 %v323, %v357
  %359 = vmatmul.f32.gmra.mxu0 %v84
  %v360 = vpop.f32.mrf.mxu0
  %v361 = vadd.f32 %v326, %v360
  %362 = vmatmul.f32.gmra.mxu0 %v90
  %v363 = vpop.f32.mrf.mxu0
  %v364 = vadd.f32 %v329, %v363
  %365 = vmatmul.f32.gmra.mxu0 %v96
  %v366 = vpop.f32.mrf.mxu0
  %v367 = vadd.f32 %v332, %v366
  %368 = vdwg.mxu0
  %369 = vmatpush.msra.mxu0 %v193
  %370 = vmatpush.msra.mxu0 %v192
  %371 = vmatpush.msra.mxu0 %v191
  %372 = vmatpush.msra.mxu0 %v190
  %373 = vmatpush.msra.mxu0 %v189
  %374 = vmatpush.msra.mxu0 %v188
  %375 = vmatpush.msra.mxu0 %v187
  %376 = vmatpush.msra.mxu0 %v186
  %377 = vmatpush.msra.mxu0 %v185
  %378 = vmatpush.msra.mxu0 %v184
  %379 = vmatpush.msra.mxu0 %v183
  %380 = vmatpush.msra.mxu0 %v182
  %381 = vmatpush.msra.mxu0 %v181
  %382 = vmatpush.msra.mxu0 %v180
  %383 = vmatpush.msra.mxu0 %v179
  %384 = vmatpush.msra.mxu0 %v178
  %385 = vmatmul.f32.gmra.mxu0 %v67
  %v386 = vpop.f32.mrf.mxu0
  %v387 = vadd.f32 %v352, %v386
  %388 = vmatmul.f32.gmra.mxu0 %v73
  %v389 = vpop.f32.mrf.mxu0
  %v390 = vadd.f32 %v355, %v389
  %391 = vmatmul.f32.gmra.mxu0 %v79
  %v392 = vpop.f32.mrf.mxu0
  %v393 = vadd.f32 %v358, %v392
  %394 = vmatmul.f32.gmra.mxu0 %v85
  %v395 = vpop.f32.mrf.mxu0
  %v396 = vadd.f32 %v361, %v395
  %397 = vmatmul.f32.gmra.mxu0 %v91
  %v398 = vpop.f32.mrf.mxu0
  %v399 = vadd.f32 %v364, %v398
  %400 = vmatmul.f32.gmra.mxu0 %v97
  %v401 = vpop.f32.mrf.mxu0
  %v402 = vadd.f32 %v367, %v401
  %403 = vdwg.mxu0
  %v404 = vld [vmem:[%s2] sm:$0xff]
  %v405 = vld [vmem:[%s2 + $0x8] sm:$0xff]
  %v406 = vld [vmem:[%s2 + $0x10] sm:$0xff]
  %v407 = vadd.f32 %v387, %v404
  %v408 = vadd.f32 %v390, %v405
  %v409 = vadd.f32 %v393, %v406
  %v410 = vadd.f32 %v396, %v404
  %v411 = vadd.f32 %v399, %v405
  %v412 = vadd.f32 %v402, %v406
  %v413 = vlaneseq
  %v414 = vand.u32 %v413, 127
  %vm415 = vcmp.lt.s32.totalorder %v414, 17
  %v416 = vsel %vm415, 0.0, -1e+30
  %v417 = vld [vmem:[%s3] sm:$0x1]
  %v418 = vld [vmem:[%s4] sm:$0x1]
  %v419 = vld [vmem:[%s5] sm:$0xff]
  %v420 = vld [vmem:[%s5 + $0x8] sm:$0xff]
  %v421 = vld [vmem:[%s5 + $0x10] sm:$0xff]
  %v422 = vld [vmem:[%s5 + $0x18] sm:$0xff]
  %v423 = vld [vmem:[%s6] sm:$0x1]
  %v424 = vld [vmem:[%s7] sm:$0xff]
  %v425 = vld [vmem:[%s7 + $0x8] sm:$0xff]
  %v426 = vld [vmem:[%s7 + $0x10] sm:$0xff]
  %v427 = vld [vmem:[%s7 + $0x18] sm:$0xff]
  %v428 = vld [vmem:[%s8] sm:$0x1]
  %vm429 = vcmask 261120
  %v430 = vsel %vm429, %v407, 0.0
  %431 = vadd.xlane.f32.xlu0 %v430
  %v432 = vpop.xlane.xlu0 %431
  %v433 = vsel %vm429, %v408, 0.0
  %434 = vadd.xlane.f32.xlu0 %v433
  %v435 = vpop.xlane.xlu0 %434
  %v436 = vsel %vm429, %v409, 0.0
  %437 = vadd.xlane.f32.xlu0 %v436
  %v438 = vpop.xlane.xlu0 %437
  %v439 = vsel %vm429, %v410, 0.0
  %440 = vadd.xlane.f32.xlu0 %v439
  %v441 = vpop.xlane.xlu0 %440
  %v442 = vsel %vm429, %v411, 0.0
  %443 = vadd.xlane.f32.xlu0 %v442
  %v444 = vpop.xlane.xlu0 %443
  %v445 = vsel %vm429, %v412, 0.0
  %446 = vadd.xlane.f32.xlu0 %v445
  %v447 = vpop.xlane.xlu0 %446
  %v448 = vrcp.pop 32.0
  %v449 = vmul.f32 32.0, %v448
  %v450 = vsub.f32 1.0, %v449
  %v451 = vmul.f32 %v448, %v450
  %v452 = vadd.f32 %v448, %v451
  %vm453 = vweird.f32 %v448
  %v454 = vsel %vm453, %v448, %v452
  %v455 = vmul.f32 %v432, %v454
  %v456 = vmul.f32 %v435, %v454
  %v457 = vmul.f32 %v438, %v454
  %v458 = vmul.f32 %v441, %v454
  %v459 = vmul.f32 %v444, %v454
  %v460 = vmul.f32 %v447, %v454
  %v461 = vsub.f32 %v407, %v455
  %v462 = vsub.f32 %v408, %v456
  %v463 = vsub.f32 %v409, %v457
  %v464 = vsub.f32 %v410, %v458
  %v465 = vsub.f32 %v411, %v459
  %v466 = vsub.f32 %v412, %v460
  %v467 = vmul.f32 %v461, %v461
  %v468 = vmul.f32 %v462, %v462
  %v469 = vmul.f32 %v463, %v463
  %v470 = vmul.f32 %v464, %v464
  %v471 = vmul.f32 %v465, %v465
  %v472 = vmul.f32 %v466, %v466
  %v473 = vsel %vm429, %v467, 0.0
  %474 = vadd.xlane.f32.xlu0 %v473
  %v475 = vpop.xlane.xlu0 %474
  %v476 = vsel %vm429, %v468, 0.0
  %477 = vadd.xlane.f32.xlu0 %v476
  %v478 = vpop.xlane.xlu0 %477
  %v479 = vsel %vm429, %v469, 0.0
  %480 = vadd.xlane.f32.xlu0 %v479
  %v481 = vpop.xlane.xlu0 %480
  %v482 = vsel %vm429, %v470, 0.0
  %483 = vadd.xlane.f32.xlu0 %v482
  %v484 = vpop.xlane.xlu0 %483
  %v485 = vsel %vm429, %v471, 0.0
  %486 = vadd.xlane.f32.xlu0 %v485
  %v487 = vpop.xlane.xlu0 %486
  %v488 = vsel %vm429, %v472, 0.0
  %489 = vadd.xlane.f32.xlu0 %v488
  %v490 = vpop.xlane.xlu0 %489
  %v491 = vmul.f32 %v475, %v454
  %v492 = vmul.f32 %v478, %v454
  %v493 = vmul.f32 %v481, %v454
  %v494 = vmul.f32 %v484, %v454
  %v495 = vmul.f32 %v487, %v454
  %v496 = vmul.f32 %v490, %v454
  %v497 = vadd.f32 %v491, 1e-06
  %v498 = vadd.f32 %v492, 1e-06
  %v499 = vadd.f32 %v493, 1e-06
  %v500 = vadd.f32 %v494, 1e-06
  %v501 = vadd.f32 %v495, 1e-06
  %v502 = vadd.f32 %v496, 1e-06
  %v503 = vrsqrt.pop %v497
  %v504 = vmul.f32 %v503, %v497
  %v505 = vmul.f32 %v504, %v503
  %v506 = vmul.f32 0.5, %v505
  %v507 = vsub.f32 1.5, %v506
  %v508 = vmul.f32 %v503, %v507
  %vm509 = vweird.f32 %v497
  %vm510 = vweird.f32 %v503
  %vm511 = vmor %vm509, %vm510
  %v512 = vsel %vm511, %v503, %v508
  %v513 = vrsqrt.pop %v498
  %v514 = vmul.f32 %v513, %v498
  %v515 = vmul.f32 %v514, %v513
  %v516 = vmul.f32 0.5, %v515
  %v517 = vsub.f32 1.5, %v516
  %v518 = vmul.f32 %v513, %v517
  %vm519 = vweird.f32 %v498
  %vm520 = vweird.f32 %v513
  %vm521 = vmor %vm519, %vm520
  %v522 = vsel %vm521, %v513, %v518
  %v523 = vrsqrt.pop %v499
  %v524 = vmul.f32 %v523, %v499
  %v525 = vmul.f32 %v524, %v523
  %v526 = vmul.f32 0.5, %v525
  %v527 = vsub.f32 1.5, %v526
  %v528 = vmul.f32 %v523, %v527
  %vm529 = vweird.f32 %v499
  %vm530 = vweird.f32 %v523
  %vm531 = vmor %vm529, %vm530
  %v532 = vsel %vm531, %v523, %v528
  %v533 = vrsqrt.pop %v500
  %v534 = vmul.f32 %v533, %v500
  %v535 = vmul.f32 %v534, %v533
  %v536 = vmul.f32 0.5, %v535
  %v537 = vsub.f32 1.5, %v536
  %v538 = vmul.f32 %v533, %v537
  %vm539 = vweird.f32 %v500
  %vm540 = vweird.f32 %v533
  %vm541 = vmor %vm539, %vm540
  %v542 = vsel %vm541, %v533, %v538
  %v543 = vrsqrt.pop %v501
  %v544 = vmul.f32 %v543, %v501
  %v545 = vmul.f32 %v544, %v543
  %v546 = vmul.f32 0.5, %v545
  %v547 = vsub.f32 1.5, %v546
  %v548 = vmul.f32 %v543, %v547
  %vm549 = vweird.f32 %v501
  %vm550 = vweird.f32 %v543
  %vm551 = vmor %vm549, %vm550
  %v552 = vsel %vm551, %v543, %v548
  %v553 = vrsqrt.pop %v502
  %v554 = vmul.f32 %v553, %v502
  %v555 = vmul.f32 %v554, %v553
  %v556 = vmul.f32 0.5, %v555
  %v557 = vsub.f32 1.5, %v556
  %v558 = vmul.f32 %v553, %v557
  %vm559 = vweird.f32 %v502
  %vm560 = vweird.f32 %v553
  %vm561 = vmor %vm559, %vm560
  %v562 = vsel %vm561, %v553, %v558
  %v563 = vmul.f32 %v461, %v512
  %v564 = vmul.f32 %v462, %v522
  %v565 = vmul.f32 %v463, %v532
  %v566 = vmul.f32 %v464, %v542
  %v567 = vmul.f32 %v465, %v552
  %v568 = vmul.f32 %v466, %v562
  %v570 = vperm.slane %v417, 0
  %v572 = vmul.f32 %v563, %v570
  %v573 = vmul.f32 %v564, %v570
  %v574 = vmul.f32 %v565, %v570
  %v575 = vmul.f32 %v566, %v570
  %v576 = vmul.f32 %v567, %v570
  %v577 = vmul.f32 %v568, %v570
  %v579 = vperm.slane %v418, 0
  %v581 = vadd.f32 %v572, %v579
  %v582 = vadd.f32 %v573, %v579
  %v583 = vadd.f32 %v574, %v579
  %v584 = vadd.f32 %v575, %v579
  %v585 = vadd.f32 %v576, %v579
  %v586 = vadd.f32 %v577, %v579
  %v588 = vperm.slane %v423, 0
  %v591 = vsel %vm429, %v581, 0
  %v594 = vsel %vm429, %v582, 0
  %v597 = vsel %vm429, %v583, 0
  %v600 = vsel %vm429, %v584, 0
  %v603 = vsel %vm429, %v585, 0
  %v606 = vsel %vm429, %v586, 0
  %608 = vmatpush.msra.mxu0 0.0
  %609 = vmatpush.msra.mxu0 0.0
  %610 = vmatpush.msra.mxu0 0.0
  %611 = vmatpush.msra.mxu0 0.0
  %612 = vmatpush.msra.mxu0 0.0
  %613 = vmatpush.msra.mxu0 0.0
  %614 = vmatpush.msra.mxu0 0.0
  %615 = vmatpush.msra.mxu0 0.0
  %616 = vmatpush.msra.mxu0 0.0
  %617 = vmatpush.msra.mxu0 0.0
  %618 = vmatpush.msra.mxu0 0.0
  %619 = vmatpush.msra.mxu0 0.0
  %620 = vmatpush.msra.mxu0 %v422
  %621 = vmatpush.msra.mxu0 %v421
  %622 = vmatpush.msra.mxu0 %v420
  %623 = vmatpush.msra.mxu0 %v419
  %624 = vmatmul.f32.gmra.mxu0 %v591
  %v625 = vpop.f32.mrf.mxu0
  %v626 = vadd.f32 %v588, %v625
  %627 = vmatmul.f32.gmra.mxu0 %v594
  %v628 = vpop.f32.mrf.mxu0
  %v629 = vadd.f32 %v588, %v628
  %630 = vmatmul.f32.gmra.mxu0 %v597
  %v631 = vpop.f32.mrf.mxu0
  %v632 = vadd.f32 %v588, %v631
  %633 = vmatmul.f32.gmra.mxu0 %v600
  %v634 = vpop.f32.mrf.mxu0
  %v635 = vadd.f32 %v588, %v634
  %636 = vmatmul.f32.gmra.mxu0 %v603
  %v637 = vpop.f32.mrf.mxu0
  %v638 = vadd.f32 %v588, %v637
  %639 = vmatmul.f32.gmra.mxu0 %v606
  %v640 = vpop.f32.mrf.mxu0
  %v641 = vadd.f32 %v588, %v640
  %642 = vdwg.mxu0
  %646 = vrot.lane.b32.xlu0 %v626, 96
  %v647 = vpop.permute.xlu0 %646
  %648 = vrot.lane.b32.xlu0 %v629, 96
  %v649 = vpop.permute.xlu0 %648
  %650 = vrot.lane.b32.xlu0 %v632, 96
  %v651 = vpop.permute.xlu0 %650
  %vm652 = vcmask 130048
  %v653 = vsel %vm652, %v626, 0
  %v655 = vsel %vm652, %v629, 0
  %v657 = vsel %vm652, %v632, 0
  %v659 = vsel %vm652, %v647, 0
  %v661 = vsel %vm652, %v649, 0
  %v663 = vsel %vm652, %v651, 0
  %665 = vmatpush.xpose.msra.mxu0 0.0
  %666 = vmatpush.xpose.msra.mxu0 0.0
  %667 = vmatpush.xpose.msra.mxu0 0.0
  %668 = vmatpush.xpose.msra.mxu0 0.0
  %669 = vmatpush.xpose.msra.mxu0 0.0
  %670 = vmatpush.xpose.msra.mxu0 0.0
  %671 = vmatpush.xpose.msra.mxu0 0.0
  %672 = vmatpush.xpose.msra.mxu0 0.0
  %673 = vmatpush.xpose.msra.mxu0 0.0
  %674 = vmatpush.xpose.msra.mxu0 0.0
  %675 = vmatpush.xpose.msra.mxu0 0.0
  %676 = vmatpush.xpose.msra.mxu0 0.0
  %677 = vmatpush.xpose.msra.mxu0 0.0
  %678 = vmatpush.xpose.msra.mxu0 %v663
  %679 = vmatpush.xpose.msra.mxu0 %v661
  %680 = vmatpush.xpose.msra.mxu0 %v659
  %681 = vmatmul.f32.gmra.mxu0 %v653
  %v682 = vpop.f32.mrf.mxu0
  %v683 = vadd.f32 0.0, %v682
  %684 = vmatmul.f32.gmra.mxu0 %v655
  %v685 = vpop.f32.mrf.mxu0
  %v686 = vadd.f32 0.0, %v685
  %687 = vmatmul.f32.gmra.mxu0 %v657
  %v688 = vpop.f32.mrf.mxu0
  %v689 = vadd.f32 0.0, %v688
  %690 = vdwg.mxu0
  %v691 = vmul.f32 %v683, 0.25
  %v692 = vmul.f32 %v686, 0.25
  %v693 = vmul.f32 %v689, 0.25
  %v694 = vadd.f32 %v691, %v416
  %v695 = vadd.f32 %v692, %v416
  %v696 = vadd.f32 %v693, %v416
  %vm697 = vcmask 195584
  %v698 = vsel %vm697, %v694, -inf
  %699 = vmax.xlane.f32.xlu0 %v698
  %v700 = vpop.xlane.xlu0 %699
  %v701 = vsel %vm697, %v695, -inf
  %702 = vmax.xlane.f32.xlu0 %v701
  %v703 = vpop.xlane.xlu0 %702
  %v704 = vsel %vm697, %v696, -inf
  %705 = vmax.xlane.f32.xlu0 %v704
  %v706 = vpop.xlane.xlu0 %705
  %v707 = vsub.f32 %v694, %v700
  %v708 = vsub.f32 %v695, %v703
  %v709 = vsub.f32 %v696, %v706
  %v710 = vmul.f32 %v707, 1.442695
  %v711 = vpow.pop %v710
  %v712 = vmul.f32 %v708, 1.442695
  %v713 = vpow.pop %v712
  %v714 = vmul.f32 %v709, 1.442695
  %v715 = vpow.pop %v714
  %v716 = vsel %vm697, %v711, 0.0
  %717 = vadd.xlane.f32.xlu0 %v716
  %v718 = vpop.xlane.xlu0 %717
  %v719 = vsel %vm697, %v713, 0.0
  %720 = vadd.xlane.f32.xlu0 %v719
  %v721 = vpop.xlane.xlu0 %720
  %v722 = vsel %vm697, %v715, 0.0
  %723 = vadd.xlane.f32.xlu0 %v722
  %v724 = vpop.xlane.xlu0 %723
  %v725 = vrcp.pop %v718
  %v726 = vmul.f32 %v718, %v725
  %v727 = vsub.f32 1.0, %v726
  %v728 = vmul.f32 %v725, %v727
  %v729 = vadd.f32 %v725, %v728
  %vm730 = vweird.f32 %v718
  %vm731 = vweird.f32 %v725
  %vm732 = vmor %vm730, %vm731
  %v733 = vsel %vm732, %v725, %v729
  %v734 = vand.u32 2147483647, %v718
  %vm735 = vcmp.eq.f32.partialorder %v734, 8.507059e+37
  %v736 = vand.u32 %v718, 2147483648
  %v737 = vor.u32 1.1754944e-38, %v736
  %v738 = vsel %vm735, %v737, %v733
  %v739 = vmul.f32 %v711, %v738
  %v740 = vrcp.pop %v721
  %v741 = vmul.f32 %v721, %v740
  %v742 = vsub.f32 1.0, %v741
  %v743 = vmul.f32 %v740, %v742
  %v744 = vadd.f32 %v740, %v743
  %vm745 = vweird.f32 %v721
  %vm746 = vweird.f32 %v740
  %vm747 = vmor %vm745, %vm746
  %v748 = vsel %vm747, %v740, %v744
  %v749 = vand.u32 2147483647, %v721
  %vm750 = vcmp.eq.f32.partialorder %v749, 8.507059e+37
  %v751 = vand.u32 %v721, 2147483648
  %v752 = vor.u32 1.1754944e-38, %v751
  %v753 = vsel %vm750, %v752, %v748
  %v754 = vmul.f32 %v713, %v753
  %v755 = vrcp.pop %v724
  %v756 = vmul.f32 %v724, %v755
  %v757 = vsub.f32 1.0, %v756
  %v758 = vmul.f32 %v755, %v757
  %v759 = vadd.f32 %v755, %v758
  %vm760 = vweird.f32 %v724
  %vm761 = vweird.f32 %v755
  %vm762 = vmor %vm760, %vm761
  %v763 = vsel %vm762, %v755, %v759
  %v764 = vand.u32 2147483647, %v724
  %vm765 = vcmp.eq.f32.partialorder %v764, 8.507059e+37
  %v766 = vand.u32 %v724, 2147483648
  %v767 = vor.u32 1.1754944e-38, %v766
  %v768 = vsel %vm765, %v767, %v763
  %v769 = vmul.f32 %v715, %v768
  %770 = vrot.lane.b32.xlu0 %v626, 64
  %v771 = vpop.permute.xlu0 %770
  %772 = vrot.lane.b32.xlu0 %v629, 64
  %v773 = vpop.permute.xlu0 %772
  %774 = vrot.lane.b32.xlu0 %v632, 64
  %v775 = vpop.permute.xlu0 %774
  %v780 = vsel %vm697, %v739, 0
  %v783 = vsel %vm697, %v754, 0
  %v786 = vsel %vm697, %v769, 0
  %788 = vmatpush.msra.mxu0 0.0
  %789 = vmatpush.msra.mxu0 0.0
  %790 = vmatpush.msra.mxu0 0.0
  %791 = vmatpush.msra.mxu0 0.0
  %792 = vmatpush.msra.mxu0 0.0
  %793 = vmatpush.msra.mxu0 0.0
  %794 = vmatpush.msra.mxu0 0.0
  %795 = vmatpush.msra.mxu0 0.0
  %796 = vmatpush.msra.mxu0 0.0
  %797 = vmatpush.msra.mxu0 0.0
  %798 = vmatpush.msra.mxu0 0.0
  %799 = vmatpush.msra.mxu0 0.0
  %800 = vmatpush.msra.mxu0 0.0
  %801 = vmatpush.msra.mxu0 %v775
  %802 = vmatpush.msra.mxu0 %v773
  %803 = vmatpush.msra.mxu0 %v771
  %804 = vmatmul.f32.gmra.mxu0 %v780
  %v805 = vpop.f32.mrf.mxu0
  %v806 = vadd.f32 0.0, %v805
  %807 = vmatmul.f32.gmra.mxu0 %v783
  %v808 = vpop.f32.mrf.mxu0
  %v809 = vadd.f32 0.0, %v808
  %810 = vmatmul.f32.gmra.mxu0 %v786
  %v811 = vpop.f32.mrf.mxu0
  %v812 = vadd.f32 0.0, %v811
  %813 = vdwg.mxu0
  %814 = vrot.lane.b32.xlu0 %v626, 112
  %v815 = vpop.permute.xlu0 %814
  %816 = vrot.lane.b32.xlu0 %v629, 112
  %v817 = vpop.permute.xlu0 %816
  %818 = vrot.lane.b32.xlu0 %v632, 112
  %v819 = vpop.permute.xlu0 %818
  %820 = vrot.lane.b32.xlu0 %v626, 80
  %v821 = vpop.permute.xlu0 %820
  %822 = vrot.lane.b32.xlu0 %v629, 80
  %v823 = vpop.permute.xlu0 %822
  %824 = vrot.lane.b32.xlu0 %v632, 80
  %v825 = vpop.permute.xlu0 %824
  %v826 = vsel %vm652, %v815, 0
  %v828 = vsel %vm652, %v817, 0
  %v830 = vsel %vm652, %v819, 0
  %v832 = vsel %vm652, %v821, 0
  %v834 = vsel %vm652, %v823, 0
  %v836 = vsel %vm652, %v825, 0
  %838 = vmatpush.xpose.msra.mxu0 0.0
  %839 = vmatpush.xpose.msra.mxu0 0.0
  %840 = vmatpush.xpose.msra.mxu0 0.0
  %841 = vmatpush.xpose.msra.mxu0 0.0
  %842 = vmatpush.xpose.msra.mxu0 0.0
  %843 = vmatpush.xpose.msra.mxu0 0.0
  %844 = vmatpush.xpose.msra.mxu0 0.0
  %845 = vmatpush.xpose.msra.mxu0 0.0
  %846 = vmatpush.xpose.msra.mxu0 0.0
  %847 = vmatpush.xpose.msra.mxu0 0.0
  %848 = vmatpush.xpose.msra.mxu0 0.0
  %849 = vmatpush.xpose.msra.mxu0 0.0
  %850 = vmatpush.xpose.msra.mxu0 0.0
  %851 = vmatpush.xpose.msra.mxu0 %v836
  %852 = vmatpush.xpose.msra.mxu0 %v834
  %853 = vmatpush.xpose.msra.mxu0 %v832
  %854 = vmatmul.f32.gmra.mxu0 %v826
  %v855 = vpop.f32.mrf.mxu0
  %v856 = vadd.f32 0.0, %v855
  %857 = vmatmul.f32.gmra.mxu0 %v828
  %v858 = vpop.f32.mrf.mxu0
  %v859 = vadd.f32 0.0, %v858
  %860 = vmatmul.f32.gmra.mxu0 %v830
  %v861 = vpop.f32.mrf.mxu0
  %v862 = vadd.f32 0.0, %v861
  %863 = vdwg.mxu0
  %v864 = vmul.f32 %v856, 0.25
  %v865 = vmul.f32 %v859, 0.25
  %v866 = vmul.f32 %v862, 0.25
  %v867 = vadd.f32 %v864, %v416
  %v868 = vadd.f32 %v865, %v416
  %v869 = vadd.f32 %v866, %v416
  %v870 = vsel %vm697, %v867, -inf
  %871 = vmax.xlane.f32.xlu0 %v870
  %v872 = vpop.xlane.xlu0 %871
  %v873 = vsel %vm697, %v868, -inf
  %874 = vmax.xlane.f32.xlu0 %v873
  %v875 = vpop.xlane.xlu0 %874
  %v876 = vsel %vm697, %v869, -inf
  %877 = vmax.xlane.f32.xlu0 %v876
  %v878 = vpop.xlane.xlu0 %877
  %v879 = vsub.f32 %v867, %v872
  %v880 = vsub.f32 %v868, %v875
  %v881 = vsub.f32 %v869, %v878
  %v882 = vmul.f32 %v879, 1.442695
  %v883 = vpow.pop %v882
  %v884 = vmul.f32 %v880, 1.442695
  %v885 = vpow.pop %v884
  %v886 = vmul.f32 %v881, 1.442695
  %v887 = vpow.pop %v886
  %v888 = vsel %vm697, %v883, 0.0
  %889 = vadd.xlane.f32.xlu0 %v888
  %v890 = vpop.xlane.xlu0 %889
  %v891 = vsel %vm697, %v885, 0.0
  %892 = vadd.xlane.f32.xlu0 %v891
  %v893 = vpop.xlane.xlu0 %892
  %v894 = vsel %vm697, %v887, 0.0
  %895 = vadd.xlane.f32.xlu0 %v894
  %v896 = vpop.xlane.xlu0 %895
  %v897 = vrcp.pop %v890
  %v898 = vmul.f32 %v890, %v897
  %v899 = vsub.f32 1.0, %v898
  %v900 = vmul.f32 %v897, %v899
  %v901 = vadd.f32 %v897, %v900
  %vm902 = vweird.f32 %v890
  %vm903 = vweird.f32 %v897
  %vm904 = vmor %vm902, %vm903
  %v905 = vsel %vm904, %v897, %v901
  %v906 = vand.u32 2147483647, %v890
  %vm907 = vcmp.eq.f32.partialorder %v906, 8.507059e+37
  %v908 = vand.u32 %v890, 2147483648
  %v909 = vor.u32 1.1754944e-38, %v908
  %v910 = vsel %vm907, %v909, %v905
  %v911 = vmul.f32 %v883, %v910
  %v912 = vrcp.pop %v893
  %v913 = vmul.f32 %v893, %v912
  %v914 = vsub.f32 1.0, %v913
  %v915 = vmul.f32 %v912, %v914
  %v916 = vadd.f32 %v912, %v915
  %vm917 = vweird.f32 %v893
  %vm918 = vweird.f32 %v912
  %vm919 = vmor %vm917, %vm918
  %v920 = vsel %vm919, %v912, %v916
  %v921 = vand.u32 2147483647, %v893
  %vm922 = vcmp.eq.f32.partialorder %v921, 8.507059e+37
  %v923 = vand.u32 %v893, 2147483648
  %v924 = vor.u32 1.1754944e-38, %v923
  %v925 = vsel %vm922, %v924, %v920
  %v926 = vmul.f32 %v885, %v925
  %v927 = vrcp.pop %v896
  %v928 = vmul.f32 %v896, %v927
  %v929 = vsub.f32 1.0, %v928
  %v930 = vmul.f32 %v927, %v929
  %v931 = vadd.f32 %v927, %v930
  %vm932 = vweird.f32 %v896
  %vm933 = vweird.f32 %v927
  %vm934 = vmor %vm932, %vm933
  %v935 = vsel %vm934, %v927, %v931
  %v936 = vand.u32 2147483647, %v896
  %vm937 = vcmp.eq.f32.partialorder %v936, 8.507059e+37
  %v938 = vand.u32 %v896, 2147483648
  %v939 = vor.u32 1.1754944e-38, %v938
  %v940 = vsel %vm937, %v939, %v935
  %v941 = vmul.f32 %v887, %v940
  %942 = vrot.lane.b32.xlu0 %v626, 48
  %v943 = vpop.permute.xlu0 %942
  %944 = vrot.lane.b32.xlu0 %v629, 48
  %v945 = vpop.permute.xlu0 %944
  %946 = vrot.lane.b32.xlu0 %v632, 48
  %v947 = vpop.permute.xlu0 %946
  %v952 = vsel %vm697, %v911, 0
  %v955 = vsel %vm697, %v926, 0
  %v958 = vsel %vm697, %v941, 0
  %960 = vmatpush.msra.mxu0 0.0
  %961 = vmatpush.msra.mxu0 0.0
  %962 = vmatpush.msra.mxu0 0.0
  %963 = vmatpush.msra.mxu0 0.0
  %964 = vmatpush.msra.mxu0 0.0
  %965 = vmatpush.msra.mxu0 0.0
  %966 = vmatpush.msra.mxu0 0.0
  %967 = vmatpush.msra.mxu0 0.0
  %968 = vmatpush.msra.mxu0 0.0
  %969 = vmatpush.msra.mxu0 0.0
  %970 = vmatpush.msra.mxu0 0.0
  %971 = vmatpush.msra.mxu0 0.0
  %972 = vmatpush.msra.mxu0 0.0
  %973 = vmatpush.msra.mxu0 %v947
  %974 = vmatpush.msra.mxu0 %v945
  %975 = vmatpush.msra.mxu0 %v943
  %976 = vmatmul.f32.gmra.mxu0 %v952
  %v977 = vpop.f32.mrf.mxu0
  %v978 = vadd.f32 0.0, %v977
  %979 = vmatmul.f32.gmra.mxu0 %v955
  %v980 = vpop.f32.mrf.mxu0
  %v981 = vadd.f32 0.0, %v980
  %982 = vmatmul.f32.gmra.mxu0 %v958
  %v983 = vpop.f32.mrf.mxu0
  %v984 = vadd.f32 0.0, %v983
  %985 = vdwg.mxu0
  %v987 = vsel %vm652, %v978, 0
  %v990 = vsel %vm652, %v981, 0
  %v993 = vsel %vm652, %v984, 0
  %995 = vmatpush.msra.mxu0 0.0
  %996 = vmatpush.msra.mxu0 0.0
  %997 = vmatpush.msra.mxu0 0.0
  %998 = vmatpush.msra.mxu0 0.0
  %999 = vmatpush.msra.mxu0 0.0
  %1000 = vmatpush.msra.mxu0 0.0
  %1001 = vmatpush.msra.mxu0 0.0
  %1002 = vmatpush.msra.mxu0 0.0
  %1003 = vmatpush.msra.mxu0 0.0
  %1004 = vmatpush.msra.mxu0 0.0
  %1005 = vmatpush.msra.mxu0 0.0
  %1006 = vmatpush.msra.mxu0 0.0
  %1007 = vmatpush.msra.mxu0 0.0
  %1008 = vmatpush.msra.mxu0 0.0
  %1009 = vmatpush.msra.mxu0 %v427
  %1010 = vmatpush.msra.mxu0 %v426
  %1011 = vmatmul.f32.gmra.mxu0 %v987
  %v1012 = vpop.f32.mrf.mxu0
  %v1013 = vadd.f32 0.0, %v1012
  %1014 = vmatmul.f32.gmra.mxu0 %v990
  %v1015 = vpop.f32.mrf.mxu0
  %v1016 = vadd.f32 0.0, %v1015
  %1017 = vmatmul.f32.gmra.mxu0 %v993
  %v1018 = vpop.f32.mrf.mxu0
  %v1019 = vadd.f32 0.0, %v1018
  %1020 = vdwg.mxu0
  %v1022 = vsel %vm652, %v806, 0
  %v1025 = vsel %vm652, %v809, 0
  %v1028 = vsel %vm652, %v812, 0
  %1030 = vmatpush.msra.mxu0 0.0
  %1031 = vmatpush.msra.mxu0 0.0
  %1032 = vmatpush.msra.mxu0 0.0
  %1033 = vmatpush.msra.mxu0 0.0
  %1034 = vmatpush.msra.mxu0 0.0
  %1035 = vmatpush.msra.mxu0 0.0
  %1036 = vmatpush.msra.mxu0 0.0
  %1037 = vmatpush.msra.mxu0 0.0
  %1038 = vmatpush.msra.mxu0 0.0
  %1039 = vmatpush.msra.mxu0 0.0
  %1040 = vmatpush.msra.mxu0 0.0
  %1041 = vmatpush.msra.mxu0 0.0
  %1042 = vmatpush.msra.mxu0 0.0
  %1043 = vmatpush.msra.mxu0 0.0
  %1044 = vmatpush.msra.mxu0 %v425
  %1045 = vmatpush.msra.mxu0 %v424
  %1046 = vmatmul.f32.gmra.mxu0 %v1022
  %v1047 = vpop.f32.mrf.mxu0
  %v1048 = vadd.f32 %v1013, %v1047
  %1049 = vmatmul.f32.gmra.mxu0 %v1025
  %v1050 = vpop.f32.mrf.mxu0
  %v1051 = vadd.f32 %v1016, %v1050
  %1052 = vmatmul.f32.gmra.mxu0 %v1028
  %v1053 = vpop.f32.mrf.mxu0
  %v1054 = vadd.f32 %v1019, %v1053
  %1055 = vdwg.mxu0
  %v1057 = vperm.slane %v428, 0
  %v1059 = vadd.f32 %v1048, %v1057
  %v1060 = vadd.f32 %v1051, %v1057
  %v1061 = vadd.f32 %v1054, %v1057
  %1065 = vrot.lane.b32.xlu0 %v635, 96
  %v1066 = vpop.permute.xlu0 %1065
  %1067 = vrot.lane.b32.xlu0 %v638, 96
  %v1068 = vpop.permute.xlu0 %1067
  %1069 = vrot.lane.b32.xlu0 %v641, 96
  %v1070 = vpop.permute.xlu0 %1069
  %v1071 = vsel %vm652, %v635, 0
  %v1073 = vsel %vm652, %v638, 0
  %v1075 = vsel %vm652, %v641, 0
  %v1077 = vsel %vm652, %v1066, 0
  %v1079 = vsel %vm652, %v1068, 0
  %v1081 = vsel %vm652, %v1070, 0
  %1083 = vmatpush.xpose.msra.mxu0 0.0
  %1084 = vmatpush.xpose.msra.mxu0 0.0
  %1085 = vmatpush.xpose.msra.mxu0 0.0
  %1086 = vmatpush.xpose.msra.mxu0 0.0
  %1087 = vmatpush.xpose.msra.mxu0 0.0
  %1088 = vmatpush.xpose.msra.mxu0 0.0
  %1089 = vmatpush.xpose.msra.mxu0 0.0
  %1090 = vmatpush.xpose.msra.mxu0 0.0
  %1091 = vmatpush.xpose.msra.mxu0 0.0
  %1092 = vmatpush.xpose.msra.mxu0 0.0
  %1093 = vmatpush.xpose.msra.mxu0 0.0
  %1094 = vmatpush.xpose.msra.mxu0 0.0
  %1095 = vmatpush.xpose.msra.mxu0 0.0
  %1096 = vmatpush.xpose.msra.mxu0 %v1081
  %1097 = vmatpush.xpose.msra.mxu0 %v1079
  %1098 = vmatpush.xpose.msra.mxu0 %v1077
  %1099 = vmatmul.f32.gmra.mxu0 %v1071
  %v1100 = vpop.f32.mrf.mxu0
  %v1101 = vadd.f32 0.0, %v1100
  %1102 = vmatmul.f32.gmra.mxu0 %v1073
  %v1103 = vpop.f32.mrf.mxu0
  %v1104 = vadd.f32 0.0, %v1103
  %1105 = vmatmul.f32.gmra.mxu0 %v1075
  %v1106 = vpop.f32.mrf.mxu0
  %v1107 = vadd.f32 0.0, %v1106
  %1108 = vdwg.mxu0
  %v1109 = vmul.f32 %v1101, 0.25
  %v1110 = vmul.f32 %v1104, 0.25
  %v1111 = vmul.f32 %v1107, 0.25
  %v1112 = vadd.f32 %v1109, %v416
  %v1113 = vadd.f32 %v1110, %v416
  %v1114 = vadd.f32 %v1111, %v416
  %v1115 = vsel %vm697, %v1112, -inf
  %1116 = vmax.xlane.f32.xlu0 %v1115
  %v1117 = vpop.xlane.xlu0 %1116
  %v1118 = vsel %vm697, %v1113, -inf
  %1119 = vmax.xlane.f32.xlu0 %v1118
  %v1120 = vpop.xlane.xlu0 %1119
  %v1121 = vsel %vm697, %v1114, -inf
  %1122 = vmax.xlane.f32.xlu0 %v1121
  %v1123 = vpop.xlane.xlu0 %1122
  %v1124 = vsub.f32 %v1112, %v1117
  %v1125 = vsub.f32 %v1113, %v1120
  %v1126 = vsub.f32 %v1114, %v1123
  %v1127 = vmul.f32 %v1124, 1.442695
  %v1128 = vpow.pop %v1127
  %v1129 = vmul.f32 %v1125, 1.442695
  %v1130 = vpow.pop %v1129
  %v1131 = vmul.f32 %v1126, 1.442695
  %v1132 = vpow.pop %v1131
  %v1133 = vsel %vm697, %v1128, 0.0
  %1134 = vadd.xlane.f32.xlu0 %v1133
  %v1135 = vpop.xlane.xlu0 %1134
  %v1136 = vsel %vm697, %v1130, 0.0
  %1137 = vadd.xlane.f32.xlu0 %v1136
  %v1138 = vpop.xlane.xlu0 %1137
  %v1139 = vsel %vm697, %v1132, 0.0
  %1140 = vadd.xlane.f32.xlu0 %v1139
  %v1141 = vpop.xlane.xlu0 %1140
  %v1142 = vrcp.pop %v1135
  %v1143 = vmul.f32 %v1135, %v1142
  %v1144 = vsub.f32 1.0, %v1143
  %v1145 = vmul.f32 %v1142, %v1144
  %v1146 = vadd.f32 %v1142, %v1145
  %vm1147 = vweird.f32 %v1135
  %vm1148 = vweird.f32 %v1142
  %vm1149 = vmor %vm1147, %vm1148
  %v1150 = vsel %vm1149, %v1142, %v1146
  %v1151 = vand.u32 2147483647, %v1135
  %vm1152 = vcmp.eq.f32.partialorder %v1151, 8.507059e+37
  %v1153 = vand.u32 %v1135, 2147483648
  %v1154 = vor.u32 1.1754944e-38, %v1153
  %v1155 = vsel %vm1152, %v1154, %v1150
  %v1156 = vmul.f32 %v1128, %v1155
  %v1157 = vrcp.pop %v1138
  %v1158 = vmul.f32 %v1138, %v1157
  %v1159 = vsub.f32 1.0, %v1158
  %v1160 = vmul.f32 %v1157, %v1159
  %v1161 = vadd.f32 %v1157, %v1160
  %vm1162 = vweird.f32 %v1138
  %vm1163 = vweird.f32 %v1157
  %vm1164 = vmor %vm1162, %vm1163
  %v1165 = vsel %vm1164, %v1157, %v1161
  %v1166 = vand.u32 2147483647, %v1138
  %vm1167 = vcmp.eq.f32.partialorder %v1166, 8.507059e+37
  %v1168 = vand.u32 %v1138, 2147483648
  %v1169 = vor.u32 1.1754944e-38, %v1168
  %v1170 = vsel %vm1167, %v1169, %v1165
  %v1171 = vmul.f32 %v1130, %v1170
  %v1172 = vrcp.pop %v1141
  %v1173 = vmul.f32 %v1141, %v1172
  %v1174 = vsub.f32 1.0, %v1173
  %v1175 = vmul.f32 %v1172, %v1174
  %v1176 = vadd.f32 %v1172, %v1175
  %vm1177 = vweird.f32 %v1141
  %vm1178 = vweird.f32 %v1172
  %vm1179 = vmor %vm1177, %vm1178
  %v1180 = vsel %vm1179, %v1172, %v1176
  %v1181 = vand.u32 2147483647, %v1141
  %vm1182 = vcmp.eq.f32.partialorder %v1181, 8.507059e+37
  %v1183 = vand.u32 %v1141, 2147483648
  %v1184 = vor.u32 1.1754944e-38, %v1183
  %v1185 = vsel %vm1182, %v1184, %v1180
  %v1186 = vmul.f32 %v1132, %v1185
  %1187 = vrot.lane.b32.xlu0 %v635, 64
  %v1188 = vpop.permute.xlu0 %1187
  %1189 = vrot.lane.b32.xlu0 %v638, 64
  %v1190 = vpop.permute.xlu0 %1189
  %1191 = vrot.lane.b32.xlu0 %v641, 64
  %v1192 = vpop.permute.xlu0 %1191
  %v1197 = vsel %vm697, %v1156, 0
  %v1200 = vsel %vm697, %v1171, 0
  %v1203 = vsel %vm697, %v1186, 0
  %1205 = vmatpush.msra.mxu0 0.0
  %1206 = vmatpush.msra.mxu0 0.0
  %1207 = vmatpush.msra.mxu0 0.0
  %1208 = vmatpush.msra.mxu0 0.0
  %1209 = vmatpush.msra.mxu0 0.0
  %1210 = vmatpush.msra.mxu0 0.0
  %1211 = vmatpush.msra.mxu0 0.0
  %1212 = vmatpush.msra.mxu0 0.0
  %1213 = vmatpush.msra.mxu0 0.0
  %1214 = vmatpush.msra.mxu0 0.0
  %1215 = vmatpush.msra.mxu0 0.0
  %1216 = vmatpush.msra.mxu0 0.0
  %1217 = vmatpush.msra.mxu0 0.0
  %1218 = vmatpush.msra.mxu0 %v1192
  %1219 = vmatpush.msra.mxu0 %v1190
  %1220 = vmatpush.msra.mxu0 %v1188
  %1221 = vmatmul.f32.gmra.mxu0 %v1197
  %v1222 = vpop.f32.mrf.mxu0
  %v1223 = vadd.f32 0.0, %v1222
  %1224 = vmatmul.f32.gmra.mxu0 %v1200
  %v1225 = vpop.f32.mrf.mxu0
  %v1226 = vadd.f32 0.0, %v1225
  %1227 = vmatmul.f32.gmra.mxu0 %v1203
  %v1228 = vpop.f32.mrf.mxu0
  %v1229 = vadd.f32 0.0, %v1228
  %1230 = vdwg.mxu0
  %1231 = vrot.lane.b32.xlu0 %v635, 112
  %v1232 = vpop.permute.xlu0 %1231
  %1233 = vrot.lane.b32.xlu0 %v638, 112
  %v1234 = vpop.permute.xlu0 %1233
  %1235 = vrot.lane.b32.xlu0 %v641, 112
  %v1236 = vpop.permute.xlu0 %1235
  %1237 = vrot.lane.b32.xlu0 %v635, 80
  %v1238 = vpop.permute.xlu0 %1237
  %1239 = vrot.lane.b32.xlu0 %v638, 80
  %v1240 = vpop.permute.xlu0 %1239
  %1241 = vrot.lane.b32.xlu0 %v641, 80
  %v1242 = vpop.permute.xlu0 %1241
  %v1243 = vsel %vm652, %v1232, 0
  %v1245 = vsel %vm652, %v1234, 0
  %v1247 = vsel %vm652, %v1236, 0
  %v1249 = vsel %vm652, %v1238, 0
  %v1251 = vsel %vm652, %v1240, 0
  %v1253 = vsel %vm652, %v1242, 0
  %1255 = vmatpush.xpose.msra.mxu0 0.0
  %1256 = vmatpush.xpose.msra.mxu0 0.0
  %1257 = vmatpush.xpose.msra.mxu0 0.0
  %1258 = vmatpush.xpose.msra.mxu0 0.0
  %1259 = vmatpush.xpose.msra.mxu0 0.0
  %1260 = vmatpush.xpose.msra.mxu0 0.0
  %1261 = vmatpush.xpose.msra.mxu0 0.0
  %1262 = vmatpush.xpose.msra.mxu0 0.0
  %1263 = vmatpush.xpose.msra.mxu0 0.0
  %1264 = vmatpush.xpose.msra.mxu0 0.0
  %1265 = vmatpush.xpose.msra.mxu0 0.0
  %1266 = vmatpush.xpose.msra.mxu0 0.0
  %1267 = vmatpush.xpose.msra.mxu0 0.0
  %1268 = vmatpush.xpose.msra.mxu0 %v1253
  %1269 = vmatpush.xpose.msra.mxu0 %v1251
  %1270 = vmatpush.xpose.msra.mxu0 %v1249
  %1271 = vmatmul.f32.gmra.mxu0 %v1243
  %v1272 = vpop.f32.mrf.mxu0
  %v1273 = vadd.f32 0.0, %v1272
  %1274 = vmatmul.f32.gmra.mxu0 %v1245
  %v1275 = vpop.f32.mrf.mxu0
  %v1276 = vadd.f32 0.0, %v1275
  %1277 = vmatmul.f32.gmra.mxu0 %v1247
  %v1278 = vpop.f32.mrf.mxu0
  %v1279 = vadd.f32 0.0, %v1278
  %1280 = vdwg.mxu0
  %v1281 = vmul.f32 %v1273, 0.25
  %v1282 = vmul.f32 %v1276, 0.25
  %v1283 = vmul.f32 %v1279, 0.25
  %v1284 = vadd.f32 %v1281, %v416
  %v1285 = vadd.f32 %v1282, %v416
  %v1286 = vadd.f32 %v1283, %v416
  %v1287 = vsel %vm697, %v1284, -inf
  %1288 = vmax.xlane.f32.xlu0 %v1287
  %v1289 = vpop.xlane.xlu0 %1288
  %v1290 = vsel %vm697, %v1285, -inf
  %1291 = vmax.xlane.f32.xlu0 %v1290
  %v1292 = vpop.xlane.xlu0 %1291
  %v1293 = vsel %vm697, %v1286, -inf
  %1294 = vmax.xlane.f32.xlu0 %v1293
  %v1295 = vpop.xlane.xlu0 %1294
  %v1296 = vsub.f32 %v1284, %v1289
  %v1297 = vsub.f32 %v1285, %v1292
  %v1298 = vsub.f32 %v1286, %v1295
  %v1299 = vmul.f32 %v1296, 1.442695
  %v1300 = vpow.pop %v1299
  %v1301 = vmul.f32 %v1297, 1.442695
  %v1302 = vpow.pop %v1301
  %v1303 = vmul.f32 %v1298, 1.442695
  %v1304 = vpow.pop %v1303
  %v1305 = vsel %vm697, %v1300, 0.0
  %1306 = vadd.xlane.f32.xlu0 %v1305
  %v1307 = vpop.xlane.xlu0 %1306
  %v1308 = vsel %vm697, %v1302, 0.0
  %1309 = vadd.xlane.f32.xlu0 %v1308
  %v1310 = vpop.xlane.xlu0 %1309
  %v1311 = vsel %vm697, %v1304, 0.0
  %1312 = vadd.xlane.f32.xlu0 %v1311
  %v1313 = vpop.xlane.xlu0 %1312
  %v1314 = vrcp.pop %v1307
  %v1315 = vmul.f32 %v1307, %v1314
  %v1316 = vsub.f32 1.0, %v1315
  %v1317 = vmul.f32 %v1314, %v1316
  %v1318 = vadd.f32 %v1314, %v1317
  %vm1319 = vweird.f32 %v1307
  %vm1320 = vweird.f32 %v1314
  %vm1321 = vmor %vm1319, %vm1320
  %v1322 = vsel %vm1321, %v1314, %v1318
  %v1323 = vand.u32 2147483647, %v1307
  %vm1324 = vcmp.eq.f32.partialorder %v1323, 8.507059e+37
  %v1325 = vand.u32 %v1307, 2147483648
  %v1326 = vor.u32 1.1754944e-38, %v1325
  %v1327 = vsel %vm1324, %v1326, %v1322
  %v1328 = vmul.f32 %v1300, %v1327
  %v1329 = vrcp.pop %v1310
  %v1330 = vmul.f32 %v1310, %v1329
  %v1331 = vsub.f32 1.0, %v1330
  %v1332 = vmul.f32 %v1329, %v1331
  %v1333 = vadd.f32 %v1329, %v1332
  %vm1334 = vweird.f32 %v1310
  %vm1335 = vweird.f32 %v1329
  %vm1336 = vmor %vm1334, %vm1335
  %v1337 = vsel %vm1336, %v1329, %v1333
  %v1338 = vand.u32 2147483647, %v1310
  %vm1339 = vcmp.eq.f32.partialorder %v1338, 8.507059e+37
  %v1340 = vand.u32 %v1310, 2147483648
  %v1341 = vor.u32 1.1754944e-38, %v1340
  %v1342 = vsel %vm1339, %v1341, %v1337
  %v1343 = vmul.f32 %v1302, %v1342
  %v1344 = vrcp.pop %v1313
  %v1345 = vmul.f32 %v1313, %v1344
  %v1346 = vsub.f32 1.0, %v1345
  %v1347 = vmul.f32 %v1344, %v1346
  %v1348 = vadd.f32 %v1344, %v1347
  %vm1349 = vweird.f32 %v1313
  %vm1350 = vweird.f32 %v1344
  %vm1351 = vmor %vm1349, %vm1350
  %v1352 = vsel %vm1351, %v1344, %v1348
  %v1353 = vand.u32 2147483647, %v1313
  %vm1354 = vcmp.eq.f32.partialorder %v1353, 8.507059e+37
  %v1355 = vand.u32 %v1313, 2147483648
  %v1356 = vor.u32 1.1754944e-38, %v1355
  %v1357 = vsel %vm1354, %v1356, %v1352
  %v1358 = vmul.f32 %v1304, %v1357
  %1359 = vrot.lane.b32.xlu0 %v635, 48
  %v1360 = vpop.permute.xlu0 %1359
  %1361 = vrot.lane.b32.xlu0 %v638, 48
  %v1362 = vpop.permute.xlu0 %1361
  %1363 = vrot.lane.b32.xlu0 %v641, 48
  %v1364 = vpop.permute.xlu0 %1363
  %v1369 = vsel %vm697, %v1328, 0
  %v1372 = vsel %vm697, %v1343, 0
  %v1375 = vsel %vm697, %v1358, 0
  %1377 = vmatpush.msra.mxu0 0.0
  %1378 = vmatpush.msra.mxu0 0.0
  %1379 = vmatpush.msra.mxu0 0.0
  %1380 = vmatpush.msra.mxu0 0.0
  %1381 = vmatpush.msra.mxu0 0.0
  %1382 = vmatpush.msra.mxu0 0.0
  %1383 = vmatpush.msra.mxu0 0.0
  %1384 = vmatpush.msra.mxu0 0.0
  %1385 = vmatpush.msra.mxu0 0.0
  %1386 = vmatpush.msra.mxu0 0.0
  %1387 = vmatpush.msra.mxu0 0.0
  %1388 = vmatpush.msra.mxu0 0.0
  %1389 = vmatpush.msra.mxu0 0.0
  %1390 = vmatpush.msra.mxu0 %v1364
  %1391 = vmatpush.msra.mxu0 %v1362
  %1392 = vmatpush.msra.mxu0 %v1360
  %1393 = vmatmul.f32.gmra.mxu0 %v1369
  %v1394 = vpop.f32.mrf.mxu0
  %v1395 = vadd.f32 0.0, %v1394
  %1396 = vmatmul.f32.gmra.mxu0 %v1372
  %v1397 = vpop.f32.mrf.mxu0
  %v1398 = vadd.f32 0.0, %v1397
  %1399 = vmatmul.f32.gmra.mxu0 %v1375
  %v1400 = vpop.f32.mrf.mxu0
  %v1401 = vadd.f32 0.0, %v1400
  %1402 = vdwg.mxu0
  %v1404 = vsel %vm652, %v1395, 0
  %v1407 = vsel %vm652, %v1398, 0
  %v1410 = vsel %vm652, %v1401, 0
  %1412 = vmatpush.msra.mxu0 0.0
  %1413 = vmatpush.msra.mxu0 0.0
  %1414 = vmatpush.msra.mxu0 0.0
  %1415 = vmatpush.msra.mxu0 0.0
  %1416 = vmatpush.msra.mxu0 0.0
  %1417 = vmatpush.msra.mxu0 0.0
  %1418 = vmatpush.msra.mxu0 0.0
  %1419 = vmatpush.msra.mxu0 0.0
  %1420 = vmatpush.msra.mxu0 0.0
  %1421 = vmatpush.msra.mxu0 0.0
  %1422 = vmatpush.msra.mxu0 0.0
  %1423 = vmatpush.msra.mxu0 0.0
  %1424 = vmatpush.msra.mxu0 0.0
  %1425 = vmatpush.msra.mxu0 0.0
  %1426 = vmatpush.msra.mxu0 %v427
  %1427 = vmatpush.msra.mxu0 %v426
  %1428 = vmatmul.f32.gmra.mxu0 %v1404
  %v1429 = vpop.f32.mrf.mxu0
  %v1430 = vadd.f32 0.0, %v1429
  %1431 = vmatmul.f32.gmra.mxu0 %v1407
  %v1432 = vpop.f32.mrf.mxu0
  %v1433 = vadd.f32 0.0, %v1432
  %1434 = vmatmul.f32.gmra.mxu0 %v1410
  %v1435 = vpop.f32.mrf.mxu0
  %v1436 = vadd.f32 0.0, %v1435
  %1437 = vdwg.mxu0
  %v1439 = vsel %vm652, %v1223, 0
  %v1442 = vsel %vm652, %v1226, 0
  %v1445 = vsel %vm652, %v1229, 0
  %1447 = vmatpush.msra.mxu0 0.0
  %1448 = vmatpush.msra.mxu0 0.0
  %1449 = vmatpush.msra.mxu0 0.0
  %1450 = vmatpush.msra.mxu0 0.0
  %1451 = vmatpush.msra.mxu0 0.0
  %1452 = vmatpush.msra.mxu0 0.0
  %1453 = vmatpush.msra.mxu0 0.0
  %1454 = vmatpush.msra.mxu0 0.0
  %1455 = vmatpush.msra.mxu0 0.0
  %1456 = vmatpush.msra.mxu0 0.0
  %1457 = vmatpush.msra.mxu0 0.0
  %1458 = vmatpush.msra.mxu0 0.0
  %1459 = vmatpush.msra.mxu0 0.0
  %1460 = vmatpush.msra.mxu0 0.0
  %1461 = vmatpush.msra.mxu0 %v425
  %1462 = vmatpush.msra.mxu0 %v424
  %1463 = vmatmul.f32.gmra.mxu0 %v1439
  %v1464 = vpop.f32.mrf.mxu0
  %v1465 = vadd.f32 %v1430, %v1464
  %1466 = vmatmul.f32.gmra.mxu0 %v1442
  %v1467 = vpop.f32.mrf.mxu0
  %v1468 = vadd.f32 %v1433, %v1467
  %1469 = vmatmul.f32.gmra.mxu0 %v1445
  %v1470 = vpop.f32.mrf.mxu0
  %v1471 = vadd.f32 %v1436, %v1470
  %1472 = vdwg.mxu0
  %v1473 = vadd.f32 %v1465, %v1057
  %v1474 = vadd.f32 %v1468, %v1057
  %v1475 = vadd.f32 %v1471, %v1057
  %v1476 = vadd.f32 %v407, %v1059
  %v1477 = vadd.f32 %v408, %v1060
  %v1478 = vadd.f32 %v409, %v1061
  %v1479 = vadd.f32 %v410, %v1473
  %v1480 = vadd.f32 %v411, %v1474
  %v1481 = vadd.f32 %v412, %v1475
  %v1482 = vld [vmem:[%s9] sm:$0x1]
  %v1483 = vld [vmem:[%s10] sm:$0x1]
  %v1484 = vsel %vm429, %v1476, 0.0
  %1485 = vadd.xlane.f32.xlu0 %v1484
  %v1486 = vpop.xlane.xlu0 %1485
  %v1487 = vsel %vm429, %v1477, 0.0
  %1488 = vadd.xlane.f32.xlu0 %v1487
  %v1489 = vpop.xlane.xlu0 %1488
  %v1490 = vsel %vm429, %v1478, 0.0
  %1491 = vadd.xlane.f32.xlu0 %v1490
  %v1492 = vpop.xlane.xlu0 %1491
  %v1493 = vsel %vm429, %v1479, 0.0
  %1494 = vadd.xlane.f32.xlu0 %v1493
  %v1495 = vpop.xlane.xlu0 %1494
  %v1496 = vsel %vm429, %v1480, 0.0
  %1497 = vadd.xlane.f32.xlu0 %v1496
  %v1498 = vpop.xlane.xlu0 %1497
  %v1499 = vsel %vm429, %v1481, 0.0
  %1500 = vadd.xlane.f32.xlu0 %v1499
  %v1501 = vpop.xlane.xlu0 %1500
  %v1502 = vmul.f32 %v1486, %v454
  %v1503 = vmul.f32 %v1489, %v454
  %v1504 = vmul.f32 %v1492, %v454
  %v1505 = vmul.f32 %v1495, %v454
  %v1506 = vmul.f32 %v1498, %v454
  %v1507 = vmul.f32 %v1501, %v454
  %v1508 = vsub.f32 %v1476, %v1502
  %v1509 = vsub.f32 %v1477, %v1503
  %v1510 = vsub.f32 %v1478, %v1504
  %v1511 = vsub.f32 %v1479, %v1505
  %v1512 = vsub.f32 %v1480, %v1506
  %v1513 = vsub.f32 %v1481, %v1507
  %v1514 = vmul.f32 %v1508, %v1508
  %v1515 = vmul.f32 %v1509, %v1509
  %v1516 = vmul.f32 %v1510, %v1510
  %v1517 = vmul.f32 %v1511, %v1511
  %v1518 = vmul.f32 %v1512, %v1512
  %v1519 = vmul.f32 %v1513, %v1513
  %v1520 = vsel %vm429, %v1514, 0.0
  %1521 = vadd.xlane.f32.xlu0 %v1520
  %v1522 = vpop.xlane.xlu0 %1521
  %v1523 = vsel %vm429, %v1515, 0.0
  %1524 = vadd.xlane.f32.xlu0 %v1523
  %v1525 = vpop.xlane.xlu0 %1524
  %v1526 = vsel %vm429, %v1516, 0.0
  %1527 = vadd.xlane.f32.xlu0 %v1526
  %v1528 = vpop.xlane.xlu0 %1527
  %v1529 = vsel %vm429, %v1517, 0.0
  %1530 = vadd.xlane.f32.xlu0 %v1529
  %v1531 = vpop.xlane.xlu0 %1530
  %v1532 = vsel %vm429, %v1518, 0.0
  %1533 = vadd.xlane.f32.xlu0 %v1532
  %v1534 = vpop.xlane.xlu0 %1533
  %v1535 = vsel %vm429, %v1519, 0.0
  %1536 = vadd.xlane.f32.xlu0 %v1535
  %v1537 = vpop.xlane.xlu0 %1536
  %v1538 = vmul.f32 %v1522, %v454
  %v1539 = vmul.f32 %v1525, %v454
  %v1540 = vmul.f32 %v1528, %v454
  %v1541 = vmul.f32 %v1531, %v454
  %v1542 = vmul.f32 %v1534, %v454
  %v1543 = vmul.f32 %v1537, %v454
  %v1544 = vadd.f32 %v1538, 1e-06
  %v1545 = vadd.f32 %v1539, 1e-06
  %v1546 = vadd.f32 %v1540, 1e-06
  %v1547 = vadd.f32 %v1541, 1e-06
  %v1548 = vadd.f32 %v1542, 1e-06
  %v1549 = vadd.f32 %v1543, 1e-06
  %v1550 = vrsqrt.pop %v1544
  %v1551 = vmul.f32 %v1550, %v1544
  %v1552 = vmul.f32 %v1551, %v1550
  %v1553 = vmul.f32 0.5, %v1552
  %v1554 = vsub.f32 1.5, %v1553
  %v1555 = vmul.f32 %v1550, %v1554
  %vm1556 = vweird.f32 %v1544
  %vm1557 = vweird.f32 %v1550
  %vm1558 = vmor %vm1556, %vm1557
  %v1559 = vsel %vm1558, %v1550, %v1555
  %v1560 = vrsqrt.pop %v1545
  %v1561 = vmul.f32 %v1560, %v1545
  %v1562 = vmul.f32 %v1561, %v1560
  %v1563 = vmul.f32 0.5, %v1562
  %v1564 = vsub.f32 1.5, %v1563
  %v1565 = vmul.f32 %v1560, %v1564
  %vm1566 = vweird.f32 %v1545
  %vm1567 = vweird.f32 %v1560
  %vm1568 = vmor %vm1566, %vm1567
  %v1569 = vsel %vm1568, %v1560, %v1565
  %v1570 = vrsqrt.pop %v1546
  %v1571 = vmul.f32 %v1570, %v1546
  %v1572 = vmul.f32 %v1571, %v1570
  %v1573 = vmul.f32 0.5, %v1572
  %v1574 = vsub.f32 1.5, %v1573
  %v1575 = vmul.f32 %v1570, %v1574
  %vm1576 = vweird.f32 %v1546
  %vm1577 = vweird.f32 %v1570
  %vm1578 = vmor %vm1576, %vm1577
  %v1579 = vsel %vm1578, %v1570, %v1575
  %v1580 = vrsqrt.pop %v1547
  %v1581 = vmul.f32 %v1580, %v1547
  %v1582 = vmul.f32 %v1581, %v1580
  %v1583 = vmul.f32 0.5, %v1582
  %v1584 = vsub.f32 1.5, %v1583
  %v1585 = vmul.f32 %v1580, %v1584
  %vm1586 = vweird.f32 %v1547
  %vm1587 = vweird.f32 %v1580
  %vm1588 = vmor %vm1586, %vm1587
  %v1589 = vsel %vm1588, %v1580, %v1585
  %v1590 = vrsqrt.pop %v1548
  %v1591 = vmul.f32 %v1590, %v1548
  %v1592 = vmul.f32 %v1591, %v1590
  %v1593 = vmul.f32 0.5, %v1592
  %v1594 = vsub.f32 1.5, %v1593
  %v1595 = vmul.f32 %v1590, %v1594
  %vm1596 = vweird.f32 %v1548
  %vm1597 = vweird.f32 %v1590
  %vm1598 = vmor %vm1596, %vm1597
  %v1599 = vsel %vm1598, %v1590, %v1595
  %v1600 = vrsqrt.pop %v1549
  %v1601 = vmul.f32 %v1600, %v1549
  %v1602 = vmul.f32 %v1601, %v1600
  %v1603 = vmul.f32 0.5, %v1602
  %v1604 = vsub.f32 1.5, %v1603
  %v1605 = vmul.f32 %v1600, %v1604
  %vm1606 = vweird.f32 %v1549
  %vm1607 = vweird.f32 %v1600
  %vm1608 = vmor %vm1606, %vm1607
  %v1609 = vsel %vm1608, %v1600, %v1605
  %v1610 = vmul.f32 %v1508, %v1559
  %v1611 = vmul.f32 %v1509, %v1569
  %v1612 = vmul.f32 %v1510, %v1579
  %v1613 = vmul.f32 %v1511, %v1589
  %v1614 = vmul.f32 %v1512, %v1599
  %v1615 = vmul.f32 %v1513, %v1609
  %v1617 = vperm.slane %v1482, 0
  %v1619 = vmul.f32 %v1610, %v1617
  %v1620 = vmul.f32 %v1611, %v1617
  %v1621 = vmul.f32 %v1612, %v1617
  %v1622 = vmul.f32 %v1613, %v1617
  %v1623 = vmul.f32 %v1614, %v1617
  %v1624 = vmul.f32 %v1615, %v1617
  %v1626 = vperm.slane %v1483, 0
  %v1628 = vadd.f32 %v1619, %v1626
  %v1629 = vadd.f32 %v1620, %v1626
  %v1630 = vadd.f32 %v1621, %v1626
  %v1631 = vadd.f32 %v1622, %v1626
  %v1632 = vadd.f32 %v1623, %v1626
  %v1633 = vadd.f32 %v1624, %v1626
  %v1634 = vld [vmem:[%s11] sm:$0xff]
  %v1635 = vld [vmem:[%s11 + $0x8] sm:$0xff]
  %v1636 = vld [vmem:[%s11 + $0x10] sm:$0xff]
  %v1637 = vld [vmem:[%s11 + $0x18] sm:$0xff]
  %v1638 = vld [vmem:[%s12] sm:$0x1]
  %v1640 = vperm.slane %v1638, 0
  %v1643 = vsel %vm429, %v1628, 0
  %v1646 = vsel %vm429, %v1629, 0
  %v1649 = vsel %vm429, %v1630, 0
  %v1652 = vsel %vm429, %v1631, 0
  %v1655 = vsel %vm429, %v1632, 0
  %v1658 = vsel %vm429, %v1633, 0
  %1660 = vmatpush.msra.mxu0 0.0
  %1661 = vmatpush.msra.mxu0 0.0
  %1662 = vmatpush.msra.mxu0 0.0
  %1663 = vmatpush.msra.mxu0 0.0
  %1664 = vmatpush.msra.mxu0 0.0
  %1665 = vmatpush.msra.mxu0 0.0
  %1666 = vmatpush.msra.mxu0 0.0
  %1667 = vmatpush.msra.mxu0 0.0
  %1668 = vmatpush.msra.mxu0 0.0
  %1669 = vmatpush.msra.mxu0 0.0
  %1670 = vmatpush.msra.mxu0 0.0
  %1671 = vmatpush.msra.mxu0 0.0
  %1672 = vmatpush.msra.mxu0 %v1637
  %1673 = vmatpush.msra.mxu0 %v1636
  %1674 = vmatpush.msra.mxu0 %v1635
  %1675 = vmatpush.msra.mxu0 %v1634
  %1676 = vmatmul.f32.gmra.mxu0 %v1643
  %v1677 = vpop.f32.mrf.mxu0
  %v1678 = vadd.f32 %v1640, %v1677
  %1679 = vmatmul.f32.gmra.mxu0 %v1646
  %v1680 = vpop.f32.mrf.mxu0
  %v1681 = vadd.f32 %v1640, %v1680
  %1682 = vmatmul.f32.gmra.mxu0 %v1649
  %v1683 = vpop.f32.mrf.mxu0
  %v1684 = vadd.f32 %v1640, %v1683
  %1685 = vmatmul.f32.gmra.mxu0 %v1652
  %v1686 = vpop.f32.mrf.mxu0
  %v1687 = vadd.f32 %v1640, %v1686
  %1688 = vmatmul.f32.gmra.mxu0 %v1655
  %v1689 = vpop.f32.mrf.mxu0
  %v1690 = vadd.f32 %v1640, %v1689
  %1691 = vmatmul.f32.gmra.mxu0 %v1658
  %v1692 = vpop.f32.mrf.mxu0
  %v1693 = vadd.f32 %v1640, %v1692
  %1694 = vdwg.mxu0
  %v1695 = vmul.f32 %v1678, 0.5
  %v1696 = vmul.f32 %v1681, 0.5
  %v1697 = vmul.f32 %v1684, 0.5
  %v1698 = vmul.f32 %v1687, 0.5
  %v1699 = vmul.f32 %v1690, 0.5
  %v1700 = vmul.f32 %v1693, 0.5
  %v1701 = vmul.f32 %v1678, 0.70710677
  %v1702 = vmul.f32 %v1681, 0.70710677
  %v1703 = vmul.f32 %v1684, 0.70710677
  %v1704 = vmul.f32 %v1687, 0.70710677
  %v1705 = vmul.f32 %v1690, 0.70710677
  %v1706 = vmul.f32 %v1693, 0.70710677
  %vm1707 = vcmp.ge.f32.partialorder %v1701, 0.0
  %vm1708 = vcmp.ge.f32.partialorder %v1702, 0.0
  %vm1709 = vcmp.ge.f32.partialorder %v1703, 0.0
  %vm1710 = vcmp.ge.f32.partialorder %v1704, 0.0
  %vm1711 = vcmp.ge.f32.partialorder %v1705, 0.0
  %vm1712 = vcmp.ge.f32.partialorder %v1706, 0.0
  %v1713 = vsel %vm1707, 1.0, -1.0
  %v1714 = vsel %vm1708, 1.0, -1.0
  %v1715 = vsel %vm1709, 1.0, -1.0
  %v1716 = vsel %vm1710, 1.0, -1.0
  %v1717 = vsel %vm1711, 1.0, -1.0
  %v1718 = vsel %vm1712, 1.0, -1.0
  %v1719 = vand.u32 2147483647, %v1701
  %v1720 = vand.u32 2147483647, %v1702
  %v1721 = vand.u32 2147483647, %v1703
  %v1722 = vand.u32 2147483647, %v1704
  %v1723 = vand.u32 2147483647, %v1705
  %v1724 = vand.u32 2147483647, %v1706
  %v1725 = vmul.f32 %v1719, 0.3275911
  %v1726 = vmul.f32 %v1720, 0.3275911
  %v1727 = vmul.f32 %v1721, 0.3275911
  %v1728 = vmul.f32 %v1722, 0.3275911
  %v1729 = vmul.f32 %v1723, 0.3275911
  %v1730 = vmul.f32 %v1724, 0.3275911
  %v1731 = vadd.f32 %v1725, 1.0
  %v1732 = vadd.f32 %v1726, 1.0
  %v1733 = vadd.f32 %v1727, 1.0
  %v1734 = vadd.f32 %v1728, 1.0
  %v1735 = vadd.f32 %v1729, 1.0
  %v1736 = vadd.f32 %v1730, 1.0
  %v1737 = vrcp.pop %v1731
  %v1738 = vmul.f32 %v1731, %v1737
  %v1739 = vsub.f32 1.0, %v1738
  %v1740 = vmul.f32 %v1737, %v1739
  %v1741 = vadd.f32 %v1737, %v1740
  %vm1742 = vweird.f32 %v1731
  %vm1743 = vweird.f32 %v1737
  %vm1744 = vmor %vm1742, %vm1743
  %v1745 = vsel %vm1744, %v1737, %v1741
  %v1746 = vand.u32 2147483647, %v1731
  %vm1747 = vcmp.eq.f32.partialorder %v1746, 8.507059e+37
  %v1748 = vand.u32 %v1731, 2147483648
  %v1749 = vor.u32 1.1754944e-38, %v1748
  %v1750 = vsel %vm1747, %v1749, %v1745
  %v1751 = vmul.f32 1.0, %v1750
  %v1752 = vrcp.pop %v1732
  %v1753 = vmul.f32 %v1732, %v1752
  %v1754 = vsub.f32 1.0, %v1753
  %v1755 = vmul.f32 %v1752, %v1754
  %v1756 = vadd.f32 %v1752, %v1755
  %vm1757 = vweird.f32 %v1732
  %vm1758 = vweird.f32 %v1752
  %vm1759 = vmor %vm1757, %vm1758
  %v1760 = vsel %vm1759, %v1752, %v1756
  %v1761 = vand.u32 2147483647, %v1732
  %vm1762 = vcmp.eq.f32.partialorder %v1761, 8.507059e+37
  %v1763 = vand.u32 %v1732, 2147483648
  %v1764 = vor.u32 1.1754944e-38, %v1763
  %v1765 = vsel %vm1762, %v1764, %v1760
  %v1766 = vmul.f32 1.0, %v1765
  %v1767 = vrcp.pop %v1733
  %v1768 = vmul.f32 %v1733, %v1767
  %v1769 = vsub.f32 1.0, %v1768
  %v1770 = vmul.f32 %v1767, %v1769
  %v1771 = vadd.f32 %v1767, %v1770
  %vm1772 = vweird.f32 %v1733
  %vm1773 = vweird.f32 %v1767
  %vm1774 = vmor %vm1772, %vm1773
  %v1775 = vsel %vm1774, %v1767, %v1771
  %v1776 = vand.u32 2147483647, %v1733
  %vm1777 = vcmp.eq.f32.partialorder %v1776, 8.507059e+37
  %v1778 = vand.u32 %v1733, 2147483648
  %v1779 = vor.u32 1.1754944e-38, %v1778
  %v1780 = vsel %vm1777, %v1779, %v1775
  %v1781 = vmul.f32 1.0, %v1780
  %v1782 = vrcp.pop %v1734
  %v1783 = vmul.f32 %v1734, %v1782
  %v1784 = vsub.f32 1.0, %v1783
  %v1785 = vmul.f32 %v1782, %v1784
  %v1786 = vadd.f32 %v1782, %v1785
  %vm1787 = vweird.f32 %v1734
  %vm1788 = vweird.f32 %v1782
  %vm1789 = vmor %vm1787, %vm1788
  %v1790 = vsel %vm1789, %v1782, %v1786
  %v1791 = vand.u32 2147483647, %v1734
  %vm1792 = vcmp.eq.f32.partialorder %v1791, 8.507059e+37
  %v1793 = vand.u32 %v1734, 2147483648
  %v1794 = vor.u32 1.1754944e-38, %v1793
  %v1795 = vsel %vm1792, %v1794, %v1790
  %v1796 = vmul.f32 1.0, %v1795
  %v1797 = vrcp.pop %v1735
  %v1798 = vmul.f32 %v1735, %v1797
  %v1799 = vsub.f32 1.0, %v1798
  %v1800 = vmul.f32 %v1797, %v1799
  %v1801 = vadd.f32 %v1797, %v1800
  %vm1802 = vweird.f32 %v1735
  %vm1803 = vweird.f32 %v1797
  %vm1804 = vmor %vm1802, %vm1803
  %v1805 = vsel %vm1804, %v1797, %v1801
  %v1806 = vand.u32 2147483647, %v1735
  %vm1807 = vcmp.eq.f32.partialorder %v1806, 8.507059e+37
  %v1808 = vand.u32 %v1735, 2147483648
  %v1809 = vor.u32 1.1754944e-38, %v1808
  %v1810 = vsel %vm1807, %v1809, %v1805
  %v1811 = vmul.f32 1.0, %v1810
  %v1812 = vrcp.pop %v1736
  %v1813 = vmul.f32 %v1736, %v1812
  %v1814 = vsub.f32 1.0, %v1813
  %v1815 = vmul.f32 %v1812, %v1814
  %v1816 = vadd.f32 %v1812, %v1815
  %vm1817 = vweird.f32 %v1736
  %vm1818 = vweird.f32 %v1812
  %vm1819 = vmor %vm1817, %vm1818
  %v1820 = vsel %vm1819, %v1812, %v1816
  %v1821 = vand.u32 2147483647, %v1736
  %vm1822 = vcmp.eq.f32.partialorder %v1821, 8.507059e+37
  %v1823 = vand.u32 %v1736, 2147483648
  %v1824 = vor.u32 1.1754944e-38, %v1823
  %v1825 = vsel %vm1822, %v1824, %v1820
  %v1826 = vmul.f32 1.0, %v1825
  %v1827 = vmul.f32 %v1751, 1.0614054
  %v1828 = vmul.f32 %v1766, 1.0614054
  %v1829 = vmul.f32 %v1781, 1.0614054
  %v1830 = vmul.f32 %v1796, 1.0614054
  %v1831 = vmul.f32 %v1811, 1.0614054
  %v1832 = vmul.f32 %v1826, 1.0614054
  %v1833 = vadd.f32 %v1827, -1.4531521
  %v1834 = vadd.f32 %v1828, -1.4531521
  %v1835 = vadd.f32 %v1829, -1.4531521
  %v1836 = vadd.f32 %v1830, -1.4531521
  %v1837 = vadd.f32 %v1831, -1.4531521
  %v1838 = vadd.f32 %v1832, -1.4531521
  %v1839 = vmul.f32 %v1833, %v1751
  %v1840 = vmul.f32 %v1834, %v1766
  %v1841 = vmul.f32 %v1835, %v1781
  %v1842 = vmul.f32 %v1836, %v1796
  %v1843 = vmul.f32 %v1837, %v1811
  %v1844 = vmul.f32 %v1838, %v1826
  %v1845 = vadd.f32 %v1839, 1.4214138
  %v1846 = vadd.f32 %v1840, 1.4214138
  %v1847 = vadd.f32 %v1841, 1.4214138
  %v1848 = vadd.f32 %v1842, 1.4214138
  %v1849 = vadd.f32 %v1843, 1.4214138
  %v1850 = vadd.f32 %v1844, 1.4214138
  %v1851 = vmul.f32 %v1845, %v1751
  %v1852 = vmul.f32 %v1846, %v1766
  %v1853 = vmul.f32 %v1847, %v1781
  %v1854 = vmul.f32 %v1848, %v1796
  %v1855 = vmul.f32 %v1849, %v1811
  %v1856 = vmul.f32 %v1850, %v1826
  %v1857 = vadd.f32 %v1851, -0.28449672
  %v1858 = vadd.f32 %v1852, -0.28449672
  %v1859 = vadd.f32 %v1853, -0.28449672
  %v1860 = vadd.f32 %v1854, -0.28449672
  %v1861 = vadd.f32 %v1855, -0.28449672
  %v1862 = vadd.f32 %v1856, -0.28449672
  %v1863 = vmul.f32 %v1857, %v1751
  %v1864 = vmul.f32 %v1858, %v1766
  %v1865 = vmul.f32 %v1859, %v1781
  %v1866 = vmul.f32 %v1860, %v1796
  %v1867 = vmul.f32 %v1861, %v1811
  %v1868 = vmul.f32 %v1862, %v1826
  %v1869 = vadd.f32 %v1863, 0.2548296
  %v1870 = vadd.f32 %v1864, 0.2548296
  %v1871 = vadd.f32 %v1865, 0.2548296
  %v1872 = vadd.f32 %v1866, 0.2548296
  %v1873 = vadd.f32 %v1867, 0.2548296
  %v1874 = vadd.f32 %v1868, 0.2548296
  %v1875 = vmul.f32 %v1869, %v1751
  %v1876 = vmul.f32 %v1870, %v1766
  %v1877 = vmul.f32 %v1871, %v1781
  %v1878 = vmul.f32 %v1872, %v1796
  %v1879 = vmul.f32 %v1873, %v1811
  %v1880 = vmul.f32 %v1874, %v1826
  %v1881 = vsub.f32 0.0, %v1719
  %v1882 = vsub.f32 0.0, %v1720
  %v1883 = vsub.f32 0.0, %v1721
  %v1884 = vsub.f32 0.0, %v1722
  %v1885 = vsub.f32 0.0, %v1723
  %v1886 = vsub.f32 0.0, %v1724
  %v1887 = vmul.f32 %v1881, %v1719
  %v1888 = vmul.f32 %v1882, %v1720
  %v1889 = vmul.f32 %v1883, %v1721
  %v1890 = vmul.f32 %v1884, %v1722
  %v1891 = vmul.f32 %v1885, %v1723
  %v1892 = vmul.f32 %v1886, %v1724
  %v1893 = vmul.f32 %v1887, 1.442695
  %v1894 = vpow.pop %v1893
  %v1895 = vmul.f32 %v1888, 1.442695
  %v1896 = vpow.pop %v1895
  %v1897 = vmul.f32 %v1889, 1.442695
  %v1898 = vpow.pop %v1897
  %v1899 = vmul.f32 %v1890, 1.442695
  %v1900 = vpow.pop %v1899
  %v1901 = vmul.f32 %v1891, 1.442695
  %v1902 = vpow.pop %v1901
  %v1903 = vmul.f32 %v1892, 1.442695
  %v1904 = vpow.pop %v1903
  %v1905 = vmul.f32 %v1875, %v1894
  %v1906 = vmul.f32 %v1876, %v1896
  %v1907 = vmul.f32 %v1877, %v1898
  %v1908 = vmul.f32 %v1878, %v1900
  %v1909 = vmul.f32 %v1879, %v1902
  %v1910 = vmul.f32 %v1880, %v1904
  %v1911 = vsub.f32 1.0, %v1905
  %v1912 = vsub.f32 1.0, %v1906
  %v1913 = vsub.f32 1.0, %v1907
  %v1914 = vsub.f32 1.0, %v1908
  %v1915 = vsub.f32 1.0, %v1909
  %v1916 = vsub.f32 1.0, %v1910
  %v1917 = vmul.f32 %v1713, %v1911
  %v1918 = vmul.f32 %v1714, %v1912
  %v1919 = vmul.f32 %v1715, %v1913
  %v1920 = vmul.f32 %v1716, %v1914
  %v1921 = vmul.f32 %v1717, %v1915
  %v1922 = vmul.f32 %v1718, %v1916
  %v1923 = vadd.f32 %v1917, 1.0
  %v1924 = vadd.f32 %v1918, 1.0
  %v1925 = vadd.f32 %v1919, 1.0
  %v1926 = vadd.f32 %v1920, 1.0
  %v1927 = vadd.f32 %v1921, 1.0
  %v1928 = vadd.f32 %v1922, 1.0
  %v1929 = vmul.f32 %v1695, %v1923
  %v1930 = vmul.f32 %v1696, %v1924
  %v1931 = vmul.f32 %v1697, %v1925
  %v1932 = vmul.f32 %v1698, %v1926
  %v1933 = vmul.f32 %v1699, %v1927
  %v1934 = vmul.f32 %v1700, %v1928
  %v1935 = vld [vmem:[%s13] sm:$0xff]
  %v1936 = vld [vmem:[%s13 + $0x8] sm:$0xff]
  %v1937 = vld [vmem:[%s13 + $0x10] sm:$0xff]
  %v1938 = vld [vmem:[%s13 + $0x18] sm:$0xff]
  %v1939 = vld [vmem:[%s13 + $0x20] sm:$0xff]
  %v1940 = vld [vmem:[%s13 + $0x28] sm:$0xff]
  %v1941 = vld [vmem:[%s13 + $0x30] sm:$0xff]
  %v1942 = vld [vmem:[%s13 + $0x38] sm:$0xff]
  %v1943 = vld [vmem:[%s14] sm:$0x1]
  %v1945 = vperm.slane %v1943, 0
  %vm1947 = vcmask 523264
  %v1949 = vsel %vm1947, %v1929, 0
  %v1952 = vsel %vm1947, %v1930, 0
  %v1955 = vsel %vm1947, %v1931, 0
  %v1958 = vsel %vm1947, %v1932, 0
  %v1961 = vsel %vm1947, %v1933, 0
  %v1964 = vsel %vm1947, %v1934, 0
  %1966 = vmatpush.msra.mxu0 0.0
  %1967 = vmatpush.msra.mxu0 0.0
  %1968 = vmatpush.msra.mxu0 0.0
  %1969 = vmatpush.msra.mxu0 0.0
  %1970 = vmatpush.msra.mxu0 0.0
  %1971 = vmatpush.msra.mxu0 0.0
  %1972 = vmatpush.msra.mxu0 0.0
  %1973 = vmatpush.msra.mxu0 0.0
  %1974 = vmatpush.msra.mxu0 %v1942
  %1975 = vmatpush.msra.mxu0 %v1941
  %1976 = vmatpush.msra.mxu0 %v1940
  %1977 = vmatpush.msra.mxu0 %v1939
  %1978 = vmatpush.msra.mxu0 %v1938
  %1979 = vmatpush.msra.mxu0 %v1937
  %1980 = vmatpush.msra.mxu0 %v1936
  %1981 = vmatpush.msra.mxu0 %v1935
  %1982 = vmatmul.f32.gmra.mxu0 %v1949
  %v1983 = vpop.f32.mrf.mxu0
  %v1984 = vadd.f32 %v1945, %v1983
  %1985 = vmatmul.f32.gmra.mxu0 %v1952
  %v1986 = vpop.f32.mrf.mxu0
  %v1987 = vadd.f32 %v1945, %v1986
  %1988 = vmatmul.f32.gmra.mxu0 %v1955
  %v1989 = vpop.f32.mrf.mxu0
  %v1990 = vadd.f32 %v1945, %v1989
  %1991 = vmatmul.f32.gmra.mxu0 %v1958
  %v1992 = vpop.f32.mrf.mxu0
  %v1993 = vadd.f32 %v1945, %v1992
  %1994 = vmatmul.f32.gmra.mxu0 %v1961
  %v1995 = vpop.f32.mrf.mxu0
  %v1996 = vadd.f32 %v1945, %v1995
  %1997 = vmatmul.f32.gmra.mxu0 %v1964
  %v1998 = vpop.f32.mrf.mxu0
  %v1999 = vadd.f32 %v1945, %v1998
  %2000 = vdwg.mxu0
  %v2001 = vadd.f32 %v1476, %v1984
  %v2002 = vadd.f32 %v1477, %v1987
  %v2003 = vadd.f32 %v1478, %v1990
  %v2004 = vadd.f32 %v1479, %v1993
  %v2005 = vadd.f32 %v1480, %v1996
  %v2006 = vadd.f32 %v1481, %v1999
  %s2007 = scalar_lea.vmem %s3, 1
  %v2008 = vld [vmem:[%s2007] sm:$0x1]
  %s2009 = scalar_lea.vmem %s4, 1
  %v2010 = vld [vmem:[%s2009] sm:$0x1]
  %s2011 = scalar_lea.vmem %s5, 32
  %v2012 = vld [vmem:[%s2011] sm:$0xff]
  %v2013 = vld [vmem:[%s2011 + $0x8] sm:$0xff]
  %v2014 = vld [vmem:[%s2011 + $0x10] sm:$0xff]
  %v2015 = vld [vmem:[%s2011 + $0x18] sm:$0xff]
  %s2016 = scalar_lea.vmem %s6, 1
  %v2017 = vld [vmem:[%s2016] sm:$0x1]
  %s2018 = scalar_lea.vmem %s7, 32
  %v2019 = vld [vmem:[%s2018] sm:$0xff]
  %v2020 = vld [vmem:[%s2018 + $0x8] sm:$0xff]
  %v2021 = vld [vmem:[%s2018 + $0x10] sm:$0xff]
  %v2022 = vld [vmem:[%s2018 + $0x18] sm:$0xff]
  %s2023 = scalar_lea.vmem %s8, 1
  %v2024 = vld [vmem:[%s2023] sm:$0x1]
  %v2025 = vsel %vm429, %v2001, 0.0
  %2026 = vadd.xlane.f32.xlu0 %v2025
  %v2027 = vpop.xlane.xlu0 %2026
  %v2028 = vsel %vm429, %v2002, 0.0
  %2029 = vadd.xlane.f32.xlu0 %v2028
  %v2030 = vpop.xlane.xlu0 %2029
  %v2031 = vsel %vm429, %v2003, 0.0
  %2032 = vadd.xlane.f32.xlu0 %v2031
  %v2033 = vpop.xlane.xlu0 %2032
  %v2034 = vsel %vm429, %v2004, 0.0
  %2035 = vadd.xlane.f32.xlu0 %v2034
  %v2036 = vpop.xlane.xlu0 %2035
  %v2037 = vsel %vm429, %v2005, 0.0
  %2038 = vadd.xlane.f32.xlu0 %v2037
  %v2039 = vpop.xlane.xlu0 %2038
  %v2040 = vsel %vm429, %v2006, 0.0
  %2041 = vadd.xlane.f32.xlu0 %v2040
  %v2042 = vpop.xlane.xlu0 %2041
  %v2043 = vmul.f32 %v2027, %v454
  %v2044 = vmul.f32 %v2030, %v454
  %v2045 = vmul.f32 %v2033, %v454
  %v2046 = vmul.f32 %v2036, %v454
  %v2047 = vmul.f32 %v2039, %v454
  %v2048 = vmul.f32 %v2042, %v454
  %v2049 = vsub.f32 %v2001, %v2043
  %v2050 = vsub.f32 %v2002, %v2044
  %v2051 = vsub.f32 %v2003, %v2045
  %v2052 = vsub.f32 %v2004, %v2046
  %v2053 = vsub.f32 %v2005, %v2047
  %v2054 = vsub.f32 %v2006, %v2048
  %v2055 = vmul.f32 %v2049, %v2049
  %v2056 = vmul.f32 %v2050, %v2050
  %v2057 = vmul.f32 %v2051, %v2051
  %v2058 = vmul.f32 %v2052, %v2052
  %v2059 = vmul.f32 %v2053, %v2053
  %v2060 = vmul.f32 %v2054, %v2054
  %v2061 = vsel %vm429, %v2055, 0.0
  %2062 = vadd.xlane.f32.xlu0 %v2061
  %v2063 = vpop.xlane.xlu0 %2062
  %v2064 = vsel %vm429, %v2056, 0.0
  %2065 = vadd.xlane.f32.xlu0 %v2064
  %v2066 = vpop.xlane.xlu0 %2065
  %v2067 = vsel %vm429, %v2057, 0.0
  %2068 = vadd.xlane.f32.xlu0 %v2067
  %v2069 = vpop.xlane.xlu0 %2068
  %v2070 = vsel %vm429, %v2058, 0.0
  %2071 = vadd.xlane.f32.xlu0 %v2070
  %v2072 = vpop.xlane.xlu0 %2071
  %v2073 = vsel %vm429, %v2059, 0.0
  %2074 = vadd.xlane.f32.xlu0 %v2073
  %v2075 = vpop.xlane.xlu0 %2074
  %v2076 = vsel %vm429, %v2060, 0.0
  %2077 = vadd.xlane.f32.xlu0 %v2076
  %v2078 = vpop.xlane.xlu0 %2077
  %v2079 = vmul.f32 %v2063, %v454
  %v2080 = vmul.f32 %v2066, %v454
  %v2081 = vmul.f32 %v2069, %v454
  %v2082 = vmul.f32 %v2072, %v454
  %v2083 = vmul.f32 %v2075, %v454
  %v2084 = vmul.f32 %v2078, %v454
  %v2085 = vadd.f32 %v2079, 1e-06
  %v2086 = vadd.f32 %v2080, 1e-06
  %v2087 = vadd.f32 %v2081, 1e-06
  %v2088 = vadd.f32 %v2082, 1e-06
  %v2089 = vadd.f32 %v2083, 1e-06
  %v2090 = vadd.f32 %v2084, 1e-06
  %v2091 = vrsqrt.pop %v2085
  %v2092 = vmul.f32 %v2091, %v2085
  %v2093 = vmul.f32 %v2092, %v2091
  %v2094 = vmul.f32 0.5, %v2093
  %v2095 = vsub.f32 1.5, %v2094
  %v2096 = vmul.f32 %v2091, %v2095
  %vm2097 = vweird.f32 %v2085
  %vm2098 = vweird.f32 %v2091
  %vm2099 = vmor %vm2097, %vm2098
  %v2100 = vsel %vm2099, %v2091, %v2096
  %v2101 = vrsqrt.pop %v2086
  %v2102 = vmul.f32 %v2101, %v2086
  %v2103 = vmul.f32 %v2102, %v2101
  %v2104 = vmul.f32 0.5, %v2103
  %v2105 = vsub.f32 1.5, %v2104
  %v2106 = vmul.f32 %v2101, %v2105
  %vm2107 = vweird.f32 %v2086
  %vm2108 = vweird.f32 %v2101
  %vm2109 = vmor %vm2107, %vm2108
  %v2110 = vsel %vm2109, %v2101, %v2106
  %v2111 = vrsqrt.pop %v2087
  %v2112 = vmul.f32 %v2111, %v2087
  %v2113 = vmul.f32 %v2112, %v2111
  %v2114 = vmul.f32 0.5, %v2113
  %v2115 = vsub.f32 1.5, %v2114
  %v2116 = vmul.f32 %v2111, %v2115
  %vm2117 = vweird.f32 %v2087
  %vm2118 = vweird.f32 %v2111
  %vm2119 = vmor %vm2117, %vm2118
  %v2120 = vsel %vm2119, %v2111, %v2116
  %v2121 = vrsqrt.pop %v2088
  %v2122 = vmul.f32 %v2121, %v2088
  %v2123 = vmul.f32 %v2122, %v2121
  %v2124 = vmul.f32 0.5, %v2123
  %v2125 = vsub.f32 1.5, %v2124
  %v2126 = vmul.f32 %v2121, %v2125
  %vm2127 = vweird.f32 %v2088
  %vm2128 = vweird.f32 %v2121
  %vm2129 = vmor %vm2127, %vm2128
  %v2130 = vsel %vm2129, %v2121, %v2126
  %v2131 = vrsqrt.pop %v2089
  %v2132 = vmul.f32 %v2131, %v2089
  %v2133 = vmul.f32 %v2132, %v2131
  %v2134 = vmul.f32 0.5, %v2133
  %v2135 = vsub.f32 1.5, %v2134
  %v2136 = vmul.f32 %v2131, %v2135
  %vm2137 = vweird.f32 %v2089
  %vm2138 = vweird.f32 %v2131
  %vm2139 = vmor %vm2137, %vm2138
  %v2140 = vsel %vm2139, %v2131, %v2136
  %v2141 = vrsqrt.pop %v2090
  %v2142 = vmul.f32 %v2141, %v2090
  %v2143 = vmul.f32 %v2142, %v2141
  %v2144 = vmul.f32 0.5, %v2143
  %v2145 = vsub.f32 1.5, %v2144
  %v2146 = vmul.f32 %v2141, %v2145
  %vm2147 = vweird.f32 %v2090
  %vm2148 = vweird.f32 %v2141
  %vm2149 = vmor %vm2147, %vm2148
  %v2150 = vsel %vm2149, %v2141, %v2146
  %v2151 = vmul.f32 %v2049, %v2100
  %v2152 = vmul.f32 %v2050, %v2110
  %v2153 = vmul.f32 %v2051, %v2120
  %v2154 = vmul.f32 %v2052, %v2130
  %v2155 = vmul.f32 %v2053, %v2140
  %v2156 = vmul.f32 %v2054, %v2150
  %v2158 = vperm.slane %v2008, 0
  %v2160 = vmul.f32 %v2151, %v2158
  %v2161 = vmul.f32 %v2152, %v2158
  %v2162 = vmul.f32 %v2153, %v2158
  %v2163 = vmul.f32 %v2154, %v2158
  %v2164 = vmul.f32 %v2155, %v2158
  %v2165 = vmul.f32 %v2156, %v2158
  %v2167 = vperm.slane %v2010, 0
  %v2169 = vadd.f32 %v2160, %v2167
  %v2170 = vadd.f32 %v2161, %v2167
  %v2171 = vadd.f32 %v2162, %v2167
  %v2172 = vadd.f32 %v2163, %v2167
  %v2173 = vadd.f32 %v2164, %v2167
  %v2174 = vadd.f32 %v2165, %v2167
  %v2176 = vperm.slane %v2017, 0
  %v2179 = vsel %vm429, %v2169, 0
  %v2182 = vsel %vm429, %v2170, 0
  %v2185 = vsel %vm429, %v2171, 0
  %v2188 = vsel %vm429, %v2172, 0
  %v2191 = vsel %vm429, %v2173, 0
  %v2194 = vsel %vm429, %v2174, 0
  %2196 = vmatpush.msra.mxu0 0.0
  %2197 = vmatpush.msra.mxu0 0.0
  %2198 = vmatpush.msra.mxu0 0.0
  %2199 = vmatpush.msra.mxu0 0.0
  %2200 = vmatpush.msra.mxu0 0.0
  %2201 = vmatpush.msra.mxu0 0.0
  %2202 = vmatpush.msra.mxu0 0.0
  %2203 = vmatpush.msra.mxu0 0.0
  %2204 = vmatpush.msra.mxu0 0.0
  %2205 = vmatpush.msra.mxu0 0.0
  %2206 = vmatpush.msra.mxu0 0.0
  %2207 = vmatpush.msra.mxu0 0.0
  %2208 = vmatpush.msra.mxu0 %v2015
  %2209 = vmatpush.msra.mxu0 %v2014
  %2210 = vmatpush.msra.mxu0 %v2013
  %2211 = vmatpush.msra.mxu0 %v2012
  %2212 = vmatmul.f32.gmra.mxu0 %v2179
  %v2213 = vpop.f32.mrf.mxu0
  %v2214 = vadd.f32 %v2176, %v2213
  %2215 = vmatmul.f32.gmra.mxu0 %v2182
  %v2216 = vpop.f32.mrf.mxu0
  %v2217 = vadd.f32 %v2176, %v2216
  %2218 = vmatmul.f32.gmra.mxu0 %v2185
  %v2219 = vpop.f32.mrf.mxu0
  %v2220 = vadd.f32 %v2176, %v2219
  %2221 = vmatmul.f32.gmra.mxu0 %v2188
  %v2222 = vpop.f32.mrf.mxu0
  %v2223 = vadd.f32 %v2176, %v2222
  %2224 = vmatmul.f32.gmra.mxu0 %v2191
  %v2225 = vpop.f32.mrf.mxu0
  %v2226 = vadd.f32 %v2176, %v2225
  %2227 = vmatmul.f32.gmra.mxu0 %v2194
  %v2228 = vpop.f32.mrf.mxu0
  %v2229 = vadd.f32 %v2176, %v2228
  %2230 = vdwg.mxu0
  %2234 = vrot.lane.b32.xlu0 %v2214, 96
  %v2235 = vpop.permute.xlu0 %2234
  %2236 = vrot.lane.b32.xlu0 %v2217, 96
  %v2237 = vpop.permute.xlu0 %2236
  %2238 = vrot.lane.b32.xlu0 %v2220, 96
  %v2239 = vpop.permute.xlu0 %2238
  %v2240 = vsel %vm652, %v2214, 0
  %v2242 = vsel %vm652, %v2217, 0
  %v2244 = vsel %vm652, %v2220, 0
  %v2246 = vsel %vm652, %v2235, 0
  %v2248 = vsel %vm652, %v2237, 0
  %v2250 = vsel %vm652, %v2239, 0
  %2252 = vmatpush.xpose.msra.mxu0 0.0
  %2253 = vmatpush.xpose.msra.mxu0 0.0
  %2254 = vmatpush.xpose.msra.mxu0 0.0
  %2255 = vmatpush.xpose.msra.mxu0 0.0
  %2256 = vmatpush.xpose.msra.mxu0 0.0
  %2257 = vmatpush.xpose.msra.mxu0 0.0
  %2258 = vmatpush.xpose.msra.mxu0 0.0
  %2259 = vmatpush.xpose.msra.mxu0 0.0
  %2260 = vmatpush.xpose.msra.mxu0 0.0
  %2261 = vmatpush.xpose.msra.mxu0 0.0
  %2262 = vmatpush.xpose.msra.mxu0 0.0
  %2263 = vmatpush.xpose.msra.mxu0 0.0
  %2264 = vmatpush.xpose.msra.mxu0 0.0
  %2265 = vmatpush.xpose.msra.mxu0 %v2250
  %2266 = vmatpush.xpose.msra.mxu0 %v2248
  %2267 = vmatpush.xpose.msra.mxu0 %v2246
  %2268 = vmatmul.f32.gmra.mxu0 %v2240
  %v2269 = vpop.f32.mrf.mxu0
  %v2270 = vadd.f32 0.0, %v2269
  %2271 = vmatmul.f32.gmra.mxu0 %v2242
  %v2272 = vpop.f32.mrf.mxu0
  %v2273 = vadd.f32 0.0, %v2272
  %2274 = vmatmul.f32.gmra.mxu0 %v2244
  %v2275 = vpop.f32.mrf.mxu0
  %v2276 = vadd.f32 0.0, %v2275
  %2277 = vdwg.mxu0
  %v2278 = vmul.f32 %v2270, 0.25
  %v2279 = vmul.f32 %v2273, 0.25
  %v2280 = vmul.f32 %v2276, 0.25
  %v2281 = vadd.f32 %v2278, %v416
  %v2282 = vadd.f32 %v2279, %v416
  %v2283 = vadd.f32 %v2280, %v416
  %v2284 = vsel %vm697, %v2281, -inf
  %2285 = vmax.xlane.f32.xlu0 %v2284
  %v2286 = vpop.xlane.xlu0 %2285
  %v2287 = vsel %vm697, %v2282, -inf
  %2288 = vmax.xlane.f32.xlu0 %v2287
  %v2289 = vpop.xlane.xlu0 %2288
  %v2290 = vsel %vm697, %v2283, -inf
  %2291 = vmax.xlane.f32.xlu0 %v2290
  %v2292 = vpop.xlane.xlu0 %2291
  %v2293 = vsub.f32 %v2281, %v2286
  %v2294 = vsub.f32 %v2282, %v2289
  %v2295 = vsub.f32 %v2283, %v2292
  %v2296 = vmul.f32 %v2293, 1.442695
  %v2297 = vpow.pop %v2296
  %v2298 = vmul.f32 %v2294, 1.442695
  %v2299 = vpow.pop %v2298
  %v2300 = vmul.f32 %v2295, 1.442695
  %v2301 = vpow.pop %v2300
  %v2302 = vsel %vm697, %v2297, 0.0
  %2303 = vadd.xlane.f32.xlu0 %v2302
  %v2304 = vpop.xlane.xlu0 %2303
  %v2305 = vsel %vm697, %v2299, 0.0
  %2306 = vadd.xlane.f32.xlu0 %v2305
  %v2307 = vpop.xlane.xlu0 %2306
  %v2308 = vsel %vm697, %v2301, 0.0
  %2309 = vadd.xlane.f32.xlu0 %v2308
  %v2310 = vpop.xlane.xlu0 %2309
  %v2311 = vrcp.pop %v2304
  %v2312 = vmul.f32 %v2304, %v2311
  %v2313 = vsub.f32 1.0, %v2312
  %v2314 = vmul.f32 %v2311, %v2313
  %v2315 = vadd.f32 %v2311, %v2314
  %vm2316 = vweird.f32 %v2304
  %vm2317 = vweird.f32 %v2311
  %vm2318 = vmor %vm2316, %vm2317
  %v2319 = vsel %vm2318, %v2311, %v2315
  %v2320 = vand.u32 2147483647, %v2304
  %vm2321 = vcmp.eq.f32.partialorder %v2320, 8.507059e+37
  %v2322 = vand.u32 %v2304, 2147483648
  %v2323 = vor.u32 1.1754944e-38, %v2322
  %v2324 = vsel %vm2321, %v2323, %v2319
  %v2325 = vmul.f32 %v2297, %v2324
  %v2326 = vrcp.pop %v2307
  %v2327 = vmul.f32 %v2307, %v2326
  %v2328 = vsub.f32 1.0, %v2327
  %v2329 = vmul.f32 %v2326, %v2328
  %v2330 = vadd.f32 %v2326, %v2329
  %vm2331 = vweird.f32 %v2307
  %vm2332 = vweird.f32 %v2326
  %vm2333 = vmor %vm2331, %vm2332
  %v2334 = vsel %vm2333, %v2326, %v2330
  %v2335 = vand.u32 2147483647, %v2307
  %vm2336 = vcmp.eq.f32.partialorder %v2335, 8.507059e+37
  %v2337 = vand.u32 %v2307, 2147483648
  %v2338 = vor.u32 1.1754944e-38, %v2337
  %v2339 = vsel %vm2336, %v2338, %v2334
  %v2340 = vmul.f32 %v2299, %v2339
  %v2341 = vrcp.pop %v2310
  %v2342 = vmul.f32 %v2310, %v2341
  %v2343 = vsub.f32 1.0, %v2342
  %v2344 = vmul.f32 %v2341, %v2343
  %v2345 = vadd.f32 %v2341, %v2344
  %vm2346 = vweird.f32 %v2310
  %vm2347 = vweird.f32 %v2341
  %vm2348 = vmor %vm2346, %vm2347
  %v2349 = vsel %vm2348, %v2341, %v2345
  %v2350 = vand.u32 2147483647, %v2310
  %vm2351 = vcmp.eq.f32.partialorder %v2350, 8.507059e+37
  %v2352 = vand.u32 %v2310, 2147483648
  %v2353 = vor.u32 1.1754944e-38, %v2352
  %v2354 = vsel %vm2351, %v2353, %v2349
  %v2355 = vmul.f32 %v2301, %v2354
  %2356 = vrot.lane.b32.xlu0 %v2214, 64
  %v2357 = vpop.permute.xlu0 %2356
  %2358 = vrot.lane.b32.xlu0 %v2217, 64
  %v2359 = vpop.permute.xlu0 %2358
  %2360 = vrot.lane.b32.xlu0 %v2220, 64
  %v2361 = vpop.permute.xlu0 %2360
  %v2366 = vsel %vm697, %v2325, 0
  %v2369 = vsel %vm697, %v2340, 0
  %v2372 = vsel %vm697, %v2355, 0
  %2374 = vmatpush.msra.mxu0 0.0
  %2375 = vmatpush.msra.mxu0 0.0
  %2376 = vmatpush.msra.mxu0 0.0
  %2377 = vmatpush.msra.mxu0 0.0
  %2378 = vmatpush.msra.mxu0 0.0
  %2379 = vmatpush.msra.mxu0 0.0
  %2380 = vmatpush.msra.mxu0 0.0
  %2381 = vmatpush.msra.mxu0 0.0
  %2382 = vmatpush.msra.mxu0 0.0
  %2383 = vmatpush.msra.mxu0 0.0
  %2384 = vmatpush.msra.mxu0 0.0
  %2385 = vmatpush.msra.mxu0 0.0
  %2386 = vmatpush.msra.mxu0 0.0
  %2387 = vmatpush.msra.mxu0 %v2361
  %2388 = vmatpush.msra.mxu0 %v2359
  %2389 = vmatpush.msra.mxu0 %v2357
  %2390 = vmatmul.f32.gmra.mxu0 %v2366
  %v2391 = vpop.f32.mrf.mxu0
  %v2392 = vadd.f32 0.0, %v2391
  %2393 = vmatmul.f32.gmra.mxu0 %v2369
  %v2394 = vpop.f32.mrf.mxu0
  %v2395 = vadd.f32 0.0, %v2394
  %2396 = vmatmul.f32.gmra.mxu0 %v2372
  %v2397 = vpop.f32.mrf.mxu0
  %v2398 = vadd.f32 0.0, %v2397
  %2399 = vdwg.mxu0
  %2400 = vrot.lane.b32.xlu0 %v2214, 112
  %v2401 = vpop.permute.xlu0 %2400
  %2402 = vrot.lane.b32.xlu0 %v2217, 112
  %v2403 = vpop.permute.xlu0 %2402
  %2404 = vrot.lane.b32.xlu0 %v2220, 112
  %v2405 = vpop.permute.xlu0 %2404
  %2406 = vrot.lane.b32.xlu0 %v2214, 80
  %v2407 = vpop.permute.xlu0 %2406
  %2408 = vrot.lane.b32.xlu0 %v2217, 80
  %v2409 = vpop.permute.xlu0 %2408
  %2410 = vrot.lane.b32.xlu0 %v2220, 80
  %v2411 = vpop.permute.xlu0 %2410
  %v2412 = vsel %vm652, %v2401, 0
  %v2414 = vsel %vm652, %v2403, 0
  %v2416 = vsel %vm652, %v2405, 0
  %v2418 = vsel %vm652, %v2407, 0
  %v2420 = vsel %vm652, %v2409, 0
  %v2422 = vsel %vm652, %v2411, 0
  %2424 = vmatpush.xpose.msra.mxu0 0.0
  %2425 = vmatpush.xpose.msra.mxu0 0.0
  %2426 = vmatpush.xpose.msra.mxu0 0.0
  %2427 = vmatpush.xpose.msra.mxu0 0.0
  %2428 = vmatpush.xpose.msra.mxu0 0.0
  %2429 = vmatpush.xpose.msra.mxu0 0.0
  %2430 = vmatpush.xpose.msra.mxu0 0.0
  %2431 = vmatpush.xpose.msra.mxu0 0.0
  %2432 = vmatpush.xpose.msra.mxu0 0.0
  %2433 = vmatpush.xpose.msra.mxu0 0.0
  %2434 = vmatpush.xpose.msra.mxu0 0.0
  %2435 = vmatpush.xpose.msra.mxu0 0.0
  %2436 = vmatpush.xpose.msra.mxu0 0.0
  %2437 = vmatpush.xpose.msra.mxu0 %v2422
  %2438 = vmatpush.xpose.msra.mxu0 %v2420
  %2439 = vmatpush.xpose.msra.mxu0 %v2418
  %2440 = vmatmul.f32.gmra.mxu0 %v2412
  %v2441 = vpop.f32.mrf.mxu0
  %v2442 = vadd.f32 0.0, %v2441
  %2443 = vmatmul.f32.gmra.mxu0 %v2414
  %v2444 = vpop.f32.mrf.mxu0
  %v2445 = vadd.f32 0.0, %v2444
  %2446 = vmatmul.f32.gmra.mxu0 %v2416
  %v2447 = vpop.f32.mrf.mxu0
  %v2448 = vadd.f32 0.0, %v2447
  %2449 = vdwg.mxu0
  %v2450 = vmul.f32 %v2442, 0.25
  %v2451 = vmul.f32 %v2445, 0.25
  %v2452 = vmul.f32 %v2448, 0.25
  %v2453 = vadd.f32 %v2450, %v416
  %v2454 = vadd.f32 %v2451, %v416
  %v2455 = vadd.f32 %v2452, %v416
  %v2456 = vsel %vm697, %v2453, -inf
  %2457 = vmax.xlane.f32.xlu0 %v2456
  %v2458 = vpop.xlane.xlu0 %2457
  %v2459 = vsel %vm697, %v2454, -inf
  %2460 = vmax.xlane.f32.xlu0 %v2459
  %v2461 = vpop.xlane.xlu0 %2460
  %v2462 = vsel %vm697, %v2455, -inf
  %2463 = vmax.xlane.f32.xlu0 %v2462
  %v2464 = vpop.xlane.xlu0 %2463
  %v2465 = vsub.f32 %v2453, %v2458
  %v2466 = vsub.f32 %v2454, %v2461
  %v2467 = vsub.f32 %v2455, %v2464
  %v2468 = vmul.f32 %v2465, 1.442695
  %v2469 = vpow.pop %v2468
  %v2470 = vmul.f32 %v2466, 1.442695
  %v2471 = vpow.pop %v2470
  %v2472 = vmul.f32 %v2467, 1.442695
  %v2473 = vpow.pop %v2472
  %v2474 = vsel %vm697, %v2469, 0.0
  %2475 = vadd.xlane.f32.xlu0 %v2474
  %v2476 = vpop.xlane.xlu0 %2475
  %v2477 = vsel %vm697, %v2471, 0.0
  %2478 = vadd.xlane.f32.xlu0 %v2477
  %v2479 = vpop.xlane.xlu0 %2478
  %v2480 = vsel %vm697, %v2473, 0.0
  %2481 = vadd.xlane.f32.xlu0 %v2480
  %v2482 = vpop.xlane.xlu0 %2481
  %v2483 = vrcp.pop %v2476
  %v2484 = vmul.f32 %v2476, %v2483
  %v2485 = vsub.f32 1.0, %v2484
  %v2486 = vmul.f32 %v2483, %v2485
  %v2487 = vadd.f32 %v2483, %v2486
  %vm2488 = vweird.f32 %v2476
  %vm2489 = vweird.f32 %v2483
  %vm2490 = vmor %vm2488, %vm2489
  %v2491 = vsel %vm2490, %v2483, %v2487
  %v2492 = vand.u32 2147483647, %v2476
  %vm2493 = vcmp.eq.f32.partialorder %v2492, 8.507059e+37
  %v2494 = vand.u32 %v2476, 2147483648
  %v2495 = vor.u32 1.1754944e-38, %v2494
  %v2496 = vsel %vm2493, %v2495, %v2491
  %v2497 = vmul.f32 %v2469, %v2496
  %v2498 = vrcp.pop %v2479
  %v2499 = vmul.f32 %v2479, %v2498
  %v2500 = vsub.f32 1.0, %v2499
  %v2501 = vmul.f32 %v2498, %v2500
  %v2502 = vadd.f32 %v2498, %v2501
  %vm2503 = vweird.f32 %v2479
  %vm2504 = vweird.f32 %v2498
  %vm2505 = vmor %vm2503, %vm2504
  %v2506 = vsel %vm2505, %v2498, %v2502
  %v2507 = vand.u32 2147483647, %v2479
  %vm2508 = vcmp.eq.f32.partialorder %v2507, 8.507059e+37
  %v2509 = vand.u32 %v2479, 2147483648
  %v2510 = vor.u32 1.1754944e-38, %v2509
  %v2511 = vsel %vm2508, %v2510, %v2506
  %v2512 = vmul.f32 %v2471, %v2511
  %v2513 = vrcp.pop %v2482
  %v2514 = vmul.f32 %v2482, %v2513
  %v2515 = vsub.f32 1.0, %v2514
  %v2516 = vmul.f32 %v2513, %v2515
  %v2517 = vadd.f32 %v2513, %v2516
  %vm2518 = vweird.f32 %v2482
  %vm2519 = vweird.f32 %v2513
  %vm2520 = vmor %vm2518, %vm2519
  %v2521 = vsel %vm2520, %v2513, %v2517
  %v2522 = vand.u32 2147483647, %v2482
  %vm2523 = vcmp.eq.f32.partialorder %v2522, 8.507059e+37
  %v2524 = vand.u32 %v2482, 2147483648
  %v2525 = vor.u32 1.1754944e-38, %v2524
  %v2526 = vsel %vm2523, %v2525, %v2521
  %v2527 = vmul.f32 %v2473, %v2526
  %2528 = vrot.lane.b32.xlu0 %v2214, 48
  %v2529 = vpop.permute.xlu0 %2528
  %2530 = vrot.lane.b32.xlu0 %v2217, 48
  %v2531 = vpop.permute.xlu0 %2530
  %2532 = vrot.lane.b32.xlu0 %v2220, 48
  %v2533 = vpop.permute.xlu0 %2532
  %v2538 = vsel %vm697, %v2497, 0
  %v2541 = vsel %vm697, %v2512, 0
  %v2544 = vsel %vm697, %v2527, 0
  %2546 = vmatpush.msra.mxu0 0.0
  %2547 = vmatpush.msra.mxu0 0.0
  %2548 = vmatpush.msra.mxu0 0.0
  %2549 = vmatpush.msra.mxu0 0.0
  %2550 = vmatpush.msra.mxu0 0.0
  %2551 = vmatpush.msra.mxu0 0.0
  %2552 = vmatpush.msra.mxu0 0.0
  %2553 = vmatpush.msra.mxu0 0.0
  %2554 = vmatpush.msra.mxu0 0.0
  %2555 = vmatpush.msra.mxu0 0.0
  %2556 = vmatpush.msra.mxu0 0.0
  %2557 = vmatpush.msra.mxu0 0.0
  %2558 = vmatpush.msra.mxu0 0.0
  %2559 = vmatpush.msra.mxu0 %v2533
  %2560 = vmatpush.msra.mxu0 %v2531
  %2561 = vmatpush.msra.mxu0 %v2529
  %2562 = vmatmul.f32.gmra.mxu0 %v2538
  %v2563 = vpop.f32.mrf.mxu0
  %v2564 = vadd.f32 0.0, %v2563
  %2565 = vmatmul.f32.gmra.mxu0 %v2541
  %v2566 = vpop.f32.mrf.mxu0
  %v2567 = vadd.f32 0.0, %v2566
  %2568 = vmatmul.f32.gmra.mxu0 %v2544
  %v2569 = vpop.f32.mrf.mxu0
  %v2570 = vadd.f32 0.0, %v2569
  %2571 = vdwg.mxu0
  %v2573 = vsel %vm652, %v2564, 0
  %v2576 = vsel %vm652, %v2567, 0
  %v2579 = vsel %vm652, %v2570, 0
  %2581 = vmatpush.msra.mxu0 0.0
  %2582 = vmatpush.msra.mxu0 0.0
  %2583 = vmatpush.msra.mxu0 0.0
  %2584 = vmatpush.msra.mxu0 0.0
  %2585 = vmatpush.msra.mxu0 0.0
  %2586 = vmatpush.msra.mxu0 0.0
  %2587 = vmatpush.msra.mxu0 0.0
  %2588 = vmatpush.msra.mxu0 0.0
  %2589 = vmatpush.msra.mxu0 0.0
  %2590 = vmatpush.msra.mxu0 0.0
  %2591 = vmatpush.msra.mxu0 0.0
  %2592 = vmatpush.msra.mxu0 0.0
  %2593 = vmatpush.msra.mxu0 0.0
  %2594 = vmatpush.msra.mxu0 0.0
  %2595 = vmatpush.msra.mxu0 %v2022
  %2596 = vmatpush.msra.mxu0 %v2021
  %2597 = vmatmul.f32.gmra.mxu0 %v2573
  %v2598 = vpop.f32.mrf.mxu0
  %v2599 = vadd.f32 0.0, %v2598
  %2600 = vmatmul.f32.gmra.mxu0 %v2576
  %v2601 = vpop.f32.mrf.mxu0
  %v2602 = vadd.f32 0.0, %v2601
  %2603 = vmatmul.f32.gmra.mxu0 %v2579
  %v2604 = vpop.f32.mrf.mxu0
  %v2605 = vadd.f32 0.0, %v2604
  %2606 = vdwg.mxu0
  %v2608 = vsel %vm652, %v2392, 0
  %v2611 = vsel %vm652, %v2395, 0
  %v2614 = vsel %vm652, %v2398, 0
  %2616 = vmatpush.msra.mxu0 0.0
  %2617 = vmatpush.msra.mxu0 0.0
  %2618 = vmatpush.msra.mxu0 0.0
  %2619 = vmatpush.msra.mxu0 0.0
  %2620 = vmatpush.msra.mxu0 0.0
  %2621 = vmatpush.msra.mxu0 0.0
  %2622 = vmatpush.msra.mxu0 0.0
  %2623 = vmatpush.msra.mxu0 0.0
  %2624 = vmatpush.msra.mxu0 0.0
  %2625 = vmatpush.msra.mxu0 0.0
  %2626 = vmatpush.msra.mxu0 0.0
  %2627 = vmatpush.msra.mxu0 0.0
  %2628 = vmatpush.msra.mxu0 0.0
  %2629 = vmatpush.msra.mxu0 0.0
  %2630 = vmatpush.msra.mxu0 %v2020
  %2631 = vmatpush.msra.mxu0 %v2019
  %2632 = vmatmul.f32.gmra.mxu0 %v2608
  %v2633 = vpop.f32.mrf.mxu0
  %v2634 = vadd.f32 %v2599, %v2633
  %2635 = vmatmul.f32.gmra.mxu0 %v2611
  %v2636 = vpop.f32.mrf.mxu0
  %v2637 = vadd.f32 %v2602, %v2636
  %2638 = vmatmul.f32.gmra.mxu0 %v2614
  %v2639 = vpop.f32.mrf.mxu0
  %v2640 = vadd.f32 %v2605, %v2639
  %2641 = vdwg.mxu0
  %v2643 = vperm.slane %v2024, 0
  %v2645 = vadd.f32 %v2634, %v2643
  %v2646 = vadd.f32 %v2637, %v2643
  %v2647 = vadd.f32 %v2640, %v2643
  %2651 = vrot.lane.b32.xlu0 %v2223, 96
  %v2652 = vpop.permute.xlu0 %2651
  %2653 = vrot.lane.b32.xlu0 %v2226, 96
  %v2654 = vpop.permute.xlu0 %2653
  %2655 = vrot.lane.b32.xlu0 %v2229, 96
  %v2656 = vpop.permute.xlu0 %2655
  %v2657 = vsel %vm652, %v2223, 0
  %v2659 = vsel %vm652, %v2226, 0
  %v2661 = vsel %vm652, %v2229, 0
  %v2663 = vsel %vm652, %v2652, 0
  %v2665 = vsel %vm652, %v2654, 0
  %v2667 = vsel %vm652, %v2656, 0
  %2669 = vmatpush.xpose.msra.mxu0 0.0
  %2670 = vmatpush.xpose.msra.mxu0 0.0
  %2671 = vmatpush.xpose.msra.mxu0 0.0
  %2672 = vmatpush.xpose.msra.mxu0 0.0
  %2673 = vmatpush.xpose.msra.mxu0 0.0
  %2674 = vmatpush.xpose.msra.mxu0 0.0
  %2675 = vmatpush.xpose.msra.mxu0 0.0
  %2676 = vmatpush.xpose.msra.mxu0 0.0
  %2677 = vmatpush.xpose.msra.mxu0 0.0
  %2678 = vmatpush.xpose.msra.mxu0 0.0
  %2679 = vmatpush.xpose.msra.mxu0 0.0
  %2680 = vmatpush.xpose.msra.mxu0 0.0
  %2681 = vmatpush.xpose.msra.mxu0 0.0
  %2682 = vmatpush.xpose.msra.mxu0 %v2667
  %2683 = vmatpush.xpose.msra.mxu0 %v2665
  %2684 = vmatpush.xpose.msra.mxu0 %v2663
  %2685 = vmatmul.f32.gmra.mxu0 %v2657
  %v2686 = vpop.f32.mrf.mxu0
  %v2687 = vadd.f32 0.0, %v2686
  %2688 = vmatmul.f32.gmra.mxu0 %v2659
  %v2689 = vpop.f32.mrf.mxu0
  %v2690 = vadd.f32 0.0, %v2689
  %2691 = vmatmul.f32.gmra.mxu0 %v2661
  %v2692 = vpop.f32.mrf.mxu0
  %v2693 = vadd.f32 0.0, %v2692
  %2694 = vdwg.mxu0
  %v2695 = vmul.f32 %v2687, 0.25
  %v2696 = vmul.f32 %v2690, 0.25
  %v2697 = vmul.f32 %v2693, 0.25
  %v2698 = vadd.f32 %v2695, %v416
  %v2699 = vadd.f32 %v2696, %v416
  %v2700 = vadd.f32 %v2697, %v416
  %v2701 = vsel %vm697, %v2698, -inf
  %2702 = vmax.xlane.f32.xlu0 %v2701
  %v2703 = vpop.xlane.xlu0 %2702
  %v2704 = vsel %vm697, %v2699, -inf
  %2705 = vmax.xlane.f32.xlu0 %v2704
  %v2706 = vpop.xlane.xlu0 %2705
  %v2707 = vsel %vm697, %v2700, -inf
  %2708 = vmax.xlane.f32.xlu0 %v2707
  %v2709 = vpop.xlane.xlu0 %2708
  %v2710 = vsub.f32 %v2698, %v2703
  %v2711 = vsub.f32 %v2699, %v2706
  %v2712 = vsub.f32 %v2700, %v2709
  %v2713 = vmul.f32 %v2710, 1.442695
  %v2714 = vpow.pop %v2713
  %v2715 = vmul.f32 %v2711, 1.442695
  %v2716 = vpow.pop %v2715
  %v2717 = vmul.f32 %v2712, 1.442695
  %v2718 = vpow.pop %v2717
  %v2719 = vsel %vm697, %v2714, 0.0
  %2720 = vadd.xlane.f32.xlu0 %v2719
  %v2721 = vpop.xlane.xlu0 %2720
  %v2722 = vsel %vm697, %v2716, 0.0
  %2723 = vadd.xlane.f32.xlu0 %v2722
  %v2724 = vpop.xlane.xlu0 %2723
  %v2725 = vsel %vm697, %v2718, 0.0
  %2726 = vadd.xlane.f32.xlu0 %v2725
  %v2727 = vpop.xlane.xlu0 %2726
  %v2728 = vrcp.pop %v2721
  %v2729 = vmul.f32 %v2721, %v2728
  %v2730 = vsub.f32 1.0, %v2729
  %v2731 = vmul.f32 %v2728, %v2730
  %v2732 = vadd.f32 %v2728, %v2731
  %vm2733 = vweird.f32 %v2721
  %vm2734 = vweird.f32 %v2728
  %vm2735 = vmor %vm2733, %vm2734
  %v2736 = vsel %vm2735, %v2728, %v2732
  %v2737 = vand.u32 2147483647, %v2721
  %vm2738 = vcmp.eq.f32.partialorder %v2737, 8.507059e+37
  %v2739 = vand.u32 %v2721, 2147483648
  %v2740 = vor.u32 1.1754944e-38, %v2739
  %v2741 = vsel %vm2738, %v2740, %v2736
  %v2742 = vmul.f32 %v2714, %v2741
  %v2743 = vrcp.pop %v2724
  %v2744 = vmul.f32 %v2724, %v2743
  %v2745 = vsub.f32 1.0, %v2744
  %v2746 = vmul.f32 %v2743, %v2745
  %v2747 = vadd.f32 %v2743, %v2746
  %vm2748 = vweird.f32 %v2724
  %vm2749 = vweird.f32 %v2743
  %vm2750 = vmor %vm2748, %vm2749
  %v2751 = vsel %vm2750, %v2743, %v2747
  %v2752 = vand.u32 2147483647, %v2724
  %vm2753 = vcmp.eq.f32.partialorder %v2752, 8.507059e+37
  %v2754 = vand.u32 %v2724, 2147483648
  %v2755 = vor.u32 1.1754944e-38, %v2754
  %v2756 = vsel %vm2753, %v2755, %v2751
  %v2757 = vmul.f32 %v2716, %v2756
  %v2758 = vrcp.pop %v2727
  %v2759 = vmul.f32 %v2727, %v2758
  %v2760 = vsub.f32 1.0, %v2759
  %v2761 = vmul.f32 %v2758, %v2760
  %v2762 = vadd.f32 %v2758, %v2761
  %vm2763 = vweird.f32 %v2727
  %vm2764 = vweird.f32 %v2758
  %vm2765 = vmor %vm2763, %vm2764
  %v2766 = vsel %vm2765, %v2758, %v2762
  %v2767 = vand.u32 2147483647, %v2727
  %vm2768 = vcmp.eq.f32.partialorder %v2767, 8.507059e+37
  %v2769 = vand.u32 %v2727, 2147483648
  %v2770 = vor.u32 1.1754944e-38, %v2769
  %v2771 = vsel %vm2768, %v2770, %v2766
  %v2772 = vmul.f32 %v2718, %v2771
  %2773 = vrot.lane.b32.xlu0 %v2223, 64
  %v2774 = vpop.permute.xlu0 %2773
  %2775 = vrot.lane.b32.xlu0 %v2226, 64
  %v2776 = vpop.permute.xlu0 %2775
  %2777 = vrot.lane.b32.xlu0 %v2229, 64
  %v2778 = vpop.permute.xlu0 %2777
  %v2783 = vsel %vm697, %v2742, 0
  %v2786 = vsel %vm697, %v2757, 0
  %v2789 = vsel %vm697, %v2772, 0
  %2791 = vmatpush.msra.mxu0 0.0
  %2792 = vmatpush.msra.mxu0 0.0
  %2793 = vmatpush.msra.mxu0 0.0
  %2794 = vmatpush.msra.mxu0 0.0
  %2795 = vmatpush.msra.mxu0 0.0
  %2796 = vmatpush.msra.mxu0 0.0
  %2797 = vmatpush.msra.mxu0 0.0
  %2798 = vmatpush.msra.mxu0 0.0
  %2799 = vmatpush.msra.mxu0 0.0
  %2800 = vmatpush.msra.mxu0 0.0
  %2801 = vmatpush.msra.mxu0 0.0
  %2802 = vmatpush.msra.mxu0 0.0
  %2803 = vmatpush.msra.mxu0 0.0
  %2804 = vmatpush.msra.mxu0 %v2778
  %2805 = vmatpush.msra.mxu0 %v2776
  %2806 = vmatpush.msra.mxu0 %v2774
  %2807 = vmatmul.f32.gmra.mxu0 %v2783
  %v2808 = vpop.f32.mrf.mxu0
  %v2809 = vadd.f32 0.0, %v2808
  %2810 = vmatmul.f32.gmra.mxu0 %v2786
  %v2811 = vpop.f32.mrf.mxu0
  %v2812 = vadd.f32 0.0, %v2811
  %2813 = vmatmul.f32.gmra.mxu0 %v2789
  %v2814 = vpop.f32.mrf.mxu0
  %v2815 = vadd.f32 0.0, %v2814
  %2816 = vdwg.mxu0
  %2817 = vrot.lane.b32.xlu0 %v2223, 112
  %v2818 = vpop.permute.xlu0 %2817
  %2819 = vrot.lane.b32.xlu0 %v2226, 112
  %v2820 = vpop.permute.xlu0 %2819
  %2821 = vrot.lane.b32.xlu0 %v2229, 112
  %v2822 = vpop.permute.xlu0 %2821
  %2823 = vrot.lane.b32.xlu0 %v2223, 80
  %v2824 = vpop.permute.xlu0 %2823
  %2825 = vrot.lane.b32.xlu0 %v2226, 80
  %v2826 = vpop.permute.xlu0 %2825
  %2827 = vrot.lane.b32.xlu0 %v2229, 80
  %v2828 = vpop.permute.xlu0 %2827
  %v2829 = vsel %vm652, %v2818, 0
  %v2831 = vsel %vm652, %v2820, 0
  %v2833 = vsel %vm652, %v2822, 0
  %v2835 = vsel %vm652, %v2824, 0
  %v2837 = vsel %vm652, %v2826, 0
  %v2839 = vsel %vm652, %v2828, 0
  %2841 = vmatpush.xpose.msra.mxu0 0.0
  %2842 = vmatpush.xpose.msra.mxu0 0.0
  %2843 = vmatpush.xpose.msra.mxu0 0.0
  %2844 = vmatpush.xpose.msra.mxu0 0.0
  %2845 = vmatpush.xpose.msra.mxu0 0.0
  %2846 = vmatpush.xpose.msra.mxu0 0.0
  %2847 = vmatpush.xpose.msra.mxu0 0.0
  %2848 = vmatpush.xpose.msra.mxu0 0.0
  %2849 = vmatpush.xpose.msra.mxu0 0.0
  %2850 = vmatpush.xpose.msra.mxu0 0.0
  %2851 = vmatpush.xpose.msra.mxu0 0.0
  %2852 = vmatpush.xpose.msra.mxu0 0.0
  %2853 = vmatpush.xpose.msra.mxu0 0.0
  %2854 = vmatpush.xpose.msra.mxu0 %v2839
  %2855 = vmatpush.xpose.msra.mxu0 %v2837
  %2856 = vmatpush.xpose.msra.mxu0 %v2835
  %2857 = vmatmul.f32.gmra.mxu0 %v2829
  %v2858 = vpop.f32.mrf.mxu0
  %v2859 = vadd.f32 0.0, %v2858
  %2860 = vmatmul.f32.gmra.mxu0 %v2831
  %v2861 = vpop.f32.mrf.mxu0
  %v2862 = vadd.f32 0.0, %v2861
  %2863 = vmatmul.f32.gmra.mxu0 %v2833
  %v2864 = vpop.f32.mrf.mxu0
  %v2865 = vadd.f32 0.0, %v2864
  %2866 = vdwg.mxu0
  %v2867 = vmul.f32 %v2859, 0.25
  %v2868 = vmul.f32 %v2862, 0.25
  %v2869 = vmul.f32 %v2865, 0.25
  %v2870 = vadd.f32 %v2867, %v416
  %v2871 = vadd.f32 %v2868, %v416
  %v2872 = vadd.f32 %v2869, %v416
  %v2873 = vsel %vm697, %v2870, -inf
  %2874 = vmax.xlane.f32.xlu0 %v2873
  %v2875 = vpop.xlane.xlu0 %2874
  %v2876 = vsel %vm697, %v2871, -inf
  %2877 = vmax.xlane.f32.xlu0 %v2876
  %v2878 = vpop.xlane.xlu0 %2877
  %v2879 = vsel %vm697, %v2872, -inf
  %2880 = vmax.xlane.f32.xlu0 %v2879
  %v2881 = vpop.xlane.xlu0 %2880
  %v2882 = vsub.f32 %v2870, %v2875
  %v2883 = vsub.f32 %v2871, %v2878
  %v2884 = vsub.f32 %v2872, %v2881
  %v2885 = vmul.f32 %v2882, 1.442695
  %v2886 = vpow.pop %v2885
  %v2887 = vmul.f32 %v2883, 1.442695
  %v2888 = vpow.pop %v2887
  %v2889 = vmul.f32 %v2884, 1.442695
  %v2890 = vpow.pop %v2889
  %v2891 = vsel %vm697, %v2886, 0.0
  %2892 = vadd.xlane.f32.xlu0 %v2891
  %v2893 = vpop.xlane.xlu0 %2892
  %v2894 = vsel %vm697, %v2888, 0.0
  %2895 = vadd.xlane.f32.xlu0 %v2894
  %v2896 = vpop.xlane.xlu0 %2895
  %v2897 = vsel %vm697, %v2890, 0.0
  %2898 = vadd.xlane.f32.xlu0 %v2897
  %v2899 = vpop.xlane.xlu0 %2898
  %v2900 = vrcp.pop %v2893
  %v2901 = vmul.f32 %v2893, %v2900
  %v2902 = vsub.f32 1.0, %v2901
  %v2903 = vmul.f32 %v2900, %v2902
  %v2904 = vadd.f32 %v2900, %v2903
  %vm2905 = vweird.f32 %v2893
  %vm2906 = vweird.f32 %v2900
  %vm2907 = vmor %vm2905, %vm2906
  %v2908 = vsel %vm2907, %v2900, %v2904
  %v2909 = vand.u32 2147483647, %v2893
  %vm2910 = vcmp.eq.f32.partialorder %v2909, 8.507059e+37
  %v2911 = vand.u32 %v2893, 2147483648
  %v2912 = vor.u32 1.1754944e-38, %v2911
  %v2913 = vsel %vm2910, %v2912, %v2908
  %v2914 = vmul.f32 %v2886, %v2913
  %v2915 = vrcp.pop %v2896
  %v2916 = vmul.f32 %v2896, %v2915
  %v2917 = vsub.f32 1.0, %v2916
  %v2918 = vmul.f32 %v2915, %v2917
  %v2919 = vadd.f32 %v2915, %v2918
  %vm2920 = vweird.f32 %v2896
  %vm2921 = vweird.f32 %v2915
  %vm2922 = vmor %vm2920, %vm2921
  %v2923 = vsel %vm2922, %v2915, %v2919
  %v2924 = vand.u32 2147483647, %v2896
  %vm2925 = vcmp.eq.f32.partialorder %v2924, 8.507059e+37
  %v2926 = vand.u32 %v2896, 2147483648
  %v2927 = vor.u32 1.1754944e-38, %v2926
  %v2928 = vsel %vm2925, %v2927, %v2923
  %v2929 = vmul.f32 %v2888, %v2928
  %v2930 = vrcp.pop %v2899
  %v2931 = vmul.f32 %v2899, %v2930
  %v2932 = vsub.f32 1.0, %v2931
  %v2933 = vmul.f32 %v2930, %v2932
  %v2934 = vadd.f32 %v2930, %v2933
  %vm2935 = vweird.f32 %v2899
  %vm2936 = vweird.f32 %v2930
  %vm2937 = vmor %vm2935, %vm2936
  %v2938 = vsel %vm2937, %v2930, %v2934
  %v2939 = vand.u32 2147483647, %v2899
  %vm2940 = vcmp.eq.f32.partialorder %v2939, 8.507059e+37
  %v2941 = vand.u32 %v2899, 2147483648
  %v2942 = vor.u32 1.1754944e-38, %v2941
  %v2943 = vsel %vm2940, %v2942, %v2938
  %v2944 = vmul.f32 %v2890, %v2943
  %2945 = vrot.lane.b32.xlu0 %v2223, 48
  %v2946 = vpop.permute.xlu0 %2945
  %2947 = vrot.lane.b32.xlu0 %v2226, 48
  %v2948 = vpop.permute.xlu0 %2947
  %2949 = vrot.lane.b32.xlu0 %v2229, 48
  %v2950 = vpop.permute.xlu0 %2949
  %v2955 = vsel %vm697, %v2914, 0
  %v2958 = vsel %vm697, %v2929, 0
  %v2961 = vsel %vm697, %v2944, 0
  %2963 = vmatpush.msra.mxu0 0.0
  %2964 = vmatpush.msra.mxu0 0.0
  %2965 = vmatpush.msra.mxu0 0.0
  %2966 = vmatpush.msra.mxu0 0.0
  %2967 = vmatpush.msra.mxu0 0.0
  %2968 = vmatpush.msra.mxu0 0.0
  %2969 = vmatpush.msra.mxu0 0.0
  %2970 = vmatpush.msra.mxu0 0.0
  %2971 = vmatpush.msra.mxu0 0.0
  %2972 = vmatpush.msra.mxu0 0.0
  %2973 = vmatpush.msra.mxu0 0.0
  %2974 = vmatpush.msra.mxu0 0.0
  %2975 = vmatpush.msra.mxu0 0.0
  %2976 = vmatpush.msra.mxu0 %v2950
  %2977 = vmatpush.msra.mxu0 %v2948
  %2978 = vmatpush.msra.mxu0 %v2946
  %2979 = vmatmul.f32.gmra.mxu0 %v2955
  %v2980 = vpop.f32.mrf.mxu0
  %v2981 = vadd.f32 0.0, %v2980
  %2982 = vmatmul.f32.gmra.mxu0 %v2958
  %v2983 = vpop.f32.mrf.mxu0
  %v2984 = vadd.f32 0.0, %v2983
  %2985 = vmatmul.f32.gmra.mxu0 %v2961
  %v2986 = vpop.f32.mrf.mxu0
  %v2987 = vadd.f32 0.0, %v2986
  %2988 = vdwg.mxu0
  %v2990 = vsel %vm652, %v2981, 0
  %v2993 = vsel %vm652, %v2984, 0
  %v2996 = vsel %vm652, %v2987, 0
  %2998 = vmatpush.msra.mxu0 0.0
  %2999 = vmatpush.msra.mxu0 0.0
  %3000 = vmatpush.msra.mxu0 0.0
  %3001 = vmatpush.msra.mxu0 0.0
  %3002 = vmatpush.msra.mxu0 0.0
  %3003 = vmatpush.msra.mxu0 0.0
  %3004 = vmatpush.msra.mxu0 0.0
  %3005 = vmatpush.msra.mxu0 0.0
  %3006 = vmatpush.msra.mxu0 0.0
  %3007 = vmatpush.msra.mxu0 0.0
  %3008 = vmatpush.msra.mxu0 0.0
  %3009 = vmatpush.msra.mxu0 0.0
  %3010 = vmatpush.msra.mxu0 0.0
  %3011 = vmatpush.msra.mxu0 0.0
  %3012 = vmatpush.msra.mxu0 %v2022
  %3013 = vmatpush.msra.mxu0 %v2021
  %3014 = vmatmul.f32.gmra.mxu0 %v2990
  %v3015 = vpop.f32.mrf.mxu0
  %v3016 = vadd.f32 0.0, %v3015
  %3017 = vmatmul.f32.gmra.mxu0 %v2993
  %v3018 = vpop.f32.mrf.mxu0
  %v3019 = vadd.f32 0.0, %v3018
  %3020 = vmatmul.f32.gmra.mxu0 %v2996
  %v3021 = vpop.f32.mrf.mxu0
  %v3022 = vadd.f32 0.0, %v3021
  %3023 = vdwg.mxu0
  %v3025 = vsel %vm652, %v2809, 0
  %v3028 = vsel %vm652, %v2812, 0
  %v3031 = vsel %vm652, %v2815, 0
  %3033 = vmatpush.msra.mxu0 0.0
  %3034 = vmatpush.msra.mxu0 0.0
  %3035 = vmatpush.msra.mxu0 0.0
  %3036 = vmatpush.msra.mxu0 0.0
  %3037 = vmatpush.msra.mxu0 0.0
  %3038 = vmatpush.msra.mxu0 0.0
  %3039 = vmatpush.msra.mxu0 0.0
  %3040 = vmatpush.msra.mxu0 0.0
  %3041 = vmatpush.msra.mxu0 0.0
  %3042 = vmatpush.msra.mxu0 0.0
  %3043 = vmatpush.msra.mxu0 0.0
  %3044 = vmatpush.msra.mxu0 0.0
  %3045 = vmatpush.msra.mxu0 0.0
  %3046 = vmatpush.msra.mxu0 0.0
  %3047 = vmatpush.msra.mxu0 %v2020
  %3048 = vmatpush.msra.mxu0 %v2019
  %3049 = vmatmul.f32.gmra.mxu0 %v3025
  %v3050 = vpop.f32.mrf.mxu0
  %v3051 = vadd.f32 %v3016, %v3050
  %3052 = vmatmul.f32.gmra.mxu0 %v3028
  %v3053 = vpop.f32.mrf.mxu0
  %v3054 = vadd.f32 %v3019, %v3053
  %3055 = vmatmul.f32.gmra.mxu0 %v3031
  %v3056 = vpop.f32.mrf.mxu0
  %v3057 = vadd.f32 %v3022, %v3056
  %3058 = vdwg.mxu0
  %v3059 = vadd.f32 %v3051, %v2643
  %v3060 = vadd.f32 %v3054, %v2643
  %v3061 = vadd.f32 %v3057, %v2643
  %v3062 = vadd.f32 %v2001, %v2645
  %v3063 = vadd.f32 %v2002, %v2646
  %v3064 = vadd.f32 %v2003, %v2647
  %v3065 = vadd.f32 %v2004, %v3059
  %v3066 = vadd.f32 %v2005, %v3060
  %v3067 = vadd.f32 %v2006, %v3061
  %s3068 = scalar_lea.vmem %s9, 1
  %v3069 = vld [vmem:[%s3068] sm:$0x1]
  %s3070 = scalar_lea.vmem %s10, 1
  %v3071 = vld [vmem:[%s3070] sm:$0x1]
  %v3072 = vsel %vm429, %v3062, 0.0
  %3073 = vadd.xlane.f32.xlu0 %v3072
  %v3074 = vpop.xlane.xlu0 %3073
  %v3075 = vsel %vm429, %v3063, 0.0
  %3076 = vadd.xlane.f32.xlu0 %v3075
  %v3077 = vpop.xlane.xlu0 %3076
  %v3078 = vsel %vm429, %v3064, 0.0
  %3079 = vadd.xlane.f32.xlu0 %v3078
  %v3080 = vpop.xlane.xlu0 %3079
  %v3081 = vsel %vm429, %v3065, 0.0
  %3082 = vadd.xlane.f32.xlu0 %v3081
  %v3083 = vpop.xlane.xlu0 %3082
  %v3084 = vsel %vm429, %v3066, 0.0
  %3085 = vadd.xlane.f32.xlu0 %v3084
  %v3086 = vpop.xlane.xlu0 %3085
  %v3087 = vsel %vm429, %v3067, 0.0
  %3088 = vadd.xlane.f32.xlu0 %v3087
  %v3089 = vpop.xlane.xlu0 %3088
  %v3090 = vmul.f32 %v3074, %v454
  %v3091 = vmul.f32 %v3077, %v454
  %v3092 = vmul.f32 %v3080, %v454
  %v3093 = vmul.f32 %v3083, %v454
  %v3094 = vmul.f32 %v3086, %v454
  %v3095 = vmul.f32 %v3089, %v454
  %v3096 = vsub.f32 %v3062, %v3090
  %v3097 = vsub.f32 %v3063, %v3091
  %v3098 = vsub.f32 %v3064, %v3092
  %v3099 = vsub.f32 %v3065, %v3093
  %v3100 = vsub.f32 %v3066, %v3094
  %v3101 = vsub.f32 %v3067, %v3095
  %v3102 = vmul.f32 %v3096, %v3096
  %v3103 = vmul.f32 %v3097, %v3097
  %v3104 = vmul.f32 %v3098, %v3098
  %v3105 = vmul.f32 %v3099, %v3099
  %v3106 = vmul.f32 %v3100, %v3100
  %v3107 = vmul.f32 %v3101, %v3101
  %v3108 = vsel %vm429, %v3102, 0.0
  %3109 = vadd.xlane.f32.xlu0 %v3108
  %v3110 = vpop.xlane.xlu0 %3109
  %v3111 = vsel %vm429, %v3103, 0.0
  %3112 = vadd.xlane.f32.xlu0 %v3111
  %v3113 = vpop.xlane.xlu0 %3112
  %v3114 = vsel %vm429, %v3104, 0.0
  %3115 = vadd.xlane.f32.xlu0 %v3114
  %v3116 = vpop.xlane.xlu0 %3115
  %v3117 = vsel %vm429, %v3105, 0.0
  %3118 = vadd.xlane.f32.xlu0 %v3117
  %v3119 = vpop.xlane.xlu0 %3118
  %v3120 = vsel %vm429, %v3106, 0.0
  %3121 = vadd.xlane.f32.xlu0 %v3120
  %v3122 = vpop.xlane.xlu0 %3121
  %v3123 = vsel %vm429, %v3107, 0.0
  %3124 = vadd.xlane.f32.xlu0 %v3123
  %v3125 = vpop.xlane.xlu0 %3124
  %v3126 = vmul.f32 %v3110, %v454
  %v3127 = vmul.f32 %v3113, %v454
  %v3128 = vmul.f32 %v3116, %v454
  %v3129 = vmul.f32 %v3119, %v454
  %v3130 = vmul.f32 %v3122, %v454
  %v3131 = vmul.f32 %v3125, %v454
  %v3132 = vadd.f32 %v3126, 1e-06
  %v3133 = vadd.f32 %v3127, 1e-06
  %v3134 = vadd.f32 %v3128, 1e-06
  %v3135 = vadd.f32 %v3129, 1e-06
  %v3136 = vadd.f32 %v3130, 1e-06
  %v3137 = vadd.f32 %v3131, 1e-06
  %v3138 = vrsqrt.pop %v3132
  %v3139 = vmul.f32 %v3138, %v3132
  %v3140 = vmul.f32 %v3139, %v3138
  %v3141 = vmul.f32 0.5, %v3140
  %v3142 = vsub.f32 1.5, %v3141
  %v3143 = vmul.f32 %v3138, %v3142
  %vm3144 = vweird.f32 %v3132
  %vm3145 = vweird.f32 %v3138
  %vm3146 = vmor %vm3144, %vm3145
  %v3147 = vsel %vm3146, %v3138, %v3143
  %v3148 = vrsqrt.pop %v3133
  %v3149 = vmul.f32 %v3148, %v3133
  %v3150 = vmul.f32 %v3149, %v3148
  %v3151 = vmul.f32 0.5, %v3150
  %v3152 = vsub.f32 1.5, %v3151
  %v3153 = vmul.f32 %v3148, %v3152
  %vm3154 = vweird.f32 %v3133
  %vm3155 = vweird.f32 %v3148
  %vm3156 = vmor %vm3154, %vm3155
  %v3157 = vsel %vm3156, %v3148, %v3153
  %v3158 = vrsqrt.pop %v3134
  %v3159 = vmul.f32 %v3158, %v3134
  %v3160 = vmul.f32 %v3159, %v3158
  %v3161 = vmul.f32 0.5, %v3160
  %v3162 = vsub.f32 1.5, %v3161
  %v3163 = vmul.f32 %v3158, %v3162
  %vm3164 = vweird.f32 %v3134
  %vm3165 = vweird.f32 %v3158
  %vm3166 = vmor %vm3164, %vm3165
  %v3167 = vsel %vm3166, %v3158, %v3163
  %v3168 = vrsqrt.pop %v3135
  %v3169 = vmul.f32 %v3168, %v3135
  %v3170 = vmul.f32 %v3169, %v3168
  %v3171 = vmul.f32 0.5, %v3170
  %v3172 = vsub.f32 1.5, %v3171
  %v3173 = vmul.f32 %v3168, %v3172
  %vm3174 = vweird.f32 %v3135
  %vm3175 = vweird.f32 %v3168
  %vm3176 = vmor %vm3174, %vm3175
  %v3177 = vsel %vm3176, %v3168, %v3173
  %v3178 = vrsqrt.pop %v3136
  %v3179 = vmul.f32 %v3178, %v3136
  %v3180 = vmul.f32 %v3179, %v3178
  %v3181 = vmul.f32 0.5, %v3180
  %v3182 = vsub.f32 1.5, %v3181
  %v3183 = vmul.f32 %v3178, %v3182
  %vm3184 = vweird.f32 %v3136
  %vm3185 = vweird.f32 %v3178
  %vm3186 = vmor %vm3184, %vm3185
  %v3187 = vsel %vm3186, %v3178, %v3183
  %v3188 = vrsqrt.pop %v3137
  %v3189 = vmul.f32 %v3188, %v3137
  %v3190 = vmul.f32 %v3189, %v3188
  %v3191 = vmul.f32 0.5, %v3190
  %v3192 = vsub.f32 1.5, %v3191
  %v3193 = vmul.f32 %v3188, %v3192
  %vm3194 = vweird.f32 %v3137
  %vm3195 = vweird.f32 %v3188
  %vm3196 = vmor %vm3194, %vm3195
  %v3197 = vsel %vm3196, %v3188, %v3193
  %v3198 = vmul.f32 %v3096, %v3147
  %v3199 = vmul.f32 %v3097, %v3157
  %v3200 = vmul.f32 %v3098, %v3167
  %v3201 = vmul.f32 %v3099, %v3177
  %v3202 = vmul.f32 %v3100, %v3187
  %v3203 = vmul.f32 %v3101, %v3197
  %v3205 = vperm.slane %v3069, 0
  %v3207 = vmul.f32 %v3198, %v3205
  %v3208 = vmul.f32 %v3199, %v3205
  %v3209 = vmul.f32 %v3200, %v3205
  %v3210 = vmul.f32 %v3201, %v3205
  %v3211 = vmul.f32 %v3202, %v3205
  %v3212 = vmul.f32 %v3203, %v3205
  %v3214 = vperm.slane %v3071, 0
  %v3216 = vadd.f32 %v3207, %v3214
  %v3217 = vadd.f32 %v3208, %v3214
  %v3218 = vadd.f32 %v3209, %v3214
  %v3219 = vadd.f32 %v3210, %v3214
  %v3220 = vadd.f32 %v3211, %v3214
  %v3221 = vadd.f32 %v3212, %v3214
  %s3222 = scalar_lea.vmem %s11, 32
  %v3223 = vld [vmem:[%s3222] sm:$0xff]
  %v3224 = vld [vmem:[%s3222 + $0x8] sm:$0xff]
  %v3225 = vld [vmem:[%s3222 + $0x10] sm:$0xff]
  %v3226 = vld [vmem:[%s3222 + $0x18] sm:$0xff]
  %s3227 = scalar_lea.vmem %s12, 1
  %v3228 = vld [vmem:[%s3227] sm:$0x1]
  %v3230 = vperm.slane %v3228, 0
  %v3233 = vsel %vm429, %v3216, 0
  %v3236 = vsel %vm429, %v3217, 0
  %v3239 = vsel %vm429, %v3218, 0
  %v3242 = vsel %vm429, %v3219, 0
  %v3245 = vsel %vm429, %v3220, 0
  %v3248 = vsel %vm429, %v3221, 0
  %3250 = vmatpush.msra.mxu0 0.0
  %3251 = vmatpush.msra.mxu0 0.0
  %3252 = vmatpush.msra.mxu0 0.0
  %3253 = vmatpush.msra.mxu0 0.0
  %3254 = vmatpush.msra.mxu0 0.0
  %3255 = vmatpush.msra.mxu0 0.0
  %3256 = vmatpush.msra.mxu0 0.0
  %3257 = vmatpush.msra.mxu0 0.0
  %3258 = vmatpush.msra.mxu0 0.0
  %3259 = vmatpush.msra.mxu0 0.0
  %3260 = vmatpush.msra.mxu0 0.0
  %3261 = vmatpush.msra.mxu0 0.0
  %3262 = vmatpush.msra.mxu0 %v3226
  %3263 = vmatpush.msra.mxu0 %v3225
  %3264 = vmatpush.msra.mxu0 %v3224
  %3265 = vmatpush.msra.mxu0 %v3223
  %3266 = vmatmul.f32.gmra.mxu0 %v3233
  %v3267 = vpop.f32.mrf.mxu0
  %v3268 = vadd.f32 %v3230, %v3267
  %3269 = vmatmul.f32.gmra.mxu0 %v3236
  %v3270 = vpop.f32.mrf.mxu0
  %v3271 = vadd.f32 %v3230, %v3270
  %3272 = vmatmul.f32.gmra.mxu0 %v3239
  %v3273 = vpop.f32.mrf.mxu0
  %v3274 = vadd.f32 %v3230, %v3273
  %3275 = vmatmul.f32.gmra.mxu0 %v3242
  %v3276 = vpop.f32.mrf.mxu0
  %v3277 = vadd.f32 %v3230, %v3276
  %3278 = vmatmul.f32.gmra.mxu0 %v3245
  %v3279 = vpop.f32.mrf.mxu0
  %v3280 = vadd.f32 %v3230, %v3279
  %3281 = vmatmul.f32.gmra.mxu0 %v3248
  %v3282 = vpop.f32.mrf.mxu0
  %v3283 = vadd.f32 %v3230, %v3282
  %3284 = vdwg.mxu0
  %v3285 = vmul.f32 %v3268, 0.5
  %v3286 = vmul.f32 %v3271, 0.5
  %v3287 = vmul.f32 %v3274, 0.5
  %v3288 = vmul.f32 %v3277, 0.5
  %v3289 = vmul.f32 %v3280, 0.5
  %v3290 = vmul.f32 %v3283, 0.5
  %v3291 = vmul.f32 %v3268, 0.70710677
  %v3292 = vmul.f32 %v3271, 0.70710677
  %v3293 = vmul.f32 %v3274, 0.70710677
  %v3294 = vmul.f32 %v3277, 0.70710677
  %v3295 = vmul.f32 %v3280, 0.70710677
  %v3296 = vmul.f32 %v3283, 0.70710677
  %vm3297 = vcmp.ge.f32.partialorder %v3291, 0.0
  %vm3298 = vcmp.ge.f32.partialorder %v3292, 0.0
  %vm3299 = vcmp.ge.f32.partialorder %v3293, 0.0
  %vm3300 = vcmp.ge.f32.partialorder %v3294, 0.0
  %vm3301 = vcmp.ge.f32.partialorder %v3295, 0.0
  %vm3302 = vcmp.ge.f32.partialorder %v3296, 0.0
  %v3303 = vsel %vm3297, 1.0, -1.0
  %v3304 = vsel %vm3298, 1.0, -1.0
  %v3305 = vsel %vm3299, 1.0, -1.0
  %v3306 = vsel %vm3300, 1.0, -1.0
  %v3307 = vsel %vm3301, 1.0, -1.0
  %v3308 = vsel %vm3302, 1.0, -1.0
  %v3309 = vand.u32 2147483647, %v3291
  %v3310 = vand.u32 2147483647, %v3292
  %v3311 = vand.u32 2147483647, %v3293
  %v3312 = vand.u32 2147483647, %v3294
  %v3313 = vand.u32 2147483647, %v3295
  %v3314 = vand.u32 2147483647, %v3296
  %v3315 = vmul.f32 %v3309, 0.3275911
  %v3316 = vmul.f32 %v3310, 0.3275911
  %v3317 = vmul.f32 %v3311, 0.3275911
  %v3318 = vmul.f32 %v3312, 0.3275911
  %v3319 = vmul.f32 %v3313, 0.3275911
  %v3320 = vmul.f32 %v3314, 0.3275911
  %v3321 = vadd.f32 %v3315, 1.0
  %v3322 = vadd.f32 %v3316, 1.0
  %v3323 = vadd.f32 %v3317, 1.0
  %v3324 = vadd.f32 %v3318, 1.0
  %v3325 = vadd.f32 %v3319, 1.0
  %v3326 = vadd.f32 %v3320, 1.0
  %v3327 = vrcp.pop %v3321
  %v3328 = vmul.f32 %v3321, %v3327
  %v3329 = vsub.f32 1.0, %v3328
  %v3330 = vmul.f32 %v3327, %v3329
  %v3331 = vadd.f32 %v3327, %v3330
  %vm3332 = vweird.f32 %v3321
  %vm3333 = vweird.f32 %v3327
  %vm3334 = vmor %vm3332, %vm3333
  %v3335 = vsel %vm3334, %v3327, %v3331
  %v3336 = vand.u32 2147483647, %v3321
  %vm3337 = vcmp.eq.f32.partialorder %v3336, 8.507059e+37
  %v3338 = vand.u32 %v3321, 2147483648
  %v3339 = vor.u32 1.1754944e-38, %v3338
  %v3340 = vsel %vm3337, %v3339, %v3335
  %v3341 = vmul.f32 1.0, %v3340
  %v3342 = vrcp.pop %v3322
  %v3343 = vmul.f32 %v3322, %v3342
  %v3344 = vsub.f32 1.0, %v3343
  %v3345 = vmul.f32 %v3342, %v3344
  %v3346 = vadd.f32 %v3342, %v3345
  %vm3347 = vweird.f32 %v3322
  %vm3348 = vweird.f32 %v3342
  %vm3349 = vmor %vm3347, %vm3348
  %v3350 = vsel %vm3349, %v3342, %v3346
  %v3351 = vand.u32 2147483647, %v3322
  %vm3352 = vcmp.eq.f32.partialorder %v3351, 8.507059e+37
  %v3353 = vand.u32 %v3322, 2147483648
  %v3354 = vor.u32 1.1754944e-38, %v3353
  %v3355 = vsel %vm3352, %v3354, %v3350
  %v3356 = vmul.f32 1.0, %v3355
  %v3357 = vrcp.pop %v3323
  %v3358 = vmul.f32 %v3323, %v3357
  %v3359 = vsub.f32 1.0, %v3358
  %v3360 = vmul.f32 %v3357, %v3359
  %v3361 = vadd.f32 %v3357, %v3360
  %vm3362 = vweird.f32 %v3323
  %vm3363 = vweird.f32 %v3357
  %vm3364 = vmor %vm3362, %vm3363
  %v3365 = vsel %vm3364, %v3357, %v3361
  %v3366 = vand.u32 2147483647, %v3323
  %vm3367 = vcmp.eq.f32.partialorder %v3366, 8.507059e+37
  %v3368 = vand.u32 %v3323, 2147483648
  %v3369 = vor.u32 1.1754944e-38, %v3368
  %v3370 = vsel %vm3367, %v3369, %v3365
  %v3371 = vmul.f32 1.0, %v3370
  %v3372 = vrcp.pop %v3324
  %v3373 = vmul.f32 %v3324, %v3372
  %v3374 = vsub.f32 1.0, %v3373
  %v3375 = vmul.f32 %v3372, %v3374
  %v3376 = vadd.f32 %v3372, %v3375
  %vm3377 = vweird.f32 %v3324
  %vm3378 = vweird.f32 %v3372
  %vm3379 = vmor %vm3377, %vm3378
  %v3380 = vsel %vm3379, %v3372, %v3376
  %v3381 = vand.u32 2147483647, %v3324
  %vm3382 = vcmp.eq.f32.partialorder %v3381, 8.507059e+37
  %v3383 = vand.u32 %v3324, 2147483648
  %v3384 = vor.u32 1.1754944e-38, %v3383
  %v3385 = vsel %vm3382, %v3384, %v3380
  %v3386 = vmul.f32 1.0, %v3385
  %v3387 = vrcp.pop %v3325
  %v3388 = vmul.f32 %v3325, %v3387
  %v3389 = vsub.f32 1.0, %v3388
  %v3390 = vmul.f32 %v3387, %v3389
  %v3391 = vadd.f32 %v3387, %v3390
  %vm3392 = vweird.f32 %v3325
  %vm3393 = vweird.f32 %v3387
  %vm3394 = vmor %vm3392, %vm3393
  %v3395 = vsel %vm3394, %v3387, %v3391
  %v3396 = vand.u32 2147483647, %v3325
  %vm3397 = vcmp.eq.f32.partialorder %v3396, 8.507059e+37
  %v3398 = vand.u32 %v3325, 2147483648
  %v3399 = vor.u32 1.1754944e-38, %v3398
  %v3400 = vsel %vm3397, %v3399, %v3395
  %v3401 = vmul.f32 1.0, %v3400
  %v3402 = vrcp.pop %v3326
  %v3403 = vmul.f32 %v3326, %v3402
  %v3404 = vsub.f32 1.0, %v3403
  %v3405 = vmul.f32 %v3402, %v3404
  %v3406 = vadd.f32 %v3402, %v3405
  %vm3407 = vweird.f32 %v3326
  %vm3408 = vweird.f32 %v3402
  %vm3409 = vmor %vm3407, %vm3408
  %v3410 = vsel %vm3409, %v3402, %v3406
  %v3411 = vand.u32 2147483647, %v3326
  %vm3412 = vcmp.eq.f32.partialorder %v3411, 8.507059e+37
  %v3413 = vand.u32 %v3326, 2147483648
  %v3414 = vor.u32 1.1754944e-38, %v3413
  %v3415 = vsel %vm3412, %v3414, %v3410
  %v3416 = vmul.f32 1.0, %v3415
  %v3417 = vmul.f32 %v3341, 1.0614054
  %v3418 = vmul.f32 %v3356, 1.0614054
  %v3419 = vmul.f32 %v3371, 1.0614054
  %v3420 = vmul.f32 %v3386, 1.0614054
  %v3421 = vmul.f32 %v3401, 1.0614054
  %v3422 = vmul.f32 %v3416, 1.0614054
  %v3423 = vadd.f32 %v3417, -1.4531521
  %v3424 = vadd.f32 %v3418, -1.4531521
  %v3425 = vadd.f32 %v3419, -1.4531521
  %v3426 = vadd.f32 %v3420, -1.4531521
  %v3427 = vadd.f32 %v3421, -1.4531521
  %v3428 = vadd.f32 %v3422, -1.4531521
  %v3429 = vmul.f32 %v3423, %v3341
  %v3430 = vmul.f32 %v3424, %v3356
  %v3431 = vmul.f32 %v3425, %v3371
  %v3432 = vmul.f32 %v3426, %v3386
  %v3433 = vmul.f32 %v3427, %v3401
  %v3434 = vmul.f32 %v3428, %v3416
  %v3435 = vadd.f32 %v3429, 1.4214138
  %v3436 = vadd.f32 %v3430, 1.4214138
  %v3437 = vadd.f32 %v3431, 1.4214138
  %v3438 = vadd.f32 %v3432, 1.4214138
  %v3439 = vadd.f32 %v3433, 1.4214138
  %v3440 = vadd.f32 %v3434, 1.4214138
  %v3441 = vmul.f32 %v3435, %v3341
  %v3442 = vmul.f32 %v3436, %v3356
  %v3443 = vmul.f32 %v3437, %v3371
  %v3444 = vmul.f32 %v3438, %v3386
  %v3445 = vmul.f32 %v3439, %v3401
  %v3446 = vmul.f32 %v3440, %v3416
  %v3447 = vadd.f32 %v3441, -0.28449672
  %v3448 = vadd.f32 %v3442, -0.28449672
  %v3449 = vadd.f32 %v3443, -0.28449672
  %v3450 = vadd.f32 %v3444, -0.28449672
  %v3451 = vadd.f32 %v3445, -0.28449672
  %v3452 = vadd.f32 %v3446, -0.28449672
  %v3453 = vmul.f32 %v3447, %v3341
  %v3454 = vmul.f32 %v3448, %v3356
  %v3455 = vmul.f32 %v3449, %v3371
  %v3456 = vmul.f32 %v3450, %v3386
  %v3457 = vmul.f32 %v3451, %v3401
  %v3458 = vmul.f32 %v3452, %v3416
  %v3459 = vadd.f32 %v3453, 0.2548296
  %v3460 = vadd.f32 %v3454, 0.2548296
  %v3461 = vadd.f32 %v3455, 0.2548296
  %v3462 = vadd.f32 %v3456, 0.2548296
  %v3463 = vadd.f32 %v3457, 0.2548296
  %v3464 = vadd.f32 %v3458, 0.2548296
  %v3465 = vmul.f32 %v3459, %v3341
  %v3466 = vmul.f32 %v3460, %v3356
  %v3467 = vmul.f32 %v3461, %v3371
  %v3468 = vmul.f32 %v3462, %v3386
  %v3469 = vmul.f32 %v3463, %v3401
  %v3470 = vmul.f32 %v3464, %v3416
  %v3471 = vsub.f32 0.0, %v3309
  %v3472 = vsub.f32 0.0, %v3310
  %v3473 = vsub.f32 0.0, %v3311
  %v3474 = vsub.f32 0.0, %v3312
  %v3475 = vsub.f32 0.0, %v3313
  %v3476 = vsub.f32 0.0, %v3314
  %v3477 = vmul.f32 %v3471, %v3309
  %v3478 = vmul.f32 %v3472, %v3310
  %v3479 = vmul.f32 %v3473, %v3311
  %v3480 = vmul.f32 %v3474, %v3312
  %v3481 = vmul.f32 %v3475, %v3313
  %v3482 = vmul.f32 %v3476, %v3314
  %v3483 = vmul.f32 %v3477, 1.442695
  %v3484 = vpow.pop %v3483
  %v3485 = vmul.f32 %v3478, 1.442695
  %v3486 = vpow.pop %v3485
  %v3487 = vmul.f32 %v3479, 1.442695
  %v3488 = vpow.pop %v3487
  %v3489 = vmul.f32 %v3480, 1.442695
  %v3490 = vpow.pop %v3489
  %v3491 = vmul.f32 %v3481, 1.442695
  %v3492 = vpow.pop %v3491
  %v3493 = vmul.f32 %v3482, 1.442695
  %v3494 = vpow.pop %v3493
  %v3495 = vmul.f32 %v3465, %v3484
  %v3496 = vmul.f32 %v3466, %v3486
  %v3497 = vmul.f32 %v3467, %v3488
  %v3498 = vmul.f32 %v3468, %v3490
  %v3499 = vmul.f32 %v3469, %v3492
  %v3500 = vmul.f32 %v3470, %v3494
  %v3501 = vsub.f32 1.0, %v3495
  %v3502 = vsub.f32 1.0, %v3496
  %v3503 = vsub.f32 1.0, %v3497
  %v3504 = vsub.f32 1.0, %v3498
  %v3505 = vsub.f32 1.0, %v3499
  %v3506 = vsub.f32 1.0, %v3500
  %v3507 = vmul.f32 %v3303, %v3501
  %v3508 = vmul.f32 %v3304, %v3502
  %v3509 = vmul.f32 %v3305, %v3503
  %v3510 = vmul.f32 %v3306, %v3504
  %v3511 = vmul.f32 %v3307, %v3505
  %v3512 = vmul.f32 %v3308, %v3506
  %v3513 = vadd.f32 %v3507, 1.0
  %v3514 = vadd.f32 %v3508, 1.0
  %v3515 = vadd.f32 %v3509, 1.0
  %v3516 = vadd.f32 %v3510, 1.0
  %v3517 = vadd.f32 %v3511, 1.0
  %v3518 = vadd.f32 %v3512, 1.0
  %v3519 = vmul.f32 %v3285, %v3513
  %v3520 = vmul.f32 %v3286, %v3514
  %v3521 = vmul.f32 %v3287, %v3515
  %v3522 = vmul.f32 %v3288, %v3516
  %v3523 = vmul.f32 %v3289, %v3517
  %v3524 = vmul.f32 %v3290, %v3518
  %s3525 = scalar_lea.vmem %s13, 64
  %v3526 = vld [vmem:[%s3525] sm:$0xff]
  %v3527 = vld [vmem:[%s3525 + $0x8] sm:$0xff]
  %v3528 = vld [vmem:[%s3525 + $0x10] sm:$0xff]
  %v3529 = vld [vmem:[%s3525 + $0x18] sm:$0xff]
  %v3530 = vld [vmem:[%s3525 + $0x20] sm:$0xff]
  %v3531 = vld [vmem:[%s3525 + $0x28] sm:$0xff]
  %v3532 = vld [vmem:[%s3525 + $0x30] sm:$0xff]
  %v3533 = vld [vmem:[%s3525 + $0x38] sm:$0xff]
  %s3534 = scalar_lea.vmem %s14, 1
  %v3535 = vld [vmem:[%s3534] sm:$0x1]
  %v3537 = vperm.slane %v3535, 0
  %v3540 = vsel %vm1947, %v3519, 0
  %v3543 = vsel %vm1947, %v3520, 0
  %v3546 = vsel %vm1947, %v3521, 0
  %v3549 = vsel %vm1947, %v3522, 0
  %v3552 = vsel %vm1947, %v3523, 0
  %v3555 = vsel %vm1947, %v3524, 0
  %3557 = vmatpush.msra.mxu0 0.0
  %3558 = vmatpush.msra.mxu0 0.0
  %3559 = vmatpush.msra.mxu0 0.0
  %3560 = vmatpush.msra.mxu0 0.0
  %3561 = vmatpush.msra.mxu0 0.0
  %3562 = vmatpush.msra.mxu0 0.0
  %3563 = vmatpush.msra.mxu0 0.0
  %3564 = vmatpush.msra.mxu0 0.0
  %3565 = vmatpush.msra.mxu0 %v3533
  %3566 = vmatpush.msra.mxu0 %v3532
  %3567 = vmatpush.msra.mxu0 %v3531
  %3568 = vmatpush.msra.mxu0 %v3530
  %3569 = vmatpush.msra.mxu0 %v3529
  %3570 = vmatpush.msra.mxu0 %v3528
  %3571 = vmatpush.msra.mxu0 %v3527
  %3572 = vmatpush.msra.mxu0 %v3526
  %3573 = vmatmul.f32.gmra.mxu0 %v3540
  %v3574 = vpop.f32.mrf.mxu0
  %v3575 = vadd.f32 %v3537, %v3574
  %3576 = vmatmul.f32.gmra.mxu0 %v3543
  %v3577 = vpop.f32.mrf.mxu0
  %3578 = vmatmul.f32.gmra.mxu0 %v3546
  %v3579 = vpop.f32.mrf.mxu0
  %3580 = vmatmul.f32.gmra.mxu0 %v3549
  %v3581 = vpop.f32.mrf.mxu0
  %v3582 = vadd.f32 %v3537, %v3581
  %3583 = vmatmul.f32.gmra.mxu0 %v3552
  %v3584 = vpop.f32.mrf.mxu0
  %3585 = vmatmul.f32.gmra.mxu0 %v3555
  %v3586 = vpop.f32.mrf.mxu0
  %3587 = vdwg.mxu0
  %v3588 = vadd.f32 %v3062, %v3575
  %v3589 = vadd.f32 %v3065, %v3582
  %v3591 = vrot.slane %v3589, 7
  %vm3593 = vcmask 1040384
  %v3594 = vsel %vm3593, %v3588, %v3591
  %v3595 = vld [vmem:[%s15] sm:$0x1]
  %v3596 = vld [vmem:[%s16] sm:$0x1]
  %vm3597 = vcmask 254976
  %v3598 = vsel %vm3597, %v3594, 0.0
  %3599 = vadd.xlane.f32.xlu0 %v3598
  %v3600 = vpop.xlane.xlu0 %3599
  %v3601 = vmul.f32 %v3600, %v454
  %v3602 = vsub.f32 %v3594, %v3601
  %v3603 = vmul.f32 %v3602, %v3602
  %v3604 = vsel %vm3597, %v3603, 0.0
  %3605 = vadd.xlane.f32.xlu0 %v3604
  %v3606 = vpop.xlane.xlu0 %3605
  %v3607 = vmul.f32 %v3606, %v454
  %v3608 = vadd.f32 %v3607, 1e-06
  %v3609 = vrsqrt.pop %v3608
  %v3610 = vmul.f32 %v3609, %v3608
  %v3611 = vmul.f32 %v3610, %v3609
  %v3612 = vmul.f32 0.5, %v3611
  %v3613 = vsub.f32 1.5, %v3612
  %v3614 = vmul.f32 %v3609, %v3613
  %vm3615 = vweird.f32 %v3608
  %vm3616 = vweird.f32 %v3609
  %vm3617 = vmor %vm3615, %vm3616
  %v3618 = vsel %vm3617, %v3609, %v3614
  %v3619 = vmul.f32 %v3602, %v3618
  %v3621 = vperm.slane %v3595, 0
  %v3623 = vmul.f32 %v3619, %v3621
  %v3625 = vperm.slane %v3596, 0
  %v3627 = vadd.f32 %v3623, %v3625
  %v3628 = vld [vmem:[%s17] sm:$0xff]
  %v3629 = vld [vmem:[%s17 + $0x8] sm:$0xff]
  %v3630 = vld [vmem:[%s17 + $0x10] sm:$0xff]
  %v3631 = vld [vmem:[%s17 + $0x18] sm:$0xff]
  %v3632 = vld [vmem:[%s18] sm:$0x1]
  %v3634 = vperm.slane %v3632, 0
  %v3637 = vsel %vm429, %v3627, 0
  %3639 = vmatpush.msra.mxu0 0.0
  %3640 = vmatpush.msra.mxu0 0.0
  %3641 = vmatpush.msra.mxu0 0.0
  %3642 = vmatpush.msra.mxu0 0.0
  %3643 = vmatpush.msra.mxu0 0.0
  %3644 = vmatpush.msra.mxu0 0.0
  %3645 = vmatpush.msra.mxu0 0.0
  %3646 = vmatpush.msra.mxu0 0.0
  %3647 = vmatpush.msra.mxu0 0.0
  %3648 = vmatpush.msra.mxu0 0.0
  %3649 = vmatpush.msra.mxu0 0.0
  %3650 = vmatpush.msra.mxu0 0.0
  %3651 = vmatpush.msra.mxu0 %v3631
  %3652 = vmatpush.msra.mxu0 %v3630
  %3653 = vmatpush.msra.mxu0 %v3629
  %3654 = vmatpush.msra.mxu0 %v3628
  %3655 = vmatmul.f32.gmra.mxu0 %v3637
  %v3656 = vpop.f32.mrf.mxu0
  %v3657 = vadd.f32 %v3634, %v3656
  %3658 = vdwg.mxu0
  %v3659 = vmax.f32 %v3657, 0.0
  %vm3660 = vcmask 517120
  %3661 = vst.msk [vmem:[%s19] sm:$0x3] %vm3660, %v3659
  // Predicated region
  $region78: #{vit_autoencoder_forward.2} parent=0 // pred_check
    _
  $region79: #{vit_autoencoder_forward.2} parent=0 // pred_check_branch
    %3663 = sbr.rel (0) target = $region81
  $region80: #{vit_autoencoder_forward.2} parent=0 // pred_region
    _
  $region81: #{vit_autoencoder_forward.2} parent=0 // pred_fallthru
    _
  // Predicated region
  $region82: #{vit_autoencoder_forward.2} parent=0 // pred_check
    _
  $region83: #{vit_autoencoder_forward.2} parent=0 // pred_check_branch
    %3665 = sbr.rel (0) target = $region85
  $region84: #{vit_autoencoder_forward.2} parent=0 // pred_region
    _
  $region85: #{vit_autoencoder_forward.2} parent=0 // pred_fallthru
    _

</llo_original>
